<compile_context>
chip_gen: v7x
topology: tpu7x:2x2x1
jax: 0.10.0
libtpu: 0.0.40
codegen_flags: <defaults>
</compile_context>

<pallas_src>
import jax
import jax.numpy as jnp
import numpy as np
from jax.experimental import pallas as pl
from jax.experimental.pallas import tpu as pltpu


# ----------------------------------------------------------------------------
# Fused kernel: one grid step == one sample; everything lives in VMEM.
# ----------------------------------------------------------------------------

def _fused_kernel(x_ref, sh1_ref, b1_ref, r1_ref, bias1_ref,
                  sh2_ref, b2_ref, r2_ref, bias2_ref,
                  w1r_ref, bfc1_ref, w2p_ref, bfc2_ref, o_ref):
    f32, bf16 = jnp.float32, jnp.bfloat16

    def dot(a, b):
        return jnp.dot(a, b, preferred_element_type=f32)

    x = x_ref[0].astype(bf16)                                   # (28, 28)

    # ---- conv1 (BN scale folded into weights) + fused 2x2 max-pool ----------
    # b1[di] / b1[3+di]: banded matrices producing even / odd output columns
    # (layout w'*32 + c); sh1[di] shifts input rows by di-1 with zero padding.
    ye = yo = None
    for di in range(3):
        xs = dot(sh1_ref[di], x).astype(bf16)                   # rows h+di-1
        te = dot(xs, b1_ref[di])                                # (28, 14*32)
        to = dot(xs, b1_ref[3 + di])
        ye = te if ye is None else ye + te
        yo = to if yo is None else yo + to
    z1 = jnp.maximum(ye, yo).astype(bf16)                       # width-pair max
    p1 = jnp.maximum(dot(r1_ref[0], z1), dot(r1_ref[1], z1))    # row-pair max
    a1 = jnp.maximum(p1 + bias1_ref[...], 0.0).astype(bf16)     # (14, 14*32)

    # ---- conv2 (BN scale folded) + fused 2x2 max-pool ------------------------
    y2e = y2o = None
    for di in range(3):
        ps = dot(sh2_ref[di], a1).astype(bf16)                  # rows p+di-1
        te = dot(ps, b2_ref[di])                                # (14, 7*64)
        to = dot(ps, b2_ref[3 + di])
        y2e = te if y2e is None else y2e + te
        y2o = to if y2o is None else y2o + to
    z2 = jnp.maximum(y2e, y2o).astype(bf16)
    p2 = jnp.maximum(dot(r2_ref[0], z2), dot(r2_ref[1], z2))
    a2 = jnp.maximum(p2 + bias2_ref[...], 0.0).astype(bf16)     # (7, 7*64)

    # ---- char_head: Linear(3136,128) -> ReLU -> Dropout(eval) -> Linear(128,14)
    h = None
    for p in range(7):
        hp = dot(a2[p:p + 1, :], w1r_ref[p])                    # (1, 128)
        h = hp if h is None else h + hp
    h = jnp.maximum(h + bfc1_ref[...], 0.0).astype(bf16)
    o_ref[0] = dot(h, w2p_ref[...]) + bfc2_ref[...]             # lane-dense (1,128)


_CONST_MAPS = {2: lambda i: (0, 0), 3: lambda i: (0, 0, 0)}


def pallas_forward(x_nchw, ops):
    """x_nchw: (B, 1, 28, 28) float32 -> logits (B, 14) float32."""
    B = x_nchw.shape[0]
    x = x_nchw.reshape(B, 28, 28).astype(jnp.float32)
    weights = list(ops)

    in_specs = [pl.BlockSpec((1, 28, 28), lambda i: (i, 0, 0))]
    in_specs += [pl.BlockSpec(a.shape, _CONST_MAPS[a.ndim]) for a in weights]

    out = pl.pallas_call(
        _fused_kernel,
        out_shape=jax.ShapeDtypeStruct((B, 1, 128), jnp.float32),
        grid_spec=pltpu.PrefetchScalarGridSpec(
            num_scalar_prefetch=0,
            grid=(B,),
            in_specs=in_specs,
            out_specs=pl.BlockSpec((1, 1, 128), lambda i: (i, 0, 0)),
        ),
        compiler_params=pltpu.CompilerParams(
            dimension_semantics=("parallel",),
            vmem_limit_bytes=32 * 1024 * 1024,
        ),
    )(x, *weights)
    return out[:, 0, :14]


# ----------------------------------------------------------------------------
# Host-side construction of the fused-kernel operands from "PyTorch-layout"
# parameters (OIHW conv weights, (out,in) Linear weights).
# ----------------------------------------------------------------------------

def build_kernel_operands(p):
    eps = 1e-5
    f32 = np.float32

    def fold_bn(w, b, gamma, beta, mean, var):
        w = np.asarray(w, f32); b = np.asarray(b, f32)
        gamma = np.asarray(gamma, f32); beta = np.asarray(beta, f32)
        mean = np.asarray(mean, f32); var = np.asarray(var, f32)
        scale = gamma / np.sqrt(var + eps)
        # The kernel max-pools before the (+bias, ReLU) epilogue; this equals
        # conv->BN->ReLU->pool only when the BN scale is positive (true here).
        assert np.all(scale > 0.0)
        return w * scale[:, None, None, None], b * scale + (beta - mean * scale)

    w1f, bias1 = fold_bn(p["conv1_w"], p["conv1_b"], p["bn1_gamma"],
                         p["bn1_beta"], p["bn1_mean"], p["bn1_var"])
    w2f, bias2 = fold_bn(p["conv2_w"], p["conv2_b"], p["bn2_gamma"],
                         p["bn2_beta"], p["bn2_mean"], p["bn2_var"])

    # conv1 banded matrices: b1[par,di][win, wp*32+c] = w1f[c,0,di,dj]
    # whenever win == 2*wp + par + dj - 1 (zero-padding terms simply omitted).
    b1 = np.zeros((2, 3, 28, 14 * 32), f32)
    for par in range(2):
        for di in range(3):
            for wp in range(14):
                for dj in range(3):
                    win = 2 * wp + par + dj - 1
                    if 0 <= win < 28:
                        b1[par, di, win, wp * 32:(wp + 1) * 32] = w1f[:, 0, di, dj]
    b1 = b1.reshape(6, 28, 14 * 32)

    sh1 = np.zeros((3, 28, 28), f32)        # row shift h -> h+di-1 (zero pad)
    for di in range(3):
        for h in range(28):
            r = h + di - 1
            if 0 <= r < 28:
                sh1[di, h, r] = 1.0

    r1s = np.zeros((2, 14, 28), f32)        # even / odd row selection
    for par in range(2):
        for hp in range(14):
            r1s[par, hp, 2 * hp + par] = 1.0

    bias1_row = np.tile(bias1, 14)[None, :]                     # (1, 448)

    # conv2 banded matrices: b2[par,di][v*32+c1, qp*64+c2] = w2f[c2,c1,di,dj]
    # whenever v == 2*qp + par + dj - 1.
    b2 = np.zeros((2, 3, 14 * 32, 7 * 64), f32)
    for par in range(2):
        for di in range(3):
            for qp in range(7):
                for dj in range(3):
                    v = 2 * qp + par + dj - 1
                    if 0 <= v < 14:
                        b2[par, di, v * 32:(v + 1) * 32,
                           qp * 64:(qp + 1) * 64] = w2f[:, :, di, dj].T
    b2 = b2.reshape(6, 14 * 32, 7 * 64)

    sh2 = np.zeros((3, 14, 14), f32)
    for di in range(3):
        for h in range(14):
            r = h + di - 1
            if 0 <= r < 14:
                sh2[di, h, r] = 1.0

    r2s = np.zeros((2, 7, 14), f32)
    for par in range(2):
        for pp in range(7):
            r2s[par, pp, 2 * pp + par] = 1.0

    bias2_row = np.tile(bias2, 7)[None, :]                      # (1, 448)

    # fc1: permute rows from PyTorch's NCHW flatten (c*49 + p*7 + q) to the
    # kernel's per-row (q*64 + c) layout -> one-time host cost, no runtime op.
    wfc1 = np.asarray(p["fc1_w"], f32).reshape(128, 64, 7, 7)   # [j, c, p, q]
    w1r = np.transpose(wfc1, (2, 3, 1, 0)).reshape(7, 7 * 64, 128)
    bfc1 = np.asarray(p["fc1_b"], f32)[None, :]                 # (1, 128)

    # fc2: zero-pad 14 -> 128 outputs so the final store is lane-dense.
    wfc2 = np.asarray(p["fc2_w"], f32)                          # (14, 128)
    w2p = np.zeros((128, 128), f32)
    w2p[:, :14] = wfc2.T
    bfc2 = np.zeros((1, 128), f32)
    bfc2[0, :14] = np.asarray(p["fc2_b"], f32)

    bf16 = jnp.bfloat16
    return (
        jnp.asarray(sh1, bf16), jnp.asarray(b1, bf16), jnp.asarray(r1s, bf16),
        jnp.asarray(bias1_row, jnp.float32),
        jnp.asarray(sh2, bf16), jnp.asarray(b2, bf16), jnp.asarray(r2s, bf16),
        jnp.asarray(bias2_row, jnp.float32),
        jnp.asarray(w1r, bf16), jnp.asarray(bfc1, jnp.float32),
        jnp.asarray(w2p, bf16), jnp.asarray(bfc2, jnp.float32),
    )


# ----------------------------------------------------------------------------
# Deterministic synthetic parameters + pure-JAX f32 reference (for validation).
# ----------------------------------------------------------------------------

def init_params(key):
    ks = jax.random.split(key, 8)
    p = {
        "conv1_w": 0.05 * jax.random.normal(ks[0], (32, 1, 3, 3), jnp.float32),
        "conv1_b": 0.01 * jax.random.normal(ks[1], (32,), jnp.float32),
        "conv2_w": 0.05 * jax.random.normal(ks[2], (64, 32, 3, 3), jnp.float32),
        "conv2_b": 0.01 * jax.random.normal(ks[3], (64,), jnp.float32),
        "fc1_w": 0.02 * jax.random.normal(ks[4], (128, 64 * 7 * 7), jnp.float32),
        "fc1_b": 0.01 * jax.random.normal(ks[5], (128,), jnp.float32),
        "fc2_w": 0.05 * jax.random.normal(ks[6], (14, 128), jnp.float32),
        "fc2_b": 0.01 * jax.random.normal(ks[7], (14,), jnp.float32),
        # BatchNorm eval, fresh init.
        "bn1_gamma": jnp.ones((32,)), "bn1_beta": jnp.zeros((32,)),
        "bn1_mean": jnp.zeros((32,)), "bn1_var": jnp.ones((32,)),
        "bn2_gamma": jnp.ones((64,)), "bn2_beta": jnp.zeros((64,)),
        "bn2_mean": jnp.zeros((64,)), "bn2_var": jnp.ones((64,)),
    }
    return p


def reference_forward(x_nchw, p):
    eps = 1e-5

    def block(x, w, b, gamma, beta, mean, var):
        y = jax.lax.conv_general_dilated(
            x, w, window_strides=(1, 1), padding=((1, 1), (1, 1)),
            dimension_numbers=("NCHW", "OIHW", "NCHW"))
        y = y + b[None, :, None, None]
        s = (gamma / jnp.sqrt(var + eps))[None, :, None, None]
        y = (y - mean[None, :, None, None]) * s + beta[None, :, None, None]
        y = jnp.maximum(y, 0.0)
        return jax.lax.reduce_window(y, -jnp.inf, jax.lax.max,
                                     (1, 1, 2, 2), (1, 1, 2, 2), "VALID")

    h = block(x_nchw, p["conv1_w"], p["conv1_b"], p["bn1_gamma"],
              p["bn1_beta"], p["bn1_mean"], p["bn1_var"])
    h = block(h, p["conv2_w"], p["conv2_b"], p["bn2_gamma"],
              p["bn2_beta"], p["bn2_mean"], p["bn2_var"])
    hf = h.reshape(h.shape[0], -1)                        # NCHW flatten
    z = jnp.maximum(hf @ p["fc1_w"].T + p["fc1_b"], 0.0)  # Dropout: identity (eval)
    return z @ p["fc2_w"].T + p["fc2_b"]


if __name__ == "__main__":
    key = jax.random.PRNGKey(0)
    k_x, k_p = jax.random.split(key)
    # 28x28 input is implied by the 64*7*7 flatten dim (28 -> 14 -> 7).
    x = jax.random.normal(k_x, (2, 1, 28, 28), jnp.float32)
    params = init_params(k_p)
    ops = build_kernel_operands(params)

    fwd = jax.jit(pallas_forward)
    logits = jax.block_until_ready(fwd(x, ops))

    assert logits.shape == (2, 14) and logits.dtype == jnp.float32
    # Parity vs. the pure-JAX f32 reference (loose tol: bf16 matmul operands).
    ref = reference_forward(x, params)
    assert float(jnp.max(jnp.abs(logits - ref))) < 2e-2

    print("KERNEL_OK")
</pallas_src>

<mosaic_0001>
module attributes {stable_mosaic.version = 11 : i64} {
  func.func @_fused_kernel(%arg0: i32, %arg1: memref<1x28x28xf32, #tpu.memory_space<vmem>>, %arg2: memref<3x28x28xbf16, #tpu.memory_space<vmem>>, %arg3: memref<6x28x448xbf16, #tpu.memory_space<vmem>>, %arg4: memref<2x14x28xbf16, #tpu.memory_space<vmem>>, %arg5: memref<1x448xf32, #tpu.memory_space<vmem>>, %arg6: memref<3x14x14xbf16, #tpu.memory_space<vmem>>, %arg7: memref<6x448x448xbf16, #tpu.memory_space<vmem>>, %arg8: memref<2x7x14xbf16, #tpu.memory_space<vmem>>, %arg9: memref<1x448xf32, #tpu.memory_space<vmem>>, %arg10: memref<7x448x128xbf16, #tpu.memory_space<vmem>>, %arg11: memref<1x128xf32, #tpu.memory_space<vmem>>, %arg12: memref<128x128xbf16, #tpu.memory_space<vmem>>, %arg13: memref<1x128xf32, #tpu.memory_space<vmem>>, %arg14: memref<1x1x128xf32, #tpu.memory_space<vmem>>) attributes {dimension_semantics = [#tpu.dimension_semantics<parallel>], iteration_bounds = array<i64: 2>, scalar_prefetch = 0 : i64, scratch_operands = 0 : i64, tpu.core_type = #tpu.core_type<tc>, window_params = [{transform_indices = @transform_0, window_bounds = array<i64: 1, 28, 28>}, {pipeline_mode = #tpu.pipeline_mode<synchronous>, transform_indices = @transform_1, window_bounds = array<i64: 3, 28, 28>}, {pipeline_mode = #tpu.pipeline_mode<synchronous>, transform_indices = @transform_2, window_bounds = array<i64: 6, 28, 448>}, {pipeline_mode = #tpu.pipeline_mode<synchronous>, transform_indices = @transform_3, window_bounds = array<i64: 2, 14, 28>}, {pipeline_mode = #tpu.pipeline_mode<synchronous>, transform_indices = @transform_4, window_bounds = array<i64: 1, 448>}, {pipeline_mode = #tpu.pipeline_mode<synchronous>, transform_indices = @transform_5, window_bounds = array<i64: 3, 14, 14>}, {pipeline_mode = #tpu.pipeline_mode<synchronous>, transform_indices = @transform_6, window_bounds = array<i64: 6, 448, 448>}, {pipeline_mode = #tpu.pipeline_mode<synchronous>, transform_indices = @transform_7, window_bounds = array<i64: 2, 7, 14>}, {pipeline_mode = #tpu.pipeline_mode<synchronous>, transform_indices = @transform_8, window_bounds = array<i64: 1, 448>}, {pipeline_mode = #tpu.pipeline_mode<synchronous>, transform_indices = @transform_9, window_bounds = array<i64: 7, 448, 128>}, {pipeline_mode = #tpu.pipeline_mode<synchronous>, transform_indices = @transform_10, window_bounds = array<i64: 1, 128>}, {pipeline_mode = #tpu.pipeline_mode<synchronous>, transform_indices = @transform_11, window_bounds = array<i64: 128, 128>}, {pipeline_mode = #tpu.pipeline_mode<synchronous>, transform_indices = @transform_12, window_bounds = array<i64: 1, 128>}, {transform_indices = @transform_13, window_bounds = array<i64: 1, 1, 128>}]} {
    %c0 = arith.constant 0 : index
    %c0_0 = arith.constant 0 : index
    %c0_1 = arith.constant 0 : index
    %0 = vector.load %arg1[%c0, %c0_0, %c0_1] : memref<1x28x28xf32, #tpu.memory_space<vmem>>, vector<1x28x28xf32>
    %1 = vector.shape_cast %0 : vector<1x28x28xf32> to vector<28x28xf32>
    %2 = arith.truncf %1 : vector<28x28xf32> to vector<28x28xbf16>
    %c0_2 = arith.constant 0 : index
    %c0_3 = arith.constant 0 : index
    %c0_4 = arith.constant 0 : index
    %3 = vector.load %arg2[%c0_2, %c0_3, %c0_4] : memref<3x28x28xbf16, #tpu.memory_space<vmem>>, vector<1x28x28xbf16>
    %4 = vector.shape_cast %3 : vector<1x28x28xbf16> to vector<28x28xbf16>
    %cst = arith.constant dense<0.000000e+00> : vector<28x28xf32>
    %5 = tpu.matmul %4, %2, %cst {dimension_numbers = #tpu.dot_dimension_numbers<[1], [0], [0], [1], [0, 0, 1, 1], [], []>} : vector<28x28xbf16>, vector<28x28xbf16>, vector<28x28xf32> -> vector<28x28xf32>
    %6 = arith.truncf %5 : vector<28x28xf32> to vector<28x28xbf16>
    %c0_5 = arith.constant 0 : index
    %c0_6 = arith.constant 0 : index
    %c0_7 = arith.constant 0 : index
    %7 = vector.load %arg3[%c0_5, %c0_6, %c0_7] : memref<6x28x448xbf16, #tpu.memory_space<vmem>>, vector<1x28x448xbf16>
    %8 = vector.shape_cast %7 : vector<1x28x448xbf16> to vector<28x448xbf16>
    %cst_8 = arith.constant dense<0.000000e+00> : vector<28x448xf32>
    %9 = tpu.matmul %6, %8, %cst_8 {dimension_numbers = #tpu.dot_dimension_numbers<[1], [0], [0], [1], [0, 0, 1, 1], [], []>} : vector<28x28xbf16>, vector<28x448xbf16>, vector<28x448xf32> -> vector<28x448xf32>
    %c3 = arith.constant 3 : index
    %c0_9 = arith.constant 0 : index
    %c0_10 = arith.constant 0 : index
    %10 = vector.load %arg3[%c3, %c0_9, %c0_10] : memref<6x28x448xbf16, #tpu.memory_space<vmem>>, vector<1x28x448xbf16>
    %11 = vector.shape_cast %10 : vector<1x28x448xbf16> to vector<28x448xbf16>
    %cst_11 = arith.constant dense<0.000000e+00> : vector<28x448xf32>
    %12 = tpu.matmul %6, %11, %cst_11 {dimension_numbers = #tpu.dot_dimension_numbers<[1], [0], [0], [1], [0, 0, 1, 1], [], []>} : vector<28x28xbf16>, vector<28x448xbf16>, vector<28x448xf32> -> vector<28x448xf32>
    %c1 = arith.constant 1 : index
    %c0_12 = arith.constant 0 : index
    %c0_13 = arith.constant 0 : index
    %13 = vector.load %arg2[%c1, %c0_12, %c0_13] : memref<3x28x28xbf16, #tpu.memory_space<vmem>>, vector<1x28x28xbf16>
    %14 = vector.shape_cast %13 : vector<1x28x28xbf16> to vector<28x28xbf16>
    %cst_14 = arith.constant dense<0.000000e+00> : vector<28x28xf32>
    %15 = tpu.matmul %14, %2, %cst_14 {dimension_numbers = #tpu.dot_dimension_numbers<[1], [0], [0], [1], [0, 0, 1, 1], [], []>} : vector<28x28xbf16>, vector<28x28xbf16>, vector<28x28xf32> -> vector<28x28xf32>
    %16 = arith.truncf %15 : vector<28x28xf32> to vector<28x28xbf16>
    %c1_15 = arith.constant 1 : index
    %c0_16 = arith.constant 0 : index
    %c0_17 = arith.constant 0 : index
    %17 = vector.load %arg3[%c1_15, %c0_16, %c0_17] : memref<6x28x448xbf16, #tpu.memory_space<vmem>>, vector<1x28x448xbf16>
    %18 = vector.shape_cast %17 : vector<1x28x448xbf16> to vector<28x448xbf16>
    %cst_18 = arith.constant dense<0.000000e+00> : vector<28x448xf32>
    %19 = tpu.matmul %16, %18, %cst_18 {dimension_numbers = #tpu.dot_dimension_numbers<[1], [0], [0], [1], [0, 0, 1, 1], [], []>} : vector<28x28xbf16>, vector<28x448xbf16>, vector<28x448xf32> -> vector<28x448xf32>
    %c4 = arith.constant 4 : index
    %c0_19 = arith.constant 0 : index
    %c0_20 = arith.constant 0 : index
    %20 = vector.load %arg3[%c4, %c0_19, %c0_20] : memref<6x28x448xbf16, #tpu.memory_space<vmem>>, vector<1x28x448xbf16>
    %21 = vector.shape_cast %20 : vector<1x28x448xbf16> to vector<28x448xbf16>
    %cst_21 = arith.constant dense<0.000000e+00> : vector<28x448xf32>
    %22 = tpu.matmul %16, %21, %cst_21 {dimension_numbers = #tpu.dot_dimension_numbers<[1], [0], [0], [1], [0, 0, 1, 1], [], []>} : vector<28x28xbf16>, vector<28x448xbf16>, vector<28x448xf32> -> vector<28x448xf32>
    %23 = arith.addf %9, %19 : vector<28x448xf32>
    %24 = arith.addf %12, %22 : vector<28x448xf32>
    %c2 = arith.constant 2 : index
    %c0_22 = arith.constant 0 : index
    %c0_23 = arith.constant 0 : index
    %25 = vector.load %arg2[%c2, %c0_22, %c0_23] : memref<3x28x28xbf16, #tpu.memory_space<vmem>>, vector<1x28x28xbf16>
    %26 = vector.shape_cast %25 : vector<1x28x28xbf16> to vector<28x28xbf16>
    %cst_24 = arith.constant dense<0.000000e+00> : vector<28x28xf32>
    %27 = tpu.matmul %26, %2, %cst_24 {dimension_numbers = #tpu.dot_dimension_numbers<[1], [0], [0], [1], [0, 0, 1, 1], [], []>} : vector<28x28xbf16>, vector<28x28xbf16>, vector<28x28xf32> -> vector<28x28xf32>
    %28 = arith.truncf %27 : vector<28x28xf32> to vector<28x28xbf16>
    %c2_25 = arith.constant 2 : index
    %c0_26 = arith.constant 0 : index
    %c0_27 = arith.constant 0 : index
    %29 = vector.load %arg3[%c2_25, %c0_26, %c0_27] : memref<6x28x448xbf16, #tpu.memory_space<vmem>>, vector<1x28x448xbf16>
    %30 = vector.shape_cast %29 : vector<1x28x448xbf16> to vector<28x448xbf16>
    %cst_28 = arith.constant dense<0.000000e+00> : vector<28x448xf32>
    %31 = tpu.matmul %28, %30, %cst_28 {dimension_numbers = #tpu.dot_dimension_numbers<[1], [0], [0], [1], [0, 0, 1, 1], [], []>} : vector<28x28xbf16>, vector<28x448xbf16>, vector<28x448xf32> -> vector<28x448xf32>
    %c5 = arith.constant 5 : index
    %c0_29 = arith.constant 0 : index
    %c0_30 = arith.constant 0 : index
    %32 = vector.load %arg3[%c5, %c0_29, %c0_30] : memref<6x28x448xbf16, #tpu.memory_space<vmem>>, vector<1x28x448xbf16>
    %33 = vector.shape_cast %32 : vector<1x28x448xbf16> to vector<28x448xbf16>
    %cst_31 = arith.constant dense<0.000000e+00> : vector<28x448xf32>
    %34 = tpu.matmul %28, %33, %cst_31 {dimension_numbers = #tpu.dot_dimension_numbers<[1], [0], [0], [1], [0, 0, 1, 1], [], []>} : vector<28x28xbf16>, vector<28x448xbf16>, vector<28x448xf32> -> vector<28x448xf32>
    %35 = arith.addf %23, %31 : vector<28x448xf32>
    %36 = arith.addf %24, %34 : vector<28x448xf32>
    %37 = arith.maximumf %35, %36 : vector<28x448xf32>
    %38 = arith.truncf %37 : vector<28x448xf32> to vector<28x448xbf16>
    %c0_32 = arith.constant 0 : index
    %c0_33 = arith.constant 0 : index
    %c0_34 = arith.constant 0 : index
    %39 = vector.load %arg4[%c0_32, %c0_33, %c0_34] : memref<2x14x28xbf16, #tpu.memory_space<vmem>>, vector<1x14x28xbf16>
    %40 = vector.shape_cast %39 : vector<1x14x28xbf16> to vector<14x28xbf16>
    %cst_35 = arith.constant dense<0.000000e+00> : vector<14x448xf32>
    %41 = tpu.matmul %40, %38, %cst_35 {dimension_numbers = #tpu.dot_dimension_numbers<[1], [0], [0], [1], [0, 0, 1, 1], [], []>} : vector<14x28xbf16>, vector<28x448xbf16>, vector<14x448xf32> -> vector<14x448xf32>
    %c1_36 = arith.constant 1 : index
    %c0_37 = arith.constant 0 : index
    %c0_38 = arith.constant 0 : index
    %42 = vector.load %arg4[%c1_36, %c0_37, %c0_38] : memref<2x14x28xbf16, #tpu.memory_space<vmem>>, vector<1x14x28xbf16>
    %43 = vector.shape_cast %42 : vector<1x14x28xbf16> to vector<14x28xbf16>
    %cst_39 = arith.constant dense<0.000000e+00> : vector<14x448xf32>
    %44 = tpu.matmul %43, %38, %cst_39 {dimension_numbers = #tpu.dot_dimension_numbers<[1], [0], [0], [1], [0, 0, 1, 1], [], []>} : vector<14x28xbf16>, vector<28x448xbf16>, vector<14x448xf32> -> vector<14x448xf32>
    %45 = arith.maximumf %41, %44 : vector<14x448xf32>
    %c0_40 = arith.constant 0 : index
    %c0_41 = arith.constant 0 : index
    %46 = vector.load %arg5[%c0_40, %c0_41] : memref<1x448xf32, #tpu.memory_space<vmem>>, vector<1x448xf32>
    %47 = vector.broadcast %46 : vector<1x448xf32> to vector<14x448xf32>
    %48 = arith.addf %45, %47 : vector<14x448xf32>
    %cst_42 = arith.constant 0.000000e+00 : f32
    %49 = vector.broadcast %cst_42 : f32 to vector<14x448xf32>
    %50 = arith.maximumf %48, %49 : vector<14x448xf32>
    %51 = arith.truncf %50 : vector<14x448xf32> to vector<14x448xbf16>
    %c0_43 = arith.constant 0 : index
    %c0_44 = arith.constant 0 : index
    %c0_45 = arith.constant 0 : index
    %52 = vector.load %arg6[%c0_43, %c0_44, %c0_45] : memref<3x14x14xbf16, #tpu.memory_space<vmem>>, vector<1x14x14xbf16>
    %53 = vector.shape_cast %52 : vector<1x14x14xbf16> to vector<14x14xbf16>
    %cst_46 = arith.constant dense<0.000000e+00> : vector<14x448xf32>
    %54 = tpu.matmul %53, %51, %cst_46 {dimension_numbers = #tpu.dot_dimension_numbers<[1], [0], [0], [1], [0, 0, 1, 1], [], []>} : vector<14x14xbf16>, vector<14x448xbf16>, vector<14x448xf32> -> vector<14x448xf32>
    %55 = arith.truncf %54 : vector<14x448xf32> to vector<14x448xbf16>
    %c0_47 = arith.constant 0 : index
    %c0_48 = arith.constant 0 : index
    %c0_49 = arith.constant 0 : index
    %56 = vector.load %arg7[%c0_47, %c0_48, %c0_49] : memref<6x448x448xbf16, #tpu.memory_space<vmem>>, vector<1x448x448xbf16>
    %57 = vector.shape_cast %56 : vector<1x448x448xbf16> to vector<448x448xbf16>
    %cst_50 = arith.constant dense<0.000000e+00> : vector<14x448xf32>
    %58 = tpu.matmul %55, %57, %cst_50 {dimension_numbers = #tpu.dot_dimension_numbers<[1], [0], [0], [1], [0, 0, 1, 1], [], []>} : vector<14x448xbf16>, vector<448x448xbf16>, vector<14x448xf32> -> vector<14x448xf32>
    %c3_51 = arith.constant 3 : index
    %c0_52 = arith.constant 0 : index
    %c0_53 = arith.constant 0 : index
    %59 = vector.load %arg7[%c3_51, %c0_52, %c0_53] : memref<6x448x448xbf16, #tpu.memory_space<vmem>>, vector<1x448x448xbf16>
    %60 = vector.shape_cast %59 : vector<1x448x448xbf16> to vector<448x448xbf16>
    %cst_54 = arith.constant dense<0.000000e+00> : vector<14x448xf32>
    %61 = tpu.matmul %55, %60, %cst_54 {dimension_numbers = #tpu.dot_dimension_numbers<[1], [0], [0], [1], [0, 0, 1, 1], [], []>} : vector<14x448xbf16>, vector<448x448xbf16>, vector<14x448xf32> -> vector<14x448xf32>
    %c1_55 = arith.constant 1 : index
    %c0_56 = arith.constant 0 : index
    %c0_57 = arith.constant 0 : index
    %62 = vector.load %arg6[%c1_55, %c0_56, %c0_57] : memref<3x14x14xbf16, #tpu.memory_space<vmem>>, vector<1x14x14xbf16>
    %63 = vector.shape_cast %62 : vector<1x14x14xbf16> to vector<14x14xbf16>
    %cst_58 = arith.constant dense<0.000000e+00> : vector<14x448xf32>
    %64 = tpu.matmul %63, %51, %cst_58 {dimension_numbers = #tpu.dot_dimension_numbers<[1], [0], [0], [1], [0, 0, 1, 1], [], []>} : vector<14x14xbf16>, vector<14x448xbf16>, vector<14x448xf32> -> vector<14x448xf32>
    %65 = arith.truncf %64 : vector<14x448xf32> to vector<14x448xbf16>
    %c1_59 = arith.constant 1 : index
    %c0_60 = arith.constant 0 : index
    %c0_61 = arith.constant 0 : index
    %66 = vector.load %arg7[%c1_59, %c0_60, %c0_61] : memref<6x448x448xbf16, #tpu.memory_space<vmem>>, vector<1x448x448xbf16>
    %67 = vector.shape_cast %66 : vector<1x448x448xbf16> to vector<448x448xbf16>
    %cst_62 = arith.constant dense<0.000000e+00> : vector<14x448xf32>
    %68 = tpu.matmul %65, %67, %cst_62 {dimension_numbers = #tpu.dot_dimension_numbers<[1], [0], [0], [1], [0, 0, 1, 1], [], []>} : vector<14x448xbf16>, vector<448x448xbf16>, vector<14x448xf32> -> vector<14x448xf32>
    %c4_63 = arith.constant 4 : index
    %c0_64 = arith.constant 0 : index
    %c0_65 = arith.constant 0 : index
    %69 = vector.load %arg7[%c4_63, %c0_64, %c0_65] : memref<6x448x448xbf16, #tpu.memory_space<vmem>>, vector<1x448x448xbf16>
    %70 = vector.shape_cast %69 : vector<1x448x448xbf16> to vector<448x448xbf16>
    %cst_66 = arith.constant dense<0.000000e+00> : vector<14x448xf32>
    %71 = tpu.matmul %65, %70, %cst_66 {dimension_numbers = #tpu.dot_dimension_numbers<[1], [0], [0], [1], [0, 0, 1, 1], [], []>} : vector<14x448xbf16>, vector<448x448xbf16>, vector<14x448xf32> -> vector<14x448xf32>
    %72 = arith.addf %58, %68 : vector<14x448xf32>
    %73 = arith.addf %61, %71 : vector<14x448xf32>
    %c2_67 = arith.constant 2 : index
    %c0_68 = arith.constant 0 : index
    %c0_69 = arith.constant 0 : index
    %74 = vector.load %arg6[%c2_67, %c0_68, %c0_69] : memref<3x14x14xbf16, #tpu.memory_space<vmem>>, vector<1x14x14xbf16>
    %75 = vector.shape_cast %74 : vector<1x14x14xbf16> to vector<14x14xbf16>
    %cst_70 = arith.constant dense<0.000000e+00> : vector<14x448xf32>
    %76 = tpu.matmul %75, %51, %cst_70 {dimension_numbers = #tpu.dot_dimension_numbers<[1], [0], [0], [1], [0, 0, 1, 1], [], []>} : vector<14x14xbf16>, vector<14x448xbf16>, vector<14x448xf32> -> vector<14x448xf32>
    %77 = arith.truncf %76 : vector<14x448xf32> to vector<14x448xbf16>
    %c2_71 = arith.constant 2 : index
    %c0_72 = arith.constant 0 : index
    %c0_73 = arith.constant 0 : index
    %78 = vector.load %arg7[%c2_71, %c0_72, %c0_73] : memref<6x448x448xbf16, #tpu.memory_space<vmem>>, vector<1x448x448xbf16>
    %79 = vector.shape_cast %78 : vector<1x448x448xbf16> to vector<448x448xbf16>
    %cst_74 = arith.constant dense<0.000000e+00> : vector<14x448xf32>
    %80 = tpu.matmul %77, %79, %cst_74 {dimension_numbers = #tpu.dot_dimension_numbers<[1], [0], [0], [1], [0, 0, 1, 1], [], []>} : vector<14x448xbf16>, vector<448x448xbf16>, vector<14x448xf32> -> vector<14x448xf32>
    %c5_75 = arith.constant 5 : index
    %c0_76 = arith.constant 0 : index
    %c0_77 = arith.constant 0 : index
    %81 = vector.load %arg7[%c5_75, %c0_76, %c0_77] : memref<6x448x448xbf16, #tpu.memory_space<vmem>>, vector<1x448x448xbf16>
    %82 = vector.shape_cast %81 : vector<1x448x448xbf16> to vector<448x448xbf16>
    %cst_78 = arith.constant dense<0.000000e+00> : vector<14x448xf32>
    %83 = tpu.matmul %77, %82, %cst_78 {dimension_numbers = #tpu.dot_dimension_numbers<[1], [0], [0], [1], [0, 0, 1, 1], [], []>} : vector<14x448xbf16>, vector<448x448xbf16>, vector<14x448xf32> -> vector<14x448xf32>
    %84 = arith.addf %72, %80 : vector<14x448xf32>
    %85 = arith.addf %73, %83 : vector<14x448xf32>
    %86 = arith.maximumf %84, %85 : vector<14x448xf32>
    %87 = arith.truncf %86 : vector<14x448xf32> to vector<14x448xbf16>
    %c0_79 = arith.constant 0 : index
    %c0_80 = arith.constant 0 : index
    %c0_81 = arith.constant 0 : index
    %88 = vector.load %arg8[%c0_79, %c0_80, %c0_81] : memref<2x7x14xbf16, #tpu.memory_space<vmem>>, vector<1x7x14xbf16>
    %89 = vector.shape_cast %88 : vector<1x7x14xbf16> to vector<7x14xbf16>
    %cst_82 = arith.constant dense<0.000000e+00> : vector<7x448xf32>
    %90 = tpu.matmul %89, %87, %cst_82 {dimension_numbers = #tpu.dot_dimension_numbers<[1], [0], [0], [1], [0, 0, 1, 1], [], []>} : vector<7x14xbf16>, vector<14x448xbf16>, vector<7x448xf32> -> vector<7x448xf32>
    %c1_83 = arith.constant 1 : index
    %c0_84 = arith.constant 0 : index
    %c0_85 = arith.constant 0 : index
    %91 = vector.load %arg8[%c1_83, %c0_84, %c0_85] : memref<2x7x14xbf16, #tpu.memory_space<vmem>>, vector<1x7x14xbf16>
    %92 = vector.shape_cast %91 : vector<1x7x14xbf16> to vector<7x14xbf16>
    %cst_86 = arith.constant dense<0.000000e+00> : vector<7x448xf32>
    %93 = tpu.matmul %92, %87, %cst_86 {dimension_numbers = #tpu.dot_dimension_numbers<[1], [0], [0], [1], [0, 0, 1, 1], [], []>} : vector<7x14xbf16>, vector<14x448xbf16>, vector<7x448xf32> -> vector<7x448xf32>
    %94 = arith.maximumf %90, %93 : vector<7x448xf32>
    %c0_87 = arith.constant 0 : index
    %c0_88 = arith.constant 0 : index
    %95 = vector.load %arg9[%c0_87, %c0_88] : memref<1x448xf32, #tpu.memory_space<vmem>>, vector<1x448xf32>
    %96 = vector.broadcast %95 : vector<1x448xf32> to vector<7x448xf32>
    %97 = arith.addf %94, %96 : vector<7x448xf32>
    %cst_89 = arith.constant 0.000000e+00 : f32
    %98 = vector.broadcast %cst_89 : f32 to vector<7x448xf32>
    %99 = arith.maximumf %97, %98 : vector<7x448xf32>
    %100 = arith.truncf %99 : vector<7x448xf32> to vector<7x448xbf16>
    %101 = vector.extract_strided_slice %100 {offsets = [0, 0], sizes = [1, 448], strides = [1, 1]} : vector<7x448xbf16> to vector<1x448xbf16>
    %c0_90 = arith.constant 0 : index
    %c0_91 = arith.constant 0 : index
    %c0_92 = arith.constant 0 : index
    %102 = vector.load %arg10[%c0_90, %c0_91, %c0_92] : memref<7x448x128xbf16, #tpu.memory_space<vmem>>, vector<1x448x128xbf16>
    %103 = vector.shape_cast %102 : vector<1x448x128xbf16> to vector<448x128xbf16>
    %cst_93 = arith.constant dense<0.000000e+00> : vector<1x128xf32>
    %104 = tpu.matmul %101, %103, %cst_93 {dimension_numbers = #tpu.dot_dimension_numbers<[1], [0], [0], [1], [0, 0, 1, 1], [], []>} : vector<1x448xbf16>, vector<448x128xbf16>, vector<1x128xf32> -> vector<1x128xf32>
    %105 = vector.extract_strided_slice %100 {offsets = [1, 0], sizes = [1, 448], strides = [1, 1]} : vector<7x448xbf16> to vector<1x448xbf16>
    %c1_94 = arith.constant 1 : index
    %c0_95 = arith.constant 0 : index
    %c0_96 = arith.constant 0 : index
    %106 = vector.load %arg10[%c1_94, %c0_95, %c0_96] : memref<7x448x128xbf16, #tpu.memory_space<vmem>>, vector<1x448x128xbf16>
    %107 = vector.shape_cast %106 : vector<1x448x128xbf16> to vector<448x128xbf16>
    %cst_97 = arith.constant dense<0.000000e+00> : vector<1x128xf32>
    %108 = tpu.matmul %105, %107, %cst_97 {dimension_numbers = #tpu.dot_dimension_numbers<[1], [0], [0], [1], [0, 0, 1, 1], [], []>} : vector<1x448xbf16>, vector<448x128xbf16>, vector<1x128xf32> -> vector<1x128xf32>
    %109 = arith.addf %104, %108 : vector<1x128xf32>
    %110 = vector.extract_strided_slice %100 {offsets = [2, 0], sizes = [1, 448], strides = [1, 1]} : vector<7x448xbf16> to vector<1x448xbf16>
    %c2_98 = arith.constant 2 : index
    %c0_99 = arith.constant 0 : index
    %c0_100 = arith.constant 0 : index
    %111 = vector.load %arg10[%c2_98, %c0_99, %c0_100] : memref<7x448x128xbf16, #tpu.memory_space<vmem>>, vector<1x448x128xbf16>
    %112 = vector.shape_cast %111 : vector<1x448x128xbf16> to vector<448x128xbf16>
    %cst_101 = arith.constant dense<0.000000e+00> : vector<1x128xf32>
    %113 = tpu.matmul %110, %112, %cst_101 {dimension_numbers = #tpu.dot_dimension_numbers<[1], [0], [0], [1], [0, 0, 1, 1], [], []>} : vector<1x448xbf16>, vector<448x128xbf16>, vector<1x128xf32> -> vector<1x128xf32>
    %114 = arith.addf %109, %113 : vector<1x128xf32>
    %115 = vector.extract_strided_slice %100 {offsets = [3, 0], sizes = [1, 448], strides = [1, 1]} : vector<7x448xbf16> to vector<1x448xbf16>
    %c3_102 = arith.constant 3 : index
    %c0_103 = arith.constant 0 : index
    %c0_104 = arith.constant 0 : index
    %116 = vector.load %arg10[%c3_102, %c0_103, %c0_104] : memref<7x448x128xbf16, #tpu.memory_space<vmem>>, vector<1x448x128xbf16>
    %117 = vector.shape_cast %116 : vector<1x448x128xbf16> to vector<448x128xbf16>
    %cst_105 = arith.constant dense<0.000000e+00> : vector<1x128xf32>
    %118 = tpu.matmul %115, %117, %cst_105 {dimension_numbers = #tpu.dot_dimension_numbers<[1], [0], [0], [1], [0, 0, 1, 1], [], []>} : vector<1x448xbf16>, vector<448x128xbf16>, vector<1x128xf32> -> vector<1x128xf32>
    %119 = arith.addf %114, %118 : vector<1x128xf32>
    %120 = vector.extract_strided_slice %100 {offsets = [4, 0], sizes = [1, 448], strides = [1, 1]} : vector<7x448xbf16> to vector<1x448xbf16>
    %c4_106 = arith.constant 4 : index
    %c0_107 = arith.constant 0 : index
    %c0_108 = arith.constant 0 : index
    %121 = vector.load %arg10[%c4_106, %c0_107, %c0_108] : memref<7x448x128xbf16, #tpu.memory_space<vmem>>, vector<1x448x128xbf16>
    %122 = vector.shape_cast %121 : vector<1x448x128xbf16> to vector<448x128xbf16>
    %cst_109 = arith.constant dense<0.000000e+00> : vector<1x128xf32>
    %123 = tpu.matmul %120, %122, %cst_109 {dimension_numbers = #tpu.dot_dimension_numbers<[1], [0], [0], [1], [0, 0, 1, 1], [], []>} : vector<1x448xbf16>, vector<448x128xbf16>, vector<1x128xf32> -> vector<1x128xf32>
    %124 = arith.addf %119, %123 : vector<1x128xf32>
    %125 = vector.extract_strided_slice %100 {offsets = [5, 0], sizes = [1, 448], strides = [1, 1]} : vector<7x448xbf16> to vector<1x448xbf16>
    %c5_110 = arith.constant 5 : index
    %c0_111 = arith.constant 0 : index
    %c0_112 = arith.constant 0 : index
    %126 = vector.load %arg10[%c5_110, %c0_111, %c0_112] : memref<7x448x128xbf16, #tpu.memory_space<vmem>>, vector<1x448x128xbf16>
    %127 = vector.shape_cast %126 : vector<1x448x128xbf16> to vector<448x128xbf16>
    %cst_113 = arith.constant dense<0.000000e+00> : vector<1x128xf32>
    %128 = tpu.matmul %125, %127, %cst_113 {dimension_numbers = #tpu.dot_dimension_numbers<[1], [0], [0], [1], [0, 0, 1, 1], [], []>} : vector<1x448xbf16>, vector<448x128xbf16>, vector<1x128xf32> -> vector<1x128xf32>
    %129 = arith.addf %124, %128 : vector<1x128xf32>
    %130 = vector.extract_strided_slice %100 {offsets = [6, 0], sizes = [1, 448], strides = [1, 1]} : vector<7x448xbf16> to vector<1x448xbf16>
    %c6 = arith.constant 6 : index
    %c0_114 = arith.constant 0 : index
    %c0_115 = arith.constant 0 : index
    %131 = vector.load %arg10[%c6, %c0_114, %c0_115] : memref<7x448x128xbf16, #tpu.memory_space<vmem>>, vector<1x448x128xbf16>
    %132 = vector.shape_cast %131 : vector<1x448x128xbf16> to vector<448x128xbf16>
    %cst_116 = arith.constant dense<0.000000e+00> : vector<1x128xf32>
    %133 = tpu.matmul %130, %132, %cst_116 {dimension_numbers = #tpu.dot_dimension_numbers<[1], [0], [0], [1], [0, 0, 1, 1], [], []>} : vector<1x448xbf16>, vector<448x128xbf16>, vector<1x128xf32> -> vector<1x128xf32>
    %134 = arith.addf %129, %133 : vector<1x128xf32>
    %c0_117 = arith.constant 0 : index
    %c0_118 = arith.constant 0 : index
    %135 = vector.load %arg11[%c0_117, %c0_118] : memref<1x128xf32, #tpu.memory_space<vmem>>, vector<1x128xf32>
    %136 = arith.addf %134, %135 : vector<1x128xf32>
    %cst_119 = arith.constant 0.000000e+00 : f32
    %137 = vector.broadcast %cst_119 : f32 to vector<1x128xf32>
    %138 = arith.maximumf %136, %137 : vector<1x128xf32>
    %139 = arith.truncf %138 : vector<1x128xf32> to vector<1x128xbf16>
    %c0_120 = arith.constant 0 : index
    %c0_121 = arith.constant 0 : index
    %140 = vector.load %arg12[%c0_120, %c0_121] : memref<128x128xbf16, #tpu.memory_space<vmem>>, vector<128x128xbf16>
    %cst_122 = arith.constant dense<0.000000e+00> : vector<1x128xf32>
    %141 = tpu.matmul %139, %140, %cst_122 {dimension_numbers = #tpu.dot_dimension_numbers<[1], [0], [0], [1], [0, 0, 1, 1], [], []>} : vector<1x128xbf16>, vector<128x128xbf16>, vector<1x128xf32> -> vector<1x128xf32>
    %c0_123 = arith.constant 0 : index
    %c0_124 = arith.constant 0 : index
    %142 = vector.load %arg13[%c0_123, %c0_124] : memref<1x128xf32, #tpu.memory_space<vmem>>, vector<1x128xf32>
    %143 = arith.addf %141, %142 : vector<1x128xf32>
    %c0_125 = arith.constant 0 : index
    %c0_126 = arith.constant 0 : index
    %c0_127 = arith.constant 0 : index
    %144 = vector.load %arg14[%c0_125, %c0_126, %c0_127] : memref<1x1x128xf32, #tpu.memory_space<vmem>>, vector<1x1x128xf32>
    %145 = vector.shape_cast %144 : vector<1x1x128xf32> to vector<1x128xf32>
    %146 = vector.shape_cast %143 : vector<1x128xf32> to vector<1x1x128xf32>
    tpu.vector_store %arg14[%c0_125, %c0_126, %c0_127], %146 {strides = array<i32>} : memref<1x1x128xf32, #tpu.memory_space<vmem>>, vector<1x1x128xf32>,
    return
  }
  func.func @transform_0(%arg0: i32) -> (i32, i32, i32) {
    %c0_i32 = arith.constant 0 : i32
    %c0_i32_0 = arith.constant 0 : i32
    %c0_i32_1 = arith.constant 0 : i32
    return %arg0, %c0_i32, %c0_i32_0 : i32, i32, i32
  }
  func.func @transform_1(%arg0: i32) -> (i32, i32, i32) {
    %c0_i32 = arith.constant 0 : i32
    %c0_i32_0 = arith.constant 0 : i32
    %c0_i32_1 = arith.constant 0 : i32
    %c0_i32_2 = arith.constant 0 : i32
    return %c0_i32, %c0_i32_0, %c0_i32_1 : i32, i32, i32
  }
  func.func @transform_2(%arg0: i32) -> (i32, i32, i32) {
    %c0_i32 = arith.constant 0 : i32
    %c0_i32_0 = arith.constant 0 : i32
    %c0_i32_1 = arith.constant 0 : i32
    %c0_i32_2 = arith.constant 0 : i32
    return %c0_i32, %c0_i32_0, %c0_i32_1 : i32, i32, i32
  }
  func.func @transform_3(%arg0: i32) -> (i32, i32, i32) {
    %c0_i32 = arith.constant 0 : i32
    %c0_i32_0 = arith.constant 0 : i32
    %c0_i32_1 = arith.constant 0 : i32
    %c0_i32_2 = arith.constant 0 : i32
    return %c0_i32, %c0_i32_0, %c0_i32_1 : i32, i32, i32
  }
  func.func @transform_4(%arg0: i32) -> (i32, i32) {
    %c0_i32 = arith.constant 0 : i32
    %c0_i32_0 = arith.constant 0 : i32
    %c0_i32_1 = arith.constant 0 : i32
    return %c0_i32, %c0_i32_0 : i32, i32
  }
  func.func @transform_5(%arg0: i32) -> (i32, i32, i32) {
    %c0_i32 = arith.constant 0 : i32
    %c0_i32_0 = arith.constant 0 : i32
    %c0_i32_1 = arith.constant 0 : i32
    %c0_i32_2 = arith.constant 0 : i32
    return %c0_i32, %c0_i32_0, %c0_i32_1 : i32, i32, i32
  }
  func.func @transform_6(%arg0: i32) -> (i32, i32, i32) {
    %c0_i32 = arith.constant 0 : i32
    %c0_i32_0 = arith.constant 0 : i32
    %c0_i32_1 = arith.constant 0 : i32
    %c0_i32_2 = arith.constant 0 : i32
    return %c0_i32, %c0_i32_0, %c0_i32_1 : i32, i32, i32
  }
  func.func @transform_7(%arg0: i32) -> (i32, i32, i32) {
    %c0_i32 = arith.constant 0 : i32
    %c0_i32_0 = arith.constant 0 : i32
    %c0_i32_1 = arith.constant 0 : i32
    %c0_i32_2 = arith.constant 0 : i32
    return %c0_i32, %c0_i32_0, %c0_i32_1 : i32, i32, i32
  }
  func.func @transform_8(%arg0: i32) -> (i32, i32) {
    %c0_i32 = arith.constant 0 : i32
    %c0_i32_0 = arith.constant 0 : i32
    %c0_i32_1 = arith.constant 0 : i32
    return %c0_i32, %c0_i32_0 : i32, i32
  }
  func.func @transform_9(%arg0: i32) -> (i32, i32, i32) {
    %c0_i32 = arith.constant 0 : i32
    %c0_i32_0 = arith.constant 0 : i32
    %c0_i32_1 = arith.constant 0 : i32
    %c0_i32_2 = arith.constant 0 : i32
    return %c0_i32, %c0_i32_0, %c0_i32_1 : i32, i32, i32
  }
  func.func @transform_10(%arg0: i32) -> (i32, i32) {
    %c0_i32 = arith.constant 0 : i32
    %c0_i32_0 = arith.constant 0 : i32
    %c0_i32_1 = arith.constant 0 : i32
    return %c0_i32, %c0_i32_0 : i32, i32
  }
  func.func @transform_11(%arg0: i32) -> (i32, i32) {
    %c0_i32 = arith.constant 0 : i32
    %c0_i32_0 = arith.constant 0 : i32
    %c0_i32_1 = arith.constant 0 : i32
    return %c0_i32, %c0_i32_0 : i32, i32
  }
  func.func @transform_12(%arg0: i32) -> (i32, i32) {
    %c0_i32 = arith.constant 0 : i32
    %c0_i32_0 = arith.constant 0 : i32
    %c0_i32_1 = arith.constant 0 : i32
    return %c0_i32, %c0_i32_0 : i32, i32
  }
  func.func @transform_13(%arg0: i32) -> (i32, i32, i32) {
    %c0_i32 = arith.constant 0 : i32
    %c0_i32_0 = arith.constant 0 : i32
    %c0_i32_1 = arith.constant 0 : i32
    return %arg0, %c0_i32, %c0_i32_0 : i32, i32, i32
  }
}

</mosaic_0001>

<llo_original>
// kernel: pallas_forward.1
$region0: #{pallas_forward.1}
  #allocation0 [shape = 'u32[]', space=smem, size = 0x4, offset = 0x4, fixed_abs, tag = 'smem constant byte address 0x4 - core index']
  #allocation1 [shape = 'u32[144,128]{1,0:T(1,128)}', space=vmem, size = 0x12000, scoped, tag = 'internal scratch']
  %s0 = inlined_call_operand.vmem [shape: f32[2,28,28], index: 0, kind: input, shape index: {}]
  %s1 = inlined_call_operand.hbm [shape: bf16[3,28,28], index: 1, kind: input, shape index: {}]
  %s2 = inlined_call_operand.hbm [shape: bf16[6,28,448], index: 2, kind: input, shape index: {}]
  %s3 = inlined_call_operand.vmem [shape: bf16[2,14,28], index: 3, kind: input, shape index: {}]
  %s4 = inlined_call_operand.hbm [shape: f32[1,448], index: 4, kind: input, shape index: {}]
  %s5 = inlined_call_operand.hbm [shape: bf16[3,14,14], index: 5, kind: input, shape index: {}]
  %s6 = inlined_call_operand.hbm [shape: bf16[6,448,448], index: 6, kind: input, shape index: {}]
  %s7 = inlined_call_operand.vmem [shape: bf16[2,7,14], index: 7, kind: input, shape index: {}]
  %s8 = inlined_call_operand.hbm [shape: f32[1,448], index: 8, kind: input, shape index: {}]
  %s9 = inlined_call_operand.hbm [shape: bf16[7,448,128], index: 9, kind: input, shape index: {}]
  %s10 = inlined_call_operand.hbm [shape: f32[1,128], index: 10, kind: input, shape index: {}]
  %s11 = inlined_call_operand.hbm [shape: bf16[128,128], index: 11, kind: input, shape index: {}]
  %s12 = inlined_call_operand.hbm [shape: f32[1,128], index: 12, kind: input, shape index: {}]
  %s13 = inlined_call_operand.hbm [shape: f32[2,1,128], index: 13, kind: output, shape index: {}]
  %s14 = sld [smem:[#allocation0]]
  $region125: #{pallas_forward.1} parent=0
    _
  %s16 = ssub.s32 1, %s14
  %s17 = scalar_select 0, %s16, %s14
  $region1: #{pallas_forward.1} parent=0
    #allocation2 [shape = 'u8[24576]{0}', space=vmem, size = 0x6000, scoped, tag = 'input window, operand 1, single buffered']
    #allocation3 [shape = 's32[2]{0}', space=sflag, size = 0x8, scoped, tag = 'scoped memory for pallas_forward.1']
    #allocation4 [shape = 's32[2]{0}', space=sflag, size = 0x8, scoped, tag = 'scoped memory for pallas_forward.1']
    #allocation5 [shape = 'u8[196608]{0}', space=vmem, size = 0x30000, scoped, tag = 'input window, operand 2, single buffered']
    #allocation6 [shape = 's32[1]{0}', space=sflag, size = 0x4, scoped, tag = 'scoped memory for pallas_forward.1']
    #allocation7 [shape = 'u8[2048]{0}', space=vmem, size = 0x800, scoped, tag = 'input window, operand 4, single buffered']
    #allocation8 [shape = 'u8[12288]{0}', space=vmem, size = 0x3000, scoped, tag = 'input window, operand 5, single buffered']
    #allocation9 [shape = 's32[1]{0}', space=sflag, size = 0x4, scoped, tag = 'scoped memory for pallas_forward.1']
    #allocation10 [shape = 'u8[2752512]{0}', space=vmem, size = 0x2a0000, scoped, tag = 'input window, operand 6, single buffered']
    #allocation11 [shape = 'u8[2048]{0}', space=vmem, size = 0x800, scoped, tag = 'input window, operand 8, single buffered']
    #allocation12 [shape = 's32[1]{0}', space=sflag, size = 0x4, scoped, tag = 'scoped memory for pallas_forward.1']
    #allocation13 [shape = 'u8[802816]{0}', space=vmem, size = 0xc4000, scoped, tag = 'input window, operand 9, single buffered']
    #allocation14 [shape = 'u8[512]{0}', space=vmem, size = 0x400, scoped, tag = 'input window, operand 10, single buffered']
    #allocation15 [shape = 's32[1]{0}', space=sflag, size = 0x4, scoped, tag = 'scoped memory for pallas_forward.1']
    #allocation16 [shape = 'u8[32768]{0}', space=vmem, size = 0x8000, scoped, tag = 'input window, operand 11, single buffered']
    #allocation17 [shape = 'u8[512]{0}', space=vmem, size = 0x400, scoped, tag = 'input window, operand 12, single buffered']
    #allocation18 [shape = 's32[1]{0}', space=sflag, size = 0x4, scoped, tag = 'scoped memory for pallas_forward.1']
    #allocation19 [shape = 'u8[1024]{0}', space=vmem, size = 0x400, scoped, tag = 'output window, operand 0']
    %18 = vsyncpa [#allocation3], 0
    %19 = vsyncpa [#allocation6], 0
    %20 = vsyncpa [#allocation9], 0
    %21 = vsyncpa [#allocation12], 0
    %22 = vsyncpa [#allocation15], 0
    %23 = vsyncpa [#allocation18], 0
    %24 = vsyncpa [#allocation4], 0
    %s25 = scalar_lea.sflag [#allocation4], 1
    %26 = vsyncpa %s25, 0
    loop: start=0, step=1, limit=4
    $region2: #{pallas_forward.1} parent=1 // loop_pre_header
      _
    $region3: #{pallas_forward.1} parent=1 // loop_header
      %s28 = sphi 0, %s32
      %p29 = scmp.ge.s32.totalorder %s28, 4
      %s38 = sphi 0, %s40
      %s41 = sphi 0, %s38
      %s42 = sphi 0, %s41
      %s58 = sphi 0, %s42
      %s62 = sphi 0, %s62
      %s64 = sphi 0, %s62
      %s65 = sphi 0, %s64
      %s79 = sphi 0, %s65
      %s83 = sphi 0, %s83
      %s85 = sphi 0, %s83
      %s86 = sphi 0, %s85
      %s100 = sphi 0, %s86
      %s104 = sphi 0, %s104
      %s106 = sphi 0, %s104
      %s107 = sphi 0, %s106
      %s121 = sphi 0, %s107
      %s125 = sphi 0, %s125
      %s127 = sphi 0, %s125
      %s128 = sphi 0, %s127
      %s142 = sphi 0, %s128
      %s146 = sphi 0, %s146
      %s148 = sphi 0, %s146
      %s149 = sphi 0, %s148
      %s163 = sphi 0, %s149
      %s167 = sphi 0, %s167
      %s169 = sphi 0, %s167
      %s170 = sphi 0, %s169
      %s184 = sphi 0, %s170
      %s188 = sphi 0, %s188
      %s190 = sphi 0, %s188
      %s191 = sphi 0, %s190
      %s205 = sphi 0, %s191
      %s209 = sphi 0, %s209
      %s211 = sphi 0, %s209
      %s212 = sphi 0, %s211
      %s226 = sphi 0, %s212
      %s230 = sphi 0, %s230
      %s232 = sphi 0, %s230
      %s233 = sphi 0, %s232
      %s247 = sphi 0, %s233
      %s251 = sphi 0, %s251
      %s253 = sphi 0, %s251
      %s254 = sphi 0, %s253
      %s268 = sphi 0, %s254
      %s272 = sphi 0, %s272
      %s274 = sphi 0, %s272
      %s275 = sphi 0, %s274
      %s289 = sphi 0, %s275
      %s293 = sphi 0, %s293
      %s295 = sphi 0, %s293
      %s296 = sphi 0, %s295
      %s310 = sphi 0, %s296
      %s316 = sphi 0, %s318
      %s319 = sphi 0, %s316
      %s320 = sphi 0, %s319
      %s336 = sphi 0, %s320
    $region4: #{pallas_forward.1} parent=1 // loop_header_branch
      %31 = sbr.rel (%p29) target = $region8
    $region5: #{pallas_forward.1} parent=1 // loop_body
      %s33 = ssub.s32 %s28, 1
      %s34 = ssub.s32 %s28, 2
      %s35 = sadd.s32 %s28, 1
      %s36 = ssub.s32 %s28, %s35
      %p37 = scmp.eq.s32.totalorder %s36, 0
      %s39 = sadd.s32 %s38, 1
      %s40 = scalar_select %p37, %s38, %s39
      %p43 = pneg %p37
      %p44 = scmp.eq.s32.totalorder %s28, 1
      %p45 = por %p43, %p44
      %p46 = scmp.ne.s32.totalorder %s38, %s41
      %p47 = scmp.eq.s32.totalorder %s28, 0
      %p48 = por %p46, %p47
      %p49 = scmp.ne.s32.totalorder %s38, %s41
      %p50 = scmp.eq.s32.totalorder %s33, 1
      %p51 = por %p49, %p50
      %p52 = scmp.ne.s32.totalorder %s41, %s42
      %p53 = scmp.eq.s32.totalorder %s33, 0
      %p54 = por %p52, %p53
      %p55 = scmp.ne.s32.totalorder %s41, %s42
      %p56 = scmp.eq.s32.totalorder %s34, 1
      %p57 = por %p55, %p56
      %p59 = scmp.ne.s32.totalorder %s42, %s58
      %p60 = scmp.eq.s32.totalorder %s34, 0
      %p61 = por %p59, %p60
      %s63 = sadd.s32 %s62, 1
      %p66 = scmp.eq.s32.totalorder %s28, 1
      %p67 = scmp.ne.s32.totalorder %s62, %s64
      %p68 = scmp.eq.s32.totalorder %s28, 0
      %p69 = por %p67, %p68
      %p70 = scmp.ne.s32.totalorder %s62, %s64
      %p71 = scmp.eq.s32.totalorder %s33, 1
      %p72 = por %p70, %p71
      %p73 = scmp.ne.s32.totalorder %s64, %s65
      %p74 = scmp.eq.s32.totalorder %s33, 0
      %p75 = por %p73, %p74
      %p76 = scmp.ne.s32.totalorder %s64, %s65
      %p77 = scmp.eq.s32.totalorder %s34, 1
      %p78 = por %p76, %p77
      %p80 = scmp.ne.s32.totalorder %s65, %s79
      %p81 = scmp.eq.s32.totalorder %s34, 0
      %p82 = por %p80, %p81
      %s84 = sadd.s32 %s83, 1
      %p87 = scmp.eq.s32.totalorder %s28, 1
      %p88 = scmp.ne.s32.totalorder %s83, %s85
      %p89 = scmp.eq.s32.totalorder %s28, 0
      %p90 = por %p88, %p89
      %p91 = scmp.ne.s32.totalorder %s83, %s85
      %p92 = scmp.eq.s32.totalorder %s33, 1
      %p93 = por %p91, %p92
      %p94 = scmp.ne.s32.totalorder %s85, %s86
      %p95 = scmp.eq.s32.totalorder %s33, 0
      %p96 = por %p94, %p95
      %p97 = scmp.ne.s32.totalorder %s85, %s86
      %p98 = scmp.eq.s32.totalorder %s34, 1
      %p99 = por %p97, %p98
      %p101 = scmp.ne.s32.totalorder %s86, %s100
      %p102 = scmp.eq.s32.totalorder %s34, 0
      %p103 = por %p101, %p102
      %s105 = sadd.s32 %s104, 1
      %p108 = scmp.eq.s32.totalorder %s28, 1
      %p109 = scmp.ne.s32.totalorder %s104, %s106
      %p110 = scmp.eq.s32.totalorder %s28, 0
      %p111 = por %p109, %p110
      %p112 = scmp.ne.s32.totalorder %s104, %s106
      %p113 = scmp.eq.s32.totalorder %s33, 1
      %p114 = por %p112, %p113
      %p115 = scmp.ne.s32.totalorder %s106, %s107
      %p116 = scmp.eq.s32.totalorder %s33, 0
      %p117 = por %p115, %p116
      %p118 = scmp.ne.s32.totalorder %s106, %s107
      %p119 = scmp.eq.s32.totalorder %s34, 1
      %p120 = por %p118, %p119
      %p122 = scmp.ne.s32.totalorder %s107, %s121
      %p123 = scmp.eq.s32.totalorder %s34, 0
      %p124 = por %p122, %p123
      %s126 = sadd.s32 %s125, 1
      %p129 = scmp.eq.s32.totalorder %s28, 1
      %p130 = scmp.ne.s32.totalorder %s125, %s127
      %p131 = scmp.eq.s32.totalorder %s28, 0
      %p132 = por %p130, %p131
      %p133 = scmp.ne.s32.totalorder %s125, %s127
      %p134 = scmp.eq.s32.totalorder %s33, 1
      %p135 = por %p133, %p134
      %p136 = scmp.ne.s32.totalorder %s127, %s128
      %p137 = scmp.eq.s32.totalorder %s33, 0
      %p138 = por %p136, %p137
      %p139 = scmp.ne.s32.totalorder %s127, %s128
      %p140 = scmp.eq.s32.totalorder %s34, 1
      %p141 = por %p139, %p140
      %p143 = scmp.ne.s32.totalorder %s128, %s142
      %p144 = scmp.eq.s32.totalorder %s34, 0
      %p145 = por %p143, %p144
      %s147 = sadd.s32 %s146, 1
      %p150 = scmp.eq.s32.totalorder %s28, 1
      %p151 = scmp.ne.s32.totalorder %s146, %s148
      %p152 = scmp.eq.s32.totalorder %s28, 0
      %p153 = por %p151, %p152
      %p154 = scmp.ne.s32.totalorder %s146, %s148
      %p155 = scmp.eq.s32.totalorder %s33, 1
      %p156 = por %p154, %p155
      %p157 = scmp.ne.s32.totalorder %s148, %s149
      %p158 = scmp.eq.s32.totalorder %s33, 0
      %p159 = por %p157, %p158
      %p160 = scmp.ne.s32.totalorder %s148, %s149
      %p161 = scmp.eq.s32.totalorder %s34, 1
      %p162 = por %p160, %p161
      %p164 = scmp.ne.s32.totalorder %s149, %s163
      %p165 = scmp.eq.s32.totalorder %s34, 0
      %p166 = por %p164, %p165
      %s168 = sadd.s32 %s167, 1
      %p171 = scmp.eq.s32.totalorder %s28, 1
      %p172 = scmp.ne.s32.totalorder %s167, %s169
      %p173 = scmp.eq.s32.totalorder %s28, 0
      %p174 = por %p172, %p173
      %p175 = scmp.ne.s32.totalorder %s167, %s169
      %p176 = scmp.eq.s32.totalorder %s33, 1
      %p177 = por %p175, %p176
      %p178 = scmp.ne.s32.totalorder %s169, %s170
      %p179 = scmp.eq.s32.totalorder %s33, 0
      %p180 = por %p178, %p179
      %p181 = scmp.ne.s32.totalorder %s169, %s170
      %p182 = scmp.eq.s32.totalorder %s34, 1
      %p183 = por %p181, %p182
      %p185 = scmp.ne.s32.totalorder %s170, %s184
      %p186 = scmp.eq.s32.totalorder %s34, 0
      %p187 = por %p185, %p186
      %s189 = sadd.s32 %s188, 1
      %p192 = scmp.eq.s32.totalorder %s28, 1
      %p193 = scmp.ne.s32.totalorder %s188, %s190
      %p194 = scmp.eq.s32.totalorder %s28, 0
      %p195 = por %p193, %p194
      %p196 = scmp.ne.s32.totalorder %s188, %s190
      %p197 = scmp.eq.s32.totalorder %s33, 1
      %p198 = por %p196, %p197
      %p199 = scmp.ne.s32.totalorder %s190, %s191
      %p200 = scmp.eq.s32.totalorder %s33, 0
      %p201 = por %p199, %p200
      %p202 = scmp.ne.s32.totalorder %s190, %s191
      %p203 = scmp.eq.s32.totalorder %s34, 1
      %p204 = por %p202, %p203
      %p206 = scmp.ne.s32.totalorder %s191, %s205
      %p207 = scmp.eq.s32.totalorder %s34, 0
      %p208 = por %p206, %p207
      %s210 = sadd.s32 %s209, 1
      %p213 = scmp.eq.s32.totalorder %s28, 1
      %p214 = scmp.ne.s32.totalorder %s209, %s211
      %p215 = scmp.eq.s32.totalorder %s28, 0
      %p216 = por %p214, %p215
      %p217 = scmp.ne.s32.totalorder %s209, %s211
      %p218 = scmp.eq.s32.totalorder %s33, 1
      %p219 = por %p217, %p218
      %p220 = scmp.ne.s32.totalorder %s211, %s212
      %p221 = scmp.eq.s32.totalorder %s33, 0
      %p222 = por %p220, %p221
      %p223 = scmp.ne.s32.totalorder %s211, %s212
      %p224 = scmp.eq.s32.totalorder %s34, 1
      %p225 = por %p223, %p224
      %p227 = scmp.ne.s32.totalorder %s212, %s226
      %p228 = scmp.eq.s32.totalorder %s34, 0
      %p229 = por %p227, %p228
      %s231 = sadd.s32 %s230, 1
      %p234 = scmp.eq.s32.totalorder %s28, 1
      %p235 = scmp.ne.s32.totalorder %s230, %s232
      %p236 = scmp.eq.s32.totalorder %s28, 0
      %p237 = por %p235, %p236
      %p238 = scmp.ne.s32.totalorder %s230, %s232
      %p239 = scmp.eq.s32.totalorder %s33, 1
      %p240 = por %p238, %p239
      %p241 = scmp.ne.s32.totalorder %s232, %s233
      %p242 = scmp.eq.s32.totalorder %s33, 0
      %p243 = por %p241, %p242
      %p244 = scmp.ne.s32.totalorder %s232, %s233
      %p245 = scmp.eq.s32.totalorder %s34, 1
      %p246 = por %p244, %p245
      %p248 = scmp.ne.s32.totalorder %s233, %s247
      %p249 = scmp.eq.s32.totalorder %s34, 0
      %p250 = por %p248, %p249
      %s252 = sadd.s32 %s251, 1
      %p255 = scmp.eq.s32.totalorder %s28, 1
      %p256 = scmp.ne.s32.totalorder %s251, %s253
      %p257 = scmp.eq.s32.totalorder %s28, 0
      %p258 = por %p256, %p257
      %p259 = scmp.ne.s32.totalorder %s251, %s253
      %p260 = scmp.eq.s32.totalorder %s33, 1
      %p261 = por %p259, %p260
      %p262 = scmp.ne.s32.totalorder %s253, %s254
      %p263 = scmp.eq.s32.totalorder %s33, 0
      %p264 = por %p262, %p263
      %p265 = scmp.ne.s32.totalorder %s253, %s254
      %p266 = scmp.eq.s32.totalorder %s34, 1
      %p267 = por %p265, %p266
      %p269 = scmp.ne.s32.totalorder %s254, %s268
      %p270 = scmp.eq.s32.totalorder %s34, 0
      %p271 = por %p269, %p270
      %s273 = sadd.s32 %s272, 1
      %p276 = scmp.eq.s32.totalorder %s28, 1
      %p277 = scmp.ne.s32.totalorder %s272, %s274
      %p278 = scmp.eq.s32.totalorder %s28, 0
      %p279 = por %p277, %p278
      %p280 = scmp.ne.s32.totalorder %s272, %s274
      %p281 = scmp.eq.s32.totalorder %s33, 1
      %p282 = por %p280, %p281
      %p283 = scmp.ne.s32.totalorder %s274, %s275
      %p284 = scmp.eq.s32.totalorder %s33, 0
      %p285 = por %p283, %p284
      %p286 = scmp.ne.s32.totalorder %s274, %s275
      %p287 = scmp.eq.s32.totalorder %s34, 1
      %p288 = por %p286, %p287
      %p290 = scmp.ne.s32.totalorder %s275, %s289
      %p291 = scmp.eq.s32.totalorder %s34, 0
      %p292 = por %p290, %p291
      %s294 = sadd.s32 %s293, 1
      %p297 = scmp.eq.s32.totalorder %s28, 1
      %p298 = scmp.ne.s32.totalorder %s293, %s295
      %p299 = scmp.eq.s32.totalorder %s28, 0
      %p300 = por %p298, %p299
      %p301 = scmp.ne.s32.totalorder %s293, %s295
      %p302 = scmp.eq.s32.totalorder %s33, 1
      %p303 = por %p301, %p302
      %p304 = scmp.ne.s32.totalorder %s295, %s296
      %p305 = scmp.eq.s32.totalorder %s33, 0
      %p306 = por %p304, %p305
      %p307 = scmp.ne.s32.totalorder %s295, %s296
      %p308 = scmp.eq.s32.totalorder %s34, 1
      %p309 = por %p307, %p308
      %p311 = scmp.ne.s32.totalorder %s296, %s310
      %p312 = scmp.eq.s32.totalorder %s34, 0
      %p313 = por %p311, %p312
      %s314 = ssub.s32 %s28, %s35
      %p315 = scmp.eq.s32.totalorder %s314, 0
      %s317 = sadd.s32 %s316, 1
      %s318 = scalar_select %p315, %s316, %s317
      %p321 = pneg %p315
      %p322 = scmp.eq.s32.totalorder %s28, 1
      %p323 = por %p321, %p322
      %p324 = scmp.ne.s32.totalorder %s316, %s319
      %p325 = scmp.eq.s32.totalorder %s28, 0
      %p326 = por %p324, %p325
      %p327 = scmp.ne.s32.totalorder %s316, %s319
      %p328 = scmp.eq.s32.totalorder %s33, 1
      %p329 = por %p327, %p328
      %p330 = scmp.ne.s32.totalorder %s319, %s320
      %p331 = scmp.eq.s32.totalorder %s33, 0
      %p332 = por %p330, %p331
      %p333 = scmp.ne.s32.totalorder %s319, %s320
      %p334 = scmp.eq.s32.totalorder %s34, 1
      %p335 = por %p333, %p334
      %p337 = scmp.ne.s32.totalorder %s320, %s336
      %p338 = scmp.eq.s32.totalorder %s34, 0
      %p339 = por %p337, %p338
      %p340 = scmp.le.s32.totalorder 1, %s28
      %p341 = scmp.lt.s32.totalorder %s28, 3
      %p342 = pnand %p340, %p341
      %p343 = pneg %p342
      // Predicated region
      $region9: #{pallas_forward.1} parent=5 // pred_check
        _
      $region10: #{pallas_forward.1} parent=5 // pred_check_branch
        %345 = sbr.rel (%p342) target = $region12
      $region11: #{pallas_forward.1} parent=5 // pred_region
        %s346 = ssub.s32 %s28, 1
        // Predicated region
        $region13: #{pallas_forward.1} parent=11 // pred_check
          %p347 = pneg %p75
        $region14: #{pallas_forward.1} parent=11 // pred_check_branch
          %349 = sbr.rel (%p347) target = $region16
        $region15: #{pallas_forward.1} parent=11 // pred_region
          %s351 = ssub.s32 768, 768
          %352 = vsyncadd [#allocation3], %s351
          %s353 = sshll.u32 [#allocation2], 4
          %s354 = int_to_ptr.vmem [resolvable:$true] %s353
          %359 = dma.hbm_to_vmem [thread:$0]  %s1, 768, %s354, [#allocation3], 64, 64, 4
        $region16: #{pallas_forward.1} parent=11 // pred_fallthru
          _
        // Predicated region
        $region17: #{pallas_forward.1} parent=11 // pred_check
          %p360 = pneg %p96
        $region18: #{pallas_forward.1} parent=11 // pred_check_branch
          %362 = sbr.rel (%p360) target = $region20
        $region19: #{pallas_forward.1} parent=11 // pred_region
          %s364 = ssub.s32 6144, 6144
          %365 = vsyncadd [#allocation6], %s364
          %s366 = sshll.u32 [#allocation5], 4
          %s367 = int_to_ptr.vmem [resolvable:$true] %s366
          %372 = dma.hbm_to_vmem [thread:$0]  %s2, 6144, %s367, [#allocation6], 256, 256, 16
        $region20: #{pallas_forward.1} parent=11 // pred_fallthru
          _
        // Predicated region
        $region21: #{pallas_forward.1} parent=11 // pred_check
          %p373 = pneg %p117
        $region22: #{pallas_forward.1} parent=11 // pred_check_branch
          %375 = sbr.rel (%p373) target = $region24
        $region23: #{pallas_forward.1} parent=11 // pred_region
          _
        $region24: #{pallas_forward.1} parent=11 // pred_fallthru
          _
        // Predicated region
        $region25: #{pallas_forward.1} parent=11 // pred_check
          %p376 = pneg %p138
        $region26: #{pallas_forward.1} parent=11 // pred_check_branch
          %378 = sbr.rel (%p376) target = $region28
        $region27: #{pallas_forward.1} parent=11 // pred_region
          %s380 = ssub.s32 64, 64
          %381 = vsyncadd [#allocation6], %s380
          %s383 = sshll.u32 [#allocation7], 4
          %s384 = int_to_ptr.vmem [resolvable:$true] %s383
          %386 = dma.hbm_to_vmem [thread:$0]  %s4, 64, %s384, [#allocation6]
        $region28: #{pallas_forward.1} parent=11 // pred_fallthru
          _
        // Predicated region
        $region29: #{pallas_forward.1} parent=11 // pred_check
          %p387 = pneg %p159
        $region30: #{pallas_forward.1} parent=11 // pred_check_branch
          %389 = sbr.rel (%p387) target = $region32
        $region31: #{pallas_forward.1} parent=11 // pred_region
          %s391 = ssub.s32 384, 384
          %392 = vsyncadd [#allocation9], %s391
          %s393 = sshll.u32 [#allocation8], 4
          %s394 = int_to_ptr.vmem [resolvable:$true] %s393
          %399 = dma.hbm_to_vmem [thread:$0]  %s5, 384, %s394, [#allocation9], 64, 64, 4
        $region32: #{pallas_forward.1} parent=11 // pred_fallthru
          _
        // Predicated region
        $region33: #{pallas_forward.1} parent=11 // pred_check
          %p400 = pneg %p180
        $region34: #{pallas_forward.1} parent=11 // pred_check_branch
          %402 = sbr.rel (%p400) target = $region36
        $region35: #{pallas_forward.1} parent=11 // pred_region
          %s404 = ssub.s32 86016, 86016
          %405 = vsyncadd [#allocation9], %s404
          %s406 = sshll.u32 [#allocation10], 4
          %s407 = int_to_ptr.vmem [resolvable:$true] %s406
          %412 = dma.hbm_to_vmem [thread:$0]  %s6, 86016, %s407, [#allocation9], 256, 256, 16
        $region36: #{pallas_forward.1} parent=11 // pred_fallthru
          _
        // Predicated region
        $region37: #{pallas_forward.1} parent=11 // pred_check
          %p413 = pneg %p201
        $region38: #{pallas_forward.1} parent=11 // pred_check_branch
          %415 = sbr.rel (%p413) target = $region40
        $region39: #{pallas_forward.1} parent=11 // pred_region
          _
        $region40: #{pallas_forward.1} parent=11 // pred_fallthru
          _
        // Predicated region
        $region41: #{pallas_forward.1} parent=11 // pred_check
          %p416 = pneg %p222
        $region42: #{pallas_forward.1} parent=11 // pred_check_branch
          %418 = sbr.rel (%p416) target = $region44
        $region43: #{pallas_forward.1} parent=11 // pred_region
          %s420 = ssub.s32 64, 64
          %421 = vsyncadd [#allocation12], %s420
          %s423 = sshll.u32 [#allocation11], 4
          %s424 = int_to_ptr.vmem [resolvable:$true] %s423
          %426 = dma.hbm_to_vmem [thread:$0]  %s8, 64, %s424, [#allocation12]
        $region44: #{pallas_forward.1} parent=11 // pred_fallthru
          _
        // Predicated region
        $region45: #{pallas_forward.1} parent=11 // pred_check
          %p427 = pneg %p243
        $region46: #{pallas_forward.1} parent=11 // pred_check_branch
          %429 = sbr.rel (%p427) target = $region48
        $region47: #{pallas_forward.1} parent=11 // pred_region
          %s431 = ssub.s32 25088, 25088
          %432 = vsyncadd [#allocation12], %s431
          %s433 = sshll.u32 [#allocation13], 4
          %s434 = int_to_ptr.vmem [resolvable:$true] %s433
          %439 = dma.hbm_to_vmem [thread:$0]  %s9, 25088, %s434, [#allocation12], 64, 64, 4
        $region48: #{pallas_forward.1} parent=11 // pred_fallthru
          _
        // Predicated region
        $region49: #{pallas_forward.1} parent=11 // pred_check
          %p440 = pneg %p264
        $region50: #{pallas_forward.1} parent=11 // pred_check_branch
          %442 = sbr.rel (%p440) target = $region52
        $region51: #{pallas_forward.1} parent=11 // pred_region
          %s444 = ssub.s32 16, 16
          %445 = vsyncadd [#allocation15], %s444
          %s447 = sshll.u32 [#allocation14], 4
          %s448 = int_to_ptr.vmem [resolvable:$true] %s447
          %450 = dma.hbm_to_vmem [thread:$0]  %s10, 16, %s448, [#allocation15]
        $region52: #{pallas_forward.1} parent=11 // pred_fallthru
          _
        // Predicated region
        $region53: #{pallas_forward.1} parent=11 // pred_check
          %p451 = pneg %p285
        $region54: #{pallas_forward.1} parent=11 // pred_check_branch
          %453 = sbr.rel (%p451) target = $region56
        $region55: #{pallas_forward.1} parent=11 // pred_region
          %s455 = ssub.s32 1024, 1024
          %456 = vsyncadd [#allocation15], %s455
          %s457 = sshll.u32 [#allocation16], 4
          %s458 = int_to_ptr.vmem [resolvable:$true] %s457
          %463 = dma.hbm_to_vmem [thread:$0]  %s11, 1024, %s458, [#allocation15], 64, 64, 4
        $region56: #{pallas_forward.1} parent=11 // pred_fallthru
          _
        // Predicated region
        $region57: #{pallas_forward.1} parent=11 // pred_check
          %p464 = pneg %p306
        $region58: #{pallas_forward.1} parent=11 // pred_check_branch
          %466 = sbr.rel (%p464) target = $region60
        $region59: #{pallas_forward.1} parent=11 // pred_region
          %s468 = ssub.s32 16, 16
          %469 = vsyncadd [#allocation18], %s468
          %s471 = sshll.u32 [#allocation17], 4
          %s472 = int_to_ptr.vmem [resolvable:$true] %s471
          %474 = dma.hbm_to_vmem [thread:$0]  %s12, 16, %s472, [#allocation18]
        $region60: #{pallas_forward.1} parent=11 // pred_fallthru
          _
      $region12: #{pallas_forward.1} parent=5 // pred_fallthru
        _
      %p475 = scmp.lt.s32.totalorder %s28, 2
      // Predicated region
      $region61: #{pallas_forward.1} parent=5 // pred_check
        %p476 = pneg %p475
      $region62: #{pallas_forward.1} parent=5 // pred_check_branch
        %478 = sbr.rel (%p476) target = $region64
      $region63: #{pallas_forward.1} parent=5 // pred_region
        // Predicated region
        $region65: #{pallas_forward.1} parent=63 // pred_check
          %p479 = pneg %p48
        $region66: #{pallas_forward.1} parent=63 // pred_check_branch
          %481 = sbr.rel (%p479) target = $region68
        $region67: #{pallas_forward.1} parent=63 // pred_region
          %p482 = scmp.lt.s32.totalorder %s28, 1
          %s483 = scalar_select %p482, %s28, 1
          %s484 = smul.addr %s483, 4
          %s485 = smul.addr %s484, 8
          %s486 = scalar_lea.vmem %s0, %s485
        $region68: #{pallas_forward.1} parent=63 // pred_fallthru
          _
      $region64: #{pallas_forward.1} parent=5 // pred_fallthru
        _
      %p487 = scmp.le.s32.totalorder 1, %s28
      %p488 = scmp.lt.s32.totalorder %s28, 3
      %p489 = pnand %p487, %p488
      %p490 = pneg %p489
      // Predicated region
      $region69: #{pallas_forward.1} parent=5 // pred_check
        _
      $region70: #{pallas_forward.1} parent=5 // pred_check_branch
        %492 = sbr.rel (%p489) target = $region72
      $region71: #{pallas_forward.1} parent=5 // pred_region
        %s493 = ssub.s32 %s28, 1
        // Predicated region
        $region73: #{pallas_forward.1} parent=71 // pred_check
          %p494 = pneg %p75
        $region74: #{pallas_forward.1} parent=71 // pred_check_branch
          %496 = sbr.rel (%p494) target = $region76
        $region75: #{pallas_forward.1} parent=71 // pred_region
          %497 = dma.done [#allocation3], 768
        $region76: #{pallas_forward.1} parent=71 // pred_fallthru
          _
        // Predicated region
        $region77: #{pallas_forward.1} parent=71 // pred_check
          %p498 = pneg %p96
        $region78: #{pallas_forward.1} parent=71 // pred_check_branch
          %500 = sbr.rel (%p498) target = $region80
        $region79: #{pallas_forward.1} parent=71 // pred_region
          %501 = dma.done [#allocation6], 6144
        $region80: #{pallas_forward.1} parent=71 // pred_fallthru
          _
        // Predicated region
        $region81: #{pallas_forward.1} parent=71 // pred_check
          %p502 = pneg %p138
        $region82: #{pallas_forward.1} parent=71 // pred_check_branch
          %504 = sbr.rel (%p502) target = $region84
        $region83: #{pallas_forward.1} parent=71 // pred_region
          %505 = dma.done [#allocation6], 64
        $region84: #{pallas_forward.1} parent=71 // pred_fallthru
          _
        // Predicated region
        $region85: #{pallas_forward.1} parent=71 // pred_check
          %p506 = pneg %p159
        $region86: #{pallas_forward.1} parent=71 // pred_check_branch
          %508 = sbr.rel (%p506) target = $region88
        $region87: #{pallas_forward.1} parent=71 // pred_region
          %509 = dma.done [#allocation9], 384
        $region88: #{pallas_forward.1} parent=71 // pred_fallthru
          _
        // Predicated region
        $region89: #{pallas_forward.1} parent=71 // pred_check
          %p510 = pneg %p180
        $region90: #{pallas_forward.1} parent=71 // pred_check_branch
          %512 = sbr.rel (%p510) target = $region92
        $region91: #{pallas_forward.1} parent=71 // pred_region
          %513 = dma.done [#allocation9], 86016
        $region92: #{pallas_forward.1} parent=71 // pred_fallthru
          _
        // Predicated region
        $region93: #{pallas_forward.1} parent=71 // pred_check
          %p514 = pneg %p222
        $region94: #{pallas_forward.1} parent=71 // pred_check_branch
          %516 = sbr.rel (%p514) target = $region96
        $region95: #{pallas_forward.1} parent=71 // pred_region
          %517 = dma.done [#allocation12], 64
        $region96: #{pallas_forward.1} parent=71 // pred_fallthru
          _
        // Predicated region
        $region97: #{pallas_forward.1} parent=71 // pred_check
          %p518 = pneg %p243
        $region98: #{pallas_forward.1} parent=71 // pred_check_branch
          %520 = sbr.rel (%p518) target = $region100
        $region99: #{pallas_forward.1} parent=71 // pred_region
          %521 = dma.done [#allocation12], 25088
        $region100: #{pallas_forward.1} parent=71 // pred_fallthru
          _
        // Predicated region
        $region101: #{pallas_forward.1} parent=71 // pred_check
          %p522 = pneg %p264
        $region102: #{pallas_forward.1} parent=71 // pred_check_branch
          %524 = sbr.rel (%p522) target = $region104
        $region103: #{pallas_forward.1} parent=71 // pred_region
          %525 = dma.done [#allocation15], 16
        $region104: #{pallas_forward.1} parent=71 // pred_fallthru
          _
        // Predicated region
        $region105: #{pallas_forward.1} parent=71 // pred_check
          %p526 = pneg %p285
        $region106: #{pallas_forward.1} parent=71 // pred_check_branch
          %528 = sbr.rel (%p526) target = $region108
        $region107: #{pallas_forward.1} parent=71 // pred_region
          %529 = dma.done [#allocation15], 1024
        $region108: #{pallas_forward.1} parent=71 // pred_fallthru
          _
        // Predicated region
        $region109: #{pallas_forward.1} parent=71 // pred_check
          %p530 = pneg %p306
        $region110: #{pallas_forward.1} parent=71 // pred_check_branch
          %532 = sbr.rel (%p530) target = $region112
        $region111: #{pallas_forward.1} parent=71 // pred_region
          %533 = dma.done [#allocation18], 16
        $region112: #{pallas_forward.1} parent=71 // pred_fallthru
          _
        %p534 = scmp.lt.s32.totalorder %s33, 1
        %s535 = scalar_select %p534, %s33, 1
        %s536 = smul.addr %s535, 4
        %s537 = smul.addr %s536, 8
        %s538 = scalar_lea.vmem %s0, %s537
        %p539 = pneg %p54
        %p540 = pneg %p51
        %p541 = pneg %p75
        %p542 = pneg %p72
        %p543 = pneg %p96
        %p544 = pneg %p93
        %p545 = pneg %p117
        %p546 = pneg %p114
        %p547 = pneg %p138
        %p548 = pneg %p135
        %p549 = pneg %p159
        %p550 = pneg %p156
        %p551 = pneg %p180
        %p552 = pneg %p177
        %p553 = pneg %p201
        %p554 = pneg %p198
        %p555 = pneg %p222
        %p556 = pneg %p219
        %p557 = pneg %p243
        %p558 = pneg %p240
        %p559 = pneg %p264
        %p560 = pneg %p261
        %p561 = pneg %p285
        %p562 = pneg %p282
        %p563 = pneg %p306
        %p564 = pneg %p303
        %p565 = pneg %p332
        %p566 = pneg %p329
        %s567 = sand.u32 %s319, 1
        %s568 = scalar_lea.sflag [#allocation4], %s567
        %s569 = sand.u32 %s319, 1
        %s570 = scalar_lea.vmem [#allocation19], %s569
        %p571 = scmp.lt.s32.totalorder %s33, 1
        %s572 = scalar_select %p571, %s33, 1
        %s573 = smul.addr %s572, 4
        %s574 = smul.addr %s573, 8
        %s575 = scalar_lea.vmem %s0, %s574
        %v577 = vld [vmem:[%s575] sm:$0xff]
        %v578 = vld [vmem:[%s575 + $0x8] sm:$0xff]
        %v579 = vld [vmem:[%s575 + $0x10] sm:$0xff]
        %v580 = vld [vmem:[%s575 + $0x18] sm:$0xf]
        %v581 = vpack.c.bf16 %v578, %v577
        %v582 = vpack.c.bf16 %v580, %v579
        %v583 = vld [vmem:[#allocation2] sm:$0xf]
        %v584 = vld [vmem:[#allocation2 + $0x4] sm:$0xf]
        %v585 = vld [vmem:[#allocation2 + $0x8] sm:$0xf]
        %v586 = vld [vmem:[#allocation2 + $0xc] sm:$0x3]
        %v591 = vunpack.c.l.b16 %v583
        %v592 = vunpack.c.l.b16 %v584
        %v593 = vunpack.c.l.b16 %v585
        %v594 = vunpack.c.l.b16 %v586
        %v595 = vpack.c.b16 %v592, %v591
        %v596 = vpack.c.b16 %v594, %v593
        %vm597 = vcmask 228352
        %v599 = vsel %vm597, %v595, 0
        %v602 = vsel %vm597, %v596, 0
        %vm604 = vcmask 1045504
        %v606 = vsel %vm604, %v582, 0
        %608 = vmatprep.subr.bf16.mxu0 0
        %609 = vmatpush1.bf16.msra.mxu0 %v581
        %610 = vmatprep.subr.bf16.mxu0 0
        %611 = vmatpush1.bf16.msra.mxu0 %v606
        %612 = vmatprep.subr.bf16.mxu0 0
        %613 = vmatpush1.bf16.msra.mxu0 0
        %614 = vmatprep.subr.bf16.mxu0 0
        %615 = vmatpush1.bf16.msra.mxu0 0
        %616 = vmatprep.subr.bf16.mxu0 0
        %617 = vmatpush1.bf16.msra.mxu0 0
        %618 = vmatprep.subr.bf16.mxu0 0
        %619 = vmatpush1.bf16.msra.mxu0 0
        %620 = vmatprep.subr.bf16.mxu0 0
        %621 = vmatpush1.bf16.msra.mxu0 0
        %622 = vmatprep.subr.bf16.mxu0 0
        %623 = vmatpush1.bf16.msra.mxu0 0
        %624 = vmatprep.subr.bf16.mxu0 0
        %625 = vmatpush1.bf16.msra.mxu0 0
        %626 = vmatprep.subr.bf16.mxu0 0
        %627 = vmatpush1.bf16.msra.mxu0 0
        %628 = vmatprep.subr.bf16.mxu0 0
        %629 = vmatpush1.bf16.msra.mxu0 0
        %630 = vmatprep.subr.bf16.mxu0 0
        %631 = vmatpush1.bf16.msra.mxu0 0
        %632 = vmatprep.subr.bf16.mxu0 0
        %633 = vmatpush1.bf16.msra.mxu0 0
        %634 = vmatprep.subr.bf16.mxu0 0
        %635 = vmatpush1.bf16.msra.mxu0 0
        %636 = vmatprep.subr.bf16.mxu0 0
        %637 = vmatpush1.bf16.msra.mxu0 0
        %638 = vmatprep.subr.bf16.mxu0 0
        %639 = vmatpush1.bf16.msra.mxu0 0
        %640 = vmatprep.mubr.bf16.mxu0 0
        %641 = vmatmul.mubr.bf16.gmra.mrb[0].mxu0 %v599
        %v642 = vpop.f32.mrb[0].mxu0
        %v643 = vadd.f32 0.0, %v642
        %v644 = vpop.f32.mrb[0].mxu0
        %v645 = vpop.f32.mrb[0].mxu0
        %v646 = vadd.f32 0.0, %v645
        %v647 = vpop.f32.mrb[0].mxu0
        %648 = vmatprep.mubr.bf16.mxu0 0
        %649 = vmatmul.mubr.bf16.gmra.mrb[0].mxu0 %v602
        %v650 = vpop.f32.mrb[0].mxu0
        %v651 = vadd.f32 0.0, %v650
        %v652 = vpop.f32.mrb[0].mxu0
        %v653 = vpop.f32.mrb[0].mxu0
        %v654 = vadd.f32 0.0, %v653
        %v655 = vpop.f32.mrb[0].mxu0
        %656 = vdwg.mxu0
        %v657 = vpack.c.bf16 %v646, %v643
        %v658 = vpack.c.bf16 %v654, %v651
        %v659 = vld [vmem:[#allocation5] sm:$0xff]
        %v660 = vld [vmem:[#allocation5 + $0x8] sm:$0xff]
        %v661 = vld [vmem:[#allocation5 + $0x10] sm:$0xff]
        %v662 = vld [vmem:[#allocation5 + $0x18] sm:$0xff]
        %v663 = vld [vmem:[#allocation5 + $0x20] sm:$0xff]
        %v664 = vld [vmem:[#allocation5 + $0x28] sm:$0xff]
        %v665 = vld [vmem:[#allocation5 + $0x30] sm:$0x33]
        %v666 = vld [vmem:[#allocation5 + $0x38] sm:$0x33]
        %s667 = scalar_lea.vmem [#allocation5], 192
        %v668 = vld [vmem:[%s667] sm:$0xff]
        %v669 = vld [vmem:[%s667 + $0x8] sm:$0xff]
        %v670 = vld [vmem:[%s667 + $0x10] sm:$0xff]
        %v671 = vld [vmem:[%s667 + $0x18] sm:$0xff]
        %v672 = vld [vmem:[%s667 + $0x20] sm:$0xff]
        %v673 = vld [vmem:[%s667 + $0x28] sm:$0xff]
        %v674 = vld [vmem:[%s667 + $0x30] sm:$0x33]
        %v675 = vld [vmem:[%s667 + $0x38] sm:$0x33]
        %s676 = scalar_lea.vmem [#allocation2], 16
        %v677 = vld [vmem:[%s676] sm:$0xf]
        %v678 = vld [vmem:[%s676 + $0x4] sm:$0xf]
        %v679 = vld [vmem:[%s676 + $0x8] sm:$0xf]
        %v680 = vld [vmem:[%s676 + $0xc] sm:$0x3]
        %v685 = vunpack.c.l.b16 %v677
        %v686 = vunpack.c.l.b16 %v678
        %v687 = vunpack.c.l.b16 %v679
        %v688 = vunpack.c.l.b16 %v680
        %v689 = vpack.c.b16 %v686, %v685
        %v690 = vpack.c.b16 %v688, %v687
        %v692 = vsel %vm597, %v689, 0
        %v695 = vsel %vm597, %v690, 0
        %697 = vmatprep.subr.bf16.mxu0 0
        %698 = vmatpush1.bf16.msra.mxu0 %v581
        %699 = vmatprep.subr.bf16.mxu0 0
        %700 = vmatpush1.bf16.msra.mxu0 %v606
        %701 = vmatprep.subr.bf16.mxu0 0
        %702 = vmatpush1.bf16.msra.mxu0 0
        %703 = vmatprep.subr.bf16.mxu0 0
        %704 = vmatpush1.bf16.msra.mxu0 0
        %705 = vmatprep.subr.bf16.mxu0 0
        %706 = vmatpush1.bf16.msra.mxu0 0
        %707 = vmatprep.subr.bf16.mxu0 0
        %708 = vmatpush1.bf16.msra.mxu0 0
        %709 = vmatprep.subr.bf16.mxu0 0
        %710 = vmatpush1.bf16.msra.mxu0 0
        %711 = vmatprep.subr.bf16.mxu0 0
        %712 = vmatpush1.bf16.msra.mxu0 0
        %713 = vmatprep.subr.bf16.mxu0 0
        %714 = vmatpush1.bf16.msra.mxu0 0
        %715 = vmatprep.subr.bf16.mxu0 0
        %716 = vmatpush1.bf16.msra.mxu0 0
        %717 = vmatprep.subr.bf16.mxu0 0
        %718 = vmatpush1.bf16.msra.mxu0 0
        %719 = vmatprep.subr.bf16.mxu0 0
        %720 = vmatpush1.bf16.msra.mxu0 0
        %721 = vmatprep.subr.bf16.mxu0 0
        %722 = vmatpush1.bf16.msra.mxu0 0
        %723 = vmatprep.subr.bf16.mxu0 0
        %724 = vmatpush1.bf16.msra.mxu0 0
        %725 = vmatprep.subr.bf16.mxu0 0
        %726 = vmatpush1.bf16.msra.mxu0 0
        %727 = vmatprep.subr.bf16.mxu0 0
        %728 = vmatpush1.bf16.msra.mxu0 0
        %729 = vmatprep.mubr.bf16.mxu0 0
        %730 = vmatmul.mubr.bf16.gmra.mrb[0].mxu0 %v692
        %v731 = vpop.f32.mrb[0].mxu0
        %v732 = vadd.f32 0.0, %v731
        %v733 = vpop.f32.mrb[0].mxu0
        %v734 = vpop.f32.mrb[0].mxu0
        %v735 = vadd.f32 0.0, %v734
        %v736 = vpop.f32.mrb[0].mxu0
        %737 = vmatprep.mubr.bf16.mxu0 0
        %738 = vmatmul.mubr.bf16.gmra.mrb[0].mxu0 %v695
        %v739 = vpop.f32.mrb[0].mxu0
        %v740 = vadd.f32 0.0, %v739
        %v741 = vpop.f32.mrb[0].mxu0
        %v742 = vpop.f32.mrb[0].mxu0
        %v743 = vadd.f32 0.0, %v742
        %v744 = vpop.f32.mrb[0].mxu0
        %745 = vdwg.mxu0
        %v746 = vpack.c.bf16 %v735, %v732
        %v747 = vpack.c.bf16 %v743, %v740
        %s748 = scalar_lea.vmem [#allocation5], 64
        %v749 = vld [vmem:[%s748] sm:$0xff]
        %v750 = vld [vmem:[%s748 + $0x8] sm:$0xff]
        %v751 = vld [vmem:[%s748 + $0x10] sm:$0xff]
        %v752 = vld [vmem:[%s748 + $0x18] sm:$0xff]
        %v753 = vld [vmem:[%s748 + $0x20] sm:$0xff]
        %v754 = vld [vmem:[%s748 + $0x28] sm:$0xff]
        %v755 = vld [vmem:[%s748 + $0x30] sm:$0x33]
        %v756 = vld [vmem:[%s748 + $0x38] sm:$0x33]
        %v765 = vunpack.c.l.b16 %v749
        %v766 = vunpack.c.h.b16 %v749
        %v767 = vunpack.c.l.b16 %v750
        %v768 = vunpack.c.h.b16 %v750
        %v769 = vunpack.c.l.b16 %v751
        %v770 = vunpack.c.h.b16 %v751
        %v771 = vunpack.c.l.b16 %v752
        %v772 = vunpack.c.h.b16 %v752
        %v773 = vunpack.c.l.b16 %v753
        %v774 = vunpack.c.h.b16 %v753
        %v775 = vunpack.c.l.b16 %v754
        %v776 = vunpack.c.h.b16 %v754
        %v777 = vunpack.c.l.b16 %v755
        %v778 = vunpack.c.h.b16 %v755
        %v779 = vunpack.c.l.b16 %v756
        %v780 = vunpack.c.h.b16 %v756
        %v781 = vpack.c.b16 %v769, %v765
        %v782 = vpack.c.b16 %v770, %v766
        %v783 = vpack.c.b16 %v771, %v767
        %v784 = vpack.c.b16 %v772, %v768
        %v785 = vpack.c.b16 %v777, %v773
        %v786 = vpack.c.b16 %v778, %v774
        %v787 = vpack.c.b16 %v779, %v775
        %v788 = vpack.c.b16 %v780, %v776
        %v794 = vsel %vm597, %v746, 0
        %v797 = vsel %vm597, %v747, 0
        %v800 = vsel %vm604, %v785, 0
        %v803 = vsel %vm604, %v786, 0
        %v806 = vsel %vm604, %v787, 0
        %v809 = vsel %vm604, %v788, 0
        %811 = vmatprep.subr.bf16.mxu0 %v782
        %812 = vmatpush1.bf16.msra.mxu0 %v781
        %813 = vmatprep.subr.bf16.mxu0 %v803
        %814 = vmatpush1.bf16.msra.mxu0 %v800
        %815 = vmatprep.subr.bf16.mxu0 0
        %816 = vmatpush1.bf16.msra.mxu0 0
        %817 = vmatprep.subr.bf16.mxu0 0
        %818 = vmatpush1.bf16.msra.mxu0 0
        %819 = vmatprep.subr.bf16.mxu0 0
        %820 = vmatpush1.bf16.msra.mxu0 0
        %821 = vmatprep.subr.bf16.mxu0 0
        %822 = vmatpush1.bf16.msra.mxu0 0
        %823 = vmatprep.subr.bf16.mxu0 0
        %824 = vmatpush1.bf16.msra.mxu0 0
        %825 = vmatprep.subr.bf16.mxu0 0
        %826 = vmatpush1.bf16.msra.mxu0 0
        %827 = vmatprep.subr.bf16.mxu0 0
        %828 = vmatpush1.bf16.msra.mxu0 0
        %829 = vmatprep.subr.bf16.mxu0 0
        %830 = vmatpush1.bf16.msra.mxu0 0
        %831 = vmatprep.subr.bf16.mxu0 0
        %832 = vmatpush1.bf16.msra.mxu0 0
        %833 = vmatprep.subr.bf16.mxu0 0
        %834 = vmatpush1.bf16.msra.mxu0 0
        %835 = vmatprep.subr.bf16.mxu0 0
        %836 = vmatpush1.bf16.msra.mxu0 0
        %837 = vmatprep.subr.bf16.mxu0 0
        %838 = vmatpush1.bf16.msra.mxu0 0
        %839 = vmatprep.subr.bf16.mxu0 0
        %840 = vmatpush1.bf16.msra.mxu0 0
        %841 = vmatprep.subr.bf16.mxu0 0
        %842 = vmatpush1.bf16.msra.mxu0 0
        %843 = vmatprep.mubr.bf16.mxu0 0
        %844 = vmatmul.mubr.bf16.gmra.mrb[0].mxu0 %v794
        %v845 = vpop.f32.mrb[0].mxu0
        %v846 = vadd.f32 0.0, %v845
        %v847 = vpop.f32.mrb[0].mxu0
        %v848 = vadd.f32 0.0, %v847
        %v849 = vpop.f32.mrb[0].mxu0
        %v850 = vadd.f32 0.0, %v849
        %v851 = vpop.f32.mrb[0].mxu0
        %v852 = vadd.f32 0.0, %v851
        %853 = vmatprep.mubr.bf16.mxu0 0
        %854 = vmatmul.mubr.bf16.gmra.mrb[0].mxu0 %v797
        %v855 = vpop.f32.mrb[0].mxu0
        %v856 = vadd.f32 0.0, %v855
        %v857 = vpop.f32.mrb[0].mxu0
        %v858 = vadd.f32 0.0, %v857
        %v859 = vpop.f32.mrb[0].mxu0
        %v860 = vadd.f32 0.0, %v859
        %v861 = vpop.f32.mrb[0].mxu0
        %v862 = vadd.f32 0.0, %v861
        %863 = vdwg.mxu0
        %864 = vmatprep.subr.bf16.mxu0 %v784
        %865 = vmatpush1.bf16.msra.mxu0 %v783
        %866 = vmatprep.subr.bf16.mxu0 %v809
        %867 = vmatpush1.bf16.msra.mxu0 %v806
        %868 = vmatprep.subr.bf16.mxu0 0
        %869 = vmatpush1.bf16.msra.mxu0 0
        %870 = vmatprep.subr.bf16.mxu0 0
        %871 = vmatpush1.bf16.msra.mxu0 0
        %872 = vmatprep.subr.bf16.mxu0 0
        %873 = vmatpush1.bf16.msra.mxu0 0
        %874 = vmatprep.subr.bf16.mxu0 0
        %875 = vmatpush1.bf16.msra.mxu0 0
        %876 = vmatprep.subr.bf16.mxu0 0
        %877 = vmatpush1.bf16.msra.mxu0 0
        %878 = vmatprep.subr.bf16.mxu0 0
        %879 = vmatpush1.bf16.msra.mxu0 0
        %880 = vmatprep.subr.bf16.mxu0 0
        %881 = vmatpush1.bf16.msra.mxu0 0
        %882 = vmatprep.subr.bf16.mxu0 0
        %883 = vmatpush1.bf16.msra.mxu0 0
        %884 = vmatprep.subr.bf16.mxu0 0
        %885 = vmatpush1.bf16.msra.mxu0 0
        %886 = vmatprep.subr.bf16.mxu0 0
        %887 = vmatpush1.bf16.msra.mxu0 0
        %888 = vmatprep.subr.bf16.mxu0 0
        %889 = vmatpush1.bf16.msra.mxu0 0
        %890 = vmatprep.subr.bf16.mxu0 0
        %891 = vmatpush1.bf16.msra.mxu0 0
        %892 = vmatprep.subr.bf16.mxu0 0
        %893 = vmatpush1.bf16.msra.mxu0 0
        %894 = vmatprep.subr.bf16.mxu0 0
        %895 = vmatpush1.bf16.msra.mxu0 0
        %896 = vmatprep.mubr.bf16.mxu0 0
        %897 = vmatmul.mubr.bf16.gmra.mrb[0].mxu0 %v794
        %v898 = vpop.f32.mrb[0].mxu0
        %v899 = vadd.f32 0.0, %v898
        %v900 = vpop.f32.mrb[0].mxu0
        %v901 = vadd.f32 0.0, %v900
        %v902 = vpop.f32.mrb[0].mxu0
        %v903 = vadd.f32 0.0, %v902
        %v904 = vpop.f32.mrb[0].mxu0
        %v905 = vadd.f32 0.0, %v904
        %906 = vmatprep.mubr.bf16.mxu0 0
        %907 = vmatmul.mubr.bf16.gmra.mrb[0].mxu0 %v797
        %v908 = vpop.f32.mrb[0].mxu0
        %v909 = vadd.f32 0.0, %v908
        %v910 = vpop.f32.mrb[0].mxu0
        %v911 = vadd.f32 0.0, %v910
        %v912 = vpop.f32.mrb[0].mxu0
        %v913 = vadd.f32 0.0, %v912
        %v914 = vpop.f32.mrb[0].mxu0
        %v915 = vadd.f32 0.0, %v914
        %916 = vdwg.mxu0
        %s917 = scalar_lea.vmem [#allocation5], 256
        %v918 = vld [vmem:[%s917] sm:$0xff]
        %v919 = vld [vmem:[%s917 + $0x8] sm:$0xff]
        %v920 = vld [vmem:[%s917 + $0x10] sm:$0xff]
        %v921 = vld [vmem:[%s917 + $0x18] sm:$0xff]
        %v922 = vld [vmem:[%s917 + $0x20] sm:$0xff]
        %v923 = vld [vmem:[%s917 + $0x28] sm:$0xff]
        %v924 = vld [vmem:[%s917 + $0x30] sm:$0x33]
        %v925 = vld [vmem:[%s917 + $0x38] sm:$0x33]
        %v934 = vunpack.c.l.b16 %v918
        %v935 = vunpack.c.h.b16 %v918
        %v936 = vunpack.c.l.b16 %v919
        %v937 = vunpack.c.h.b16 %v919
        %v938 = vunpack.c.l.b16 %v920
        %v939 = vunpack.c.h.b16 %v920
        %v940 = vunpack.c.l.b16 %v921
        %v941 = vunpack.c.h.b16 %v921
        %v942 = vunpack.c.l.b16 %v922
        %v943 = vunpack.c.h.b16 %v922
        %v944 = vunpack.c.l.b16 %v923
        %v945 = vunpack.c.h.b16 %v923
        %v946 = vunpack.c.l.b16 %v924
        %v947 = vunpack.c.h.b16 %v924
        %v948 = vunpack.c.l.b16 %v925
        %v949 = vunpack.c.h.b16 %v925
        %v950 = vpack.c.b16 %v938, %v934
        %v951 = vpack.c.b16 %v939, %v935
        %v952 = vpack.c.b16 %v940, %v936
        %v953 = vpack.c.b16 %v941, %v937
        %v954 = vpack.c.b16 %v946, %v942
        %v955 = vpack.c.b16 %v947, %v943
        %v956 = vpack.c.b16 %v948, %v944
        %v957 = vpack.c.b16 %v949, %v945
        %v963 = vsel %vm604, %v954, 0
        %v966 = vsel %vm604, %v955, 0
        %v969 = vsel %vm604, %v956, 0
        %v972 = vsel %vm604, %v957, 0
        %974 = vmatprep.subr.bf16.mxu0 %v951
        %975 = vmatpush1.bf16.msra.mxu0 %v950
        %976 = vmatprep.subr.bf16.mxu0 %v966
        %977 = vmatpush1.bf16.msra.mxu0 %v963
        %978 = vmatprep.subr.bf16.mxu0 0
        %979 = vmatpush1.bf16.msra.mxu0 0
        %980 = vmatprep.subr.bf16.mxu0 0
        %981 = vmatpush1.bf16.msra.mxu0 0
        %982 = vmatprep.subr.bf16.mxu0 0
        %983 = vmatpush1.bf16.msra.mxu0 0
        %984 = vmatprep.subr.bf16.mxu0 0
        %985 = vmatpush1.bf16.msra.mxu0 0
        %986 = vmatprep.subr.bf16.mxu0 0
        %987 = vmatpush1.bf16.msra.mxu0 0
        %988 = vmatprep.subr.bf16.mxu0 0
        %989 = vmatpush1.bf16.msra.mxu0 0
        %990 = vmatprep.subr.bf16.mxu0 0
        %991 = vmatpush1.bf16.msra.mxu0 0
        %992 = vmatprep.subr.bf16.mxu0 0
        %993 = vmatpush1.bf16.msra.mxu0 0
        %994 = vmatprep.subr.bf16.mxu0 0
        %995 = vmatpush1.bf16.msra.mxu0 0
        %996 = vmatprep.subr.bf16.mxu0 0
        %997 = vmatpush1.bf16.msra.mxu0 0
        %998 = vmatprep.subr.bf16.mxu0 0
        %999 = vmatpush1.bf16.msra.mxu0 0
        %1000 = vmatprep.subr.bf16.mxu0 0
        %1001 = vmatpush1.bf16.msra.mxu0 0
        %1002 = vmatprep.subr.bf16.mxu0 0
        %1003 = vmatpush1.bf16.msra.mxu0 0
        %1004 = vmatprep.subr.bf16.mxu0 0
        %1005 = vmatpush1.bf16.msra.mxu0 0
        %1006 = vmatprep.mubr.bf16.mxu0 0
        %1007 = vmatmul.mubr.bf16.gmra.mrb[0].mxu0 %v794
        %v1008 = vpop.f32.mrb[0].mxu0
        %v1009 = vadd.f32 0.0, %v1008
        %v1010 = vpop.f32.mrb[0].mxu0
        %v1011 = vadd.f32 0.0, %v1010
        %v1012 = vpop.f32.mrb[0].mxu0
        %v1013 = vadd.f32 0.0, %v1012
        %v1014 = vpop.f32.mrb[0].mxu0
        %v1015 = vadd.f32 0.0, %v1014
        %1016 = vmatprep.mubr.bf16.mxu0 0
        %1017 = vmatmul.mubr.bf16.gmra.mrb[0].mxu0 %v797
        %v1018 = vpop.f32.mrb[0].mxu0
        %v1019 = vadd.f32 0.0, %v1018
        %v1020 = vpop.f32.mrb[0].mxu0
        %v1021 = vadd.f32 0.0, %v1020
        %v1022 = vpop.f32.mrb[0].mxu0
        %v1023 = vadd.f32 0.0, %v1022
        %v1024 = vpop.f32.mrb[0].mxu0
        %v1025 = vadd.f32 0.0, %v1024
        %1026 = vdwg.mxu0
        %1027 = vmatprep.subr.bf16.mxu0 %v953
        %1028 = vmatpush1.bf16.msra.mxu0 %v952
        %1029 = vmatprep.subr.bf16.mxu0 %v972
        %1030 = vmatpush1.bf16.msra.mxu0 %v969
        %1031 = vmatprep.subr.bf16.mxu0 0
        %1032 = vmatpush1.bf16.msra.mxu0 0
        %1033 = vmatprep.subr.bf16.mxu0 0
        %1034 = vmatpush1.bf16.msra.mxu0 0
        %1035 = vmatprep.subr.bf16.mxu0 0
        %1036 = vmatpush1.bf16.msra.mxu0 0
        %1037 = vmatprep.subr.bf16.mxu0 0
        %1038 = vmatpush1.bf16.msra.mxu0 0
        %1039 = vmatprep.subr.bf16.mxu0 0
        %1040 = vmatpush1.bf16.msra.mxu0 0
        %1041 = vmatprep.subr.bf16.mxu0 0
        %1042 = vmatpush1.bf16.msra.mxu0 0
        %1043 = vmatprep.subr.bf16.mxu0 0
        %1044 = vmatpush1.bf16.msra.mxu0 0
        %1045 = vmatprep.subr.bf16.mxu0 0
        %1046 = vmatpush1.bf16.msra.mxu0 0
        %1047 = vmatprep.subr.bf16.mxu0 0
        %1048 = vmatpush1.bf16.msra.mxu0 0
        %1049 = vmatprep.subr.bf16.mxu0 0
        %1050 = vmatpush1.bf16.msra.mxu0 0
        %1051 = vmatprep.subr.bf16.mxu0 0
        %1052 = vmatpush1.bf16.msra.mxu0 0
        %1053 = vmatprep.subr.bf16.mxu0 0
        %1054 = vmatpush1.bf16.msra.mxu0 0
        %1055 = vmatprep.subr.bf16.mxu0 0
        %1056 = vmatpush1.bf16.msra.mxu0 0
        %1057 = vmatprep.subr.bf16.mxu0 0
        %1058 = vmatpush1.bf16.msra.mxu0 0
        %1059 = vmatprep.mubr.bf16.mxu0 0
        %1060 = vmatmul.mubr.bf16.gmra.mrb[0].mxu0 %v794
        %v1061 = vpop.f32.mrb[0].mxu0
        %v1062 = vadd.f32 0.0, %v1061
        %v1063 = vpop.f32.mrb[0].mxu0
        %v1064 = vadd.f32 0.0, %v1063
        %v1065 = vpop.f32.mrb[0].mxu0
        %v1066 = vadd.f32 0.0, %v1065
        %v1067 = vpop.f32.mrb[0].mxu0
        %v1068 = vadd.f32 0.0, %v1067
        %1069 = vmatprep.mubr.bf16.mxu0 0
        %1070 = vmatmul.mubr.bf16.gmra.mrb[0].mxu0 %v797
        %v1071 = vpop.f32.mrb[0].mxu0
        %v1072 = vadd.f32 0.0, %v1071
        %v1073 = vpop.f32.mrb[0].mxu0
        %v1074 = vadd.f32 0.0, %v1073
        %v1075 = vpop.f32.mrb[0].mxu0
        %v1076 = vadd.f32 0.0, %v1075
        %v1077 = vpop.f32.mrb[0].mxu0
        %v1078 = vadd.f32 0.0, %v1077
        %1079 = vdwg.mxu0
        %v1088 = vunpack.c.l.b16 %v659
        %v1089 = vunpack.c.h.b16 %v659
        %v1090 = vunpack.c.l.b16 %v660
        %v1091 = vunpack.c.h.b16 %v660
        %v1092 = vunpack.c.l.b16 %v661
        %v1093 = vunpack.c.h.b16 %v661
        %v1094 = vunpack.c.l.b16 %v662
        %v1095 = vunpack.c.h.b16 %v662
        %v1096 = vunpack.c.l.b16 %v663
        %v1097 = vunpack.c.h.b16 %v663
        %v1098 = vunpack.c.l.b16 %v664
        %v1099 = vunpack.c.h.b16 %v664
        %v1100 = vunpack.c.l.b16 %v665
        %v1101 = vunpack.c.h.b16 %v665
        %v1102 = vunpack.c.l.b16 %v666
        %v1103 = vunpack.c.h.b16 %v666
        %v1104 = vpack.c.b16 %v1092, %v1088
        %v1105 = vpack.c.b16 %v1093, %v1089
        %v1106 = vpack.c.b16 %v1094, %v1090
        %v1107 = vpack.c.b16 %v1095, %v1091
        %v1108 = vpack.c.b16 %v1100, %v1096
        %v1109 = vpack.c.b16 %v1101, %v1097
        %v1110 = vpack.c.b16 %v1102, %v1098
        %v1111 = vpack.c.b16 %v1103, %v1099
        %v1117 = vsel %vm597, %v657, 0
        %v1120 = vsel %vm597, %v658, 0
        %v1123 = vsel %vm604, %v1108, 0
        %v1126 = vsel %vm604, %v1109, 0
        %v1129 = vsel %vm604, %v1110, 0
        %v1132 = vsel %vm604, %v1111, 0
        %1134 = vmatprep.subr.bf16.mxu0 %v1105
        %1135 = vmatpush1.bf16.msra.mxu0 %v1104
        %1136 = vmatprep.subr.bf16.mxu0 %v1126
        %1137 = vmatpush1.bf16.msra.mxu0 %v1123
        %1138 = vmatprep.subr.bf16.mxu0 0
        %1139 = vmatpush1.bf16.msra.mxu0 0
        %1140 = vmatprep.subr.bf16.mxu0 0
        %1141 = vmatpush1.bf16.msra.mxu0 0
        %1142 = vmatprep.subr.bf16.mxu0 0
        %1143 = vmatpush1.bf16.msra.mxu0 0
        %1144 = vmatprep.subr.bf16.mxu0 0
        %1145 = vmatpush1.bf16.msra.mxu0 0
        %1146 = vmatprep.subr.bf16.mxu0 0
        %1147 = vmatpush1.bf16.msra.mxu0 0
        %1148 = vmatprep.subr.bf16.mxu0 0
        %1149 = vmatpush1.bf16.msra.mxu0 0
        %1150 = vmatprep.subr.bf16.mxu0 0
        %1151 = vmatpush1.bf16.msra.mxu0 0
        %1152 = vmatprep.subr.bf16.mxu0 0
        %1153 = vmatpush1.bf16.msra.mxu0 0
        %1154 = vmatprep.subr.bf16.mxu0 0
        %1155 = vmatpush1.bf16.msra.mxu0 0
        %1156 = vmatprep.subr.bf16.mxu0 0
        %1157 = vmatpush1.bf16.msra.mxu0 0
        %1158 = vmatprep.subr.bf16.mxu0 0
        %1159 = vmatpush1.bf16.msra.mxu0 0
        %1160 = vmatprep.subr.bf16.mxu0 0
        %1161 = vmatpush1.bf16.msra.mxu0 0
        %1162 = vmatprep.subr.bf16.mxu0 0
        %1163 = vmatpush1.bf16.msra.mxu0 0
        %1164 = vmatprep.subr.bf16.mxu0 0
        %1165 = vmatpush1.bf16.msra.mxu0 0
        %1166 = vmatprep.mubr.bf16.mxu0 0
        %1167 = vmatmul.mubr.bf16.gmra.mrb[0].mxu0 %v1117
        %v1168 = vpop.f32.mrb[0].mxu0
        %v1169 = vadd.f32 %v846, %v1168
        %v1170 = vpop.f32.mrb[0].mxu0
        %v1171 = vadd.f32 %v848, %v1170
        %v1172 = vpop.f32.mrb[0].mxu0
        %v1173 = vadd.f32 %v850, %v1172
        %v1174 = vpop.f32.mrb[0].mxu0
        %v1175 = vadd.f32 %v852, %v1174
        %1176 = vmatprep.mubr.bf16.mxu0 0
        %1177 = vmatmul.mubr.bf16.gmra.mrb[0].mxu0 %v1120
        %v1178 = vpop.f32.mrb[0].mxu0
        %v1179 = vadd.f32 %v856, %v1178
        %v1180 = vpop.f32.mrb[0].mxu0
        %v1181 = vadd.f32 %v858, %v1180
        %v1182 = vpop.f32.mrb[0].mxu0
        %v1183 = vadd.f32 %v860, %v1182
        %v1184 = vpop.f32.mrb[0].mxu0
        %v1185 = vadd.f32 %v862, %v1184
        %1186 = vdwg.mxu0
        %1187 = vmatprep.subr.bf16.mxu0 %v1107
        %1188 = vmatpush1.bf16.msra.mxu0 %v1106
        %1189 = vmatprep.subr.bf16.mxu0 %v1132
        %1190 = vmatpush1.bf16.msra.mxu0 %v1129
        %1191 = vmatprep.subr.bf16.mxu0 0
        %1192 = vmatpush1.bf16.msra.mxu0 0
        %1193 = vmatprep.subr.bf16.mxu0 0
        %1194 = vmatpush1.bf16.msra.mxu0 0
        %1195 = vmatprep.subr.bf16.mxu0 0
        %1196 = vmatpush1.bf16.msra.mxu0 0
        %1197 = vmatprep.subr.bf16.mxu0 0
        %1198 = vmatpush1.bf16.msra.mxu0 0
        %1199 = vmatprep.subr.bf16.mxu0 0
        %1200 = vmatpush1.bf16.msra.mxu0 0
        %1201 = vmatprep.subr.bf16.mxu0 0
        %1202 = vmatpush1.bf16.msra.mxu0 0
        %1203 = vmatprep.subr.bf16.mxu0 0
        %1204 = vmatpush1.bf16.msra.mxu0 0
        %1205 = vmatprep.subr.bf16.mxu0 0
        %1206 = vmatpush1.bf16.msra.mxu0 0
        %1207 = vmatprep.subr.bf16.mxu0 0
        %1208 = vmatpush1.bf16.msra.mxu0 0
        %1209 = vmatprep.subr.bf16.mxu0 0
        %1210 = vmatpush1.bf16.msra.mxu0 0
        %1211 = vmatprep.subr.bf16.mxu0 0
        %1212 = vmatpush1.bf16.msra.mxu0 0
        %1213 = vmatprep.subr.bf16.mxu0 0
        %1214 = vmatpush1.bf16.msra.mxu0 0
        %1215 = vmatprep.subr.bf16.mxu0 0
        %1216 = vmatpush1.bf16.msra.mxu0 0
        %1217 = vmatprep.subr.bf16.mxu0 0
        %1218 = vmatpush1.bf16.msra.mxu0 0
        %1219 = vmatprep.mubr.bf16.mxu0 0
        %1220 = vmatmul.mubr.bf16.gmra.mrb[0].mxu0 %v1117
        %v1221 = vpop.f32.mrb[0].mxu0
        %v1222 = vadd.f32 %v899, %v1221
        %v1223 = vpop.f32.mrb[0].mxu0
        %v1224 = vadd.f32 %v901, %v1223
        %v1225 = vpop.f32.mrb[0].mxu0
        %v1226 = vadd.f32 %v903, %v1225
        %v1227 = vpop.f32.mrb[0].mxu0
        %v1228 = vadd.f32 %v905, %v1227
        %1229 = vmatprep.mubr.bf16.mxu0 0
        %1230 = vmatmul.mubr.bf16.gmra.mrb[0].mxu0 %v1120
        %v1231 = vpop.f32.mrb[0].mxu0
        %v1232 = vadd.f32 %v909, %v1231
        %v1233 = vpop.f32.mrb[0].mxu0
        %v1234 = vadd.f32 %v911, %v1233
        %v1235 = vpop.f32.mrb[0].mxu0
        %v1236 = vadd.f32 %v913, %v1235
        %v1237 = vpop.f32.mrb[0].mxu0
        %v1238 = vadd.f32 %v915, %v1237
        %1239 = vdwg.mxu0
        %v1248 = vunpack.c.l.b16 %v668
        %v1249 = vunpack.c.h.b16 %v668
        %v1250 = vunpack.c.l.b16 %v669
        %v1251 = vunpack.c.h.b16 %v669
        %v1252 = vunpack.c.l.b16 %v670
        %v1253 = vunpack.c.h.b16 %v670
        %v1254 = vunpack.c.l.b16 %v671
        %v1255 = vunpack.c.h.b16 %v671
        %v1256 = vunpack.c.l.b16 %v672
        %v1257 = vunpack.c.h.b16 %v672
        %v1258 = vunpack.c.l.b16 %v673
        %v1259 = vunpack.c.h.b16 %v673
        %v1260 = vunpack.c.l.b16 %v674
        %v1261 = vunpack.c.h.b16 %v674
        %v1262 = vunpack.c.l.b16 %v675
        %v1263 = vunpack.c.h.b16 %v675
        %v1264 = vpack.c.b16 %v1252, %v1248
        %v1265 = vpack.c.b16 %v1253, %v1249
        %v1266 = vpack.c.b16 %v1254, %v1250
        %v1267 = vpack.c.b16 %v1255, %v1251
        %v1268 = vpack.c.b16 %v1260, %v1256
        %v1269 = vpack.c.b16 %v1261, %v1257
        %v1270 = vpack.c.b16 %v1262, %v1258
        %v1271 = vpack.c.b16 %v1263, %v1259
        %v1277 = vsel %vm604, %v1268, 0
        %v1280 = vsel %vm604, %v1269, 0
        %v1283 = vsel %vm604, %v1270, 0
        %v1286 = vsel %vm604, %v1271, 0
        %1288 = vmatprep.subr.bf16.mxu0 %v1265
        %1289 = vmatpush1.bf16.msra.mxu0 %v1264
        %1290 = vmatprep.subr.bf16.mxu0 %v1280
        %1291 = vmatpush1.bf16.msra.mxu0 %v1277
        %1292 = vmatprep.subr.bf16.mxu0 0
        %1293 = vmatpush1.bf16.msra.mxu0 0
        %1294 = vmatprep.subr.bf16.mxu0 0
        %1295 = vmatpush1.bf16.msra.mxu0 0
        %1296 = vmatprep.subr.bf16.mxu0 0
        %1297 = vmatpush1.bf16.msra.mxu0 0
        %1298 = vmatprep.subr.bf16.mxu0 0
        %1299 = vmatpush1.bf16.msra.mxu0 0
        %1300 = vmatprep.subr.bf16.mxu0 0
        %1301 = vmatpush1.bf16.msra.mxu0 0
        %1302 = vmatprep.subr.bf16.mxu0 0
        %1303 = vmatpush1.bf16.msra.mxu0 0
        %1304 = vmatprep.subr.bf16.mxu0 0
        %1305 = vmatpush1.bf16.msra.mxu0 0
        %1306 = vmatprep.subr.bf16.mxu0 0
        %1307 = vmatpush1.bf16.msra.mxu0 0
        %1308 = vmatprep.subr.bf16.mxu0 0
        %1309 = vmatpush1.bf16.msra.mxu0 0
        %1310 = vmatprep.subr.bf16.mxu0 0
        %1311 = vmatpush1.bf16.msra.mxu0 0
        %1312 = vmatprep.subr.bf16.mxu0 0
        %1313 = vmatpush1.bf16.msra.mxu0 0
        %1314 = vmatprep.subr.bf16.mxu0 0
        %1315 = vmatpush1.bf16.msra.mxu0 0
        %1316 = vmatprep.subr.bf16.mxu0 0
        %1317 = vmatpush1.bf16.msra.mxu0 0
        %1318 = vmatprep.subr.bf16.mxu0 0
        %1319 = vmatpush1.bf16.msra.mxu0 0
        %1320 = vmatprep.mubr.bf16.mxu0 0
        %1321 = vmatmul.mubr.bf16.gmra.mrb[0].mxu0 %v1117
        %v1322 = vpop.f32.mrb[0].mxu0
        %v1323 = vadd.f32 %v1009, %v1322
        %v1324 = vpop.f32.mrb[0].mxu0
        %v1325 = vadd.f32 %v1011, %v1324
        %v1326 = vpop.f32.mrb[0].mxu0
        %v1327 = vadd.f32 %v1013, %v1326
        %v1328 = vpop.f32.mrb[0].mxu0
        %v1329 = vadd.f32 %v1015, %v1328
        %1330 = vmatprep.mubr.bf16.mxu0 0
        %1331 = vmatmul.mubr.bf16.gmra.mrb[0].mxu0 %v1120
        %v1332 = vpop.f32.mrb[0].mxu0
        %v1333 = vadd.f32 %v1019, %v1332
        %v1334 = vpop.f32.mrb[0].mxu0
        %v1335 = vadd.f32 %v1021, %v1334
        %v1336 = vpop.f32.mrb[0].mxu0
        %v1337 = vadd.f32 %v1023, %v1336
        %v1338 = vpop.f32.mrb[0].mxu0
        %v1339 = vadd.f32 %v1025, %v1338
        %1340 = vdwg.mxu0
        %1341 = vmatprep.subr.bf16.mxu0 %v1267
        %1342 = vmatpush1.bf16.msra.mxu0 %v1266
        %1343 = vmatprep.subr.bf16.mxu0 %v1286
        %1344 = vmatpush1.bf16.msra.mxu0 %v1283
        %1345 = vmatprep.subr.bf16.mxu0 0
        %1346 = vmatpush1.bf16.msra.mxu0 0
        %1347 = vmatprep.subr.bf16.mxu0 0
        %1348 = vmatpush1.bf16.msra.mxu0 0
        %1349 = vmatprep.subr.bf16.mxu0 0
        %1350 = vmatpush1.bf16.msra.mxu0 0
        %1351 = vmatprep.subr.bf16.mxu0 0
        %1352 = vmatpush1.bf16.msra.mxu0 0
        %1353 = vmatprep.subr.bf16.mxu0 0
        %1354 = vmatpush1.bf16.msra.mxu0 0
        %1355 = vmatprep.subr.bf16.mxu0 0
        %1356 = vmatpush1.bf16.msra.mxu0 0
        %1357 = vmatprep.subr.bf16.mxu0 0
        %1358 = vmatpush1.bf16.msra.mxu0 0
        %1359 = vmatprep.subr.bf16.mxu0 0
        %1360 = vmatpush1.bf16.msra.mxu0 0
        %1361 = vmatprep.subr.bf16.mxu0 0
        %1362 = vmatpush1.bf16.msra.mxu0 0
        %1363 = vmatprep.subr.bf16.mxu0 0
        %1364 = vmatpush1.bf16.msra.mxu0 0
        %1365 = vmatprep.subr.bf16.mxu0 0
        %1366 = vmatpush1.bf16.msra.mxu0 0
        %1367 = vmatprep.subr.bf16.mxu0 0
        %1368 = vmatpush1.bf16.msra.mxu0 0
        %1369 = vmatprep.subr.bf16.mxu0 0
        %1370 = vmatpush1.bf16.msra.mxu0 0
        %1371 = vmatprep.subr.bf16.mxu0 0
        %1372 = vmatpush1.bf16.msra.mxu0 0
        %1373 = vmatprep.mubr.bf16.mxu0 0
        %1374 = vmatmul.mubr.bf16.gmra.mrb[0].mxu0 %v1117
        %v1375 = vpop.f32.mrb[0].mxu0
        %v1376 = vadd.f32 %v1062, %v1375
        %v1377 = vpop.f32.mrb[0].mxu0
        %v1378 = vadd.f32 %v1064, %v1377
        %v1379 = vpop.f32.mrb[0].mxu0
        %v1380 = vadd.f32 %v1066, %v1379
        %v1381 = vpop.f32.mrb[0].mxu0
        %v1382 = vadd.f32 %v1068, %v1381
        %1383 = vmatprep.mubr.bf16.mxu0 0
        %1384 = vmatmul.mubr.bf16.gmra.mrb[0].mxu0 %v1120
        %v1385 = vpop.f32.mrb[0].mxu0
        %v1386 = vadd.f32 %v1072, %v1385
        %v1387 = vpop.f32.mrb[0].mxu0
        %v1388 = vadd.f32 %v1074, %v1387
        %v1389 = vpop.f32.mrb[0].mxu0
        %v1390 = vadd.f32 %v1076, %v1389
        %v1391 = vpop.f32.mrb[0].mxu0
        %v1392 = vadd.f32 %v1078, %v1391
        %1393 = vdwg.mxu0
        %s1394 = scalar_lea.vmem [#allocation2], 32
        %v1395 = vld [vmem:[%s1394] sm:$0xf]
        %v1396 = vld [vmem:[%s1394 + $0x4] sm:$0xf]
        %v1397 = vld [vmem:[%s1394 + $0x8] sm:$0xf]
        %v1398 = vld [vmem:[%s1394 + $0xc] sm:$0x3]
        %v1403 = vunpack.c.l.b16 %v1395
        %v1404 = vunpack.c.l.b16 %v1396
        %v1405 = vunpack.c.l.b16 %v1397
        %v1406 = vunpack.c.l.b16 %v1398
        %v1407 = vpack.c.b16 %v1404, %v1403
        %v1408 = vpack.c.b16 %v1406, %v1405
        %v1410 = vsel %vm597, %v1407, 0
        %v1413 = vsel %vm597, %v1408, 0
        %1415 = vmatprep.subr.bf16.mxu0 0
        %1416 = vmatpush1.bf16.msra.mxu0 %v581
        %1417 = vmatprep.subr.bf16.mxu0 0
        %1418 = vmatpush1.bf16.msra.mxu0 %v606
        %1419 = vmatprep.subr.bf16.mxu0 0
        %1420 = vmatpush1.bf16.msra.mxu0 0
        %1421 = vmatprep.subr.bf16.mxu0 0
        %1422 = vmatpush1.bf16.msra.mxu0 0
        %1423 = vmatprep.subr.bf16.mxu0 0
        %1424 = vmatpush1.bf16.msra.mxu0 0
        %1425 = vmatprep.subr.bf16.mxu0 0
        %1426 = vmatpush1.bf16.msra.mxu0 0
        %1427 = vmatprep.subr.bf16.mxu0 0
        %1428 = vmatpush1.bf16.msra.mxu0 0
        %1429 = vmatprep.subr.bf16.mxu0 0
        %1430 = vmatpush1.bf16.msra.mxu0 0
        %1431 = vmatprep.subr.bf16.mxu0 0
        %1432 = vmatpush1.bf16.msra.mxu0 0
        %1433 = vmatprep.subr.bf16.mxu0 0
        %1434 = vmatpush1.bf16.msra.mxu0 0
        %1435 = vmatprep.subr.bf16.mxu0 0
        %1436 = vmatpush1.bf16.msra.mxu0 0
        %1437 = vmatprep.subr.bf16.mxu0 0
        %1438 = vmatpush1.bf16.msra.mxu0 0
        %1439 = vmatprep.subr.bf16.mxu0 0
        %1440 = vmatpush1.bf16.msra.mxu0 0
        %1441 = vmatprep.subr.bf16.mxu0 0
        %1442 = vmatpush1.bf16.msra.mxu0 0
        %1443 = vmatprep.subr.bf16.mxu0 0
        %1444 = vmatpush1.bf16.msra.mxu0 0
        %1445 = vmatprep.subr.bf16.mxu0 0
        %1446 = vmatpush1.bf16.msra.mxu0 0
        %1447 = vmatprep.mubr.bf16.mxu0 0
        %1448 = vmatmul.mubr.bf16.gmra.mrb[0].mxu0 %v1410
        %v1449 = vpop.f32.mrb[0].mxu0
        %v1450 = vadd.f32 0.0, %v1449
        %v1451 = vpop.f32.mrb[0].mxu0
        %v1452 = vpop.f32.mrb[0].mxu0
        %v1453 = vadd.f32 0.0, %v1452
        %v1454 = vpop.f32.mrb[0].mxu0
        %1455 = vmatprep.mubr.bf16.mxu0 0
        %1456 = vmatmul.mubr.bf16.gmra.mrb[0].mxu0 %v1413
        %v1457 = vpop.f32.mrb[0].mxu0
        %v1458 = vadd.f32 0.0, %v1457
        %v1459 = vpop.f32.mrb[0].mxu0
        %v1460 = vpop.f32.mrb[0].mxu0
        %v1461 = vadd.f32 0.0, %v1460
        %v1462 = vpop.f32.mrb[0].mxu0
        %1463 = vdwg.mxu0
        %v1464 = vpack.c.bf16 %v1453, %v1450
        %v1465 = vpack.c.bf16 %v1461, %v1458
        %s1466 = scalar_lea.vmem [#allocation5], 128
        %v1467 = vld [vmem:[%s1466] sm:$0xff]
        %v1468 = vld [vmem:[%s1466 + $0x8] sm:$0xff]
        %v1469 = vld [vmem:[%s1466 + $0x10] sm:$0xff]
        %v1470 = vld [vmem:[%s1466 + $0x18] sm:$0xff]
        %v1471 = vld [vmem:[%s1466 + $0x20] sm:$0xff]
        %v1472 = vld [vmem:[%s1466 + $0x28] sm:$0xff]
        %v1473 = vld [vmem:[%s1466 + $0x30] sm:$0x33]
        %v1474 = vld [vmem:[%s1466 + $0x38] sm:$0x33]
        %v1483 = vunpack.c.l.b16 %v1467
        %v1484 = vunpack.c.h.b16 %v1467
        %v1485 = vunpack.c.l.b16 %v1468
        %v1486 = vunpack.c.h.b16 %v1468
        %v1487 = vunpack.c.l.b16 %v1469
        %v1488 = vunpack.c.h.b16 %v1469
        %v1489 = vunpack.c.l.b16 %v1470
        %v1490 = vunpack.c.h.b16 %v1470
        %v1491 = vunpack.c.l.b16 %v1471
        %v1492 = vunpack.c.h.b16 %v1471
        %v1493 = vunpack.c.l.b16 %v1472
        %v1494 = vunpack.c.h.b16 %v1472
        %v1495 = vunpack.c.l.b16 %v1473
        %v1496 = vunpack.c.h.b16 %v1473
        %v1497 = vunpack.c.l.b16 %v1474
        %v1498 = vunpack.c.h.b16 %v1474
        %v1499 = vpack.c.b16 %v1487, %v1483
        %v1500 = vpack.c.b16 %v1488, %v1484
        %v1501 = vpack.c.b16 %v1489, %v1485
        %v1502 = vpack.c.b16 %v1490, %v1486
        %v1503 = vpack.c.b16 %v1495, %v1491
        %v1504 = vpack.c.b16 %v1496, %v1492
        %v1505 = vpack.c.b16 %v1497, %v1493
        %v1506 = vpack.c.b16 %v1498, %v1494
        %v1512 = vsel %vm597, %v1464, 0
        %v1515 = vsel %vm597, %v1465, 0
        %v1518 = vsel %vm604, %v1503, 0
        %v1521 = vsel %vm604, %v1504, 0
        %v1524 = vsel %vm604, %v1505, 0
        %v1527 = vsel %vm604, %v1506, 0
        %1529 = vmatprep.subr.bf16.mxu0 %v1500
        %1530 = vmatpush1.bf16.msra.mxu0 %v1499
        %1531 = vmatprep.subr.bf16.mxu0 %v1521
        %1532 = vmatpush1.bf16.msra.mxu0 %v1518
        %1533 = vmatprep.subr.bf16.mxu0 0
        %1534 = vmatpush1.bf16.msra.mxu0 0
        %1535 = vmatprep.subr.bf16.mxu0 0
        %1536 = vmatpush1.bf16.msra.mxu0 0
        %1537 = vmatprep.subr.bf16.mxu0 0
        %1538 = vmatpush1.bf16.msra.mxu0 0
        %1539 = vmatprep.subr.bf16.mxu0 0
        %1540 = vmatpush1.bf16.msra.mxu0 0
        %1541 = vmatprep.subr.bf16.mxu0 0
        %1542 = vmatpush1.bf16.msra.mxu0 0
        %1543 = vmatprep.subr.bf16.mxu0 0
        %1544 = vmatpush1.bf16.msra.mxu0 0
        %1545 = vmatprep.subr.bf16.mxu0 0
        %1546 = vmatpush1.bf16.msra.mxu0 0
        %1547 = vmatprep.subr.bf16.mxu0 0
        %1548 = vmatpush1.bf16.msra.mxu0 0
        %1549 = vmatprep.subr.bf16.mxu0 0
        %1550 = vmatpush1.bf16.msra.mxu0 0
        %1551 = vmatprep.subr.bf16.mxu0 0
        %1552 = vmatpush1.bf16.msra.mxu0 0
        %1553 = vmatprep.subr.bf16.mxu0 0
        %1554 = vmatpush1.bf16.msra.mxu0 0
        %1555 = vmatprep.subr.bf16.mxu0 0
        %1556 = vmatpush1.bf16.msra.mxu0 0
        %1557 = vmatprep.subr.bf16.mxu0 0
        %1558 = vmatpush1.bf16.msra.mxu0 0
        %1559 = vmatprep.subr.bf16.mxu0 0
        %1560 = vmatpush1.bf16.msra.mxu0 0
        %1561 = vmatprep.mubr.bf16.mxu0 0
        %1562 = vmatmul.mubr.bf16.gmra.mrb[0].mxu0 %v1512
        %v1563 = vpop.f32.mrb[0].mxu0
        %v1564 = vadd.f32 0.0, %v1563
        %v1565 = vpop.f32.mrb[0].mxu0
        %v1566 = vadd.f32 0.0, %v1565
        %v1567 = vpop.f32.mrb[0].mxu0
        %v1568 = vadd.f32 0.0, %v1567
        %v1569 = vpop.f32.mrb[0].mxu0
        %v1570 = vadd.f32 0.0, %v1569
        %1571 = vmatprep.mubr.bf16.mxu0 0
        %1572 = vmatmul.mubr.bf16.gmra.mrb[0].mxu0 %v1515
        %v1573 = vpop.f32.mrb[0].mxu0
        %v1574 = vadd.f32 0.0, %v1573
        %v1575 = vpop.f32.mrb[0].mxu0
        %v1576 = vadd.f32 0.0, %v1575
        %v1577 = vpop.f32.mrb[0].mxu0
        %v1578 = vadd.f32 0.0, %v1577
        %v1579 = vpop.f32.mrb[0].mxu0
        %v1580 = vadd.f32 0.0, %v1579
        %1581 = vdwg.mxu0
        %1582 = vmatprep.subr.bf16.mxu0 %v1502
        %1583 = vmatpush1.bf16.msra.mxu0 %v1501
        %1584 = vmatprep.subr.bf16.mxu0 %v1527
        %1585 = vmatpush1.bf16.msra.mxu0 %v1524
        %1586 = vmatprep.subr.bf16.mxu0 0
        %1587 = vmatpush1.bf16.msra.mxu0 0
        %1588 = vmatprep.subr.bf16.mxu0 0
        %1589 = vmatpush1.bf16.msra.mxu0 0
        %1590 = vmatprep.subr.bf16.mxu0 0
        %1591 = vmatpush1.bf16.msra.mxu0 0
        %1592 = vmatprep.subr.bf16.mxu0 0
        %1593 = vmatpush1.bf16.msra.mxu0 0
        %1594 = vmatprep.subr.bf16.mxu0 0
        %1595 = vmatpush1.bf16.msra.mxu0 0
        %1596 = vmatprep.subr.bf16.mxu0 0
        %1597 = vmatpush1.bf16.msra.mxu0 0
        %1598 = vmatprep.subr.bf16.mxu0 0
        %1599 = vmatpush1.bf16.msra.mxu0 0
        %1600 = vmatprep.subr.bf16.mxu0 0
        %1601 = vmatpush1.bf16.msra.mxu0 0
        %1602 = vmatprep.subr.bf16.mxu0 0
        %1603 = vmatpush1.bf16.msra.mxu0 0
        %1604 = vmatprep.subr.bf16.mxu0 0
        %1605 = vmatpush1.bf16.msra.mxu0 0
        %1606 = vmatprep.subr.bf16.mxu0 0
        %1607 = vmatpush1.bf16.msra.mxu0 0
        %1608 = vmatprep.subr.bf16.mxu0 0
        %1609 = vmatpush1.bf16.msra.mxu0 0
        %1610 = vmatprep.subr.bf16.mxu0 0
        %1611 = vmatpush1.bf16.msra.mxu0 0
        %1612 = vmatprep.subr.bf16.mxu0 0
        %1613 = vmatpush1.bf16.msra.mxu0 0
        %1614 = vmatprep.mubr.bf16.mxu0 0
        %1615 = vmatmul.mubr.bf16.gmra.mrb[0].mxu0 %v1512
        %v1616 = vpop.f32.mrb[0].mxu0
        %v1617 = vadd.f32 0.0, %v1616
        %v1618 = vpop.f32.mrb[0].mxu0
        %v1619 = vadd.f32 0.0, %v1618
        %v1620 = vpop.f32.mrb[0].mxu0
        %v1621 = vadd.f32 0.0, %v1620
        %v1622 = vpop.f32.mrb[0].mxu0
        %v1623 = vadd.f32 0.0, %v1622
        %1624 = vmatprep.mubr.bf16.mxu0 0
        %1625 = vmatmul.mubr.bf16.gmra.mrb[0].mxu0 %v1515
        %v1626 = vpop.f32.mrb[0].mxu0
        %v1627 = vadd.f32 0.0, %v1626
        %v1628 = vpop.f32.mrb[0].mxu0
        %v1629 = vadd.f32 0.0, %v1628
        %v1630 = vpop.f32.mrb[0].mxu0
        %v1631 = vadd.f32 0.0, %v1630
        %v1632 = vpop.f32.mrb[0].mxu0
        %v1633 = vadd.f32 0.0, %v1632
        %1634 = vdwg.mxu0
        %s1635 = scalar_lea.vmem [#allocation5], 320
        %v1636 = vld [vmem:[%s1635] sm:$0xff]
        %v1637 = vld [vmem:[%s1635 + $0x8] sm:$0xff]
        %v1638 = vld [vmem:[%s1635 + $0x10] sm:$0xff]
        %v1639 = vld [vmem:[%s1635 + $0x18] sm:$0xff]
        %v1640 = vld [vmem:[%s1635 + $0x20] sm:$0xff]
        %v1641 = vld [vmem:[%s1635 + $0x28] sm:$0xff]
        %v1642 = vld [vmem:[%s1635 + $0x30] sm:$0x33]
        %v1643 = vld [vmem:[%s1635 + $0x38] sm:$0x33]
        %v1652 = vunpack.c.l.b16 %v1636
        %v1653 = vunpack.c.h.b16 %v1636
        %v1654 = vunpack.c.l.b16 %v1637
        %v1655 = vunpack.c.h.b16 %v1637
        %v1656 = vunpack.c.l.b16 %v1638
        %v1657 = vunpack.c.h.b16 %v1638
        %v1658 = vunpack.c.l.b16 %v1639
        %v1659 = vunpack.c.h.b16 %v1639
        %v1660 = vunpack.c.l.b16 %v1640
        %v1661 = vunpack.c.h.b16 %v1640
        %v1662 = vunpack.c.l.b16 %v1641
        %v1663 = vunpack.c.h.b16 %v1641
        %v1664 = vunpack.c.l.b16 %v1642
        %v1665 = vunpack.c.h.b16 %v1642
        %v1666 = vunpack.c.l.b16 %v1643
        %v1667 = vunpack.c.h.b16 %v1643
        %v1668 = vpack.c.b16 %v1656, %v1652
        %v1669 = vpack.c.b16 %v1657, %v1653
        %v1670 = vpack.c.b16 %v1658, %v1654
        %v1671 = vpack.c.b16 %v1659, %v1655
        %v1672 = vpack.c.b16 %v1664, %v1660
        %v1673 = vpack.c.b16 %v1665, %v1661
        %v1674 = vpack.c.b16 %v1666, %v1662
        %v1675 = vpack.c.b16 %v1667, %v1663
        %v1681 = vsel %vm604, %v1672, 0
        %v1684 = vsel %vm604, %v1673, 0
        %v1687 = vsel %vm604, %v1674, 0
        %v1690 = vsel %vm604, %v1675, 0
        %1692 = vmatprep.subr.bf16.mxu0 %v1669
        %1693 = vmatpush1.bf16.msra.mxu0 %v1668
        %1694 = vmatprep.subr.bf16.mxu0 %v1684
        %1695 = vmatpush1.bf16.msra.mxu0 %v1681
        %1696 = vmatprep.subr.bf16.mxu0 0
        %1697 = vmatpush1.bf16.msra.mxu0 0
        %1698 = vmatprep.subr.bf16.mxu0 0
        %1699 = vmatpush1.bf16.msra.mxu0 0
        %1700 = vmatprep.subr.bf16.mxu0 0
        %1701 = vmatpush1.bf16.msra.mxu0 0
        %1702 = vmatprep.subr.bf16.mxu0 0
        %1703 = vmatpush1.bf16.msra.mxu0 0
        %1704 = vmatprep.subr.bf16.mxu0 0
        %1705 = vmatpush1.bf16.msra.mxu0 0
        %1706 = vmatprep.subr.bf16.mxu0 0
        %1707 = vmatpush1.bf16.msra.mxu0 0
        %1708 = vmatprep.subr.bf16.mxu0 0
        %1709 = vmatpush1.bf16.msra.mxu0 0
        %1710 = vmatprep.subr.bf16.mxu0 0
        %1711 = vmatpush1.bf16.msra.mxu0 0
        %1712 = vmatprep.subr.bf16.mxu0 0
        %1713 = vmatpush1.bf16.msra.mxu0 0
        %1714 = vmatprep.subr.bf16.mxu0 0
        %1715 = vmatpush1.bf16.msra.mxu0 0
        %1716 = vmatprep.subr.bf16.mxu0 0
        %1717 = vmatpush1.bf16.msra.mxu0 0
        %1718 = vmatprep.subr.bf16.mxu0 0
        %1719 = vmatpush1.bf16.msra.mxu0 0
        %1720 = vmatprep.subr.bf16.mxu0 0
        %1721 = vmatpush1.bf16.msra.mxu0 0
        %1722 = vmatprep.subr.bf16.mxu0 0
        %1723 = vmatpush1.bf16.msra.mxu0 0
        %1724 = vmatprep.mubr.bf16.mxu0 0
        %1725 = vmatmul.mubr.bf16.gmra.mrb[0].mxu0 %v1512
        %v1726 = vpop.f32.mrb[0].mxu0
        %v1727 = vadd.f32 0.0, %v1726
        %v1728 = vpop.f32.mrb[0].mxu0
        %v1729 = vadd.f32 0.0, %v1728
        %v1730 = vpop.f32.mrb[0].mxu0
        %v1731 = vadd.f32 0.0, %v1730
        %v1732 = vpop.f32.mrb[0].mxu0
        %v1733 = vadd.f32 0.0, %v1732
        %1734 = vmatprep.mubr.bf16.mxu0 0
        %1735 = vmatmul.mubr.bf16.gmra.mrb[0].mxu0 %v1515
        %v1736 = vpop.f32.mrb[0].mxu0
        %v1737 = vadd.f32 0.0, %v1736
        %v1738 = vpop.f32.mrb[0].mxu0
        %v1739 = vadd.f32 0.0, %v1738
        %v1740 = vpop.f32.mrb[0].mxu0
        %v1741 = vadd.f32 0.0, %v1740
        %v1742 = vpop.f32.mrb[0].mxu0
        %v1743 = vadd.f32 0.0, %v1742
        %1744 = vdwg.mxu0
        %1745 = vmatprep.subr.bf16.mxu0 %v1671
        %1746 = vmatpush1.bf16.msra.mxu0 %v1670
        %1747 = vmatprep.subr.bf16.mxu0 %v1690
        %1748 = vmatpush1.bf16.msra.mxu0 %v1687
        %1749 = vmatprep.subr.bf16.mxu0 0
        %1750 = vmatpush1.bf16.msra.mxu0 0
        %1751 = vmatprep.subr.bf16.mxu0 0
        %1752 = vmatpush1.bf16.msra.mxu0 0
        %1753 = vmatprep.subr.bf16.mxu0 0
        %1754 = vmatpush1.bf16.msra.mxu0 0
        %1755 = vmatprep.subr.bf16.mxu0 0
        %1756 = vmatpush1.bf16.msra.mxu0 0
        %1757 = vmatprep.subr.bf16.mxu0 0
        %1758 = vmatpush1.bf16.msra.mxu0 0
        %1759 = vmatprep.subr.bf16.mxu0 0
        %1760 = vmatpush1.bf16.msra.mxu0 0
        %1761 = vmatprep.subr.bf16.mxu0 0
        %1762 = vmatpush1.bf16.msra.mxu0 0
        %1763 = vmatprep.subr.bf16.mxu0 0
        %1764 = vmatpush1.bf16.msra.mxu0 0
        %1765 = vmatprep.subr.bf16.mxu0 0
        %1766 = vmatpush1.bf16.msra.mxu0 0
        %1767 = vmatprep.subr.bf16.mxu0 0
        %1768 = vmatpush1.bf16.msra.mxu0 0
        %1769 = vmatprep.subr.bf16.mxu0 0
        %1770 = vmatpush1.bf16.msra.mxu0 0
        %1771 = vmatprep.subr.bf16.mxu0 0
        %1772 = vmatpush1.bf16.msra.mxu0 0
        %1773 = vmatprep.subr.bf16.mxu0 0
        %1774 = vmatpush1.bf16.msra.mxu0 0
        %1775 = vmatprep.subr.bf16.mxu0 0
        %1776 = vmatpush1.bf16.msra.mxu0 0
        %1777 = vmatprep.mubr.bf16.mxu0 0
        %1778 = vmatmul.mubr.bf16.gmra.mrb[0].mxu0 %v1512
        %v1779 = vpop.f32.mrb[0].mxu0
        %v1780 = vadd.f32 0.0, %v1779
        %v1781 = vpop.f32.mrb[0].mxu0
        %v1782 = vadd.f32 0.0, %v1781
        %v1783 = vpop.f32.mrb[0].mxu0
        %v1784 = vadd.f32 0.0, %v1783
        %v1785 = vpop.f32.mrb[0].mxu0
        %v1786 = vadd.f32 0.0, %v1785
        %1787 = vmatprep.mubr.bf16.mxu0 0
        %1788 = vmatmul.mubr.bf16.gmra.mrb[0].mxu0 %v1515
        %v1789 = vpop.f32.mrb[0].mxu0
        %v1790 = vadd.f32 0.0, %v1789
        %v1791 = vpop.f32.mrb[0].mxu0
        %v1792 = vadd.f32 0.0, %v1791
        %v1793 = vpop.f32.mrb[0].mxu0
        %v1794 = vadd.f32 0.0, %v1793
        %v1795 = vpop.f32.mrb[0].mxu0
        %v1796 = vadd.f32 0.0, %v1795
        %1797 = vdwg.mxu0
        %v1798 = vadd.f32 %v1169, %v1564
        %v1799 = vadd.f32 %v1171, %v1566
        %v1800 = vadd.f32 %v1222, %v1617
        %v1801 = vadd.f32 %v1224, %v1619
        %v1802 = vadd.f32 %v1173, %v1568
        %v1803 = vadd.f32 %v1175, %v1570
        %v1804 = vadd.f32 %v1226, %v1621
        %v1805 = vadd.f32 %v1228, %v1623
        %v1806 = vadd.f32 %v1179, %v1574
        %v1807 = vadd.f32 %v1181, %v1576
        %v1808 = vadd.f32 %v1232, %v1627
        %v1809 = vadd.f32 %v1234, %v1629
        %v1810 = vadd.f32 %v1183, %v1578
        %v1811 = vadd.f32 %v1185, %v1580
        %v1812 = vadd.f32 %v1236, %v1631
        %v1813 = vadd.f32 %v1238, %v1633
        %v1814 = vadd.f32 %v1323, %v1727
        %v1815 = vadd.f32 %v1325, %v1729
        %v1816 = vadd.f32 %v1376, %v1780
        %v1817 = vadd.f32 %v1378, %v1782
        %v1818 = vadd.f32 %v1327, %v1731
        %v1819 = vadd.f32 %v1329, %v1733
        %v1820 = vadd.f32 %v1380, %v1784
        %v1821 = vadd.f32 %v1382, %v1786
        %v1822 = vadd.f32 %v1333, %v1737
        %v1823 = vadd.f32 %v1335, %v1739
        %v1824 = vadd.f32 %v1386, %v1790
        %v1825 = vadd.f32 %v1388, %v1792
        %v1826 = vadd.f32 %v1337, %v1741
        %v1827 = vadd.f32 %v1339, %v1743
        %v1828 = vadd.f32 %v1390, %v1794
        %v1829 = vadd.f32 %v1392, %v1796
        %v1830 = vmax.f32 %v1798, %v1814
        %v1831 = vmax.f32 %v1799, %v1815
        %v1832 = vmax.f32 %v1800, %v1816
        %v1833 = vmax.f32 %v1801, %v1817
        %v1834 = vmax.f32 %v1802, %v1818
        %v1835 = vmax.f32 %v1803, %v1819
        %v1836 = vmax.f32 %v1804, %v1820
        %v1837 = vmax.f32 %v1805, %v1821
        %v1838 = vmax.f32 %v1806, %v1822
        %v1839 = vmax.f32 %v1807, %v1823
        %v1840 = vmax.f32 %v1808, %v1824
        %v1841 = vmax.f32 %v1809, %v1825
        %v1842 = vmax.f32 %v1810, %v1826
        %v1843 = vmax.f32 %v1811, %v1827
        %v1844 = vmax.f32 %v1812, %v1828
        %v1845 = vmax.f32 %v1813, %v1829
        %v1846 = vpack.c.bf16 %v1834, %v1830
        %v1847 = vpack.c.bf16 %v1835, %v1831
        %v1848 = vpack.c.bf16 %v1836, %v1832
        %v1849 = vpack.c.bf16 %v1837, %v1833
        %v1850 = vpack.c.bf16 %v1842, %v1838
        %v1851 = vpack.c.bf16 %v1843, %v1839
        %v1852 = vpack.c.bf16 %v1844, %v1840
        %v1853 = vpack.c.bf16 %v1845, %v1841
        %v1854 = vld [vmem:[%s3] sm:$0xf]
        %v1855 = vld [vmem:[%s3 + $0x4] sm:$0x7]
        %v1858 = vunpack.c.l.b16 %v1854
        %v1859 = vunpack.c.l.b16 %v1855
        %v1860 = vpack.c.b16 %v1859, %v1858
        %v1862 = vsel %vm597, %v1860, 0
        %v1865 = vsel %vm604, %v1850, 0
        %v1868 = vsel %vm604, %v1851, 0
        %v1871 = vsel %vm604, %v1852, 0
        %v1874 = vsel %vm604, %v1853, 0
        %1876 = vmatprep.subr.bf16.mxu0 %v1847
        %1877 = vmatpush1.bf16.msra.mxu0 %v1846
        %1878 = vmatprep.subr.bf16.mxu0 %v1868
        %1879 = vmatpush1.bf16.msra.mxu0 %v1865
        %1880 = vmatprep.subr.bf16.mxu0 0
        %1881 = vmatpush1.bf16.msra.mxu0 0
        %1882 = vmatprep.subr.bf16.mxu0 0
        %1883 = vmatpush1.bf16.msra.mxu0 0
        %1884 = vmatprep.subr.bf16.mxu0 0
        %1885 = vmatpush1.bf16.msra.mxu0 0
        %1886 = vmatprep.subr.bf16.mxu0 0
        %1887 = vmatpush1.bf16.msra.mxu0 0
        %1888 = vmatprep.subr.bf16.mxu0 0
        %1889 = vmatpush1.bf16.msra.mxu0 0
        %1890 = vmatprep.subr.bf16.mxu0 0
        %1891 = vmatpush1.bf16.msra.mxu0 0
        %1892 = vmatprep.subr.bf16.mxu0 0
        %1893 = vmatpush1.bf16.msra.mxu0 0
        %1894 = vmatprep.subr.bf16.mxu0 0
        %1895 = vmatpush1.bf16.msra.mxu0 0
        %1896 = vmatprep.subr.bf16.mxu0 0
        %1897 = vmatpush1.bf16.msra.mxu0 0
        %1898 = vmatprep.subr.bf16.mxu0 0
        %1899 = vmatpush1.bf16.msra.mxu0 0
        %1900 = vmatprep.subr.bf16.mxu0 0
        %1901 = vmatpush1.bf16.msra.mxu0 0
        %1902 = vmatprep.subr.bf16.mxu0 0
        %1903 = vmatpush1.bf16.msra.mxu0 0
        %1904 = vmatprep.subr.bf16.mxu0 0
        %1905 = vmatpush1.bf16.msra.mxu0 0
        %1906 = vmatprep.subr.bf16.mxu0 0
        %1907 = vmatpush1.bf16.msra.mxu0 0
        %1908 = vmatprep.mubr.bf16.mxu0 0
        %1909 = vmatmul.mubr.bf16.gmra.mrb[0].mxu0 %v1862
        %v1910 = vpop.f32.mrb[0].mxu0
        %v1911 = vadd.f32 0.0, %v1910
        %v1912 = vpop.f32.mrb[0].mxu0
        %v1913 = vadd.f32 0.0, %v1912
        %v1914 = vpop.f32.mrb[0].mxu0
        %v1915 = vadd.f32 0.0, %v1914
        %v1916 = vpop.f32.mrb[0].mxu0
        %v1917 = vadd.f32 0.0, %v1916
        %1918 = vdwg.mxu0
        %1919 = vmatprep.subr.bf16.mxu0 %v1849
        %1920 = vmatpush1.bf16.msra.mxu0 %v1848
        %1921 = vmatprep.subr.bf16.mxu0 %v1874
        %1922 = vmatpush1.bf16.msra.mxu0 %v1871
        %1923 = vmatprep.subr.bf16.mxu0 0
        %1924 = vmatpush1.bf16.msra.mxu0 0
        %1925 = vmatprep.subr.bf16.mxu0 0
        %1926 = vmatpush1.bf16.msra.mxu0 0
        %1927 = vmatprep.subr.bf16.mxu0 0
        %1928 = vmatpush1.bf16.msra.mxu0 0
        %1929 = vmatprep.subr.bf16.mxu0 0
        %1930 = vmatpush1.bf16.msra.mxu0 0
        %1931 = vmatprep.subr.bf16.mxu0 0
        %1932 = vmatpush1.bf16.msra.mxu0 0
        %1933 = vmatprep.subr.bf16.mxu0 0
        %1934 = vmatpush1.bf16.msra.mxu0 0
        %1935 = vmatprep.subr.bf16.mxu0 0
        %1936 = vmatpush1.bf16.msra.mxu0 0
        %1937 = vmatprep.subr.bf16.mxu0 0
        %1938 = vmatpush1.bf16.msra.mxu0 0
        %1939 = vmatprep.subr.bf16.mxu0 0
        %1940 = vmatpush1.bf16.msra.mxu0 0
        %1941 = vmatprep.subr.bf16.mxu0 0
        %1942 = vmatpush1.bf16.msra.mxu0 0
        %1943 = vmatprep.subr.bf16.mxu0 0
        %1944 = vmatpush1.bf16.msra.mxu0 0
        %1945 = vmatprep.subr.bf16.mxu0 0
        %1946 = vmatpush1.bf16.msra.mxu0 0
        %1947 = vmatprep.subr.bf16.mxu0 0
        %1948 = vmatpush1.bf16.msra.mxu0 0
        %1949 = vmatprep.subr.bf16.mxu0 0
        %1950 = vmatpush1.bf16.msra.mxu0 0
        %1951 = vmatprep.mubr.bf16.mxu0 0
        %1952 = vmatmul.mubr.bf16.gmra.mrb[0].mxu0 %v1862
        %v1953 = vpop.f32.mrb[0].mxu0
        %v1954 = vadd.f32 0.0, %v1953
        %v1955 = vpop.f32.mrb[0].mxu0
        %v1956 = vadd.f32 0.0, %v1955
        %v1957 = vpop.f32.mrb[0].mxu0
        %v1958 = vadd.f32 0.0, %v1957
        %v1959 = vpop.f32.mrb[0].mxu0
        %v1960 = vadd.f32 0.0, %v1959
        %1961 = vdwg.mxu0
        %s1962 = scalar_lea.vmem %s3, 8
        %v1963 = vld [vmem:[%s1962] sm:$0xf]
        %v1964 = vld [vmem:[%s1962 + $0x4] sm:$0x7]
        %v1967 = vunpack.c.l.b16 %v1963
        %v1968 = vunpack.c.l.b16 %v1964
        %v1969 = vpack.c.b16 %v1968, %v1967
        %v1971 = vsel %vm597, %v1969, 0
        %1973 = vmatprep.subr.bf16.mxu0 %v1847
        %1974 = vmatpush1.bf16.msra.mxu0 %v1846
        %1975 = vmatprep.subr.bf16.mxu0 %v1868
        %1976 = vmatpush1.bf16.msra.mxu0 %v1865
        %1977 = vmatprep.subr.bf16.mxu0 0
        %1978 = vmatpush1.bf16.msra.mxu0 0
        %1979 = vmatprep.subr.bf16.mxu0 0
        %1980 = vmatpush1.bf16.msra.mxu0 0
        %1981 = vmatprep.subr.bf16.mxu0 0
        %1982 = vmatpush1.bf16.msra.mxu0 0
        %1983 = vmatprep.subr.bf16.mxu0 0
        %1984 = vmatpush1.bf16.msra.mxu0 0
        %1985 = vmatprep.subr.bf16.mxu0 0
        %1986 = vmatpush1.bf16.msra.mxu0 0
        %1987 = vmatprep.subr.bf16.mxu0 0
        %1988 = vmatpush1.bf16.msra.mxu0 0
        %1989 = vmatprep.subr.bf16.mxu0 0
        %1990 = vmatpush1.bf16.msra.mxu0 0
        %1991 = vmatprep.subr.bf16.mxu0 0
        %1992 = vmatpush1.bf16.msra.mxu0 0
        %1993 = vmatprep.subr.bf16.mxu0 0
        %1994 = vmatpush1.bf16.msra.mxu0 0
        %1995 = vmatprep.subr.bf16.mxu0 0
        %1996 = vmatpush1.bf16.msra.mxu0 0
        %1997 = vmatprep.subr.bf16.mxu0 0
        %1998 = vmatpush1.bf16.msra.mxu0 0
        %1999 = vmatprep.subr.bf16.mxu0 0
        %2000 = vmatpush1.bf16.msra.mxu0 0
        %2001 = vmatprep.subr.bf16.mxu0 0
        %2002 = vmatpush1.bf16.msra.mxu0 0
        %2003 = vmatprep.subr.bf16.mxu0 0
        %2004 = vmatpush1.bf16.msra.mxu0 0
        %2005 = vmatprep.mubr.bf16.mxu0 0
        %2006 = vmatmul.mubr.bf16.gmra.mrb[0].mxu0 %v1971
        %v2007 = vpop.f32.mrb[0].mxu0
        %v2008 = vadd.f32 0.0, %v2007
        %v2009 = vpop.f32.mrb[0].mxu0
        %v2010 = vadd.f32 0.0, %v2009
        %v2011 = vpop.f32.mrb[0].mxu0
        %v2012 = vadd.f32 0.0, %v2011
        %v2013 = vpop.f32.mrb[0].mxu0
        %v2014 = vadd.f32 0.0, %v2013
        %2015 = vdwg.mxu0
        %2016 = vmatprep.subr.bf16.mxu0 %v1849
        %2017 = vmatpush1.bf16.msra.mxu0 %v1848
        %2018 = vmatprep.subr.bf16.mxu0 %v1874
        %2019 = vmatpush1.bf16.msra.mxu0 %v1871
        %2020 = vmatprep.subr.bf16.mxu0 0
        %2021 = vmatpush1.bf16.msra.mxu0 0
        %2022 = vmatprep.subr.bf16.mxu0 0
        %2023 = vmatpush1.bf16.msra.mxu0 0
        %2024 = vmatprep.subr.bf16.mxu0 0
        %2025 = vmatpush1.bf16.msra.mxu0 0
        %2026 = vmatprep.subr.bf16.mxu0 0
        %2027 = vmatpush1.bf16.msra.mxu0 0
        %2028 = vmatprep.subr.bf16.mxu0 0
        %2029 = vmatpush1.bf16.msra.mxu0 0
        %2030 = vmatprep.subr.bf16.mxu0 0
        %2031 = vmatpush1.bf16.msra.mxu0 0
        %2032 = vmatprep.subr.bf16.mxu0 0
        %2033 = vmatpush1.bf16.msra.mxu0 0
        %2034 = vmatprep.subr.bf16.mxu0 0
        %2035 = vmatpush1.bf16.msra.mxu0 0
        %2036 = vmatprep.subr.bf16.mxu0 0
        %2037 = vmatpush1.bf16.msra.mxu0 0
        %2038 = vmatprep.subr.bf16.mxu0 0
        %2039 = vmatpush1.bf16.msra.mxu0 0
        %2040 = vmatprep.subr.bf16.mxu0 0
        %2041 = vmatpush1.bf16.msra.mxu0 0
        %2042 = vmatprep.subr.bf16.mxu0 0
        %2043 = vmatpush1.bf16.msra.mxu0 0
        %2044 = vmatprep.subr.bf16.mxu0 0
        %2045 = vmatpush1.bf16.msra.mxu0 0
        %2046 = vmatprep.subr.bf16.mxu0 0
        %2047 = vmatpush1.bf16.msra.mxu0 0
        %2048 = vmatprep.mubr.bf16.mxu0 0
        %2049 = vmatmul.mubr.bf16.gmra.mrb[0].mxu0 %v1971
        %v2050 = vpop.f32.mrb[0].mxu0
        %v2051 = vadd.f32 0.0, %v2050
        %v2052 = vpop.f32.mrb[0].mxu0
        %v2053 = vadd.f32 0.0, %v2052
        %v2054 = vpop.f32.mrb[0].mxu0
        %v2055 = vadd.f32 0.0, %v2054
        %v2056 = vpop.f32.mrb[0].mxu0
        %v2057 = vadd.f32 0.0, %v2056
        %2058 = vdwg.mxu0
        %v2059 = vmax.f32 %v1911, %v2008
        %v2060 = vmax.f32 %v1913, %v2010
        %v2061 = vmax.f32 %v1954, %v2051
        %v2062 = vmax.f32 %v1956, %v2053
        %v2063 = vmax.f32 %v1915, %v2012
        %v2064 = vmax.f32 %v1917, %v2014
        %v2065 = vmax.f32 %v1958, %v2055
        %v2066 = vmax.f32 %v1960, %v2057
        %v2067 = vld [vmem:[#allocation7] sm:$0xf]
        %v2069 = vlaneseq
        %v2070 = vshrl.u32 %v2069, 7
        %v2071 = vsub.s32 0, %v2070
        %v2072 = vrot.slane %v2067, %v2071
        %v2073 = vlaneseq
        %v2074 = vshrl.u32 %v2073, 7
        %v2075 = vsub.s32 1, %v2074
        %v2076 = vrot.slane %v2067, %v2075
        %v2077 = vlaneseq
        %v2078 = vshrl.u32 %v2077, 7
        %v2079 = vsub.s32 2, %v2078
        %v2080 = vrot.slane %v2067, %v2079
        %v2081 = vlaneseq
        %v2082 = vshrl.u32 %v2081, 7
        %v2083 = vsub.s32 3, %v2082
        %v2084 = vrot.slane %v2067, %v2083
        %v2089 = vadd.f32 %v2059, %v2072
        %v2090 = vadd.f32 %v2060, %v2076
        %v2091 = vadd.f32 %v2061, %v2080
        %v2092 = vadd.f32 %v2062, %v2084
        %v2093 = vadd.f32 %v2063, %v2072
        %v2094 = vadd.f32 %v2064, %v2076
        %v2095 = vadd.f32 %v2065, %v2080
        %v2096 = vadd.f32 %v2066, %v2084
        %v2097 = vmax.f32 %v2089, 0.0
        %v2098 = vmax.f32 %v2090, 0.0
        %v2099 = vmax.f32 %v2091, 0.0
        %v2100 = vmax.f32 %v2092, 0.0
        %v2101 = vmax.f32 %v2093, 0.0
        %v2102 = vmax.f32 %v2094, 0.0
        %v2103 = vmax.f32 %v2095, 0.0
        %v2104 = vmax.f32 %v2096, 0.0
        %v2105 = vpack.c.bf16 %v2101, %v2097
        %v2106 = vpack.c.bf16 %v2102, %v2098
        %v2107 = vpack.c.bf16 %v2103, %v2099
        %v2108 = vpack.c.bf16 %v2104, %v2100
        %v2109 = vld [vmem:[#allocation8] sm:$0xf]
        %v2110 = vld [vmem:[#allocation8 + $0x4] sm:$0x7]
        %v2113 = vunpack.c.l.b16 %v2109
        %v2114 = vunpack.c.l.b16 %v2110
        %v2115 = vpack.c.b16 %v2114, %v2113
        %vm2116 = vcmask 113664
        %v2118 = vsel %vm2116, %v2115, 0
        %vm2120 = vcmask 1046528
        %v2122 = vsel %vm2120, %v2105, 0
        %v2125 = vsel %vm2120, %v2106, 0
        %v2128 = vsel %vm2120, %v2107, 0
        %v2131 = vsel %vm2120, %v2108, 0
        %2133 = vmatprep.subr.bf16.mxu0 %v2125
        %2134 = vmatpush1.bf16.msra.mxu0 %v2122
        %2135 = vmatprep.subr.bf16.mxu0 0
        %2136 = vmatpush1.bf16.msra.mxu0 0
        %2137 = vmatprep.subr.bf16.mxu0 0
        %2138 = vmatpush1.bf16.msra.mxu0 0
        %2139 = vmatprep.subr.bf16.mxu0 0
        %2140 = vmatpush1.bf16.msra.mxu0 0
        %2141 = vmatprep.subr.bf16.mxu0 0
        %2142 = vmatpush1.bf16.msra.mxu0 0
        %2143 = vmatprep.subr.bf16.mxu0 0
        %2144 = vmatpush1.bf16.msra.mxu0 0
        %2145 = vmatprep.subr.bf16.mxu0 0
        %2146 = vmatpush1.bf16.msra.mxu0 0
        %2147 = vmatprep.subr.bf16.mxu0 0
        %2148 = vmatpush1.bf16.msra.mxu0 0
        %2149 = vmatprep.subr.bf16.mxu0 0
        %2150 = vmatpush1.bf16.msra.mxu0 0
        %2151 = vmatprep.subr.bf16.mxu0 0
        %2152 = vmatpush1.bf16.msra.mxu0 0
        %2153 = vmatprep.subr.bf16.mxu0 0
        %2154 = vmatpush1.bf16.msra.mxu0 0
        %2155 = vmatprep.subr.bf16.mxu0 0
        %2156 = vmatpush1.bf16.msra.mxu0 0
        %2157 = vmatprep.subr.bf16.mxu0 0
        %2158 = vmatpush1.bf16.msra.mxu0 0
        %2159 = vmatprep.subr.bf16.mxu0 0
        %2160 = vmatpush1.bf16.msra.mxu0 0
        %2161 = vmatprep.subr.bf16.mxu0 0
        %2162 = vmatpush1.bf16.msra.mxu0 0
        %2163 = vmatprep.subr.bf16.mxu0 0
        %2164 = vmatpush1.bf16.msra.mxu0 0
        %2165 = vmatprep.mubr.bf16.mxu0 0
        %2166 = vmatmul.mubr.bf16.gmra.mrb[0].mxu0 %v2118
        %v2167 = vpop.f32.mrb[0].mxu0
        %v2168 = vadd.f32 0.0, %v2167
        %v2169 = vpop.f32.mrb[0].mxu0
        %v2170 = vadd.f32 0.0, %v2169
        %v2171 = vpop.f32.mrb[0].mxu0
        %v2172 = vadd.f32 0.0, %v2171
        %v2173 = vpop.f32.mrb[0].mxu0
        %v2174 = vadd.f32 0.0, %v2173
        %2175 = vdwg.mxu0
        %2176 = vmatprep.subr.bf16.mxu0 %v2131
        %2177 = vmatpush1.bf16.msra.mxu0 %v2128
        %2178 = vmatprep.subr.bf16.mxu0 0
        %2179 = vmatpush1.bf16.msra.mxu0 0
        %2180 = vmatprep.subr.bf16.mxu0 0
        %2181 = vmatpush1.bf16.msra.mxu0 0
        %2182 = vmatprep.subr.bf16.mxu0 0
        %2183 = vmatpush1.bf16.msra.mxu0 0
        %2184 = vmatprep.subr.bf16.mxu0 0
        %2185 = vmatpush1.bf16.msra.mxu0 0
        %2186 = vmatprep.subr.bf16.mxu0 0
        %2187 = vmatpush1.bf16.msra.mxu0 0
        %2188 = vmatprep.subr.bf16.mxu0 0
        %2189 = vmatpush1.bf16.msra.mxu0 0
        %2190 = vmatprep.subr.bf16.mxu0 0
        %2191 = vmatpush1.bf16.msra.mxu0 0
        %2192 = vmatprep.subr.bf16.mxu0 0
        %2193 = vmatpush1.bf16.msra.mxu0 0
        %2194 = vmatprep.subr.bf16.mxu0 0
        %2195 = vmatpush1.bf16.msra.mxu0 0
        %2196 = vmatprep.subr.bf16.mxu0 0
        %2197 = vmatpush1.bf16.msra.mxu0 0
        %2198 = vmatprep.subr.bf16.mxu0 0
        %2199 = vmatpush1.bf16.msra.mxu0 0
        %2200 = vmatprep.subr.bf16.mxu0 0
        %2201 = vmatpush1.bf16.msra.mxu0 0
        %2202 = vmatprep.subr.bf16.mxu0 0
        %2203 = vmatpush1.bf16.msra.mxu0 0
        %2204 = vmatprep.subr.bf16.mxu0 0
        %2205 = vmatpush1.bf16.msra.mxu0 0
        %2206 = vmatprep.subr.bf16.mxu0 0
        %2207 = vmatpush1.bf16.msra.mxu0 0
        %2208 = vmatprep.mubr.bf16.mxu0 0
        %2209 = vmatmul.mubr.bf16.gmra.mrb[0].mxu0 %v2118
        %v2210 = vpop.f32.mrb[0].mxu0
        %v2211 = vadd.f32 0.0, %v2210
        %v2212 = vpop.f32.mrb[0].mxu0
        %v2213 = vadd.f32 0.0, %v2212
        %v2214 = vpop.f32.mrb[0].mxu0
        %v2215 = vadd.f32 0.0, %v2214
        %v2216 = vpop.f32.mrb[0].mxu0
        %v2217 = vadd.f32 0.0, %v2216
        %2218 = vdwg.mxu0
        %v2219 = vpack.c.bf16 %v2172, %v2168
        %v2220 = vpack.c.bf16 %v2174, %v2170
        %v2221 = vpack.c.bf16 %v2215, %v2211
        %v2222 = vpack.c.bf16 %v2217, %v2213
        %v2223 = vld [vmem:[#allocation10] sm:$0xff]
        %v2224 = vld [vmem:[#allocation10 + $0x8] sm:$0xff]
        %v2225 = vld [vmem:[#allocation10 + $0x10] sm:$0xff]
        %v2226 = vld [vmem:[#allocation10 + $0x18] sm:$0xff]
        %v2227 = vld [vmem:[#allocation10 + $0x20] sm:$0xff]
        %v2228 = vld [vmem:[#allocation10 + $0x28] sm:$0xff]
        %v2229 = vld [vmem:[#allocation10 + $0x30] sm:$0xff]
        %v2230 = vld [vmem:[#allocation10 + $0x38] sm:$0xff]
        %v2231 = vld [vmem:[#allocation10 + $0x40] sm:$0xff]
        %v2232 = vld [vmem:[#allocation10 + $0x48] sm:$0xff]
        %v2233 = vld [vmem:[#allocation10 + $0x50] sm:$0xff]
        %v2234 = vld [vmem:[#allocation10 + $0x58] sm:$0xff]
        %v2235 = vld [vmem:[#allocation10 + $0x60] sm:$0xff]
        %v2236 = vld [vmem:[#allocation10 + $0x68] sm:$0xff]
        %v2237 = vld [vmem:[#allocation10 + $0x70] sm:$0xff]
        %v2238 = vld [vmem:[#allocation10 + $0x78] sm:$0xff]
        %v2239 = vld [vmem:[#allocation10 + $0x80] sm:$0xff]
        %v2240 = vld [vmem:[#allocation10 + $0x88] sm:$0xff]
        %v2241 = vld [vmem:[#allocation10 + $0x90] sm:$0xff]
        %v2242 = vld [vmem:[#allocation10 + $0x98] sm:$0xff]
        %v2243 = vld [vmem:[#allocation10 + $0xa0] sm:$0xff]
        %v2244 = vld [vmem:[#allocation10 + $0xa8] sm:$0xff]
        %v2245 = vld [vmem:[#allocation10 + $0xb0] sm:$0xff]
        %v2246 = vld [vmem:[#allocation10 + $0xb8] sm:$0xff]
        %v2247 = vld [vmem:[#allocation10 + $0xc0] sm:$0xff]
        %v2248 = vld [vmem:[#allocation10 + $0xc8] sm:$0xff]
        %v2249 = vld [vmem:[#allocation10 + $0xd0] sm:$0xff]
        %v2250 = vld [vmem:[#allocation10 + $0xd8] sm:$0xff]
        %v2251 = vld [vmem:[#allocation10 + $0xe0] sm:$0xff]
        %v2252 = vld [vmem:[#allocation10 + $0xe8] sm:$0xff]
        %v2253 = vld [vmem:[#allocation10 + $0xf0] sm:$0xff]
        %v2254 = vld [vmem:[#allocation10 + $0xf8] sm:$0xff]
        %v2255 = vld [vmem:[#allocation10 + $0x100] sm:$0xff]
        %v2256 = vld [vmem:[#allocation10 + $0x108] sm:$0xff]
        %v2257 = vld [vmem:[#allocation10 + $0x110] sm:$0xff]
        %v2258 = vld [vmem:[#allocation10 + $0x118] sm:$0xff]
        %v2259 = vld [vmem:[#allocation10 + $0x120] sm:$0xff]
        %v2260 = vld [vmem:[#allocation10 + $0x128] sm:$0xff]
        %v2261 = vld [vmem:[#allocation10 + $0x130] sm:$0xff]
        %v2262 = vld [vmem:[#allocation10 + $0x138] sm:$0xff]
        %v2263 = vld [vmem:[#allocation10 + $0x140] sm:$0xff]
        %v2264 = vld [vmem:[#allocation10 + $0x148] sm:$0xff]
        %v2265 = vld [vmem:[#allocation10 + $0x150] sm:$0xff]
        %v2266 = vld [vmem:[#allocation10 + $0x158] sm:$0xff]
        %v2267 = vld [vmem:[#allocation10 + $0x160] sm:$0xff]
        %v2268 = vld [vmem:[#allocation10 + $0x168] sm:$0xff]
        %v2269 = vld [vmem:[#allocation10 + $0x170] sm:$0xff]
        %v2270 = vld [vmem:[#allocation10 + $0x178] sm:$0xff]
        %v2271 = vld [vmem:[#allocation10 + $0x180] sm:$0xff]
        %v2272 = vld [vmem:[#allocation10 + $0x188] sm:$0xff]
        %v2273 = vld [vmem:[#allocation10 + $0x190] sm:$0xff]
        %v2274 = vld [vmem:[#allocation10 + $0x198] sm:$0xff]
        %v2275 = vld [vmem:[#allocation10 + $0x1a0] sm:$0xff]
        %v2276 = vld [vmem:[#allocation10 + $0x1a8] sm:$0xff]
        %v2277 = vld [vmem:[#allocation10 + $0x1b0] sm:$0xff]
        %v2278 = vld [vmem:[#allocation10 + $0x1b8] sm:$0xff]
        %v2279 = vld [vmem:[#allocation10 + $0x1c0] sm:$0xff]
        %v2280 = vld [vmem:[#allocation10 + $0x1c8] sm:$0xff]
        %v2281 = vld [vmem:[#allocation10 + $0x1d0] sm:$0xff]
        %v2282 = vld [vmem:[#allocation10 + $0x1d8] sm:$0xff]
        %v2283 = vld [vmem:[#allocation10 + $0x1e0] sm:$0xff]
        %v2284 = vld [vmem:[#allocation10 + $0x1e8] sm:$0xff]
        %v2285 = vld [vmem:[#allocation10 + $0x1f0] sm:$0xff]
        %v2286 = vld [vmem:[#allocation10 + $0x1f8] sm:$0xff]
        %v2287 = vld [vmem:[#allocation10 + $0x200] sm:$0xff]
        %v2288 = vld [vmem:[#allocation10 + $0x208] sm:$0xff]
        %v2289 = vld [vmem:[#allocation10 + $0x210] sm:$0xff]
        %v2290 = vld [vmem:[#allocation10 + $0x218] sm:$0xff]
        %v2291 = vld [vmem:[#allocation10 + $0x220] sm:$0xff]
        %v2292 = vld [vmem:[#allocation10 + $0x228] sm:$0xff]
        %v2293 = vld [vmem:[#allocation10 + $0x230] sm:$0xff]
        %v2294 = vld [vmem:[#allocation10 + $0x238] sm:$0xff]
        %v2295 = vld [vmem:[#allocation10 + $0x240] sm:$0xff]
        %v2296 = vld [vmem:[#allocation10 + $0x248] sm:$0xff]
        %v2297 = vld [vmem:[#allocation10 + $0x250] sm:$0xff]
        %v2298 = vld [vmem:[#allocation10 + $0x258] sm:$0xff]
        %v2299 = vld [vmem:[#allocation10 + $0x260] sm:$0xff]
        %v2300 = vld [vmem:[#allocation10 + $0x268] sm:$0xff]
        %v2301 = vld [vmem:[#allocation10 + $0x270] sm:$0xff]
        %v2302 = vld [vmem:[#allocation10 + $0x278] sm:$0xff]
        %v2303 = vld [vmem:[#allocation10 + $0x280] sm:$0xff]
        %v2304 = vld [vmem:[#allocation10 + $0x288] sm:$0xff]
        %v2305 = vld [vmem:[#allocation10 + $0x290] sm:$0xff]
        %v2306 = vld [vmem:[#allocation10 + $0x298] sm:$0xff]
        %v2307 = vld [vmem:[#allocation10 + $0x2a0] sm:$0xff]
        %v2308 = vld [vmem:[#allocation10 + $0x2a8] sm:$0xff]
        %v2309 = vld [vmem:[#allocation10 + $0x2b0] sm:$0xff]
        %v2310 = vld [vmem:[#allocation10 + $0x2b8] sm:$0xff]
        %v2311 = vld [vmem:[#allocation10 + $0x2c0] sm:$0xff]
        %v2312 = vld [vmem:[#allocation10 + $0x2c8] sm:$0xff]
        %v2313 = vld [vmem:[#allocation10 + $0x2d0] sm:$0xff]
        %v2314 = vld [vmem:[#allocation10 + $0x2d8] sm:$0xff]
        %v2315 = vld [vmem:[#allocation10 + $0x2e0] sm:$0xff]
        %v2316 = vld [vmem:[#allocation10 + $0x2e8] sm:$0xff]
        %v2317 = vld [vmem:[#allocation10 + $0x2f0] sm:$0xff]
        %v2318 = vld [vmem:[#allocation10 + $0x2f8] sm:$0xff]
        %v2319 = vld [vmem:[#allocation10 + $0x300] sm:$0xff]
        %v2320 = vld [vmem:[#allocation10 + $0x308] sm:$0xff]
        %v2321 = vld [vmem:[#allocation10 + $0x310] sm:$0xff]
        %v2322 = vld [vmem:[#allocation10 + $0x318] sm:$0xff]
        %v2323 = vld [vmem:[#allocation10 + $0x320] sm:$0xff]
        %v2324 = vld [vmem:[#allocation10 + $0x328] sm:$0xff]
        %v2325 = vld [vmem:[#allocation10 + $0x330] sm:$0xff]
        %v2326 = vld [vmem:[#allocation10 + $0x338] sm:$0xff]
        %v2327 = vld [vmem:[#allocation10 + $0x340] sm:$0xff]
        %v2328 = vld [vmem:[#allocation10 + $0x348] sm:$0xff]
        %v2329 = vld [vmem:[#allocation10 + $0x350] sm:$0xff]
        %v2330 = vld [vmem:[#allocation10 + $0x358] sm:$0xff]
        %v2331 = vld [vmem:[#allocation10 + $0x360] sm:$0xff]
        %v2332 = vld [vmem:[#allocation10 + $0x368] sm:$0xff]
        %v2333 = vld [vmem:[#allocation10 + $0x370] sm:$0xff]
        %v2334 = vld [vmem:[#allocation10 + $0x378] sm:$0xff]
        %s2335 = scalar_lea.vmem [#allocation10], 2688
        %v2336 = vld [vmem:[%s2335] sm:$0xff]
        %v2337 = vld [vmem:[%s2335 + $0x8] sm:$0xff]
        %v2338 = vld [vmem:[%s2335 + $0x10] sm:$0xff]
        %v2339 = vld [vmem:[%s2335 + $0x18] sm:$0xff]
        %v2340 = vld [vmem:[%s2335 + $0x20] sm:$0xff]
        %v2341 = vld [vmem:[%s2335 + $0x28] sm:$0xff]
        %v2342 = vld [vmem:[%s2335 + $0x30] sm:$0xff]
        %v2343 = vld [vmem:[%s2335 + $0x38] sm:$0xff]
        %v2344 = vld [vmem:[%s2335 + $0x40] sm:$0xff]
        %v2345 = vld [vmem:[%s2335 + $0x48] sm:$0xff]
        %v2346 = vld [vmem:[%s2335 + $0x50] sm:$0xff]
        %v2347 = vld [vmem:[%s2335 + $0x58] sm:$0xff]
        %v2348 = vld [vmem:[%s2335 + $0x60] sm:$0xff]
        %v2349 = vld [vmem:[%s2335 + $0x68] sm:$0xff]
        %v2350 = vld [vmem:[%s2335 + $0x70] sm:$0xff]
        %v2351 = vld [vmem:[%s2335 + $0x78] sm:$0xff]
        %v2352 = vld [vmem:[%s2335 + $0x80] sm:$0xff]
        %v2353 = vld [vmem:[%s2335 + $0x88] sm:$0xff]
        %v2354 = vld [vmem:[%s2335 + $0x90] sm:$0xff]
        %v2355 = vld [vmem:[%s2335 + $0x98] sm:$0xff]
        %v2356 = vld [vmem:[%s2335 + $0xa0] sm:$0xff]
        %v2357 = vld [vmem:[%s2335 + $0xa8] sm:$0xff]
        %v2358 = vld [vmem:[%s2335 + $0xb0] sm:$0xff]
        %v2359 = vld [vmem:[%s2335 + $0xb8] sm:$0xff]
        %v2360 = vld [vmem:[%s2335 + $0xc0] sm:$0xff]
        %v2361 = vld [vmem:[%s2335 + $0xc8] sm:$0xff]
        %v2362 = vld [vmem:[%s2335 + $0xd0] sm:$0xff]
        %v2363 = vld [vmem:[%s2335 + $0xd8] sm:$0xff]
        %v2364 = vld [vmem:[%s2335 + $0xe0] sm:$0xff]
        %v2365 = vld [vmem:[%s2335 + $0xe8] sm:$0xff]
        %v2366 = vld [vmem:[%s2335 + $0xf0] sm:$0xff]
        %v2367 = vld [vmem:[%s2335 + $0xf8] sm:$0xff]
        %v2368 = vld [vmem:[%s2335 + $0x100] sm:$0xff]
        %v2369 = vld [vmem:[%s2335 + $0x108] sm:$0xff]
        %v2370 = vld [vmem:[%s2335 + $0x110] sm:$0xff]
        %v2371 = vld [vmem:[%s2335 + $0x118] sm:$0xff]
        %v2372 = vld [vmem:[%s2335 + $0x120] sm:$0xff]
        %v2373 = vld [vmem:[%s2335 + $0x128] sm:$0xff]
        %v2374 = vld [vmem:[%s2335 + $0x130] sm:$0xff]
        %v2375 = vld [vmem:[%s2335 + $0x138] sm:$0xff]
        %v2376 = vld [vmem:[%s2335 + $0x140] sm:$0xff]
        %v2377 = vld [vmem:[%s2335 + $0x148] sm:$0xff]
        %v2378 = vld [vmem:[%s2335 + $0x150] sm:$0xff]
        %v2379 = vld [vmem:[%s2335 + $0x158] sm:$0xff]
        %v2380 = vld [vmem:[%s2335 + $0x160] sm:$0xff]
        %v2381 = vld [vmem:[%s2335 + $0x168] sm:$0xff]
        %v2382 = vld [vmem:[%s2335 + $0x170] sm:$0xff]
        %v2383 = vld [vmem:[%s2335 + $0x178] sm:$0xff]
        %v2384 = vld [vmem:[%s2335 + $0x180] sm:$0xff]
        %v2385 = vld [vmem:[%s2335 + $0x188] sm:$0xff]
        %v2386 = vld [vmem:[%s2335 + $0x190] sm:$0xff]
        %v2387 = vld [vmem:[%s2335 + $0x198] sm:$0xff]
        %v2388 = vld [vmem:[%s2335 + $0x1a0] sm:$0xff]
        %v2389 = vld [vmem:[%s2335 + $0x1a8] sm:$0xff]
        %v2390 = vld [vmem:[%s2335 + $0x1b0] sm:$0xff]
        %v2391 = vld [vmem:[%s2335 + $0x1b8] sm:$0xff]
        %v2392 = vld [vmem:[%s2335 + $0x1c0] sm:$0xff]
        %v2393 = vld [vmem:[%s2335 + $0x1c8] sm:$0xff]
        %v2394 = vld [vmem:[%s2335 + $0x1d0] sm:$0xff]
        %v2395 = vld [vmem:[%s2335 + $0x1d8] sm:$0xff]
        %v2396 = vld [vmem:[%s2335 + $0x1e0] sm:$0xff]
        %v2397 = vld [vmem:[%s2335 + $0x1e8] sm:$0xff]
        %v2398 = vld [vmem:[%s2335 + $0x1f0] sm:$0xff]
        %v2399 = vld [vmem:[%s2335 + $0x1f8] sm:$0xff]
        %v2400 = vld [vmem:[%s2335 + $0x200] sm:$0xff]
        %v2401 = vld [vmem:[%s2335 + $0x208] sm:$0xff]
        %v2402 = vld [vmem:[%s2335 + $0x210] sm:$0xff]
        %v2403 = vld [vmem:[%s2335 + $0x218] sm:$0xff]
        %v2404 = vld [vmem:[%s2335 + $0x220] sm:$0xff]
        %v2405 = vld [vmem:[%s2335 + $0x228] sm:$0xff]
        %v2406 = vld [vmem:[%s2335 + $0x230] sm:$0xff]
        %v2407 = vld [vmem:[%s2335 + $0x238] sm:$0xff]
        %v2408 = vld [vmem:[%s2335 + $0x240] sm:$0xff]
        %v2409 = vld [vmem:[%s2335 + $0x248] sm:$0xff]
        %v2410 = vld [vmem:[%s2335 + $0x250] sm:$0xff]
        %v2411 = vld [vmem:[%s2335 + $0x258] sm:$0xff]
        %v2412 = vld [vmem:[%s2335 + $0x260] sm:$0xff]
        %v2413 = vld [vmem:[%s2335 + $0x268] sm:$0xff]
        %v2414 = vld [vmem:[%s2335 + $0x270] sm:$0xff]
        %v2415 = vld [vmem:[%s2335 + $0x278] sm:$0xff]
        %v2416 = vld [vmem:[%s2335 + $0x280] sm:$0xff]
        %v2417 = vld [vmem:[%s2335 + $0x288] sm:$0xff]
        %v2418 = vld [vmem:[%s2335 + $0x290] sm:$0xff]
        %v2419 = vld [vmem:[%s2335 + $0x298] sm:$0xff]
        %v2420 = vld [vmem:[%s2335 + $0x2a0] sm:$0xff]
        %v2421 = vld [vmem:[%s2335 + $0x2a8] sm:$0xff]
        %v2422 = vld [vmem:[%s2335 + $0x2b0] sm:$0xff]
        %v2423 = vld [vmem:[%s2335 + $0x2b8] sm:$0xff]
        %v2424 = vld [vmem:[%s2335 + $0x2c0] sm:$0xff]
        %v2425 = vld [vmem:[%s2335 + $0x2c8] sm:$0xff]
        %v2426 = vld [vmem:[%s2335 + $0x2d0] sm:$0xff]
        %v2427 = vld [vmem:[%s2335 + $0x2d8] sm:$0xff]
        %v2428 = vld [vmem:[%s2335 + $0x2e0] sm:$0xff]
        %v2429 = vld [vmem:[%s2335 + $0x2e8] sm:$0xff]
        %v2430 = vld [vmem:[%s2335 + $0x2f0] sm:$0xff]
        %v2431 = vld [vmem:[%s2335 + $0x2f8] sm:$0xff]
        %v2432 = vld [vmem:[%s2335 + $0x300] sm:$0xff]
        %v2433 = vld [vmem:[%s2335 + $0x308] sm:$0xff]
        %v2434 = vld [vmem:[%s2335 + $0x310] sm:$0xff]
        %v2435 = vld [vmem:[%s2335 + $0x318] sm:$0xff]
        %v2436 = vld [vmem:[%s2335 + $0x320] sm:$0xff]
        %v2437 = vld [vmem:[%s2335 + $0x328] sm:$0xff]
        %v2438 = vld [vmem:[%s2335 + $0x330] sm:$0xff]
        %v2439 = vld [vmem:[%s2335 + $0x338] sm:$0xff]
        %v2440 = vld [vmem:[%s2335 + $0x340] sm:$0xff]
        %v2441 = vld [vmem:[%s2335 + $0x348] sm:$0xff]
        %v2442 = vld [vmem:[%s2335 + $0x350] sm:$0xff]
        %v2443 = vld [vmem:[%s2335 + $0x358] sm:$0xff]
        %v2444 = vld [vmem:[%s2335 + $0x360] sm:$0xff]
        %v2445 = vld [vmem:[%s2335 + $0x368] sm:$0xff]
        %v2446 = vld [vmem:[%s2335 + $0x370] sm:$0xff]
        %v2447 = vld [vmem:[%s2335 + $0x378] sm:$0xff]
        %s2448 = scalar_lea.vmem [#allocation8], 8
        %v2449 = vld [vmem:[%s2448] sm:$0xf]
        %v2450 = vld [vmem:[%s2448 + $0x4] sm:$0x7]
        %v2453 = vunpack.c.l.b16 %v2449
        %v2454 = vunpack.c.l.b16 %v2450
        %v2455 = vpack.c.b16 %v2454, %v2453
        %v2457 = vsel %vm2116, %v2455, 0
        %2459 = vmatprep.subr.bf16.mxu0 %v2125
        %2460 = vmatpush1.bf16.msra.mxu0 %v2122
        %2461 = vmatprep.subr.bf16.mxu0 0
        %2462 = vmatpush1.bf16.msra.mxu0 0
        %2463 = vmatprep.subr.bf16.mxu0 0
        %2464 = vmatpush1.bf16.msra.mxu0 0
        %2465 = vmatprep.subr.bf16.mxu0 0
        %2466 = vmatpush1.bf16.msra.mxu0 0
        %2467 = vmatprep.subr.bf16.mxu0 0
        %2468 = vmatpush1.bf16.msra.mxu0 0
        %2469 = vmatprep.subr.bf16.mxu0 0
        %2470 = vmatpush1.bf16.msra.mxu0 0
        %2471 = vmatprep.subr.bf16.mxu0 0
        %2472 = vmatpush1.bf16.msra.mxu0 0
        %2473 = vmatprep.subr.bf16.mxu0 0
        %2474 = vmatpush1.bf16.msra.mxu0 0
        %2475 = vmatprep.subr.bf16.mxu0 0
        %2476 = vmatpush1.bf16.msra.mxu0 0
        %2477 = vmatprep.subr.bf16.mxu0 0
        %2478 = vmatpush1.bf16.msra.mxu0 0
        %2479 = vmatprep.subr.bf16.mxu0 0
        %2480 = vmatpush1.bf16.msra.mxu0 0
        %2481 = vmatprep.subr.bf16.mxu0 0
        %2482 = vmatpush1.bf16.msra.mxu0 0
        %2483 = vmatprep.subr.bf16.mxu0 0
        %2484 = vmatpush1.bf16.msra.mxu0 0
        %2485 = vmatprep.subr.bf16.mxu0 0
        %2486 = vmatpush1.bf16.msra.mxu0 0
        %2487 = vmatprep.subr.bf16.mxu0 0
        %2488 = vmatpush1.bf16.msra.mxu0 0
        %2489 = vmatprep.subr.bf16.mxu0 0
        %2490 = vmatpush1.bf16.msra.mxu0 0
        %2491 = vmatprep.mubr.bf16.mxu0 0
        %2492 = vmatmul.mubr.bf16.gmra.mrb[0].mxu0 %v2457
        %v2493 = vpop.f32.mrb[0].mxu0
        %v2494 = vadd.f32 0.0, %v2493
        %v2495 = vpop.f32.mrb[0].mxu0
        %v2496 = vadd.f32 0.0, %v2495
        %v2497 = vpop.f32.mrb[0].mxu0
        %v2498 = vadd.f32 0.0, %v2497
        %v2499 = vpop.f32.mrb[0].mxu0
        %v2500 = vadd.f32 0.0, %v2499
        %2501 = vdwg.mxu0
        %2502 = vmatprep.subr.bf16.mxu0 %v2131
        %2503 = vmatpush1.bf16.msra.mxu0 %v2128
        %2504 = vmatprep.subr.bf16.mxu0 0
        %2505 = vmatpush1.bf16.msra.mxu0 0
        %2506 = vmatprep.subr.bf16.mxu0 0
        %2507 = vmatpush1.bf16.msra.mxu0 0
        %2508 = vmatprep.subr.bf16.mxu0 0
        %2509 = vmatpush1.bf16.msra.mxu0 0
        %2510 = vmatprep.subr.bf16.mxu0 0
        %2511 = vmatpush1.bf16.msra.mxu0 0
        %2512 = vmatprep.subr.bf16.mxu0 0
        %2513 = vmatpush1.bf16.msra.mxu0 0
        %2514 = vmatprep.subr.bf16.mxu0 0
        %2515 = vmatpush1.bf16.msra.mxu0 0
        %2516 = vmatprep.subr.bf16.mxu0 0
        %2517 = vmatpush1.bf16.msra.mxu0 0
        %2518 = vmatprep.subr.bf16.mxu0 0
        %2519 = vmatpush1.bf16.msra.mxu0 0
        %2520 = vmatprep.subr.bf16.mxu0 0
        %2521 = vmatpush1.bf16.msra.mxu0 0
        %2522 = vmatprep.subr.bf16.mxu0 0
        %2523 = vmatpush1.bf16.msra.mxu0 0
        %2524 = vmatprep.subr.bf16.mxu0 0
        %2525 = vmatpush1.bf16.msra.mxu0 0
        %2526 = vmatprep.subr.bf16.mxu0 0
        %2527 = vmatpush1.bf16.msra.mxu0 0
        %2528 = vmatprep.subr.bf16.mxu0 0
        %2529 = vmatpush1.bf16.msra.mxu0 0
        %2530 = vmatprep.subr.bf16.mxu0 0
        %2531 = vmatpush1.bf16.msra.mxu0 0
        %2532 = vmatprep.subr.bf16.mxu0 0
        %2533 = vmatpush1.bf16.msra.mxu0 0
        %2534 = vmatprep.mubr.bf16.mxu0 0
        %2535 = vmatmul.mubr.bf16.gmra.mrb[0].mxu0 %v2457
        %v2536 = vpop.f32.mrb[0].mxu0
        %v2537 = vadd.f32 0.0, %v2536
        %v2538 = vpop.f32.mrb[0].mxu0
        %v2539 = vadd.f32 0.0, %v2538
        %v2540 = vpop.f32.mrb[0].mxu0
        %v2541 = vadd.f32 0.0, %v2540
        %v2542 = vpop.f32.mrb[0].mxu0
        %v2543 = vadd.f32 0.0, %v2542
        %2544 = vdwg.mxu0
        %v2545 = vpack.c.bf16 %v2498, %v2494
        %v2546 = vpack.c.bf16 %v2500, %v2496
        %v2547 = vpack.c.bf16 %v2541, %v2537
        %v2548 = vpack.c.bf16 %v2543, %v2539
        %s2549 = scalar_lea.vmem [#allocation10], 896
        %v2550 = vld [vmem:[%s2549] sm:$0xff]
        %v2551 = vld [vmem:[%s2549 + $0x8] sm:$0xff]
        %v2552 = vld [vmem:[%s2549 + $0x10] sm:$0xff]
        %v2553 = vld [vmem:[%s2549 + $0x18] sm:$0xff]
        %v2554 = vld [vmem:[%s2549 + $0x20] sm:$0xff]
        %v2555 = vld [vmem:[%s2549 + $0x28] sm:$0xff]
        %v2556 = vld [vmem:[%s2549 + $0x30] sm:$0xff]
        %v2557 = vld [vmem:[%s2549 + $0x38] sm:$0xff]
        %v2558 = vld [vmem:[%s2549 + $0x40] sm:$0xff]
        %v2559 = vld [vmem:[%s2549 + $0x48] sm:$0xff]
        %v2560 = vld [vmem:[%s2549 + $0x50] sm:$0xff]
        %v2561 = vld [vmem:[%s2549 + $0x58] sm:$0xff]
        %v2562 = vld [vmem:[%s2549 + $0x60] sm:$0xff]
        %v2563 = vld [vmem:[%s2549 + $0x68] sm:$0xff]
        %v2564 = vld [vmem:[%s2549 + $0x70] sm:$0xff]
        %v2565 = vld [vmem:[%s2549 + $0x78] sm:$0xff]
        %v2566 = vld [vmem:[%s2549 + $0x80] sm:$0xff]
        %v2567 = vld [vmem:[%s2549 + $0x88] sm:$0xff]
        %v2568 = vld [vmem:[%s2549 + $0x90] sm:$0xff]
        %v2569 = vld [vmem:[%s2549 + $0x98] sm:$0xff]
        %v2570 = vld [vmem:[%s2549 + $0xa0] sm:$0xff]
        %v2571 = vld [vmem:[%s2549 + $0xa8] sm:$0xff]
        %v2572 = vld [vmem:[%s2549 + $0xb0] sm:$0xff]
        %v2573 = vld [vmem:[%s2549 + $0xb8] sm:$0xff]
        %v2574 = vld [vmem:[%s2549 + $0xc0] sm:$0xff]
        %v2575 = vld [vmem:[%s2549 + $0xc8] sm:$0xff]
        %v2576 = vld [vmem:[%s2549 + $0xd0] sm:$0xff]
        %v2577 = vld [vmem:[%s2549 + $0xd8] sm:$0xff]
        %v2578 = vld [vmem:[%s2549 + $0xe0] sm:$0xff]
        %v2579 = vld [vmem:[%s2549 + $0xe8] sm:$0xff]
        %v2580 = vld [vmem:[%s2549 + $0xf0] sm:$0xff]
        %v2581 = vld [vmem:[%s2549 + $0xf8] sm:$0xff]
        %v2582 = vld [vmem:[%s2549 + $0x100] sm:$0xff]
        %v2583 = vld [vmem:[%s2549 + $0x108] sm:$0xff]
        %v2584 = vld [vmem:[%s2549 + $0x110] sm:$0xff]
        %v2585 = vld [vmem:[%s2549 + $0x118] sm:$0xff]
        %v2586 = vld [vmem:[%s2549 + $0x120] sm:$0xff]
        %v2587 = vld [vmem:[%s2549 + $0x128] sm:$0xff]
        %v2588 = vld [vmem:[%s2549 + $0x130] sm:$0xff]
        %v2589 = vld [vmem:[%s2549 + $0x138] sm:$0xff]
        %v2590 = vld [vmem:[%s2549 + $0x140] sm:$0xff]
        %v2591 = vld [vmem:[%s2549 + $0x148] sm:$0xff]
        %v2592 = vld [vmem:[%s2549 + $0x150] sm:$0xff]
        %v2593 = vld [vmem:[%s2549 + $0x158] sm:$0xff]
        %v2594 = vld [vmem:[%s2549 + $0x160] sm:$0xff]
        %v2595 = vld [vmem:[%s2549 + $0x168] sm:$0xff]
        %v2596 = vld [vmem:[%s2549 + $0x170] sm:$0xff]
        %v2597 = vld [vmem:[%s2549 + $0x178] sm:$0xff]
        %v2598 = vld [vmem:[%s2549 + $0x180] sm:$0xff]
        %v2599 = vld [vmem:[%s2549 + $0x188] sm:$0xff]
        %v2600 = vld [vmem:[%s2549 + $0x190] sm:$0xff]
        %v2601 = vld [vmem:[%s2549 + $0x198] sm:$0xff]
        %v2602 = vld [vmem:[%s2549 + $0x1a0] sm:$0xff]
        %v2603 = vld [vmem:[%s2549 + $0x1a8] sm:$0xff]
        %v2604 = vld [vmem:[%s2549 + $0x1b0] sm:$0xff]
        %v2605 = vld [vmem:[%s2549 + $0x1b8] sm:$0xff]
        %v2606 = vld [vmem:[%s2549 + $0x1c0] sm:$0xff]
        %v2607 = vld [vmem:[%s2549 + $0x1c8] sm:$0xff]
        %v2608 = vld [vmem:[%s2549 + $0x1d0] sm:$0xff]
        %v2609 = vld [vmem:[%s2549 + $0x1d8] sm:$0xff]
        %v2610 = vld [vmem:[%s2549 + $0x1e0] sm:$0xff]
        %v2611 = vld [vmem:[%s2549 + $0x1e8] sm:$0xff]
        %v2612 = vld [vmem:[%s2549 + $0x1f0] sm:$0xff]
        %v2613 = vld [vmem:[%s2549 + $0x1f8] sm:$0xff]
        %v2614 = vld [vmem:[%s2549 + $0x200] sm:$0xff]
        %v2615 = vld [vmem:[%s2549 + $0x208] sm:$0xff]
        %v2616 = vld [vmem:[%s2549 + $0x210] sm:$0xff]
        %v2617 = vld [vmem:[%s2549 + $0x218] sm:$0xff]
        %v2618 = vld [vmem:[%s2549 + $0x220] sm:$0xff]
        %v2619 = vld [vmem:[%s2549 + $0x228] sm:$0xff]
        %v2620 = vld [vmem:[%s2549 + $0x230] sm:$0xff]
        %v2621 = vld [vmem:[%s2549 + $0x238] sm:$0xff]
        %v2622 = vld [vmem:[%s2549 + $0x240] sm:$0xff]
        %v2623 = vld [vmem:[%s2549 + $0x248] sm:$0xff]
        %v2624 = vld [vmem:[%s2549 + $0x250] sm:$0xff]
        %v2625 = vld [vmem:[%s2549 + $0x258] sm:$0xff]
        %v2626 = vld [vmem:[%s2549 + $0x260] sm:$0xff]
        %v2627 = vld [vmem:[%s2549 + $0x268] sm:$0xff]
        %v2628 = vld [vmem:[%s2549 + $0x270] sm:$0xff]
        %v2629 = vld [vmem:[%s2549 + $0x278] sm:$0xff]
        %v2630 = vld [vmem:[%s2549 + $0x280] sm:$0xff]
        %v2631 = vld [vmem:[%s2549 + $0x288] sm:$0xff]
        %v2632 = vld [vmem:[%s2549 + $0x290] sm:$0xff]
        %v2633 = vld [vmem:[%s2549 + $0x298] sm:$0xff]
        %v2634 = vld [vmem:[%s2549 + $0x2a0] sm:$0xff]
        %v2635 = vld [vmem:[%s2549 + $0x2a8] sm:$0xff]
        %v2636 = vld [vmem:[%s2549 + $0x2b0] sm:$0xff]
        %v2637 = vld [vmem:[%s2549 + $0x2b8] sm:$0xff]
        %v2638 = vld [vmem:[%s2549 + $0x2c0] sm:$0xff]
        %v2639 = vld [vmem:[%s2549 + $0x2c8] sm:$0xff]
        %v2640 = vld [vmem:[%s2549 + $0x2d0] sm:$0xff]
        %v2641 = vld [vmem:[%s2549 + $0x2d8] sm:$0xff]
        %v2642 = vld [vmem:[%s2549 + $0x2e0] sm:$0xff]
        %v2643 = vld [vmem:[%s2549 + $0x2e8] sm:$0xff]
        %v2644 = vld [vmem:[%s2549 + $0x2f0] sm:$0xff]
        %v2645 = vld [vmem:[%s2549 + $0x2f8] sm:$0xff]
        %v2646 = vld [vmem:[%s2549 + $0x300] sm:$0xff]
        %v2647 = vld [vmem:[%s2549 + $0x308] sm:$0xff]
        %v2648 = vld [vmem:[%s2549 + $0x310] sm:$0xff]
        %v2649 = vld [vmem:[%s2549 + $0x318] sm:$0xff]
        %v2650 = vld [vmem:[%s2549 + $0x320] sm:$0xff]
        %v2651 = vld [vmem:[%s2549 + $0x328] sm:$0xff]
        %v2652 = vld [vmem:[%s2549 + $0x330] sm:$0xff]
        %v2653 = vld [vmem:[%s2549 + $0x338] sm:$0xff]
        %v2654 = vld [vmem:[%s2549 + $0x340] sm:$0xff]
        %v2655 = vld [vmem:[%s2549 + $0x348] sm:$0xff]
        %v2656 = vld [vmem:[%s2549 + $0x350] sm:$0xff]
        %v2657 = vld [vmem:[%s2549 + $0x358] sm:$0xff]
        %v2658 = vld [vmem:[%s2549 + $0x360] sm:$0xff]
        %v2659 = vld [vmem:[%s2549 + $0x368] sm:$0xff]
        %v2660 = vld [vmem:[%s2549 + $0x370] sm:$0xff]
        %v2661 = vld [vmem:[%s2549 + $0x378] sm:$0xff]
        %v2774 = vunpack.c.l.b16 %v2550
        %v2775 = vunpack.c.h.b16 %v2550
        %v2776 = vunpack.c.l.b16 %v2551
        %v2777 = vunpack.c.h.b16 %v2551
        %v2778 = vunpack.c.l.b16 %v2552
        %v2779 = vunpack.c.h.b16 %v2552
        %v2780 = vunpack.c.l.b16 %v2553
        %v2781 = vunpack.c.h.b16 %v2553
        %v2782 = vunpack.c.l.b16 %v2554
        %v2783 = vunpack.c.h.b16 %v2554
        %v2784 = vunpack.c.l.b16 %v2555
        %v2785 = vunpack.c.h.b16 %v2555
        %v2786 = vunpack.c.l.b16 %v2556
        %v2787 = vunpack.c.h.b16 %v2556
        %v2788 = vunpack.c.l.b16 %v2557
        %v2789 = vunpack.c.h.b16 %v2557
        %v2790 = vunpack.c.l.b16 %v2558
        %v2791 = vunpack.c.h.b16 %v2558
        %v2792 = vunpack.c.l.b16 %v2559
        %v2793 = vunpack.c.h.b16 %v2559
        %v2794 = vunpack.c.l.b16 %v2560
        %v2795 = vunpack.c.h.b16 %v2560
        %v2796 = vunpack.c.l.b16 %v2561
        %v2797 = vunpack.c.h.b16 %v2561
        %v2798 = vunpack.c.l.b16 %v2562
        %v2799 = vunpack.c.h.b16 %v2562
        %v2800 = vunpack.c.l.b16 %v2563
        %v2801 = vunpack.c.h.b16 %v2563
        %v2802 = vunpack.c.l.b16 %v2564
        %v2803 = vunpack.c.h.b16 %v2564
        %v2804 = vunpack.c.l.b16 %v2565
        %v2805 = vunpack.c.h.b16 %v2565
        %v2806 = vunpack.c.l.b16 %v2566
        %v2807 = vunpack.c.h.b16 %v2566
        %v2808 = vunpack.c.l.b16 %v2567
        %v2809 = vunpack.c.h.b16 %v2567
        %v2810 = vunpack.c.l.b16 %v2568
        %v2811 = vunpack.c.h.b16 %v2568
        %v2812 = vunpack.c.l.b16 %v2569
        %v2813 = vunpack.c.h.b16 %v2569
        %v2814 = vunpack.c.l.b16 %v2570
        %v2815 = vunpack.c.h.b16 %v2570
        %v2816 = vunpack.c.l.b16 %v2571
        %v2817 = vunpack.c.h.b16 %v2571
        %v2818 = vunpack.c.l.b16 %v2572
        %v2819 = vunpack.c.h.b16 %v2572
        %v2820 = vunpack.c.l.b16 %v2573
        %v2821 = vunpack.c.h.b16 %v2573
        %v2822 = vunpack.c.l.b16 %v2574
        %v2823 = vunpack.c.h.b16 %v2574
        %v2824 = vunpack.c.l.b16 %v2575
        %v2825 = vunpack.c.h.b16 %v2575
        %v2826 = vunpack.c.l.b16 %v2576
        %v2827 = vunpack.c.h.b16 %v2576
        %v2828 = vunpack.c.l.b16 %v2577
        %v2829 = vunpack.c.h.b16 %v2577
        %v2830 = vunpack.c.l.b16 %v2578
        %v2831 = vunpack.c.h.b16 %v2578
        %v2832 = vunpack.c.l.b16 %v2579
        %v2833 = vunpack.c.h.b16 %v2579
        %v2834 = vunpack.c.l.b16 %v2580
        %v2835 = vunpack.c.h.b16 %v2580
        %v2836 = vunpack.c.l.b16 %v2581
        %v2837 = vunpack.c.h.b16 %v2581
        %v2838 = vunpack.c.l.b16 %v2582
        %v2839 = vunpack.c.h.b16 %v2582
        %v2840 = vunpack.c.l.b16 %v2583
        %v2841 = vunpack.c.h.b16 %v2583
        %v2842 = vunpack.c.l.b16 %v2584
        %v2843 = vunpack.c.h.b16 %v2584
        %v2844 = vunpack.c.l.b16 %v2585
        %v2845 = vunpack.c.h.b16 %v2585
        %v2846 = vunpack.c.l.b16 %v2586
        %v2847 = vunpack.c.h.b16 %v2586
        %v2848 = vunpack.c.l.b16 %v2587
        %v2849 = vunpack.c.h.b16 %v2587
        %v2850 = vunpack.c.l.b16 %v2588
        %v2851 = vunpack.c.h.b16 %v2588
        %v2852 = vunpack.c.l.b16 %v2589
        %v2853 = vunpack.c.h.b16 %v2589
        %v2854 = vunpack.c.l.b16 %v2590
        %v2855 = vunpack.c.h.b16 %v2590
        %v2856 = vunpack.c.l.b16 %v2591
        %v2857 = vunpack.c.h.b16 %v2591
        %v2858 = vunpack.c.l.b16 %v2592
        %v2859 = vunpack.c.h.b16 %v2592
        %v2860 = vunpack.c.l.b16 %v2593
        %v2861 = vunpack.c.h.b16 %v2593
        %v2862 = vunpack.c.l.b16 %v2594
        %v2863 = vunpack.c.h.b16 %v2594
        %v2864 = vunpack.c.l.b16 %v2595
        %v2865 = vunpack.c.h.b16 %v2595
        %v2866 = vunpack.c.l.b16 %v2596
        %v2867 = vunpack.c.h.b16 %v2596
        %v2868 = vunpack.c.l.b16 %v2597
        %v2869 = vunpack.c.h.b16 %v2597
        %v2870 = vunpack.c.l.b16 %v2598
        %v2871 = vunpack.c.h.b16 %v2598
        %v2872 = vunpack.c.l.b16 %v2599
        %v2873 = vunpack.c.h.b16 %v2599
        %v2874 = vunpack.c.l.b16 %v2600
        %v2875 = vunpack.c.h.b16 %v2600
        %v2876 = vunpack.c.l.b16 %v2601
        %v2877 = vunpack.c.h.b16 %v2601
        %v2878 = vunpack.c.l.b16 %v2602
        %v2879 = vunpack.c.h.b16 %v2602
        %v2880 = vunpack.c.l.b16 %v2603
        %v2881 = vunpack.c.h.b16 %v2603
        %v2882 = vunpack.c.l.b16 %v2604
        %v2883 = vunpack.c.h.b16 %v2604
        %v2884 = vunpack.c.l.b16 %v2605
        %v2885 = vunpack.c.h.b16 %v2605
        %v2886 = vunpack.c.l.b16 %v2606
        %v2887 = vunpack.c.h.b16 %v2606
        %v2888 = vunpack.c.l.b16 %v2607
        %v2889 = vunpack.c.h.b16 %v2607
        %v2890 = vunpack.c.l.b16 %v2608
        %v2891 = vunpack.c.h.b16 %v2608
        %v2892 = vunpack.c.l.b16 %v2609
        %v2893 = vunpack.c.h.b16 %v2609
        %v2894 = vunpack.c.l.b16 %v2610
        %v2895 = vunpack.c.h.b16 %v2610
        %v2896 = vunpack.c.l.b16 %v2611
        %v2897 = vunpack.c.h.b16 %v2611
        %v2898 = vunpack.c.l.b16 %v2612
        %v2899 = vunpack.c.h.b16 %v2612
        %v2900 = vunpack.c.l.b16 %v2613
        %v2901 = vunpack.c.h.b16 %v2613
        %v2902 = vunpack.c.l.b16 %v2614
        %v2903 = vunpack.c.h.b16 %v2614
        %v2904 = vunpack.c.l.b16 %v2615
        %v2905 = vunpack.c.h.b16 %v2615
        %v2906 = vunpack.c.l.b16 %v2616
        %v2907 = vunpack.c.h.b16 %v2616
        %v2908 = vunpack.c.l.b16 %v2617
        %v2909 = vunpack.c.h.b16 %v2617
        %v2910 = vunpack.c.l.b16 %v2618
        %v2911 = vunpack.c.h.b16 %v2618
        %v2912 = vunpack.c.l.b16 %v2619
        %v2913 = vunpack.c.h.b16 %v2619
        %v2914 = vunpack.c.l.b16 %v2620
        %v2915 = vunpack.c.h.b16 %v2620
        %v2916 = vunpack.c.l.b16 %v2621
        %v2917 = vunpack.c.h.b16 %v2621
        %v2918 = vunpack.c.l.b16 %v2622
        %v2919 = vunpack.c.h.b16 %v2622
        %v2920 = vunpack.c.l.b16 %v2623
        %v2921 = vunpack.c.h.b16 %v2623
        %v2922 = vunpack.c.l.b16 %v2624
        %v2923 = vunpack.c.h.b16 %v2624
        %v2924 = vunpack.c.l.b16 %v2625
        %v2925 = vunpack.c.h.b16 %v2625
        %v2926 = vunpack.c.l.b16 %v2626
        %v2927 = vunpack.c.h.b16 %v2626
        %v2928 = vunpack.c.l.b16 %v2627
        %v2929 = vunpack.c.h.b16 %v2627
        %v2930 = vunpack.c.l.b16 %v2628
        %v2931 = vunpack.c.h.b16 %v2628
        %v2932 = vunpack.c.l.b16 %v2629
        %v2933 = vunpack.c.h.b16 %v2629
        %v2934 = vunpack.c.l.b16 %v2630
        %v2935 = vunpack.c.h.b16 %v2630
        %v2936 = vunpack.c.l.b16 %v2631
        %v2937 = vunpack.c.h.b16 %v2631
        %v2938 = vunpack.c.l.b16 %v2632
        %v2939 = vunpack.c.h.b16 %v2632
        %v2940 = vunpack.c.l.b16 %v2633
        %v2941 = vunpack.c.h.b16 %v2633
        %v2942 = vunpack.c.l.b16 %v2634
        %v2943 = vunpack.c.h.b16 %v2634
        %v2944 = vunpack.c.l.b16 %v2635
        %v2945 = vunpack.c.h.b16 %v2635
        %v2946 = vunpack.c.l.b16 %v2636
        %v2947 = vunpack.c.h.b16 %v2636
        %v2948 = vunpack.c.l.b16 %v2637
        %v2949 = vunpack.c.h.b16 %v2637
        %v2950 = vunpack.c.l.b16 %v2638
        %v2951 = vunpack.c.h.b16 %v2638
        %v2952 = vunpack.c.l.b16 %v2639
        %v2953 = vunpack.c.h.b16 %v2639
        %v2954 = vunpack.c.l.b16 %v2640
        %v2955 = vunpack.c.h.b16 %v2640
        %v2956 = vunpack.c.l.b16 %v2641
        %v2957 = vunpack.c.h.b16 %v2641
        %v2958 = vunpack.c.l.b16 %v2642
        %v2959 = vunpack.c.h.b16 %v2642
        %v2960 = vunpack.c.l.b16 %v2643
        %v2961 = vunpack.c.h.b16 %v2643
        %v2962 = vunpack.c.l.b16 %v2644
        %v2963 = vunpack.c.h.b16 %v2644
        %v2964 = vunpack.c.l.b16 %v2645
        %v2965 = vunpack.c.h.b16 %v2645
        %v2966 = vunpack.c.l.b16 %v2646
        %v2967 = vunpack.c.h.b16 %v2646
        %v2968 = vunpack.c.l.b16 %v2647
        %v2969 = vunpack.c.h.b16 %v2647
        %v2970 = vunpack.c.l.b16 %v2648
        %v2971 = vunpack.c.h.b16 %v2648
        %v2972 = vunpack.c.l.b16 %v2649
        %v2973 = vunpack.c.h.b16 %v2649
        %v2974 = vunpack.c.l.b16 %v2650
        %v2975 = vunpack.c.h.b16 %v2650
        %v2976 = vunpack.c.l.b16 %v2651
        %v2977 = vunpack.c.h.b16 %v2651
        %v2978 = vunpack.c.l.b16 %v2652
        %v2979 = vunpack.c.h.b16 %v2652
        %v2980 = vunpack.c.l.b16 %v2653
        %v2981 = vunpack.c.h.b16 %v2653
        %v2982 = vunpack.c.l.b16 %v2654
        %v2983 = vunpack.c.h.b16 %v2654
        %v2984 = vunpack.c.l.b16 %v2655
        %v2985 = vunpack.c.h.b16 %v2655
        %v2986 = vunpack.c.l.b16 %v2656
        %v2987 = vunpack.c.h.b16 %v2656
        %v2988 = vunpack.c.l.b16 %v2657
        %v2989 = vunpack.c.h.b16 %v2657
        %v2990 = vunpack.c.l.b16 %v2658
        %v2991 = vunpack.c.h.b16 %v2658
        %v2992 = vunpack.c.l.b16 %v2659
        %v2993 = vunpack.c.h.b16 %v2659
        %v2994 = vunpack.c.l.b16 %v2660
        %v2995 = vunpack.c.h.b16 %v2660
        %v2996 = vunpack.c.l.b16 %v2661
        %v2997 = vunpack.c.h.b16 %v2661
        %v2998 = vpack.c.b16 %v2778, %v2774
        %v2999 = vpack.c.b16 %v2779, %v2775
        %v3000 = vpack.c.b16 %v2780, %v2776
        %v3001 = vpack.c.b16 %v2781, %v2777
        %v3002 = vpack.c.b16 %v2786, %v2782
        %v3003 = vpack.c.b16 %v2787, %v2783
        %v3004 = vpack.c.b16 %v2788, %v2784
        %v3005 = vpack.c.b16 %v2789, %v2785
        %v3006 = vpack.c.b16 %v2794, %v2790
        %v3007 = vpack.c.b16 %v2795, %v2791
        %v3008 = vpack.c.b16 %v2796, %v2792
        %v3009 = vpack.c.b16 %v2797, %v2793
        %v3010 = vpack.c.b16 %v2802, %v2798
        %v3011 = vpack.c.b16 %v2803, %v2799
        %v3012 = vpack.c.b16 %v2804, %v2800
        %v3013 = vpack.c.b16 %v2805, %v2801
        %v3014 = vpack.c.b16 %v2810, %v2806
        %v3015 = vpack.c.b16 %v2811, %v2807
        %v3016 = vpack.c.b16 %v2812, %v2808
        %v3017 = vpack.c.b16 %v2813, %v2809
        %v3018 = vpack.c.b16 %v2818, %v2814
        %v3019 = vpack.c.b16 %v2819, %v2815
        %v3020 = vpack.c.b16 %v2820, %v2816
        %v3021 = vpack.c.b16 %v2821, %v2817
        %v3022 = vpack.c.b16 %v2826, %v2822
        %v3023 = vpack.c.b16 %v2827, %v2823
        %v3024 = vpack.c.b16 %v2828, %v2824
        %v3025 = vpack.c.b16 %v2829, %v2825
        %v3026 = vpack.c.b16 %v2834, %v2830
        %v3027 = vpack.c.b16 %v2835, %v2831
        %v3028 = vpack.c.b16 %v2836, %v2832
        %v3029 = vpack.c.b16 %v2837, %v2833
        %v3030 = vpack.c.b16 %v2842, %v2838
        %v3031 = vpack.c.b16 %v2843, %v2839
        %v3032 = vpack.c.b16 %v2844, %v2840
        %v3033 = vpack.c.b16 %v2845, %v2841
        %v3034 = vpack.c.b16 %v2850, %v2846
        %v3035 = vpack.c.b16 %v2851, %v2847
        %v3036 = vpack.c.b16 %v2852, %v2848
        %v3037 = vpack.c.b16 %v2853, %v2849
        %v3038 = vpack.c.b16 %v2858, %v2854
        %v3039 = vpack.c.b16 %v2859, %v2855
        %v3040 = vpack.c.b16 %v2860, %v2856
        %v3041 = vpack.c.b16 %v2861, %v2857
        %v3042 = vpack.c.b16 %v2866, %v2862
        %v3043 = vpack.c.b16 %v2867, %v2863
        %v3044 = vpack.c.b16 %v2868, %v2864
        %v3045 = vpack.c.b16 %v2869, %v2865
        %v3046 = vpack.c.b16 %v2874, %v2870
        %v3047 = vpack.c.b16 %v2875, %v2871
        %v3048 = vpack.c.b16 %v2876, %v2872
        %v3049 = vpack.c.b16 %v2877, %v2873
        %v3050 = vpack.c.b16 %v2882, %v2878
        %v3051 = vpack.c.b16 %v2883, %v2879
        %v3052 = vpack.c.b16 %v2884, %v2880
        %v3053 = vpack.c.b16 %v2885, %v2881
        %v3054 = vpack.c.b16 %v2890, %v2886
        %v3055 = vpack.c.b16 %v2891, %v2887
        %v3056 = vpack.c.b16 %v2892, %v2888
        %v3057 = vpack.c.b16 %v2893, %v2889
        %v3058 = vpack.c.b16 %v2898, %v2894
        %v3059 = vpack.c.b16 %v2899, %v2895
        %v3060 = vpack.c.b16 %v2900, %v2896
        %v3061 = vpack.c.b16 %v2901, %v2897
        %v3062 = vpack.c.b16 %v2906, %v2902
        %v3063 = vpack.c.b16 %v2907, %v2903
        %v3064 = vpack.c.b16 %v2908, %v2904
        %v3065 = vpack.c.b16 %v2909, %v2905
        %v3066 = vpack.c.b16 %v2914, %v2910
        %v3067 = vpack.c.b16 %v2915, %v2911
        %v3068 = vpack.c.b16 %v2916, %v2912
        %v3069 = vpack.c.b16 %v2917, %v2913
        %v3070 = vpack.c.b16 %v2922, %v2918
        %v3071 = vpack.c.b16 %v2923, %v2919
        %v3072 = vpack.c.b16 %v2924, %v2920
        %v3073 = vpack.c.b16 %v2925, %v2921
        %v3074 = vpack.c.b16 %v2930, %v2926
        %v3075 = vpack.c.b16 %v2931, %v2927
        %v3076 = vpack.c.b16 %v2932, %v2928
        %v3077 = vpack.c.b16 %v2933, %v2929
        %v3078 = vpack.c.b16 %v2938, %v2934
        %v3079 = vpack.c.b16 %v2939, %v2935
        %v3080 = vpack.c.b16 %v2940, %v2936
        %v3081 = vpack.c.b16 %v2941, %v2937
        %v3082 = vpack.c.b16 %v2946, %v2942
        %v3083 = vpack.c.b16 %v2947, %v2943
        %v3084 = vpack.c.b16 %v2948, %v2944
        %v3085 = vpack.c.b16 %v2949, %v2945
        %v3086 = vpack.c.b16 %v2954, %v2950
        %v3087 = vpack.c.b16 %v2955, %v2951
        %v3088 = vpack.c.b16 %v2956, %v2952
        %v3089 = vpack.c.b16 %v2957, %v2953
        %v3090 = vpack.c.b16 %v2962, %v2958
        %v3091 = vpack.c.b16 %v2963, %v2959
        %v3092 = vpack.c.b16 %v2964, %v2960
        %v3093 = vpack.c.b16 %v2965, %v2961
        %v3094 = vpack.c.b16 %v2970, %v2966
        %v3095 = vpack.c.b16 %v2971, %v2967
        %v3096 = vpack.c.b16 %v2972, %v2968
        %v3097 = vpack.c.b16 %v2973, %v2969
        %v3098 = vpack.c.b16 %v2978, %v2974
        %v3099 = vpack.c.b16 %v2979, %v2975
        %v3100 = vpack.c.b16 %v2980, %v2976
        %v3101 = vpack.c.b16 %v2981, %v2977
        %v3102 = vpack.c.b16 %v2986, %v2982
        %v3103 = vpack.c.b16 %v2987, %v2983
        %v3104 = vpack.c.b16 %v2988, %v2984
        %v3105 = vpack.c.b16 %v2989, %v2985
        %v3106 = vpack.c.b16 %v2994, %v2990
        %v3107 = vpack.c.b16 %v2995, %v2991
        %v3108 = vpack.c.b16 %v2996, %v2992
        %v3109 = vpack.c.b16 %v2997, %v2993
        %vm3222 = vcmask 523264
        %v3224 = vsel %vm3222, %v2548, 0
        %3226 = vmatprep.subr.bf16.mxu0 %v2999
        %3227 = vmatpush1.bf16.msra.mxu0 %v2998
        %3228 = vmatprep.subr.bf16.mxu0 %v3003
        %3229 = vmatpush1.bf16.msra.mxu0 %v3002
        %3230 = vmatprep.subr.bf16.mxu0 %v3007
        %3231 = vmatpush1.bf16.msra.mxu0 %v3006
        %3232 = vmatprep.subr.bf16.mxu0 %v3011
        %3233 = vmatpush1.bf16.msra.mxu0 %v3010
        %3234 = vmatprep.subr.bf16.mxu0 %v3015
        %3235 = vmatpush1.bf16.msra.mxu0 %v3014
        %3236 = vmatprep.subr.bf16.mxu0 %v3019
        %3237 = vmatpush1.bf16.msra.mxu0 %v3018
        %3238 = vmatprep.subr.bf16.mxu0 %v3023
        %3239 = vmatpush1.bf16.msra.mxu0 %v3022
        %3240 = vmatprep.subr.bf16.mxu0 %v3027
        %3241 = vmatpush1.bf16.msra.mxu0 %v3026
        %3242 = vmatprep.subr.bf16.mxu0 %v3031
        %3243 = vmatpush1.bf16.msra.mxu0 %v3030
        %3244 = vmatprep.subr.bf16.mxu0 %v3035
        %3245 = vmatpush1.bf16.msra.mxu0 %v3034
        %3246 = vmatprep.subr.bf16.mxu0 %v3039
        %3247 = vmatpush1.bf16.msra.mxu0 %v3038
        %3248 = vmatprep.subr.bf16.mxu0 %v3043
        %3249 = vmatpush1.bf16.msra.mxu0 %v3042
        %3250 = vmatprep.subr.bf16.mxu0 %v3047
        %3251 = vmatpush1.bf16.msra.mxu0 %v3046
        %3252 = vmatprep.subr.bf16.mxu0 %v3051
        %3253 = vmatpush1.bf16.msra.mxu0 %v3050
        %3254 = vmatprep.subr.bf16.mxu0 %v3055
        %3255 = vmatpush1.bf16.msra.mxu0 %v3054
        %3256 = vmatprep.subr.bf16.mxu0 %v3059
        %3257 = vmatpush1.bf16.msra.mxu0 %v3058
        %3258 = vmatprep.mubr.bf16.mxu0 %v2546
        %3259 = vmatmul.mubr.bf16.gmra.mrb[0].mxu0 %v2545
        %v3260 = vpop.f32.mrb[0].mxu0
        %v3261 = vadd.f32 0.0, %v3260
        %v3262 = vpop.f32.mrb[0].mxu0
        %v3263 = vadd.f32 0.0, %v3262
        %v3264 = vpop.f32.mrb[0].mxu0
        %v3265 = vadd.f32 0.0, %v3264
        %v3266 = vpop.f32.mrb[0].mxu0
        %v3267 = vadd.f32 0.0, %v3266
        %3268 = vdwg.mxu0
        %3269 = vmatprep.subr.bf16.mxu0 %v3063
        %3270 = vmatpush1.bf16.msra.mxu0 %v3062
        %3271 = vmatprep.subr.bf16.mxu0 %v3067
        %3272 = vmatpush1.bf16.msra.mxu0 %v3066
        %3273 = vmatprep.subr.bf16.mxu0 %v3071
        %3274 = vmatpush1.bf16.msra.mxu0 %v3070
        %3275 = vmatprep.subr.bf16.mxu0 %v3075
        %3276 = vmatpush1.bf16.msra.mxu0 %v3074
        %3277 = vmatprep.subr.bf16.mxu0 %v3079
        %3278 = vmatpush1.bf16.msra.mxu0 %v3078
        %3279 = vmatprep.subr.bf16.mxu0 %v3083
        %3280 = vmatpush1.bf16.msra.mxu0 %v3082
        %3281 = vmatprep.subr.bf16.mxu0 %v3087
        %3282 = vmatpush1.bf16.msra.mxu0 %v3086
        %3283 = vmatprep.subr.bf16.mxu0 %v3091
        %3284 = vmatpush1.bf16.msra.mxu0 %v3090
        %3285 = vmatprep.subr.bf16.mxu0 %v3095
        %3286 = vmatpush1.bf16.msra.mxu0 %v3094
        %3287 = vmatprep.subr.bf16.mxu0 %v3099
        %3288 = vmatpush1.bf16.msra.mxu0 %v3098
        %3289 = vmatprep.subr.bf16.mxu0 %v3103
        %3290 = vmatpush1.bf16.msra.mxu0 %v3102
        %3291 = vmatprep.subr.bf16.mxu0 %v3107
        %3292 = vmatpush1.bf16.msra.mxu0 %v3106
        %3293 = vmatprep.subr.bf16.mxu0 0
        %3294 = vmatpush1.bf16.msra.mxu0 0
        %3295 = vmatprep.subr.bf16.mxu0 0
        %3296 = vmatpush1.bf16.msra.mxu0 0
        %3297 = vmatprep.subr.bf16.mxu0 0
        %3298 = vmatpush1.bf16.msra.mxu0 0
        %3299 = vmatprep.subr.bf16.mxu0 0
        %3300 = vmatpush1.bf16.msra.mxu0 0
        %3301 = vmatprep.mubr.bf16.mxu0 %v3224
        %3302 = vmatmul.mubr.bf16.gmra.mrb[0].mxu0 %v2547
        %v3303 = vpop.f32.mrb[0].mxu0
        %v3304 = vadd.f32 %v3261, %v3303
        %v3305 = vpop.f32.mrb[0].mxu0
        %v3306 = vadd.f32 %v3263, %v3305
        %v3307 = vpop.f32.mrb[0].mxu0
        %v3308 = vadd.f32 %v3265, %v3307
        %v3309 = vpop.f32.mrb[0].mxu0
        %v3310 = vadd.f32 %v3267, %v3309
        %3311 = vdwg.mxu0
        %3312 = vmatprep.subr.bf16.mxu0 %v3001
        %3313 = vmatpush1.bf16.msra.mxu0 %v3000
        %3314 = vmatprep.subr.bf16.mxu0 %v3005
        %3315 = vmatpush1.bf16.msra.mxu0 %v3004
        %3316 = vmatprep.subr.bf16.mxu0 %v3009
        %3317 = vmatpush1.bf16.msra.mxu0 %v3008
        %3318 = vmatprep.subr.bf16.mxu0 %v3013
        %3319 = vmatpush1.bf16.msra.mxu0 %v3012
        %3320 = vmatprep.subr.bf16.mxu0 %v3017
        %3321 = vmatpush1.bf16.msra.mxu0 %v3016
        %3322 = vmatprep.subr.bf16.mxu0 %v3021
        %3323 = vmatpush1.bf16.msra.mxu0 %v3020
        %3324 = vmatprep.subr.bf16.mxu0 %v3025
        %3325 = vmatpush1.bf16.msra.mxu0 %v3024
        %3326 = vmatprep.subr.bf16.mxu0 %v3029
        %3327 = vmatpush1.bf16.msra.mxu0 %v3028
        %3328 = vmatprep.subr.bf16.mxu0 %v3033
        %3329 = vmatpush1.bf16.msra.mxu0 %v3032
        %3330 = vmatprep.subr.bf16.mxu0 %v3037
        %3331 = vmatpush1.bf16.msra.mxu0 %v3036
        %3332 = vmatprep.subr.bf16.mxu0 %v3041
        %3333 = vmatpush1.bf16.msra.mxu0 %v3040
        %3334 = vmatprep.subr.bf16.mxu0 %v3045
        %3335 = vmatpush1.bf16.msra.mxu0 %v3044
        %3336 = vmatprep.subr.bf16.mxu0 %v3049
        %3337 = vmatpush1.bf16.msra.mxu0 %v3048
        %3338 = vmatprep.subr.bf16.mxu0 %v3053
        %3339 = vmatpush1.bf16.msra.mxu0 %v3052
        %3340 = vmatprep.subr.bf16.mxu0 %v3057
        %3341 = vmatpush1.bf16.msra.mxu0 %v3056
        %3342 = vmatprep.subr.bf16.mxu0 %v3061
        %3343 = vmatpush1.bf16.msra.mxu0 %v3060
        %3344 = vmatprep.mubr.bf16.mxu0 %v2546
        %3345 = vmatmul.mubr.bf16.gmra.mrb[0].mxu0 %v2545
        %v3346 = vpop.f32.mrb[0].mxu0
        %v3347 = vadd.f32 0.0, %v3346
        %v3348 = vpop.f32.mrb[0].mxu0
        %v3349 = vadd.f32 0.0, %v3348
        %v3350 = vpop.f32.mrb[0].mxu0
        %v3351 = vadd.f32 0.0, %v3350
        %v3352 = vpop.f32.mrb[0].mxu0
        %v3353 = vadd.f32 0.0, %v3352
        %3354 = vdwg.mxu0
        %3355 = vmatprep.subr.bf16.mxu0 %v3065
        %3356 = vmatpush1.bf16.msra.mxu0 %v3064
        %3357 = vmatprep.subr.bf16.mxu0 %v3069
        %3358 = vmatpush1.bf16.msra.mxu0 %v3068
        %3359 = vmatprep.subr.bf16.mxu0 %v3073
        %3360 = vmatpush1.bf16.msra.mxu0 %v3072
        %3361 = vmatprep.subr.bf16.mxu0 %v3077
        %3362 = vmatpush1.bf16.msra.mxu0 %v3076
        %3363 = vmatprep.subr.bf16.mxu0 %v3081
        %3364 = vmatpush1.bf16.msra.mxu0 %v3080
        %3365 = vmatprep.subr.bf16.mxu0 %v3085
        %3366 = vmatpush1.bf16.msra.mxu0 %v3084
        %3367 = vmatprep.subr.bf16.mxu0 %v3089
        %3368 = vmatpush1.bf16.msra.mxu0 %v3088
        %3369 = vmatprep.subr.bf16.mxu0 %v3093
        %3370 = vmatpush1.bf16.msra.mxu0 %v3092
        %3371 = vmatprep.subr.bf16.mxu0 %v3097
        %3372 = vmatpush1.bf16.msra.mxu0 %v3096
        %3373 = vmatprep.subr.bf16.mxu0 %v3101
        %3374 = vmatpush1.bf16.msra.mxu0 %v3100
        %3375 = vmatprep.subr.bf16.mxu0 %v3105
        %3376 = vmatpush1.bf16.msra.mxu0 %v3104
        %3377 = vmatprep.subr.bf16.mxu0 %v3109
        %3378 = vmatpush1.bf16.msra.mxu0 %v3108
        %3379 = vmatprep.subr.bf16.mxu0 0
        %3380 = vmatpush1.bf16.msra.mxu0 0
        %3381 = vmatprep.subr.bf16.mxu0 0
        %3382 = vmatpush1.bf16.msra.mxu0 0
        %3383 = vmatprep.subr.bf16.mxu0 0
        %3384 = vmatpush1.bf16.msra.mxu0 0
        %3385 = vmatprep.subr.bf16.mxu0 0
        %3386 = vmatpush1.bf16.msra.mxu0 0
        %3387 = vmatprep.mubr.bf16.mxu0 %v3224
        %3388 = vmatmul.mubr.bf16.gmra.mrb[0].mxu0 %v2547
        %v3389 = vpop.f32.mrb[0].mxu0
        %v3390 = vadd.f32 %v3347, %v3389
        %v3391 = vpop.f32.mrb[0].mxu0
        %v3392 = vadd.f32 %v3349, %v3391
        %v3393 = vpop.f32.mrb[0].mxu0
        %v3394 = vadd.f32 %v3351, %v3393
        %v3395 = vpop.f32.mrb[0].mxu0
        %v3396 = vadd.f32 %v3353, %v3395
        %3397 = vdwg.mxu0
        %s3398 = scalar_lea.vmem [#allocation10], 3584
        %v3399 = vld [vmem:[%s3398] sm:$0xff]
        %v3400 = vld [vmem:[%s3398 + $0x8] sm:$0xff]
        %v3401 = vld [vmem:[%s3398 + $0x10] sm:$0xff]
        %v3402 = vld [vmem:[%s3398 + $0x18] sm:$0xff]
        %v3403 = vld [vmem:[%s3398 + $0x20] sm:$0xff]
        %v3404 = vld [vmem:[%s3398 + $0x28] sm:$0xff]
        %v3405 = vld [vmem:[%s3398 + $0x30] sm:$0xff]
        %v3406 = vld [vmem:[%s3398 + $0x38] sm:$0xff]
        %v3407 = vld [vmem:[%s3398 + $0x40] sm:$0xff]
        %v3408 = vld [vmem:[%s3398 + $0x48] sm:$0xff]
        %v3409 = vld [vmem:[%s3398 + $0x50] sm:$0xff]
        %v3410 = vld [vmem:[%s3398 + $0x58] sm:$0xff]
        %v3411 = vld [vmem:[%s3398 + $0x60] sm:$0xff]
        %v3412 = vld [vmem:[%s3398 + $0x68] sm:$0xff]
        %v3413 = vld [vmem:[%s3398 + $0x70] sm:$0xff]
        %v3414 = vld [vmem:[%s3398 + $0x78] sm:$0xff]
        %v3415 = vld [vmem:[%s3398 + $0x80] sm:$0xff]
        %v3416 = vld [vmem:[%s3398 + $0x88] sm:$0xff]
        %v3417 = vld [vmem:[%s3398 + $0x90] sm:$0xff]
        %v3418 = vld [vmem:[%s3398 + $0x98] sm:$0xff]
        %v3419 = vld [vmem:[%s3398 + $0xa0] sm:$0xff]
        %v3420 = vld [vmem:[%s3398 + $0xa8] sm:$0xff]
        %v3421 = vld [vmem:[%s3398 + $0xb0] sm:$0xff]
        %v3422 = vld [vmem:[%s3398 + $0xb8] sm:$0xff]
        %v3423 = vld [vmem:[%s3398 + $0xc0] sm:$0xff]
        %v3424 = vld [vmem:[%s3398 + $0xc8] sm:$0xff]
        %v3425 = vld [vmem:[%s3398 + $0xd0] sm:$0xff]
        %v3426 = vld [vmem:[%s3398 + $0xd8] sm:$0xff]
        %v3427 = vld [vmem:[%s3398 + $0xe0] sm:$0xff]
        %v3428 = vld [vmem:[%s3398 + $0xe8] sm:$0xff]
        %v3429 = vld [vmem:[%s3398 + $0xf0] sm:$0xff]
        %v3430 = vld [vmem:[%s3398 + $0xf8] sm:$0xff]
        %v3431 = vld [vmem:[%s3398 + $0x100] sm:$0xff]
        %v3432 = vld [vmem:[%s3398 + $0x108] sm:$0xff]
        %v3433 = vld [vmem:[%s3398 + $0x110] sm:$0xff]
        %v3434 = vld [vmem:[%s3398 + $0x118] sm:$0xff]
        %v3435 = vld [vmem:[%s3398 + $0x120] sm:$0xff]
        %v3436 = vld [vmem:[%s3398 + $0x128] sm:$0xff]
        %v3437 = vld [vmem:[%s3398 + $0x130] sm:$0xff]
        %v3438 = vld [vmem:[%s3398 + $0x138] sm:$0xff]
        %v3439 = vld [vmem:[%s3398 + $0x140] sm:$0xff]
        %v3440 = vld [vmem:[%s3398 + $0x148] sm:$0xff]
        %v3441 = vld [vmem:[%s3398 + $0x150] sm:$0xff]
        %v3442 = vld [vmem:[%s3398 + $0x158] sm:$0xff]
        %v3443 = vld [vmem:[%s3398 + $0x160] sm:$0xff]
        %v3444 = vld [vmem:[%s3398 + $0x168] sm:$0xff]
        %v3445 = vld [vmem:[%s3398 + $0x170] sm:$0xff]
        %v3446 = vld [vmem:[%s3398 + $0x178] sm:$0xff]
        %v3447 = vld [vmem:[%s3398 + $0x180] sm:$0xff]
        %v3448 = vld [vmem:[%s3398 + $0x188] sm:$0xff]
        %v3449 = vld [vmem:[%s3398 + $0x190] sm:$0xff]
        %v3450 = vld [vmem:[%s3398 + $0x198] sm:$0xff]
        %v3451 = vld [vmem:[%s3398 + $0x1a0] sm:$0xff]
        %v3452 = vld [vmem:[%s3398 + $0x1a8] sm:$0xff]
        %v3453 = vld [vmem:[%s3398 + $0x1b0] sm:$0xff]
        %v3454 = vld [vmem:[%s3398 + $0x1b8] sm:$0xff]
        %v3455 = vld [vmem:[%s3398 + $0x1c0] sm:$0xff]
        %v3456 = vld [vmem:[%s3398 + $0x1c8] sm:$0xff]
        %v3457 = vld [vmem:[%s3398 + $0x1d0] sm:$0xff]
        %v3458 = vld [vmem:[%s3398 + $0x1d8] sm:$0xff]
        %v3459 = vld [vmem:[%s3398 + $0x1e0] sm:$0xff]
        %v3460 = vld [vmem:[%s3398 + $0x1e8] sm:$0xff]
        %v3461 = vld [vmem:[%s3398 + $0x1f0] sm:$0xff]
        %v3462 = vld [vmem:[%s3398 + $0x1f8] sm:$0xff]
        %v3463 = vld [vmem:[%s3398 + $0x200] sm:$0xff]
        %v3464 = vld [vmem:[%s3398 + $0x208] sm:$0xff]
        %v3465 = vld [vmem:[%s3398 + $0x210] sm:$0xff]
        %v3466 = vld [vmem:[%s3398 + $0x218] sm:$0xff]
        %v3467 = vld [vmem:[%s3398 + $0x220] sm:$0xff]
        %v3468 = vld [vmem:[%s3398 + $0x228] sm:$0xff]
        %v3469 = vld [vmem:[%s3398 + $0x230] sm:$0xff]
        %v3470 = vld [vmem:[%s3398 + $0x238] sm:$0xff]
        %v3471 = vld [vmem:[%s3398 + $0x240] sm:$0xff]
        %v3472 = vld [vmem:[%s3398 + $0x248] sm:$0xff]
        %v3473 = vld [vmem:[%s3398 + $0x250] sm:$0xff]
        %v3474 = vld [vmem:[%s3398 + $0x258] sm:$0xff]
        %v3475 = vld [vmem:[%s3398 + $0x260] sm:$0xff]
        %v3476 = vld [vmem:[%s3398 + $0x268] sm:$0xff]
        %v3477 = vld [vmem:[%s3398 + $0x270] sm:$0xff]
        %v3478 = vld [vmem:[%s3398 + $0x278] sm:$0xff]
        %v3479 = vld [vmem:[%s3398 + $0x280] sm:$0xff]
        %v3480 = vld [vmem:[%s3398 + $0x288] sm:$0xff]
        %v3481 = vld [vmem:[%s3398 + $0x290] sm:$0xff]
        %v3482 = vld [vmem:[%s3398 + $0x298] sm:$0xff]
        %v3483 = vld [vmem:[%s3398 + $0x2a0] sm:$0xff]
        %v3484 = vld [vmem:[%s3398 + $0x2a8] sm:$0xff]
        %v3485 = vld [vmem:[%s3398 + $0x2b0] sm:$0xff]
        %v3486 = vld [vmem:[%s3398 + $0x2b8] sm:$0xff]
        %v3487 = vld [vmem:[%s3398 + $0x2c0] sm:$0xff]
        %v3488 = vld [vmem:[%s3398 + $0x2c8] sm:$0xff]
        %v3489 = vld [vmem:[%s3398 + $0x2d0] sm:$0xff]
        %v3490 = vld [vmem:[%s3398 + $0x2d8] sm:$0xff]
        %v3491 = vld [vmem:[%s3398 + $0x2e0] sm:$0xff]
        %v3492 = vld [vmem:[%s3398 + $0x2e8] sm:$0xff]
        %v3493 = vld [vmem:[%s3398 + $0x2f0] sm:$0xff]
        %v3494 = vld [vmem:[%s3398 + $0x2f8] sm:$0xff]
        %v3495 = vld [vmem:[%s3398 + $0x300] sm:$0xff]
        %v3496 = vld [vmem:[%s3398 + $0x308] sm:$0xff]
        %v3497 = vld [vmem:[%s3398 + $0x310] sm:$0xff]
        %v3498 = vld [vmem:[%s3398 + $0x318] sm:$0xff]
        %v3499 = vld [vmem:[%s3398 + $0x320] sm:$0xff]
        %v3500 = vld [vmem:[%s3398 + $0x328] sm:$0xff]
        %v3501 = vld [vmem:[%s3398 + $0x330] sm:$0xff]
        %v3502 = vld [vmem:[%s3398 + $0x338] sm:$0xff]
        %v3503 = vld [vmem:[%s3398 + $0x340] sm:$0xff]
        %v3504 = vld [vmem:[%s3398 + $0x348] sm:$0xff]
        %v3505 = vld [vmem:[%s3398 + $0x350] sm:$0xff]
        %v3506 = vld [vmem:[%s3398 + $0x358] sm:$0xff]
        %v3507 = vld [vmem:[%s3398 + $0x360] sm:$0xff]
        %v3508 = vld [vmem:[%s3398 + $0x368] sm:$0xff]
        %v3509 = vld [vmem:[%s3398 + $0x370] sm:$0xff]
        %v3510 = vld [vmem:[%s3398 + $0x378] sm:$0xff]
        %v3623 = vunpack.c.l.b16 %v3399
        %v3624 = vunpack.c.h.b16 %v3399
        %v3625 = vunpack.c.l.b16 %v3400
        %v3626 = vunpack.c.h.b16 %v3400
        %v3627 = vunpack.c.l.b16 %v3401
        %v3628 = vunpack.c.h.b16 %v3401
        %v3629 = vunpack.c.l.b16 %v3402
        %v3630 = vunpack.c.h.b16 %v3402
        %v3631 = vunpack.c.l.b16 %v3403
        %v3632 = vunpack.c.h.b16 %v3403
        %v3633 = vunpack.c.l.b16 %v3404
        %v3634 = vunpack.c.h.b16 %v3404
        %v3635 = vunpack.c.l.b16 %v3405
        %v3636 = vunpack.c.h.b16 %v3405
        %v3637 = vunpack.c.l.b16 %v3406
        %v3638 = vunpack.c.h.b16 %v3406
        %v3639 = vunpack.c.l.b16 %v3407
        %v3640 = vunpack.c.h.b16 %v3407
        %v3641 = vunpack.c.l.b16 %v3408
        %v3642 = vunpack.c.h.b16 %v3408
        %v3643 = vunpack.c.l.b16 %v3409
        %v3644 = vunpack.c.h.b16 %v3409
        %v3645 = vunpack.c.l.b16 %v3410
        %v3646 = vunpack.c.h.b16 %v3410
        %v3647 = vunpack.c.l.b16 %v3411
        %v3648 = vunpack.c.h.b16 %v3411
        %v3649 = vunpack.c.l.b16 %v3412
        %v3650 = vunpack.c.h.b16 %v3412
        %v3651 = vunpack.c.l.b16 %v3413
        %v3652 = vunpack.c.h.b16 %v3413
        %v3653 = vunpack.c.l.b16 %v3414
        %v3654 = vunpack.c.h.b16 %v3414
        %v3655 = vunpack.c.l.b16 %v3415
        %v3656 = vunpack.c.h.b16 %v3415
        %v3657 = vunpack.c.l.b16 %v3416
        %v3658 = vunpack.c.h.b16 %v3416
        %v3659 = vunpack.c.l.b16 %v3417
        %v3660 = vunpack.c.h.b16 %v3417
        %v3661 = vunpack.c.l.b16 %v3418
        %v3662 = vunpack.c.h.b16 %v3418
        %v3663 = vunpack.c.l.b16 %v3419
        %v3664 = vunpack.c.h.b16 %v3419
        %v3665 = vunpack.c.l.b16 %v3420
        %v3666 = vunpack.c.h.b16 %v3420
        %v3667 = vunpack.c.l.b16 %v3421
        %v3668 = vunpack.c.h.b16 %v3421
        %v3669 = vunpack.c.l.b16 %v3422
        %v3670 = vunpack.c.h.b16 %v3422
        %v3671 = vunpack.c.l.b16 %v3423
        %v3672 = vunpack.c.h.b16 %v3423
        %v3673 = vunpack.c.l.b16 %v3424
        %v3674 = vunpack.c.h.b16 %v3424
        %v3675 = vunpack.c.l.b16 %v3425
        %v3676 = vunpack.c.h.b16 %v3425
        %v3677 = vunpack.c.l.b16 %v3426
        %v3678 = vunpack.c.h.b16 %v3426
        %v3679 = vunpack.c.l.b16 %v3427
        %v3680 = vunpack.c.h.b16 %v3427
        %v3681 = vunpack.c.l.b16 %v3428
        %v3682 = vunpack.c.h.b16 %v3428
        %v3683 = vunpack.c.l.b16 %v3429
        %v3684 = vunpack.c.h.b16 %v3429
        %v3685 = vunpack.c.l.b16 %v3430
        %v3686 = vunpack.c.h.b16 %v3430
        %v3687 = vunpack.c.l.b16 %v3431
        %v3688 = vunpack.c.h.b16 %v3431
        %v3689 = vunpack.c.l.b16 %v3432
        %v3690 = vunpack.c.h.b16 %v3432
        %v3691 = vunpack.c.l.b16 %v3433
        %v3692 = vunpack.c.h.b16 %v3433
        %v3693 = vunpack.c.l.b16 %v3434
        %v3694 = vunpack.c.h.b16 %v3434
        %v3695 = vunpack.c.l.b16 %v3435
        %v3696 = vunpack.c.h.b16 %v3435
        %v3697 = vunpack.c.l.b16 %v3436
        %v3698 = vunpack.c.h.b16 %v3436
        %v3699 = vunpack.c.l.b16 %v3437
        %v3700 = vunpack.c.h.b16 %v3437
        %v3701 = vunpack.c.l.b16 %v3438
        %v3702 = vunpack.c.h.b16 %v3438
        %v3703 = vunpack.c.l.b16 %v3439
        %v3704 = vunpack.c.h.b16 %v3439
        %v3705 = vunpack.c.l.b16 %v3440
        %v3706 = vunpack.c.h.b16 %v3440
        %v3707 = vunpack.c.l.b16 %v3441
        %v3708 = vunpack.c.h.b16 %v3441
        %v3709 = vunpack.c.l.b16 %v3442
        %v3710 = vunpack.c.h.b16 %v3442
        %v3711 = vunpack.c.l.b16 %v3443
        %v3712 = vunpack.c.h.b16 %v3443
        %v3713 = vunpack.c.l.b16 %v3444
        %v3714 = vunpack.c.h.b16 %v3444
        %v3715 = vunpack.c.l.b16 %v3445
        %v3716 = vunpack.c.h.b16 %v3445
        %v3717 = vunpack.c.l.b16 %v3446
        %v3718 = vunpack.c.h.b16 %v3446
        %v3719 = vunpack.c.l.b16 %v3447
        %v3720 = vunpack.c.h.b16 %v3447
        %v3721 = vunpack.c.l.b16 %v3448
        %v3722 = vunpack.c.h.b16 %v3448
        %v3723 = vunpack.c.l.b16 %v3449
        %v3724 = vunpack.c.h.b16 %v3449
        %v3725 = vunpack.c.l.b16 %v3450
        %v3726 = vunpack.c.h.b16 %v3450
        %v3727 = vunpack.c.l.b16 %v3451
        %v3728 = vunpack.c.h.b16 %v3451
        %v3729 = vunpack.c.l.b16 %v3452
        %v3730 = vunpack.c.h.b16 %v3452
        %v3731 = vunpack.c.l.b16 %v3453
        %v3732 = vunpack.c.h.b16 %v3453
        %v3733 = vunpack.c.l.b16 %v3454
        %v3734 = vunpack.c.h.b16 %v3454
        %v3735 = vunpack.c.l.b16 %v3455
        %v3736 = vunpack.c.h.b16 %v3455
        %v3737 = vunpack.c.l.b16 %v3456
        %v3738 = vunpack.c.h.b16 %v3456
        %v3739 = vunpack.c.l.b16 %v3457
        %v3740 = vunpack.c.h.b16 %v3457
        %v3741 = vunpack.c.l.b16 %v3458
        %v3742 = vunpack.c.h.b16 %v3458
        %v3743 = vunpack.c.l.b16 %v3459
        %v3744 = vunpack.c.h.b16 %v3459
        %v3745 = vunpack.c.l.b16 %v3460
        %v3746 = vunpack.c.h.b16 %v3460
        %v3747 = vunpack.c.l.b16 %v3461
        %v3748 = vunpack.c.h.b16 %v3461
        %v3749 = vunpack.c.l.b16 %v3462
        %v3750 = vunpack.c.h.b16 %v3462
        %v3751 = vunpack.c.l.b16 %v3463
        %v3752 = vunpack.c.h.b16 %v3463
        %v3753 = vunpack.c.l.b16 %v3464
        %v3754 = vunpack.c.h.b16 %v3464
        %v3755 = vunpack.c.l.b16 %v3465
        %v3756 = vunpack.c.h.b16 %v3465
        %v3757 = vunpack.c.l.b16 %v3466
        %v3758 = vunpack.c.h.b16 %v3466
        %v3759 = vunpack.c.l.b16 %v3467
        %v3760 = vunpack.c.h.b16 %v3467
        %v3761 = vunpack.c.l.b16 %v3468
        %v3762 = vunpack.c.h.b16 %v3468
        %v3763 = vunpack.c.l.b16 %v3469
        %v3764 = vunpack.c.h.b16 %v3469
        %v3765 = vunpack.c.l.b16 %v3470
        %v3766 = vunpack.c.h.b16 %v3470
        %v3767 = vunpack.c.l.b16 %v3471
        %v3768 = vunpack.c.h.b16 %v3471
        %v3769 = vunpack.c.l.b16 %v3472
        %v3770 = vunpack.c.h.b16 %v3472
        %v3771 = vunpack.c.l.b16 %v3473
        %v3772 = vunpack.c.h.b16 %v3473
        %v3773 = vunpack.c.l.b16 %v3474
        %v3774 = vunpack.c.h.b16 %v3474
        %v3775 = vunpack.c.l.b16 %v3475
        %v3776 = vunpack.c.h.b16 %v3475
        %v3777 = vunpack.c.l.b16 %v3476
        %v3778 = vunpack.c.h.b16 %v3476
        %v3779 = vunpack.c.l.b16 %v3477
        %v3780 = vunpack.c.h.b16 %v3477
        %v3781 = vunpack.c.l.b16 %v3478
        %v3782 = vunpack.c.h.b16 %v3478
        %v3783 = vunpack.c.l.b16 %v3479
        %v3784 = vunpack.c.h.b16 %v3479
        %v3785 = vunpack.c.l.b16 %v3480
        %v3786 = vunpack.c.h.b16 %v3480
        %v3787 = vunpack.c.l.b16 %v3481
        %v3788 = vunpack.c.h.b16 %v3481
        %v3789 = vunpack.c.l.b16 %v3482
        %v3790 = vunpack.c.h.b16 %v3482
        %v3791 = vunpack.c.l.b16 %v3483
        %v3792 = vunpack.c.h.b16 %v3483
        %v3793 = vunpack.c.l.b16 %v3484
        %v3794 = vunpack.c.h.b16 %v3484
        %v3795 = vunpack.c.l.b16 %v3485
        %v3796 = vunpack.c.h.b16 %v3485
        %v3797 = vunpack.c.l.b16 %v3486
        %v3798 = vunpack.c.h.b16 %v3486
        %v3799 = vunpack.c.l.b16 %v3487
        %v3800 = vunpack.c.h.b16 %v3487
        %v3801 = vunpack.c.l.b16 %v3488
        %v3802 = vunpack.c.h.b16 %v3488
        %v3803 = vunpack.c.l.b16 %v3489
        %v3804 = vunpack.c.h.b16 %v3489
        %v3805 = vunpack.c.l.b16 %v3490
        %v3806 = vunpack.c.h.b16 %v3490
        %v3807 = vunpack.c.l.b16 %v3491
        %v3808 = vunpack.c.h.b16 %v3491
        %v3809 = vunpack.c.l.b16 %v3492
        %v3810 = vunpack.c.h.b16 %v3492
        %v3811 = vunpack.c.l.b16 %v3493
        %v3812 = vunpack.c.h.b16 %v3493
        %v3813 = vunpack.c.l.b16 %v3494
        %v3814 = vunpack.c.h.b16 %v3494
        %v3815 = vunpack.c.l.b16 %v3495
        %v3816 = vunpack.c.h.b16 %v3495
        %v3817 = vunpack.c.l.b16 %v3496
        %v3818 = vunpack.c.h.b16 %v3496
        %v3819 = vunpack.c.l.b16 %v3497
        %v3820 = vunpack.c.h.b16 %v3497
        %v3821 = vunpack.c.l.b16 %v3498
        %v3822 = vunpack.c.h.b16 %v3498
        %v3823 = vunpack.c.l.b16 %v3499
        %v3824 = vunpack.c.h.b16 %v3499
        %v3825 = vunpack.c.l.b16 %v3500
        %v3826 = vunpack.c.h.b16 %v3500
        %v3827 = vunpack.c.l.b16 %v3501
        %v3828 = vunpack.c.h.b16 %v3501
        %v3829 = vunpack.c.l.b16 %v3502
        %v3830 = vunpack.c.h.b16 %v3502
        %v3831 = vunpack.c.l.b16 %v3503
        %v3832 = vunpack.c.h.b16 %v3503
        %v3833 = vunpack.c.l.b16 %v3504
        %v3834 = vunpack.c.h.b16 %v3504
        %v3835 = vunpack.c.l.b16 %v3505
        %v3836 = vunpack.c.h.b16 %v3505
        %v3837 = vunpack.c.l.b16 %v3506
        %v3838 = vunpack.c.h.b16 %v3506
        %v3839 = vunpack.c.l.b16 %v3507
        %v3840 = vunpack.c.h.b16 %v3507
        %v3841 = vunpack.c.l.b16 %v3508
        %v3842 = vunpack.c.h.b16 %v3508
        %v3843 = vunpack.c.l.b16 %v3509
        %v3844 = vunpack.c.h.b16 %v3509
        %v3845 = vunpack.c.l.b16 %v3510
        %v3846 = vunpack.c.h.b16 %v3510
        %v3847 = vpack.c.b16 %v3627, %v3623
        %v3848 = vpack.c.b16 %v3628, %v3624
        %v3849 = vpack.c.b16 %v3629, %v3625
        %v3850 = vpack.c.b16 %v3630, %v3626
        %v3851 = vpack.c.b16 %v3635, %v3631
        %v3852 = vpack.c.b16 %v3636, %v3632
        %v3853 = vpack.c.b16 %v3637, %v3633
        %v3854 = vpack.c.b16 %v3638, %v3634
        %v3855 = vpack.c.b16 %v3643, %v3639
        %v3856 = vpack.c.b16 %v3644, %v3640
        %v3857 = vpack.c.b16 %v3645, %v3641
        %v3858 = vpack.c.b16 %v3646, %v3642
        %v3859 = vpack.c.b16 %v3651, %v3647
        %v3860 = vpack.c.b16 %v3652, %v3648
        %v3861 = vpack.c.b16 %v3653, %v3649
        %v3862 = vpack.c.b16 %v3654, %v3650
        %v3863 = vpack.c.b16 %v3659, %v3655
        %v3864 = vpack.c.b16 %v3660, %v3656
        %v3865 = vpack.c.b16 %v3661, %v3657
        %v3866 = vpack.c.b16 %v3662, %v3658
        %v3867 = vpack.c.b16 %v3667, %v3663
        %v3868 = vpack.c.b16 %v3668, %v3664
        %v3869 = vpack.c.b16 %v3669, %v3665
        %v3870 = vpack.c.b16 %v3670, %v3666
        %v3871 = vpack.c.b16 %v3675, %v3671
        %v3872 = vpack.c.b16 %v3676, %v3672
        %v3873 = vpack.c.b16 %v3677, %v3673
        %v3874 = vpack.c.b16 %v3678, %v3674
        %v3875 = vpack.c.b16 %v3683, %v3679
        %v3876 = vpack.c.b16 %v3684, %v3680
        %v3877 = vpack.c.b16 %v3685, %v3681
        %v3878 = vpack.c.b16 %v3686, %v3682
        %v3879 = vpack.c.b16 %v3691, %v3687
        %v3880 = vpack.c.b16 %v3692, %v3688
        %v3881 = vpack.c.b16 %v3693, %v3689
        %v3882 = vpack.c.b16 %v3694, %v3690
        %v3883 = vpack.c.b16 %v3699, %v3695
        %v3884 = vpack.c.b16 %v3700, %v3696
        %v3885 = vpack.c.b16 %v3701, %v3697
        %v3886 = vpack.c.b16 %v3702, %v3698
        %v3887 = vpack.c.b16 %v3707, %v3703
        %v3888 = vpack.c.b16 %v3708, %v3704
        %v3889 = vpack.c.b16 %v3709, %v3705
        %v3890 = vpack.c.b16 %v3710, %v3706
        %v3891 = vpack.c.b16 %v3715, %v3711
        %v3892 = vpack.c.b16 %v3716, %v3712
        %v3893 = vpack.c.b16 %v3717, %v3713
        %v3894 = vpack.c.b16 %v3718, %v3714
        %v3895 = vpack.c.b16 %v3723, %v3719
        %v3896 = vpack.c.b16 %v3724, %v3720
        %v3897 = vpack.c.b16 %v3725, %v3721
        %v3898 = vpack.c.b16 %v3726, %v3722
        %v3899 = vpack.c.b16 %v3731, %v3727
        %v3900 = vpack.c.b16 %v3732, %v3728
        %v3901 = vpack.c.b16 %v3733, %v3729
        %v3902 = vpack.c.b16 %v3734, %v3730
        %v3903 = vpack.c.b16 %v3739, %v3735
        %v3904 = vpack.c.b16 %v3740, %v3736
        %v3905 = vpack.c.b16 %v3741, %v3737
        %v3906 = vpack.c.b16 %v3742, %v3738
        %v3907 = vpack.c.b16 %v3747, %v3743
        %v3908 = vpack.c.b16 %v3748, %v3744
        %v3909 = vpack.c.b16 %v3749, %v3745
        %v3910 = vpack.c.b16 %v3750, %v3746
        %v3911 = vpack.c.b16 %v3755, %v3751
        %v3912 = vpack.c.b16 %v3756, %v3752
        %v3913 = vpack.c.b16 %v3757, %v3753
        %v3914 = vpack.c.b16 %v3758, %v3754
        %v3915 = vpack.c.b16 %v3763, %v3759
        %v3916 = vpack.c.b16 %v3764, %v3760
        %v3917 = vpack.c.b16 %v3765, %v3761
        %v3918 = vpack.c.b16 %v3766, %v3762
        %v3919 = vpack.c.b16 %v3771, %v3767
        %v3920 = vpack.c.b16 %v3772, %v3768
        %v3921 = vpack.c.b16 %v3773, %v3769
        %v3922 = vpack.c.b16 %v3774, %v3770
        %v3923 = vpack.c.b16 %v3779, %v3775
        %v3924 = vpack.c.b16 %v3780, %v3776
        %v3925 = vpack.c.b16 %v3781, %v3777
        %v3926 = vpack.c.b16 %v3782, %v3778
        %v3927 = vpack.c.b16 %v3787, %v3783
        %v3928 = vpack.c.b16 %v3788, %v3784
        %v3929 = vpack.c.b16 %v3789, %v3785
        %v3930 = vpack.c.b16 %v3790, %v3786
        %v3931 = vpack.c.b16 %v3795, %v3791
        %v3932 = vpack.c.b16 %v3796, %v3792
        %v3933 = vpack.c.b16 %v3797, %v3793
        %v3934 = vpack.c.b16 %v3798, %v3794
        %v3935 = vpack.c.b16 %v3803, %v3799
        %v3936 = vpack.c.b16 %v3804, %v3800
        %v3937 = vpack.c.b16 %v3805, %v3801
        %v3938 = vpack.c.b16 %v3806, %v3802
        %v3939 = vpack.c.b16 %v3811, %v3807
        %v3940 = vpack.c.b16 %v3812, %v3808
        %v3941 = vpack.c.b16 %v3813, %v3809
        %v3942 = vpack.c.b16 %v3814, %v3810
        %v3943 = vpack.c.b16 %v3819, %v3815
        %v3944 = vpack.c.b16 %v3820, %v3816
        %v3945 = vpack.c.b16 %v3821, %v3817
        %v3946 = vpack.c.b16 %v3822, %v3818
        %v3947 = vpack.c.b16 %v3827, %v3823
        %v3948 = vpack.c.b16 %v3828, %v3824
        %v3949 = vpack.c.b16 %v3829, %v3825
        %v3950 = vpack.c.b16 %v3830, %v3826
        %v3951 = vpack.c.b16 %v3835, %v3831
        %v3952 = vpack.c.b16 %v3836, %v3832
        %v3953 = vpack.c.b16 %v3837, %v3833
        %v3954 = vpack.c.b16 %v3838, %v3834
        %v3955 = vpack.c.b16 %v3843, %v3839
        %v3956 = vpack.c.b16 %v3844, %v3840
        %v3957 = vpack.c.b16 %v3845, %v3841
        %v3958 = vpack.c.b16 %v3846, %v3842
        %4071 = vmatprep.subr.bf16.mxu0 %v3848
        %4072 = vmatpush1.bf16.msra.mxu0 %v3847
        %4073 = vmatprep.subr.bf16.mxu0 %v3852
        %4074 = vmatpush1.bf16.msra.mxu0 %v3851
        %4075 = vmatprep.subr.bf16.mxu0 %v3856
        %4076 = vmatpush1.bf16.msra.mxu0 %v3855
        %4077 = vmatprep.subr.bf16.mxu0 %v3860
        %4078 = vmatpush1.bf16.msra.mxu0 %v3859
        %4079 = vmatprep.subr.bf16.mxu0 %v3864
        %4080 = vmatpush1.bf16.msra.mxu0 %v3863
        %4081 = vmatprep.subr.bf16.mxu0 %v3868
        %4082 = vmatpush1.bf16.msra.mxu0 %v3867
        %4083 = vmatprep.subr.bf16.mxu0 %v3872
        %4084 = vmatpush1.bf16.msra.mxu0 %v3871
        %4085 = vmatprep.subr.bf16.mxu0 %v3876
        %4086 = vmatpush1.bf16.msra.mxu0 %v3875
        %4087 = vmatprep.subr.bf16.mxu0 %v3880
        %4088 = vmatpush1.bf16.msra.mxu0 %v3879
        %4089 = vmatprep.subr.bf16.mxu0 %v3884
        %4090 = vmatpush1.bf16.msra.mxu0 %v3883
        %4091 = vmatprep.subr.bf16.mxu0 %v3888
        %4092 = vmatpush1.bf16.msra.mxu0 %v3887
        %4093 = vmatprep.subr.bf16.mxu0 %v3892
        %4094 = vmatpush1.bf16.msra.mxu0 %v3891
        %4095 = vmatprep.subr.bf16.mxu0 %v3896
        %4096 = vmatpush1.bf16.msra.mxu0 %v3895
        %4097 = vmatprep.subr.bf16.mxu0 %v3900
        %4098 = vmatpush1.bf16.msra.mxu0 %v3899
        %4099 = vmatprep.subr.bf16.mxu0 %v3904
        %4100 = vmatpush1.bf16.msra.mxu0 %v3903
        %4101 = vmatprep.subr.bf16.mxu0 %v3908
        %4102 = vmatpush1.bf16.msra.mxu0 %v3907
        %4103 = vmatprep.mubr.bf16.mxu0 %v2546
        %4104 = vmatmul.mubr.bf16.gmra.mrb[0].mxu0 %v2545
        %v4105 = vpop.f32.mrb[0].mxu0
        %v4106 = vadd.f32 0.0, %v4105
        %v4107 = vpop.f32.mrb[0].mxu0
        %v4108 = vadd.f32 0.0, %v4107
        %v4109 = vpop.f32.mrb[0].mxu0
        %v4110 = vadd.f32 0.0, %v4109
        %v4111 = vpop.f32.mrb[0].mxu0
        %v4112 = vadd.f32 0.0, %v4111
        %4113 = vdwg.mxu0
        %4114 = vmatprep.subr.bf16.mxu0 %v3912
        %4115 = vmatpush1.bf16.msra.mxu0 %v3911
        %4116 = vmatprep.subr.bf16.mxu0 %v3916
        %4117 = vmatpush1.bf16.msra.mxu0 %v3915
        %4118 = vmatprep.subr.bf16.mxu0 %v3920
        %4119 = vmatpush1.bf16.msra.mxu0 %v3919
        %4120 = vmatprep.subr.bf16.mxu0 %v3924
        %4121 = vmatpush1.bf16.msra.mxu0 %v3923
        %4122 = vmatprep.subr.bf16.mxu0 %v3928
        %4123 = vmatpush1.bf16.msra.mxu0 %v3927
        %4124 = vmatprep.subr.bf16.mxu0 %v3932
        %4125 = vmatpush1.bf16.msra.mxu0 %v3931
        %4126 = vmatprep.subr.bf16.mxu0 %v3936
        %4127 = vmatpush1.bf16.msra.mxu0 %v3935
        %4128 = vmatprep.subr.bf16.mxu0 %v3940
        %4129 = vmatpush1.bf16.msra.mxu0 %v3939
        %4130 = vmatprep.subr.bf16.mxu0 %v3944
        %4131 = vmatpush1.bf16.msra.mxu0 %v3943
        %4132 = vmatprep.subr.bf16.mxu0 %v3948
        %4133 = vmatpush1.bf16.msra.mxu0 %v3947
        %4134 = vmatprep.subr.bf16.mxu0 %v3952
        %4135 = vmatpush1.bf16.msra.mxu0 %v3951
        %4136 = vmatprep.subr.bf16.mxu0 %v3956
        %4137 = vmatpush1.bf16.msra.mxu0 %v3955
        %4138 = vmatprep.subr.bf16.mxu0 0
        %4139 = vmatpush1.bf16.msra.mxu0 0
        %4140 = vmatprep.subr.bf16.mxu0 0
        %4141 = vmatpush1.bf16.msra.mxu0 0
        %4142 = vmatprep.subr.bf16.mxu0 0
        %4143 = vmatpush1.bf16.msra.mxu0 0
        %4144 = vmatprep.subr.bf16.mxu0 0
        %4145 = vmatpush1.bf16.msra.mxu0 0
        %4146 = vmatprep.mubr.bf16.mxu0 %v3224
        %4147 = vmatmul.mubr.bf16.gmra.mrb[0].mxu0 %v2547
        %v4148 = vpop.f32.mrb[0].mxu0
        %v4149 = vadd.f32 %v4106, %v4148
        %v4150 = vpop.f32.mrb[0].mxu0
        %v4151 = vadd.f32 %v4108, %v4150
        %v4152 = vpop.f32.mrb[0].mxu0
        %v4153 = vadd.f32 %v4110, %v4152
        %v4154 = vpop.f32.mrb[0].mxu0
        %v4155 = vadd.f32 %v4112, %v4154
        %4156 = vdwg.mxu0
        %4157 = vmatprep.subr.bf16.mxu0 %v3850
        %4158 = vmatpush1.bf16.msra.mxu0 %v3849
        %4159 = vmatprep.subr.bf16.mxu0 %v3854
        %4160 = vmatpush1.bf16.msra.mxu0 %v3853
        %4161 = vmatprep.subr.bf16.mxu0 %v3858
        %4162 = vmatpush1.bf16.msra.mxu0 %v3857
        %4163 = vmatprep.subr.bf16.mxu0 %v3862
        %4164 = vmatpush1.bf16.msra.mxu0 %v3861
        %4165 = vmatprep.subr.bf16.mxu0 %v3866
        %4166 = vmatpush1.bf16.msra.mxu0 %v3865
        %4167 = vmatprep.subr.bf16.mxu0 %v3870
        %4168 = vmatpush1.bf16.msra.mxu0 %v3869
        %4169 = vmatprep.subr.bf16.mxu0 %v3874
        %4170 = vmatpush1.bf16.msra.mxu0 %v3873
        %4171 = vmatprep.subr.bf16.mxu0 %v3878
        %4172 = vmatpush1.bf16.msra.mxu0 %v3877
        %4173 = vmatprep.subr.bf16.mxu0 %v3882
        %4174 = vmatpush1.bf16.msra.mxu0 %v3881
        %4175 = vmatprep.subr.bf16.mxu0 %v3886
        %4176 = vmatpush1.bf16.msra.mxu0 %v3885
        %4177 = vmatprep.subr.bf16.mxu0 %v3890
        %4178 = vmatpush1.bf16.msra.mxu0 %v3889
        %4179 = vmatprep.subr.bf16.mxu0 %v3894
        %4180 = vmatpush1.bf16.msra.mxu0 %v3893
        %4181 = vmatprep.subr.bf16.mxu0 %v3898
        %4182 = vmatpush1.bf16.msra.mxu0 %v3897
        %4183 = vmatprep.subr.bf16.mxu0 %v3902
        %4184 = vmatpush1.bf16.msra.mxu0 %v3901
        %4185 = vmatprep.subr.bf16.mxu0 %v3906
        %4186 = vmatpush1.bf16.msra.mxu0 %v3905
        %4187 = vmatprep.subr.bf16.mxu0 %v3910
        %4188 = vmatpush1.bf16.msra.mxu0 %v3909
        %4189 = vmatprep.mubr.bf16.mxu0 %v2546
        %4190 = vmatmul.mubr.bf16.gmra.mrb[0].mxu0 %v2545
        %v4191 = vpop.f32.mrb[0].mxu0
        %v4192 = vadd.f32 0.0, %v4191
        %v4193 = vpop.f32.mrb[0].mxu0
        %v4194 = vadd.f32 0.0, %v4193
        %v4195 = vpop.f32.mrb[0].mxu0
        %v4196 = vadd.f32 0.0, %v4195
        %v4197 = vpop.f32.mrb[0].mxu0
        %v4198 = vadd.f32 0.0, %v4197
        %4199 = vdwg.mxu0
        %4200 = vmatprep.subr.bf16.mxu0 %v3914
        %4201 = vmatpush1.bf16.msra.mxu0 %v3913
        %4202 = vmatprep.subr.bf16.mxu0 %v3918
        %4203 = vmatpush1.bf16.msra.mxu0 %v3917
        %4204 = vmatprep.subr.bf16.mxu0 %v3922
        %4205 = vmatpush1.bf16.msra.mxu0 %v3921
        %4206 = vmatprep.subr.bf16.mxu0 %v3926
        %4207 = vmatpush1.bf16.msra.mxu0 %v3925
        %4208 = vmatprep.subr.bf16.mxu0 %v3930
        %4209 = vmatpush1.bf16.msra.mxu0 %v3929
        %4210 = vmatprep.subr.bf16.mxu0 %v3934
        %4211 = vmatpush1.bf16.msra.mxu0 %v3933
        %4212 = vmatprep.subr.bf16.mxu0 %v3938
        %4213 = vmatpush1.bf16.msra.mxu0 %v3937
        %4214 = vmatprep.subr.bf16.mxu0 %v3942
        %4215 = vmatpush1.bf16.msra.mxu0 %v3941
        %4216 = vmatprep.subr.bf16.mxu0 %v3946
        %4217 = vmatpush1.bf16.msra.mxu0 %v3945
        %4218 = vmatprep.subr.bf16.mxu0 %v3950
        %4219 = vmatpush1.bf16.msra.mxu0 %v3949
        %4220 = vmatprep.subr.bf16.mxu0 %v3954
        %4221 = vmatpush1.bf16.msra.mxu0 %v3953
        %4222 = vmatprep.subr.bf16.mxu0 %v3958
        %4223 = vmatpush1.bf16.msra.mxu0 %v3957
        %4224 = vmatprep.subr.bf16.mxu0 0
        %4225 = vmatpush1.bf16.msra.mxu0 0
        %4226 = vmatprep.subr.bf16.mxu0 0
        %4227 = vmatpush1.bf16.msra.mxu0 0
        %4228 = vmatprep.subr.bf16.mxu0 0
        %4229 = vmatpush1.bf16.msra.mxu0 0
        %4230 = vmatprep.subr.bf16.mxu0 0
        %4231 = vmatpush1.bf16.msra.mxu0 0
        %4232 = vmatprep.mubr.bf16.mxu0 %v3224
        %4233 = vmatmul.mubr.bf16.gmra.mrb[0].mxu0 %v2547
        %v4234 = vpop.f32.mrb[0].mxu0
        %v4235 = vadd.f32 %v4192, %v4234
        %v4236 = vpop.f32.mrb[0].mxu0
        %v4237 = vadd.f32 %v4194, %v4236
        %v4238 = vpop.f32.mrb[0].mxu0
        %v4239 = vadd.f32 %v4196, %v4238
        %v4240 = vpop.f32.mrb[0].mxu0
        %v4241 = vadd.f32 %v4198, %v4240
        %4242 = vdwg.mxu0
        %v4355 = vunpack.c.l.b16 %v2223
        %v4356 = vunpack.c.h.b16 %v2223
        %v4357 = vunpack.c.l.b16 %v2224
        %v4358 = vunpack.c.h.b16 %v2224
        %v4359 = vunpack.c.l.b16 %v2225
        %v4360 = vunpack.c.h.b16 %v2225
        %v4361 = vunpack.c.l.b16 %v2226
        %v4362 = vunpack.c.h.b16 %v2226
        %v4363 = vunpack.c.l.b16 %v2227
        %v4364 = vunpack.c.h.b16 %v2227
        %v4365 = vunpack.c.l.b16 %v2228
        %v4366 = vunpack.c.h.b16 %v2228
        %v4367 = vunpack.c.l.b16 %v2229
        %v4368 = vunpack.c.h.b16 %v2229
        %v4369 = vunpack.c.l.b16 %v2230
        %v4370 = vunpack.c.h.b16 %v2230
        %v4371 = vunpack.c.l.b16 %v2231
        %v4372 = vunpack.c.h.b16 %v2231
        %v4373 = vunpack.c.l.b16 %v2232
        %v4374 = vunpack.c.h.b16 %v2232
        %v4375 = vunpack.c.l.b16 %v2233
        %v4376 = vunpack.c.h.b16 %v2233
        %v4377 = vunpack.c.l.b16 %v2234
        %v4378 = vunpack.c.h.b16 %v2234
        %v4379 = vunpack.c.l.b16 %v2235
        %v4380 = vunpack.c.h.b16 %v2235
        %v4381 = vunpack.c.l.b16 %v2236
        %v4382 = vunpack.c.h.b16 %v2236
        %v4383 = vunpack.c.l.b16 %v2237
        %v4384 = vunpack.c.h.b16 %v2237
        %v4385 = vunpack.c.l.b16 %v2238
        %v4386 = vunpack.c.h.b16 %v2238
        %v4387 = vunpack.c.l.b16 %v2239
        %v4388 = vunpack.c.h.b16 %v2239
        %v4389 = vunpack.c.l.b16 %v2240
        %v4390 = vunpack.c.h.b16 %v2240
        %v4391 = vunpack.c.l.b16 %v2241
        %v4392 = vunpack.c.h.b16 %v2241
        %v4393 = vunpack.c.l.b16 %v2242
        %v4394 = vunpack.c.h.b16 %v2242
        %v4395 = vunpack.c.l.b16 %v2243
        %v4396 = vunpack.c.h.b16 %v2243
        %v4397 = vunpack.c.l.b16 %v2244
        %v4398 = vunpack.c.h.b16 %v2244
        %v4399 = vunpack.c.l.b16 %v2245
        %v4400 = vunpack.c.h.b16 %v2245
        %v4401 = vunpack.c.l.b16 %v2246
        %v4402 = vunpack.c.h.b16 %v2246
        %v4403 = vunpack.c.l.b16 %v2247
        %v4404 = vunpack.c.h.b16 %v2247
        %v4405 = vunpack.c.l.b16 %v2248
        %v4406 = vunpack.c.h.b16 %v2248
        %v4407 = vunpack.c.l.b16 %v2249
        %v4408 = vunpack.c.h.b16 %v2249
        %v4409 = vunpack.c.l.b16 %v2250
        %v4410 = vunpack.c.h.b16 %v2250
        %v4411 = vunpack.c.l.b16 %v2251
        %v4412 = vunpack.c.h.b16 %v2251
        %v4413 = vunpack.c.l.b16 %v2252
        %v4414 = vunpack.c.h.b16 %v2252
        %v4415 = vunpack.c.l.b16 %v2253
        %v4416 = vunpack.c.h.b16 %v2253
        %v4417 = vunpack.c.l.b16 %v2254
        %v4418 = vunpack.c.h.b16 %v2254
        %v4419 = vunpack.c.l.b16 %v2255
        %v4420 = vunpack.c.h.b16 %v2255
        %v4421 = vunpack.c.l.b16 %v2256
        %v4422 = vunpack.c.h.b16 %v2256
        %v4423 = vunpack.c.l.b16 %v2257
        %v4424 = vunpack.c.h.b16 %v2257
        %v4425 = vunpack.c.l.b16 %v2258
        %v4426 = vunpack.c.h.b16 %v2258
        %v4427 = vunpack.c.l.b16 %v2259
        %v4428 = vunpack.c.h.b16 %v2259
        %v4429 = vunpack.c.l.b16 %v2260
        %v4430 = vunpack.c.h.b16 %v2260
        %v4431 = vunpack.c.l.b16 %v2261
        %v4432 = vunpack.c.h.b16 %v2261
        %v4433 = vunpack.c.l.b16 %v2262
        %v4434 = vunpack.c.h.b16 %v2262
        %v4435 = vunpack.c.l.b16 %v2263
        %v4436 = vunpack.c.h.b16 %v2263
        %v4437 = vunpack.c.l.b16 %v2264
        %v4438 = vunpack.c.h.b16 %v2264
        %v4439 = vunpack.c.l.b16 %v2265
        %v4440 = vunpack.c.h.b16 %v2265
        %v4441 = vunpack.c.l.b16 %v2266
        %v4442 = vunpack.c.h.b16 %v2266
        %v4443 = vunpack.c.l.b16 %v2267
        %v4444 = vunpack.c.h.b16 %v2267
        %v4445 = vunpack.c.l.b16 %v2268
        %v4446 = vunpack.c.h.b16 %v2268
        %v4447 = vunpack.c.l.b16 %v2269
        %v4448 = vunpack.c.h.b16 %v2269
        %v4449 = vunpack.c.l.b16 %v2270
        %v4450 = vunpack.c.h.b16 %v2270
        %v4451 = vunpack.c.l.b16 %v2271
        %v4452 = vunpack.c.h.b16 %v2271
        %v4453 = vunpack.c.l.b16 %v2272
        %v4454 = vunpack.c.h.b16 %v2272
        %v4455 = vunpack.c.l.b16 %v2273
        %v4456 = vunpack.c.h.b16 %v2273
        %v4457 = vunpack.c.l.b16 %v2274
        %v4458 = vunpack.c.h.b16 %v2274
        %v4459 = vunpack.c.l.b16 %v2275
        %v4460 = vunpack.c.h.b16 %v2275
        %v4461 = vunpack.c.l.b16 %v2276
        %v4462 = vunpack.c.h.b16 %v2276
        %v4463 = vunpack.c.l.b16 %v2277
        %v4464 = vunpack.c.h.b16 %v2277
        %v4465 = vunpack.c.l.b16 %v2278
        %v4466 = vunpack.c.h.b16 %v2278
        %v4467 = vunpack.c.l.b16 %v2279
        %v4468 = vunpack.c.h.b16 %v2279
        %v4469 = vunpack.c.l.b16 %v2280
        %v4470 = vunpack.c.h.b16 %v2280
        %v4471 = vunpack.c.l.b16 %v2281
        %v4472 = vunpack.c.h.b16 %v2281
        %v4473 = vunpack.c.l.b16 %v2282
        %v4474 = vunpack.c.h.b16 %v2282
        %v4475 = vunpack.c.l.b16 %v2283
        %v4476 = vunpack.c.h.b16 %v2283
        %v4477 = vunpack.c.l.b16 %v2284
        %v4478 = vunpack.c.h.b16 %v2284
        %v4479 = vunpack.c.l.b16 %v2285
        %v4480 = vunpack.c.h.b16 %v2285
        %v4481 = vunpack.c.l.b16 %v2286
        %v4482 = vunpack.c.h.b16 %v2286
        %v4483 = vunpack.c.l.b16 %v2287
        %v4484 = vunpack.c.h.b16 %v2287
        %v4485 = vunpack.c.l.b16 %v2288
        %v4486 = vunpack.c.h.b16 %v2288
        %v4487 = vunpack.c.l.b16 %v2289
        %v4488 = vunpack.c.h.b16 %v2289
        %v4489 = vunpack.c.l.b16 %v2290
        %v4490 = vunpack.c.h.b16 %v2290
        %v4491 = vunpack.c.l.b16 %v2291
        %v4492 = vunpack.c.h.b16 %v2291
        %v4493 = vunpack.c.l.b16 %v2292
        %v4494 = vunpack.c.h.b16 %v2292
        %v4495 = vunpack.c.l.b16 %v2293
        %v4496 = vunpack.c.h.b16 %v2293
        %v4497 = vunpack.c.l.b16 %v2294
        %v4498 = vunpack.c.h.b16 %v2294
        %v4499 = vunpack.c.l.b16 %v2295
        %v4500 = vunpack.c.h.b16 %v2295
        %v4501 = vunpack.c.l.b16 %v2296
        %v4502 = vunpack.c.h.b16 %v2296
        %v4503 = vunpack.c.l.b16 %v2297
        %v4504 = vunpack.c.h.b16 %v2297
        %v4505 = vunpack.c.l.b16 %v2298
        %v4506 = vunpack.c.h.b16 %v2298
        %v4507 = vunpack.c.l.b16 %v2299
        %v4508 = vunpack.c.h.b16 %v2299
        %v4509 = vunpack.c.l.b16 %v2300
        %v4510 = vunpack.c.h.b16 %v2300
        %v4511 = vunpack.c.l.b16 %v2301
        %v4512 = vunpack.c.h.b16 %v2301
        %v4513 = vunpack.c.l.b16 %v2302
        %v4514 = vunpack.c.h.b16 %v2302
        %v4515 = vunpack.c.l.b16 %v2303
        %v4516 = vunpack.c.h.b16 %v2303
        %v4517 = vunpack.c.l.b16 %v2304
        %v4518 = vunpack.c.h.b16 %v2304
        %v4519 = vunpack.c.l.b16 %v2305
        %v4520 = vunpack.c.h.b16 %v2305
        %v4521 = vunpack.c.l.b16 %v2306
        %v4522 = vunpack.c.h.b16 %v2306
        %v4523 = vunpack.c.l.b16 %v2307
        %v4524 = vunpack.c.h.b16 %v2307
        %v4525 = vunpack.c.l.b16 %v2308
        %v4526 = vunpack.c.h.b16 %v2308
        %v4527 = vunpack.c.l.b16 %v2309
        %v4528 = vunpack.c.h.b16 %v2309
        %v4529 = vunpack.c.l.b16 %v2310
        %v4530 = vunpack.c.h.b16 %v2310
        %v4531 = vunpack.c.l.b16 %v2311
        %v4532 = vunpack.c.h.b16 %v2311
        %v4533 = vunpack.c.l.b16 %v2312
        %v4534 = vunpack.c.h.b16 %v2312
        %v4535 = vunpack.c.l.b16 %v2313
        %v4536 = vunpack.c.h.b16 %v2313
        %v4537 = vunpack.c.l.b16 %v2314
        %v4538 = vunpack.c.h.b16 %v2314
        %v4539 = vunpack.c.l.b16 %v2315
        %v4540 = vunpack.c.h.b16 %v2315
        %v4541 = vunpack.c.l.b16 %v2316
        %v4542 = vunpack.c.h.b16 %v2316
        %v4543 = vunpack.c.l.b16 %v2317
        %v4544 = vunpack.c.h.b16 %v2317
        %v4545 = vunpack.c.l.b16 %v2318
        %v4546 = vunpack.c.h.b16 %v2318
        %v4547 = vunpack.c.l.b16 %v2319
        %v4548 = vunpack.c.h.b16 %v2319
        %v4549 = vunpack.c.l.b16 %v2320
        %v4550 = vunpack.c.h.b16 %v2320
        %v4551 = vunpack.c.l.b16 %v2321
        %v4552 = vunpack.c.h.b16 %v2321
        %v4553 = vunpack.c.l.b16 %v2322
        %v4554 = vunpack.c.h.b16 %v2322
        %v4555 = vunpack.c.l.b16 %v2323
        %v4556 = vunpack.c.h.b16 %v2323
        %v4557 = vunpack.c.l.b16 %v2324
        %v4558 = vunpack.c.h.b16 %v2324
        %v4559 = vunpack.c.l.b16 %v2325
        %v4560 = vunpack.c.h.b16 %v2325
        %v4561 = vunpack.c.l.b16 %v2326
        %v4562 = vunpack.c.h.b16 %v2326
        %v4563 = vunpack.c.l.b16 %v2327
        %v4564 = vunpack.c.h.b16 %v2327
        %v4565 = vunpack.c.l.b16 %v2328
        %v4566 = vunpack.c.h.b16 %v2328
        %v4567 = vunpack.c.l.b16 %v2329
        %v4568 = vunpack.c.h.b16 %v2329
        %v4569 = vunpack.c.l.b16 %v2330
        %v4570 = vunpack.c.h.b16 %v2330
        %v4571 = vunpack.c.l.b16 %v2331
        %v4572 = vunpack.c.h.b16 %v2331
        %v4573 = vunpack.c.l.b16 %v2332
        %v4574 = vunpack.c.h.b16 %v2332
        %v4575 = vunpack.c.l.b16 %v2333
        %v4576 = vunpack.c.h.b16 %v2333
        %v4577 = vunpack.c.l.b16 %v2334
        %v4578 = vunpack.c.h.b16 %v2334
        %v4579 = vpack.c.b16 %v4359, %v4355
        %v4580 = vpack.c.b16 %v4360, %v4356
        %v4581 = vpack.c.b16 %v4361, %v4357
        %v4582 = vpack.c.b16 %v4362, %v4358
        %v4583 = vpack.c.b16 %v4367, %v4363
        %v4584 = vpack.c.b16 %v4368, %v4364
        %v4585 = vpack.c.b16 %v4369, %v4365
        %v4586 = vpack.c.b16 %v4370, %v4366
        %v4587 = vpack.c.b16 %v4375, %v4371
        %v4588 = vpack.c.b16 %v4376, %v4372
        %v4589 = vpack.c.b16 %v4377, %v4373
        %v4590 = vpack.c.b16 %v4378, %v4374
        %v4591 = vpack.c.b16 %v4383, %v4379
        %v4592 = vpack.c.b16 %v4384, %v4380
        %v4593 = vpack.c.b16 %v4385, %v4381
        %v4594 = vpack.c.b16 %v4386, %v4382
        %v4595 = vpack.c.b16 %v4391, %v4387
        %v4596 = vpack.c.b16 %v4392, %v4388
        %v4597 = vpack.c.b16 %v4393, %v4389
        %v4598 = vpack.c.b16 %v4394, %v4390
        %v4599 = vpack.c.b16 %v4399, %v4395
        %v4600 = vpack.c.b16 %v4400, %v4396
        %v4601 = vpack.c.b16 %v4401, %v4397
        %v4602 = vpack.c.b16 %v4402, %v4398
        %v4603 = vpack.c.b16 %v4407, %v4403
        %v4604 = vpack.c.b16 %v4408, %v4404
        %v4605 = vpack.c.b16 %v4409, %v4405
        %v4606 = vpack.c.b16 %v4410, %v4406
        %v4607 = vpack.c.b16 %v4415, %v4411
        %v4608 = vpack.c.b16 %v4416, %v4412
        %v4609 = vpack.c.b16 %v4417, %v4413
        %v4610 = vpack.c.b16 %v4418, %v4414
        %v4611 = vpack.c.b16 %v4423, %v4419
        %v4612 = vpack.c.b16 %v4424, %v4420
        %v4613 = vpack.c.b16 %v4425, %v4421
        %v4614 = vpack.c.b16 %v4426, %v4422
        %v4615 = vpack.c.b16 %v4431, %v4427
        %v4616 = vpack.c.b16 %v4432, %v4428
        %v4617 = vpack.c.b16 %v4433, %v4429
        %v4618 = vpack.c.b16 %v4434, %v4430
        %v4619 = vpack.c.b16 %v4439, %v4435
        %v4620 = vpack.c.b16 %v4440, %v4436
        %v4621 = vpack.c.b16 %v4441, %v4437
        %v4622 = vpack.c.b16 %v4442, %v4438
        %v4623 = vpack.c.b16 %v4447, %v4443
        %v4624 = vpack.c.b16 %v4448, %v4444
        %v4625 = vpack.c.b16 %v4449, %v4445
        %v4626 = vpack.c.b16 %v4450, %v4446
        %v4627 = vpack.c.b16 %v4455, %v4451
        %v4628 = vpack.c.b16 %v4456, %v4452
        %v4629 = vpack.c.b16 %v4457, %v4453
        %v4630 = vpack.c.b16 %v4458, %v4454
        %v4631 = vpack.c.b16 %v4463, %v4459
        %v4632 = vpack.c.b16 %v4464, %v4460
        %v4633 = vpack.c.b16 %v4465, %v4461
        %v4634 = vpack.c.b16 %v4466, %v4462
        %v4635 = vpack.c.b16 %v4471, %v4467
        %v4636 = vpack.c.b16 %v4472, %v4468
        %v4637 = vpack.c.b16 %v4473, %v4469
        %v4638 = vpack.c.b16 %v4474, %v4470
        %v4639 = vpack.c.b16 %v4479, %v4475
        %v4640 = vpack.c.b16 %v4480, %v4476
        %v4641 = vpack.c.b16 %v4481, %v4477
        %v4642 = vpack.c.b16 %v4482, %v4478
        %v4643 = vpack.c.b16 %v4487, %v4483
        %v4644 = vpack.c.b16 %v4488, %v4484
        %v4645 = vpack.c.b16 %v4489, %v4485
        %v4646 = vpack.c.b16 %v4490, %v4486
        %v4647 = vpack.c.b16 %v4495, %v4491
        %v4648 = vpack.c.b16 %v4496, %v4492
        %v4649 = vpack.c.b16 %v4497, %v4493
        %v4650 = vpack.c.b16 %v4498, %v4494
        %v4651 = vpack.c.b16 %v4503, %v4499
        %v4652 = vpack.c.b16 %v4504, %v4500
        %v4653 = vpack.c.b16 %v4505, %v4501
        %v4654 = vpack.c.b16 %v4506, %v4502
        %v4655 = vpack.c.b16 %v4511, %v4507
        %v4656 = vpack.c.b16 %v4512, %v4508
        %v4657 = vpack.c.b16 %v4513, %v4509
        %v4658 = vpack.c.b16 %v4514, %v4510
        %v4659 = vpack.c.b16 %v4519, %v4515
        %v4660 = vpack.c.b16 %v4520, %v4516
        %v4661 = vpack.c.b16 %v4521, %v4517
        %v4662 = vpack.c.b16 %v4522, %v4518
        %v4663 = vpack.c.b16 %v4527, %v4523
        %v4664 = vpack.c.b16 %v4528, %v4524
        %v4665 = vpack.c.b16 %v4529, %v4525
        %v4666 = vpack.c.b16 %v4530, %v4526
        %v4667 = vpack.c.b16 %v4535, %v4531
        %v4668 = vpack.c.b16 %v4536, %v4532
        %v4669 = vpack.c.b16 %v4537, %v4533
        %v4670 = vpack.c.b16 %v4538, %v4534
        %v4671 = vpack.c.b16 %v4543, %v4539
        %v4672 = vpack.c.b16 %v4544, %v4540
        %v4673 = vpack.c.b16 %v4545, %v4541
        %v4674 = vpack.c.b16 %v4546, %v4542
        %v4675 = vpack.c.b16 %v4551, %v4547
        %v4676 = vpack.c.b16 %v4552, %v4548
        %v4677 = vpack.c.b16 %v4553, %v4549
        %v4678 = vpack.c.b16 %v4554, %v4550
        %v4679 = vpack.c.b16 %v4559, %v4555
        %v4680 = vpack.c.b16 %v4560, %v4556
        %v4681 = vpack.c.b16 %v4561, %v4557
        %v4682 = vpack.c.b16 %v4562, %v4558
        %v4683 = vpack.c.b16 %v4567, %v4563
        %v4684 = vpack.c.b16 %v4568, %v4564
        %v4685 = vpack.c.b16 %v4569, %v4565
        %v4686 = vpack.c.b16 %v4570, %v4566
        %v4687 = vpack.c.b16 %v4575, %v4571
        %v4688 = vpack.c.b16 %v4576, %v4572
        %v4689 = vpack.c.b16 %v4577, %v4573
        %v4690 = vpack.c.b16 %v4578, %v4574
        %v4804 = vsel %vm3222, %v2222, 0
        %4806 = vmatprep.subr.bf16.mxu0 %v4580
        %4807 = vmatpush1.bf16.msra.mxu0 %v4579
        %4808 = vmatprep.subr.bf16.mxu0 %v4584
        %4809 = vmatpush1.bf16.msra.mxu0 %v4583
        %4810 = vmatprep.subr.bf16.mxu0 %v4588
        %4811 = vmatpush1.bf16.msra.mxu0 %v4587
        %4812 = vmatprep.subr.bf16.mxu0 %v4592
        %4813 = vmatpush1.bf16.msra.mxu0 %v4591
        %4814 = vmatprep.subr.bf16.mxu0 %v4596
        %4815 = vmatpush1.bf16.msra.mxu0 %v4595
        %4816 = vmatprep.subr.bf16.mxu0 %v4600
        %4817 = vmatpush1.bf16.msra.mxu0 %v4599
        %4818 = vmatprep.subr.bf16.mxu0 %v4604
        %4819 = vmatpush1.bf16.msra.mxu0 %v4603
        %4820 = vmatprep.subr.bf16.mxu0 %v4608
        %4821 = vmatpush1.bf16.msra.mxu0 %v4607
        %4822 = vmatprep.subr.bf16.mxu0 %v4612
        %4823 = vmatpush1.bf16.msra.mxu0 %v4611
        %4824 = vmatprep.subr.bf16.mxu0 %v4616
        %4825 = vmatpush1.bf16.msra.mxu0 %v4615
        %4826 = vmatprep.subr.bf16.mxu0 %v4620
        %4827 = vmatpush1.bf16.msra.mxu0 %v4619
        %4828 = vmatprep.subr.bf16.mxu0 %v4624
        %4829 = vmatpush1.bf16.msra.mxu0 %v4623
        %4830 = vmatprep.subr.bf16.mxu0 %v4628
        %4831 = vmatpush1.bf16.msra.mxu0 %v4627
        %4832 = vmatprep.subr.bf16.mxu0 %v4632
        %4833 = vmatpush1.bf16.msra.mxu0 %v4631
        %4834 = vmatprep.subr.bf16.mxu0 %v4636
        %4835 = vmatpush1.bf16.msra.mxu0 %v4635
        %4836 = vmatprep.subr.bf16.mxu0 %v4640
        %4837 = vmatpush1.bf16.msra.mxu0 %v4639
        %4838 = vmatprep.mubr.bf16.mxu0 %v2220
        %4839 = vmatmul.mubr.bf16.gmra.mrb[0].mxu0 %v2219
        %v4840 = vpop.f32.mrb[0].mxu0
        %v4841 = vadd.f32 %v3304, %v4840
        %v4842 = vpop.f32.mrb[0].mxu0
        %v4843 = vadd.f32 %v3306, %v4842
        %v4844 = vpop.f32.mrb[0].mxu0
        %v4845 = vadd.f32 %v3308, %v4844
        %v4846 = vpop.f32.mrb[0].mxu0
        %v4847 = vadd.f32 %v3310, %v4846
        %4848 = vdwg.mxu0
        %4849 = vmatprep.subr.bf16.mxu0 %v4644
        %4850 = vmatpush1.bf16.msra.mxu0 %v4643
        %4851 = vmatprep.subr.bf16.mxu0 %v4648
        %4852 = vmatpush1.bf16.msra.mxu0 %v4647
        %4853 = vmatprep.subr.bf16.mxu0 %v4652
        %4854 = vmatpush1.bf16.msra.mxu0 %v4651
        %4855 = vmatprep.subr.bf16.mxu0 %v4656
        %4856 = vmatpush1.bf16.msra.mxu0 %v4655
        %4857 = vmatprep.subr.bf16.mxu0 %v4660
        %4858 = vmatpush1.bf16.msra.mxu0 %v4659
        %4859 = vmatprep.subr.bf16.mxu0 %v4664
        %4860 = vmatpush1.bf16.msra.mxu0 %v4663
        %4861 = vmatprep.subr.bf16.mxu0 %v4668
        %4862 = vmatpush1.bf16.msra.mxu0 %v4667
        %4863 = vmatprep.subr.bf16.mxu0 %v4672
        %4864 = vmatpush1.bf16.msra.mxu0 %v4671
        %4865 = vmatprep.subr.bf16.mxu0 %v4676
        %4866 = vmatpush1.bf16.msra.mxu0 %v4675
        %4867 = vmatprep.subr.bf16.mxu0 %v4680
        %4868 = vmatpush1.bf16.msra.mxu0 %v4679
        %4869 = vmatprep.subr.bf16.mxu0 %v4684
        %4870 = vmatpush1.bf16.msra.mxu0 %v4683
        %4871 = vmatprep.subr.bf16.mxu0 %v4688
        %4872 = vmatpush1.bf16.msra.mxu0 %v4687
        %4873 = vmatprep.subr.bf16.mxu0 0
        %4874 = vmatpush1.bf16.msra.mxu0 0
        %4875 = vmatprep.subr.bf16.mxu0 0
        %4876 = vmatpush1.bf16.msra.mxu0 0
        %4877 = vmatprep.subr.bf16.mxu0 0
        %4878 = vmatpush1.bf16.msra.mxu0 0
        %4879 = vmatprep.subr.bf16.mxu0 0
        %4880 = vmatpush1.bf16.msra.mxu0 0
        %4881 = vmatprep.mubr.bf16.mxu0 %v4804
        %4882 = vmatmul.mubr.bf16.gmra.mrb[0].mxu0 %v2221
        %v4883 = vpop.f32.mrb[0].mxu0
        %v4884 = vadd.f32 %v4841, %v4883
        %v4885 = vpop.f32.mrb[0].mxu0
        %v4886 = vadd.f32 %v4843, %v4885
        %v4887 = vpop.f32.mrb[0].mxu0
        %v4888 = vadd.f32 %v4845, %v4887
        %v4889 = vpop.f32.mrb[0].mxu0
        %v4890 = vadd.f32 %v4847, %v4889
        %4891 = vdwg.mxu0
        %4892 = vmatprep.subr.bf16.mxu0 %v4582
        %4893 = vmatpush1.bf16.msra.mxu0 %v4581
        %4894 = vmatprep.subr.bf16.mxu0 %v4586
        %4895 = vmatpush1.bf16.msra.mxu0 %v4585
        %4896 = vmatprep.subr.bf16.mxu0 %v4590
        %4897 = vmatpush1.bf16.msra.mxu0 %v4589
        %4898 = vmatprep.subr.bf16.mxu0 %v4594
        %4899 = vmatpush1.bf16.msra.mxu0 %v4593
        %4900 = vmatprep.subr.bf16.mxu0 %v4598
        %4901 = vmatpush1.bf16.msra.mxu0 %v4597
        %4902 = vmatprep.subr.bf16.mxu0 %v4602
        %4903 = vmatpush1.bf16.msra.mxu0 %v4601
        %4904 = vmatprep.subr.bf16.mxu0 %v4606
        %4905 = vmatpush1.bf16.msra.mxu0 %v4605
        %4906 = vmatprep.subr.bf16.mxu0 %v4610
        %4907 = vmatpush1.bf16.msra.mxu0 %v4609
        %4908 = vmatprep.subr.bf16.mxu0 %v4614
        %4909 = vmatpush1.bf16.msra.mxu0 %v4613
        %4910 = vmatprep.subr.bf16.mxu0 %v4618
        %4911 = vmatpush1.bf16.msra.mxu0 %v4617
        %4912 = vmatprep.subr.bf16.mxu0 %v4622
        %4913 = vmatpush1.bf16.msra.mxu0 %v4621
        %4914 = vmatprep.subr.bf16.mxu0 %v4626
        %4915 = vmatpush1.bf16.msra.mxu0 %v4625
        %4916 = vmatprep.subr.bf16.mxu0 %v4630
        %4917 = vmatpush1.bf16.msra.mxu0 %v4629
        %4918 = vmatprep.subr.bf16.mxu0 %v4634
        %4919 = vmatpush1.bf16.msra.mxu0 %v4633
        %4920 = vmatprep.subr.bf16.mxu0 %v4638
        %4921 = vmatpush1.bf16.msra.mxu0 %v4637
        %4922 = vmatprep.subr.bf16.mxu0 %v4642
        %4923 = vmatpush1.bf16.msra.mxu0 %v4641
        %4924 = vmatprep.mubr.bf16.mxu0 %v2220
        %4925 = vmatmul.mubr.bf16.gmra.mrb[0].mxu0 %v2219
        %v4926 = vpop.f32.mrb[0].mxu0
        %v4927 = vadd.f32 %v3390, %v4926
        %v4928 = vpop.f32.mrb[0].mxu0
        %v4929 = vadd.f32 %v3392, %v4928
        %v4930 = vpop.f32.mrb[0].mxu0
        %v4931 = vadd.f32 %v3394, %v4930
        %v4932 = vpop.f32.mrb[0].mxu0
        %v4933 = vadd.f32 %v3396, %v4932
        %4934 = vdwg.mxu0
        %4935 = vmatprep.subr.bf16.mxu0 %v4646
        %4936 = vmatpush1.bf16.msra.mxu0 %v4645
        %4937 = vmatprep.subr.bf16.mxu0 %v4650
        %4938 = vmatpush1.bf16.msra.mxu0 %v4649
        %4939 = vmatprep.subr.bf16.mxu0 %v4654
        %4940 = vmatpush1.bf16.msra.mxu0 %v4653
        %4941 = vmatprep.subr.bf16.mxu0 %v4658
        %4942 = vmatpush1.bf16.msra.mxu0 %v4657
        %4943 = vmatprep.subr.bf16.mxu0 %v4662
        %4944 = vmatpush1.bf16.msra.mxu0 %v4661
        %4945 = vmatprep.subr.bf16.mxu0 %v4666
        %4946 = vmatpush1.bf16.msra.mxu0 %v4665
        %4947 = vmatprep.subr.bf16.mxu0 %v4670
        %4948 = vmatpush1.bf16.msra.mxu0 %v4669
        %4949 = vmatprep.subr.bf16.mxu0 %v4674
        %4950 = vmatpush1.bf16.msra.mxu0 %v4673
        %4951 = vmatprep.subr.bf16.mxu0 %v4678
        %4952 = vmatpush1.bf16.msra.mxu0 %v4677
        %4953 = vmatprep.subr.bf16.mxu0 %v4682
        %4954 = vmatpush1.bf16.msra.mxu0 %v4681
        %4955 = vmatprep.subr.bf16.mxu0 %v4686
        %4956 = vmatpush1.bf16.msra.mxu0 %v4685
        %4957 = vmatprep.subr.bf16.mxu0 %v4690
        %4958 = vmatpush1.bf16.msra.mxu0 %v4689
        %4959 = vmatprep.subr.bf16.mxu0 0
        %4960 = vmatpush1.bf16.msra.mxu0 0
        %4961 = vmatprep.subr.bf16.mxu0 0
        %4962 = vmatpush1.bf16.msra.mxu0 0
        %4963 = vmatprep.subr.bf16.mxu0 0
        %4964 = vmatpush1.bf16.msra.mxu0 0
        %4965 = vmatprep.subr.bf16.mxu0 0
        %4966 = vmatpush1.bf16.msra.mxu0 0
        %4967 = vmatprep.mubr.bf16.mxu0 %v4804
        %4968 = vmatmul.mubr.bf16.gmra.mrb[0].mxu0 %v2221
        %v4969 = vpop.f32.mrb[0].mxu0
        %v4970 = vadd.f32 %v4927, %v4969
        %v4971 = vpop.f32.mrb[0].mxu0
        %v4972 = vadd.f32 %v4929, %v4971
        %v4973 = vpop.f32.mrb[0].mxu0
        %v4974 = vadd.f32 %v4931, %v4973
        %v4975 = vpop.f32.mrb[0].mxu0
        %v4976 = vadd.f32 %v4933, %v4975
        %4977 = vdwg.mxu0
        %v5090 = vunpack.c.l.b16 %v2336
        %v5091 = vunpack.c.h.b16 %v2336
        %v5092 = vunpack.c.l.b16 %v2337
        %v5093 = vunpack.c.h.b16 %v2337
        %v5094 = vunpack.c.l.b16 %v2338
        %v5095 = vunpack.c.h.b16 %v2338
        %v5096 = vunpack.c.l.b16 %v2339
        %v5097 = vunpack.c.h.b16 %v2339
        %v5098 = vunpack.c.l.b16 %v2340
        %v5099 = vunpack.c.h.b16 %v2340
        %v5100 = vunpack.c.l.b16 %v2341
        %v5101 = vunpack.c.h.b16 %v2341
        %v5102 = vunpack.c.l.b16 %v2342
        %v5103 = vunpack.c.h.b16 %v2342
        %v5104 = vunpack.c.l.b16 %v2343
        %v5105 = vunpack.c.h.b16 %v2343
        %v5106 = vunpack.c.l.b16 %v2344
        %v5107 = vunpack.c.h.b16 %v2344
        %v5108 = vunpack.c.l.b16 %v2345
        %v5109 = vunpack.c.h.b16 %v2345
        %v5110 = vunpack.c.l.b16 %v2346
        %v5111 = vunpack.c.h.b16 %v2346
        %v5112 = vunpack.c.l.b16 %v2347
        %v5113 = vunpack.c.h.b16 %v2347
        %v5114 = vunpack.c.l.b16 %v2348
        %v5115 = vunpack.c.h.b16 %v2348
        %v5116 = vunpack.c.l.b16 %v2349
        %v5117 = vunpack.c.h.b16 %v2349
        %v5118 = vunpack.c.l.b16 %v2350
        %v5119 = vunpack.c.h.b16 %v2350
        %v5120 = vunpack.c.l.b16 %v2351
        %v5121 = vunpack.c.h.b16 %v2351
        %v5122 = vunpack.c.l.b16 %v2352
        %v5123 = vunpack.c.h.b16 %v2352
        %v5124 = vunpack.c.l.b16 %v2353
        %v5125 = vunpack.c.h.b16 %v2353
        %v5126 = vunpack.c.l.b16 %v2354
        %v5127 = vunpack.c.h.b16 %v2354
        %v5128 = vunpack.c.l.b16 %v2355
        %v5129 = vunpack.c.h.b16 %v2355
        %v5130 = vunpack.c.l.b16 %v2356
        %v5131 = vunpack.c.h.b16 %v2356
        %v5132 = vunpack.c.l.b16 %v2357
        %v5133 = vunpack.c.h.b16 %v2357
        %v5134 = vunpack.c.l.b16 %v2358
        %v5135 = vunpack.c.h.b16 %v2358
        %v5136 = vunpack.c.l.b16 %v2359
        %v5137 = vunpack.c.h.b16 %v2359
        %v5138 = vunpack.c.l.b16 %v2360
        %v5139 = vunpack.c.h.b16 %v2360
        %v5140 = vunpack.c.l.b16 %v2361
        %v5141 = vunpack.c.h.b16 %v2361
        %v5142 = vunpack.c.l.b16 %v2362
        %v5143 = vunpack.c.h.b16 %v2362
        %v5144 = vunpack.c.l.b16 %v2363
        %v5145 = vunpack.c.h.b16 %v2363
        %v5146 = vunpack.c.l.b16 %v2364
        %v5147 = vunpack.c.h.b16 %v2364
        %v5148 = vunpack.c.l.b16 %v2365
        %v5149 = vunpack.c.h.b16 %v2365
        %v5150 = vunpack.c.l.b16 %v2366
        %v5151 = vunpack.c.h.b16 %v2366
        %v5152 = vunpack.c.l.b16 %v2367
        %v5153 = vunpack.c.h.b16 %v2367
        %v5154 = vunpack.c.l.b16 %v2368
        %v5155 = vunpack.c.h.b16 %v2368
        %v5156 = vunpack.c.l.b16 %v2369
        %v5157 = vunpack.c.h.b16 %v2369
        %v5158 = vunpack.c.l.b16 %v2370
        %v5159 = vunpack.c.h.b16 %v2370
        %v5160 = vunpack.c.l.b16 %v2371
        %v5161 = vunpack.c.h.b16 %v2371
        %v5162 = vunpack.c.l.b16 %v2372
        %v5163 = vunpack.c.h.b16 %v2372
        %v5164 = vunpack.c.l.b16 %v2373
        %v5165 = vunpack.c.h.b16 %v2373
        %v5166 = vunpack.c.l.b16 %v2374
        %v5167 = vunpack.c.h.b16 %v2374
        %v5168 = vunpack.c.l.b16 %v2375
        %v5169 = vunpack.c.h.b16 %v2375
        %v5170 = vunpack.c.l.b16 %v2376
        %v5171 = vunpack.c.h.b16 %v2376
        %v5172 = vunpack.c.l.b16 %v2377
        %v5173 = vunpack.c.h.b16 %v2377
        %v5174 = vunpack.c.l.b16 %v2378
        %v5175 = vunpack.c.h.b16 %v2378
        %v5176 = vunpack.c.l.b16 %v2379
        %v5177 = vunpack.c.h.b16 %v2379
        %v5178 = vunpack.c.l.b16 %v2380
        %v5179 = vunpack.c.h.b16 %v2380
        %v5180 = vunpack.c.l.b16 %v2381
        %v5181 = vunpack.c.h.b16 %v2381
        %v5182 = vunpack.c.l.b16 %v2382
        %v5183 = vunpack.c.h.b16 %v2382
        %v5184 = vunpack.c.l.b16 %v2383
        %v5185 = vunpack.c.h.b16 %v2383
        %v5186 = vunpack.c.l.b16 %v2384
        %v5187 = vunpack.c.h.b16 %v2384
        %v5188 = vunpack.c.l.b16 %v2385
        %v5189 = vunpack.c.h.b16 %v2385
        %v5190 = vunpack.c.l.b16 %v2386
        %v5191 = vunpack.c.h.b16 %v2386
        %v5192 = vunpack.c.l.b16 %v2387
        %v5193 = vunpack.c.h.b16 %v2387
        %v5194 = vunpack.c.l.b16 %v2388
        %v5195 = vunpack.c.h.b16 %v2388
        %v5196 = vunpack.c.l.b16 %v2389
        %v5197 = vunpack.c.h.b16 %v2389
        %v5198 = vunpack.c.l.b16 %v2390
        %v5199 = vunpack.c.h.b16 %v2390
        %v5200 = vunpack.c.l.b16 %v2391
        %v5201 = vunpack.c.h.b16 %v2391
        %v5202 = vunpack.c.l.b16 %v2392
        %v5203 = vunpack.c.h.b16 %v2392
        %v5204 = vunpack.c.l.b16 %v2393
        %v5205 = vunpack.c.h.b16 %v2393
        %v5206 = vunpack.c.l.b16 %v2394
        %v5207 = vunpack.c.h.b16 %v2394
        %v5208 = vunpack.c.l.b16 %v2395
        %v5209 = vunpack.c.h.b16 %v2395
        %v5210 = vunpack.c.l.b16 %v2396
        %v5211 = vunpack.c.h.b16 %v2396
        %v5212 = vunpack.c.l.b16 %v2397
        %v5213 = vunpack.c.h.b16 %v2397
        %v5214 = vunpack.c.l.b16 %v2398
        %v5215 = vunpack.c.h.b16 %v2398
        %v5216 = vunpack.c.l.b16 %v2399
        %v5217 = vunpack.c.h.b16 %v2399
        %v5218 = vunpack.c.l.b16 %v2400
        %v5219 = vunpack.c.h.b16 %v2400
        %v5220 = vunpack.c.l.b16 %v2401
        %v5221 = vunpack.c.h.b16 %v2401
        %v5222 = vunpack.c.l.b16 %v2402
        %v5223 = vunpack.c.h.b16 %v2402
        %v5224 = vunpack.c.l.b16 %v2403
        %v5225 = vunpack.c.h.b16 %v2403
        %v5226 = vunpack.c.l.b16 %v2404
        %v5227 = vunpack.c.h.b16 %v2404
        %v5228 = vunpack.c.l.b16 %v2405
        %v5229 = vunpack.c.h.b16 %v2405
        %v5230 = vunpack.c.l.b16 %v2406
        %v5231 = vunpack.c.h.b16 %v2406
        %v5232 = vunpack.c.l.b16 %v2407
        %v5233 = vunpack.c.h.b16 %v2407
        %v5234 = vunpack.c.l.b16 %v2408
        %v5235 = vunpack.c.h.b16 %v2408
        %v5236 = vunpack.c.l.b16 %v2409
        %v5237 = vunpack.c.h.b16 %v2409
        %v5238 = vunpack.c.l.b16 %v2410
        %v5239 = vunpack.c.h.b16 %v2410
        %v5240 = vunpack.c.l.b16 %v2411
        %v5241 = vunpack.c.h.b16 %v2411
        %v5242 = vunpack.c.l.b16 %v2412
        %v5243 = vunpack.c.h.b16 %v2412
        %v5244 = vunpack.c.l.b16 %v2413
        %v5245 = vunpack.c.h.b16 %v2413
        %v5246 = vunpack.c.l.b16 %v2414
        %v5247 = vunpack.c.h.b16 %v2414
        %v5248 = vunpack.c.l.b16 %v2415
        %v5249 = vunpack.c.h.b16 %v2415
        %v5250 = vunpack.c.l.b16 %v2416
        %v5251 = vunpack.c.h.b16 %v2416
        %v5252 = vunpack.c.l.b16 %v2417
        %v5253 = vunpack.c.h.b16 %v2417
        %v5254 = vunpack.c.l.b16 %v2418
        %v5255 = vunpack.c.h.b16 %v2418
        %v5256 = vunpack.c.l.b16 %v2419
        %v5257 = vunpack.c.h.b16 %v2419
        %v5258 = vunpack.c.l.b16 %v2420
        %v5259 = vunpack.c.h.b16 %v2420
        %v5260 = vunpack.c.l.b16 %v2421
        %v5261 = vunpack.c.h.b16 %v2421
        %v5262 = vunpack.c.l.b16 %v2422
        %v5263 = vunpack.c.h.b16 %v2422
        %v5264 = vunpack.c.l.b16 %v2423
        %v5265 = vunpack.c.h.b16 %v2423
        %v5266 = vunpack.c.l.b16 %v2424
        %v5267 = vunpack.c.h.b16 %v2424
        %v5268 = vunpack.c.l.b16 %v2425
        %v5269 = vunpack.c.h.b16 %v2425
        %v5270 = vunpack.c.l.b16 %v2426
        %v5271 = vunpack.c.h.b16 %v2426
        %v5272 = vunpack.c.l.b16 %v2427
        %v5273 = vunpack.c.h.b16 %v2427
        %v5274 = vunpack.c.l.b16 %v2428
        %v5275 = vunpack.c.h.b16 %v2428
        %v5276 = vunpack.c.l.b16 %v2429
        %v5277 = vunpack.c.h.b16 %v2429
        %v5278 = vunpack.c.l.b16 %v2430
        %v5279 = vunpack.c.h.b16 %v2430
        %v5280 = vunpack.c.l.b16 %v2431
        %v5281 = vunpack.c.h.b16 %v2431
        %v5282 = vunpack.c.l.b16 %v2432
        %v5283 = vunpack.c.h.b16 %v2432
        %v5284 = vunpack.c.l.b16 %v2433
        %v5285 = vunpack.c.h.b16 %v2433
        %v5286 = vunpack.c.l.b16 %v2434
        %v5287 = vunpack.c.h.b16 %v2434
        %v5288 = vunpack.c.l.b16 %v2435
        %v5289 = vunpack.c.h.b16 %v2435
        %v5290 = vunpack.c.l.b16 %v2436
        %v5291 = vunpack.c.h.b16 %v2436
        %v5292 = vunpack.c.l.b16 %v2437
        %v5293 = vunpack.c.h.b16 %v2437
        %v5294 = vunpack.c.l.b16 %v2438
        %v5295 = vunpack.c.h.b16 %v2438
        %v5296 = vunpack.c.l.b16 %v2439
        %v5297 = vunpack.c.h.b16 %v2439
        %v5298 = vunpack.c.l.b16 %v2440
        %v5299 = vunpack.c.h.b16 %v2440
        %v5300 = vunpack.c.l.b16 %v2441
        %v5301 = vunpack.c.h.b16 %v2441
        %v5302 = vunpack.c.l.b16 %v2442
        %v5303 = vunpack.c.h.b16 %v2442
        %v5304 = vunpack.c.l.b16 %v2443
        %v5305 = vunpack.c.h.b16 %v2443
        %v5306 = vunpack.c.l.b16 %v2444
        %v5307 = vunpack.c.h.b16 %v2444
        %v5308 = vunpack.c.l.b16 %v2445
        %v5309 = vunpack.c.h.b16 %v2445
        %v5310 = vunpack.c.l.b16 %v2446
        %v5311 = vunpack.c.h.b16 %v2446
        %v5312 = vunpack.c.l.b16 %v2447
        %v5313 = vunpack.c.h.b16 %v2447
        %v5314 = vpack.c.b16 %v5094, %v5090
        %v5315 = vpack.c.b16 %v5095, %v5091
        %v5316 = vpack.c.b16 %v5096, %v5092
        %v5317 = vpack.c.b16 %v5097, %v5093
        %v5318 = vpack.c.b16 %v5102, %v5098
        %v5319 = vpack.c.b16 %v5103, %v5099
        %v5320 = vpack.c.b16 %v5104, %v5100
        %v5321 = vpack.c.b16 %v5105, %v5101
        %v5322 = vpack.c.b16 %v5110, %v5106
        %v5323 = vpack.c.b16 %v5111, %v5107
        %v5324 = vpack.c.b16 %v5112, %v5108
        %v5325 = vpack.c.b16 %v5113, %v5109
        %v5326 = vpack.c.b16 %v5118, %v5114
        %v5327 = vpack.c.b16 %v5119, %v5115
        %v5328 = vpack.c.b16 %v5120, %v5116
        %v5329 = vpack.c.b16 %v5121, %v5117
        %v5330 = vpack.c.b16 %v5126, %v5122
        %v5331 = vpack.c.b16 %v5127, %v5123
        %v5332 = vpack.c.b16 %v5128, %v5124
        %v5333 = vpack.c.b16 %v5129, %v5125
        %v5334 = vpack.c.b16 %v5134, %v5130
        %v5335 = vpack.c.b16 %v5135, %v5131
        %v5336 = vpack.c.b16 %v5136, %v5132
        %v5337 = vpack.c.b16 %v5137, %v5133
        %v5338 = vpack.c.b16 %v5142, %v5138
        %v5339 = vpack.c.b16 %v5143, %v5139
        %v5340 = vpack.c.b16 %v5144, %v5140
        %v5341 = vpack.c.b16 %v5145, %v5141
        %v5342 = vpack.c.b16 %v5150, %v5146
        %v5343 = vpack.c.b16 %v5151, %v5147
        %v5344 = vpack.c.b16 %v5152, %v5148
        %v5345 = vpack.c.b16 %v5153, %v5149
        %v5346 = vpack.c.b16 %v5158, %v5154
        %v5347 = vpack.c.b16 %v5159, %v5155
        %v5348 = vpack.c.b16 %v5160, %v5156
        %v5349 = vpack.c.b16 %v5161, %v5157
        %v5350 = vpack.c.b16 %v5166, %v5162
        %v5351 = vpack.c.b16 %v5167, %v5163
        %v5352 = vpack.c.b16 %v5168, %v5164
        %v5353 = vpack.c.b16 %v5169, %v5165
        %v5354 = vpack.c.b16 %v5174, %v5170
        %v5355 = vpack.c.b16 %v5175, %v5171
        %v5356 = vpack.c.b16 %v5176, %v5172
        %v5357 = vpack.c.b16 %v5177, %v5173
        %v5358 = vpack.c.b16 %v5182, %v5178
        %v5359 = vpack.c.b16 %v5183, %v5179
        %v5360 = vpack.c.b16 %v5184, %v5180
        %v5361 = vpack.c.b16 %v5185, %v5181
        %v5362 = vpack.c.b16 %v5190, %v5186
        %v5363 = vpack.c.b16 %v5191, %v5187
        %v5364 = vpack.c.b16 %v5192, %v5188
        %v5365 = vpack.c.b16 %v5193, %v5189
        %v5366 = vpack.c.b16 %v5198, %v5194
        %v5367 = vpack.c.b16 %v5199, %v5195
        %v5368 = vpack.c.b16 %v5200, %v5196
        %v5369 = vpack.c.b16 %v5201, %v5197
        %v5370 = vpack.c.b16 %v5206, %v5202
        %v5371 = vpack.c.b16 %v5207, %v5203
        %v5372 = vpack.c.b16 %v5208, %v5204
        %v5373 = vpack.c.b16 %v5209, %v5205
        %v5374 = vpack.c.b16 %v5214, %v5210
        %v5375 = vpack.c.b16 %v5215, %v5211
        %v5376 = vpack.c.b16 %v5216, %v5212
        %v5377 = vpack.c.b16 %v5217, %v5213
        %v5378 = vpack.c.b16 %v5222, %v5218
        %v5379 = vpack.c.b16 %v5223, %v5219
        %v5380 = vpack.c.b16 %v5224, %v5220
        %v5381 = vpack.c.b16 %v5225, %v5221
        %v5382 = vpack.c.b16 %v5230, %v5226
        %v5383 = vpack.c.b16 %v5231, %v5227
        %v5384 = vpack.c.b16 %v5232, %v5228
        %v5385 = vpack.c.b16 %v5233, %v5229
        %v5386 = vpack.c.b16 %v5238, %v5234
        %v5387 = vpack.c.b16 %v5239, %v5235
        %v5388 = vpack.c.b16 %v5240, %v5236
        %v5389 = vpack.c.b16 %v5241, %v5237
        %v5390 = vpack.c.b16 %v5246, %v5242
        %v5391 = vpack.c.b16 %v5247, %v5243
        %v5392 = vpack.c.b16 %v5248, %v5244
        %v5393 = vpack.c.b16 %v5249, %v5245
        %v5394 = vpack.c.b16 %v5254, %v5250
        %v5395 = vpack.c.b16 %v5255, %v5251
        %v5396 = vpack.c.b16 %v5256, %v5252
        %v5397 = vpack.c.b16 %v5257, %v5253
        %v5398 = vpack.c.b16 %v5262, %v5258
        %v5399 = vpack.c.b16 %v5263, %v5259
        %v5400 = vpack.c.b16 %v5264, %v5260
        %v5401 = vpack.c.b16 %v5265, %v5261
        %v5402 = vpack.c.b16 %v5270, %v5266
        %v5403 = vpack.c.b16 %v5271, %v5267
        %v5404 = vpack.c.b16 %v5272, %v5268
        %v5405 = vpack.c.b16 %v5273, %v5269
        %v5406 = vpack.c.b16 %v5278, %v5274
        %v5407 = vpack.c.b16 %v5279, %v5275
        %v5408 = vpack.c.b16 %v5280, %v5276
        %v5409 = vpack.c.b16 %v5281, %v5277
        %v5410 = vpack.c.b16 %v5286, %v5282
        %v5411 = vpack.c.b16 %v5287, %v5283
        %v5412 = vpack.c.b16 %v5288, %v5284
        %v5413 = vpack.c.b16 %v5289, %v5285
        %v5414 = vpack.c.b16 %v5294, %v5290
        %v5415 = vpack.c.b16 %v5295, %v5291
        %v5416 = vpack.c.b16 %v5296, %v5292
        %v5417 = vpack.c.b16 %v5297, %v5293
        %v5418 = vpack.c.b16 %v5302, %v5298
        %v5419 = vpack.c.b16 %v5303, %v5299
        %v5420 = vpack.c.b16 %v5304, %v5300
        %v5421 = vpack.c.b16 %v5305, %v5301
        %v5422 = vpack.c.b16 %v5310, %v5306
        %v5423 = vpack.c.b16 %v5311, %v5307
        %v5424 = vpack.c.b16 %v5312, %v5308
        %v5425 = vpack.c.b16 %v5313, %v5309
        %5538 = vmatprep.subr.bf16.mxu0 %v5315
        %5539 = vmatpush1.bf16.msra.mxu0 %v5314
        %5540 = vmatprep.subr.bf16.mxu0 %v5319
        %5541 = vmatpush1.bf16.msra.mxu0 %v5318
        %5542 = vmatprep.subr.bf16.mxu0 %v5323
        %5543 = vmatpush1.bf16.msra.mxu0 %v5322
        %5544 = vmatprep.subr.bf16.mxu0 %v5327
        %5545 = vmatpush1.bf16.msra.mxu0 %v5326
        %5546 = vmatprep.subr.bf16.mxu0 %v5331
        %5547 = vmatpush1.bf16.msra.mxu0 %v5330
        %5548 = vmatprep.subr.bf16.mxu0 %v5335
        %5549 = vmatpush1.bf16.msra.mxu0 %v5334
        %5550 = vmatprep.subr.bf16.mxu0 %v5339
        %5551 = vmatpush1.bf16.msra.mxu0 %v5338
        %5552 = vmatprep.subr.bf16.mxu0 %v5343
        %5553 = vmatpush1.bf16.msra.mxu0 %v5342
        %5554 = vmatprep.subr.bf16.mxu0 %v5347
        %5555 = vmatpush1.bf16.msra.mxu0 %v5346
        %5556 = vmatprep.subr.bf16.mxu0 %v5351
        %5557 = vmatpush1.bf16.msra.mxu0 %v5350
        %5558 = vmatprep.subr.bf16.mxu0 %v5355
        %5559 = vmatpush1.bf16.msra.mxu0 %v5354
        %5560 = vmatprep.subr.bf16.mxu0 %v5359
        %5561 = vmatpush1.bf16.msra.mxu0 %v5358
        %5562 = vmatprep.subr.bf16.mxu0 %v5363
        %5563 = vmatpush1.bf16.msra.mxu0 %v5362
        %5564 = vmatprep.subr.bf16.mxu0 %v5367
        %5565 = vmatpush1.bf16.msra.mxu0 %v5366
        %5566 = vmatprep.subr.bf16.mxu0 %v5371
        %5567 = vmatpush1.bf16.msra.mxu0 %v5370
        %5568 = vmatprep.subr.bf16.mxu0 %v5375
        %5569 = vmatpush1.bf16.msra.mxu0 %v5374
        %5570 = vmatprep.mubr.bf16.mxu0 %v2220
        %5571 = vmatmul.mubr.bf16.gmra.mrb[0].mxu0 %v2219
        %v5572 = vpop.f32.mrb[0].mxu0
        %v5573 = vadd.f32 %v4149, %v5572
        %v5574 = vpop.f32.mrb[0].mxu0
        %v5575 = vadd.f32 %v4151, %v5574
        %v5576 = vpop.f32.mrb[0].mxu0
        %v5577 = vadd.f32 %v4153, %v5576
        %v5578 = vpop.f32.mrb[0].mxu0
        %v5579 = vadd.f32 %v4155, %v5578
        %5580 = vdwg.mxu0
        %5581 = vmatprep.subr.bf16.mxu0 %v5379
        %5582 = vmatpush1.bf16.msra.mxu0 %v5378
        %5583 = vmatprep.subr.bf16.mxu0 %v5383
        %5584 = vmatpush1.bf16.msra.mxu0 %v5382
        %5585 = vmatprep.subr.bf16.mxu0 %v5387
        %5586 = vmatpush1.bf16.msra.mxu0 %v5386
        %5587 = vmatprep.subr.bf16.mxu0 %v5391
        %5588 = vmatpush1.bf16.msra.mxu0 %v5390
        %5589 = vmatprep.subr.bf16.mxu0 %v5395
        %5590 = vmatpush1.bf16.msra.mxu0 %v5394
        %5591 = vmatprep.subr.bf16.mxu0 %v5399
        %5592 = vmatpush1.bf16.msra.mxu0 %v5398
        %5593 = vmatprep.subr.bf16.mxu0 %v5403
        %5594 = vmatpush1.bf16.msra.mxu0 %v5402
        %5595 = vmatprep.subr.bf16.mxu0 %v5407
        %5596 = vmatpush1.bf16.msra.mxu0 %v5406
        %5597 = vmatprep.subr.bf16.mxu0 %v5411
        %5598 = vmatpush1.bf16.msra.mxu0 %v5410
        %5599 = vmatprep.subr.bf16.mxu0 %v5415
        %5600 = vmatpush1.bf16.msra.mxu0 %v5414
        %5601 = vmatprep.subr.bf16.mxu0 %v5419
        %5602 = vmatpush1.bf16.msra.mxu0 %v5418
        %5603 = vmatprep.subr.bf16.mxu0 %v5423
        %5604 = vmatpush1.bf16.msra.mxu0 %v5422
        %5605 = vmatprep.subr.bf16.mxu0 0
        %5606 = vmatpush1.bf16.msra.mxu0 0
        %5607 = vmatprep.subr.bf16.mxu0 0
        %5608 = vmatpush1.bf16.msra.mxu0 0
        %5609 = vmatprep.subr.bf16.mxu0 0
        %5610 = vmatpush1.bf16.msra.mxu0 0
        %5611 = vmatprep.subr.bf16.mxu0 0
        %5612 = vmatpush1.bf16.msra.mxu0 0
        %5613 = vmatprep.mubr.bf16.mxu0 %v4804
        %5614 = vmatmul.mubr.bf16.gmra.mrb[0].mxu0 %v2221
        %v5615 = vpop.f32.mrb[0].mxu0
        %v5616 = vadd.f32 %v5573, %v5615
        %v5617 = vpop.f32.mrb[0].mxu0
        %v5618 = vadd.f32 %v5575, %v5617
        %v5619 = vpop.f32.mrb[0].mxu0
        %v5620 = vadd.f32 %v5577, %v5619
        %v5621 = vpop.f32.mrb[0].mxu0
        %v5622 = vadd.f32 %v5579, %v5621
        %5623 = vdwg.mxu0
        %5624 = vmatprep.subr.bf16.mxu0 %v5317
        %5625 = vmatpush1.bf16.msra.mxu0 %v5316
        %5626 = vmatprep.subr.bf16.mxu0 %v5321
        %5627 = vmatpush1.bf16.msra.mxu0 %v5320
        %5628 = vmatprep.subr.bf16.mxu0 %v5325
        %5629 = vmatpush1.bf16.msra.mxu0 %v5324
        %5630 = vmatprep.subr.bf16.mxu0 %v5329
        %5631 = vmatpush1.bf16.msra.mxu0 %v5328
        %5632 = vmatprep.subr.bf16.mxu0 %v5333
        %5633 = vmatpush1.bf16.msra.mxu0 %v5332
        %5634 = vmatprep.subr.bf16.mxu0 %v5337
        %5635 = vmatpush1.bf16.msra.mxu0 %v5336
        %5636 = vmatprep.subr.bf16.mxu0 %v5341
        %5637 = vmatpush1.bf16.msra.mxu0 %v5340
        %5638 = vmatprep.subr.bf16.mxu0 %v5345
        %5639 = vmatpush1.bf16.msra.mxu0 %v5344
        %5640 = vmatprep.subr.bf16.mxu0 %v5349
        %5641 = vmatpush1.bf16.msra.mxu0 %v5348
        %5642 = vmatprep.subr.bf16.mxu0 %v5353
        %5643 = vmatpush1.bf16.msra.mxu0 %v5352
        %5644 = vmatprep.subr.bf16.mxu0 %v5357
        %5645 = vmatpush1.bf16.msra.mxu0 %v5356
        %5646 = vmatprep.subr.bf16.mxu0 %v5361
        %5647 = vmatpush1.bf16.msra.mxu0 %v5360
        %5648 = vmatprep.subr.bf16.mxu0 %v5365
        %5649 = vmatpush1.bf16.msra.mxu0 %v5364
        %5650 = vmatprep.subr.bf16.mxu0 %v5369
        %5651 = vmatpush1.bf16.msra.mxu0 %v5368
        %5652 = vmatprep.subr.bf16.mxu0 %v5373
        %5653 = vmatpush1.bf16.msra.mxu0 %v5372
        %5654 = vmatprep.subr.bf16.mxu0 %v5377
        %5655 = vmatpush1.bf16.msra.mxu0 %v5376
        %5656 = vmatprep.mubr.bf16.mxu0 %v2220
        %5657 = vmatmul.mubr.bf16.gmra.mrb[0].mxu0 %v2219
        %v5658 = vpop.f32.mrb[0].mxu0
        %v5659 = vadd.f32 %v4235, %v5658
        %v5660 = vpop.f32.mrb[0].mxu0
        %v5661 = vadd.f32 %v4237, %v5660
        %v5662 = vpop.f32.mrb[0].mxu0
        %v5663 = vadd.f32 %v4239, %v5662
        %v5664 = vpop.f32.mrb[0].mxu0
        %v5665 = vadd.f32 %v4241, %v5664
        %5666 = vdwg.mxu0
        %5667 = vmatprep.subr.bf16.mxu0 %v5381
        %5668 = vmatpush1.bf16.msra.mxu0 %v5380
        %5669 = vmatprep.subr.bf16.mxu0 %v5385
        %5670 = vmatpush1.bf16.msra.mxu0 %v5384
        %5671 = vmatprep.subr.bf16.mxu0 %v5389
        %5672 = vmatpush1.bf16.msra.mxu0 %v5388
        %5673 = vmatprep.subr.bf16.mxu0 %v5393
        %5674 = vmatpush1.bf16.msra.mxu0 %v5392
        %5675 = vmatprep.subr.bf16.mxu0 %v5397
        %5676 = vmatpush1.bf16.msra.mxu0 %v5396
        %5677 = vmatprep.subr.bf16.mxu0 %v5401
        %5678 = vmatpush1.bf16.msra.mxu0 %v5400
        %5679 = vmatprep.subr.bf16.mxu0 %v5405
        %5680 = vmatpush1.bf16.msra.mxu0 %v5404
        %5681 = vmatprep.subr.bf16.mxu0 %v5409
        %5682 = vmatpush1.bf16.msra.mxu0 %v5408
        %5683 = vmatprep.subr.bf16.mxu0 %v5413
        %5684 = vmatpush1.bf16.msra.mxu0 %v5412
        %5685 = vmatprep.subr.bf16.mxu0 %v5417
        %5686 = vmatpush1.bf16.msra.mxu0 %v5416
        %5687 = vmatprep.subr.bf16.mxu0 %v5421
        %5688 = vmatpush1.bf16.msra.mxu0 %v5420
        %5689 = vmatprep.subr.bf16.mxu0 %v5425
        %5690 = vmatpush1.bf16.msra.mxu0 %v5424
        %5691 = vmatprep.subr.bf16.mxu0 0
        %5692 = vmatpush1.bf16.msra.mxu0 0
        %5693 = vmatprep.subr.bf16.mxu0 0
        %5694 = vmatpush1.bf16.msra.mxu0 0
        %5695 = vmatprep.subr.bf16.mxu0 0
        %5696 = vmatpush1.bf16.msra.mxu0 0
        %5697 = vmatprep.subr.bf16.mxu0 0
        %5698 = vmatpush1.bf16.msra.mxu0 0
        %5699 = vmatprep.mubr.bf16.mxu0 %v4804
        %5700 = vmatmul.mubr.bf16.gmra.mrb[0].mxu0 %v2221
        %v5701 = vpop.f32.mrb[0].mxu0
        %v5702 = vadd.f32 %v5659, %v5701
        %v5703 = vpop.f32.mrb[0].mxu0
        %v5704 = vadd.f32 %v5661, %v5703
        %v5705 = vpop.f32.mrb[0].mxu0
        %v5706 = vadd.f32 %v5663, %v5705
        %v5707 = vpop.f32.mrb[0].mxu0
        %v5708 = vadd.f32 %v5665, %v5707
        %5709 = vdwg.mxu0
        %s5710 = scalar_lea.vmem [#allocation8], 16
        %v5711 = vld [vmem:[%s5710] sm:$0xf]
        %v5712 = vld [vmem:[%s5710 + $0x4] sm:$0x7]
        %v5715 = vunpack.c.l.b16 %v5711
        %v5716 = vunpack.c.l.b16 %v5712
        %v5717 = vpack.c.b16 %v5716, %v5715
        %v5719 = vsel %vm2116, %v5717, 0
        %5721 = vmatprep.subr.bf16.mxu0 %v2125
        %5722 = vmatpush1.bf16.msra.mxu0 %v2122
        %5723 = vmatprep.subr.bf16.mxu0 0
        %5724 = vmatpush1.bf16.msra.mxu0 0
        %5725 = vmatprep.subr.bf16.mxu0 0
        %5726 = vmatpush1.bf16.msra.mxu0 0
        %5727 = vmatprep.subr.bf16.mxu0 0
        %5728 = vmatpush1.bf16.msra.mxu0 0
        %5729 = vmatprep.subr.bf16.mxu0 0
        %5730 = vmatpush1.bf16.msra.mxu0 0
        %5731 = vmatprep.subr.bf16.mxu0 0
        %5732 = vmatpush1.bf16.msra.mxu0 0
        %5733 = vmatprep.subr.bf16.mxu0 0
        %5734 = vmatpush1.bf16.msra.mxu0 0
        %5735 = vmatprep.subr.bf16.mxu0 0
        %5736 = vmatpush1.bf16.msra.mxu0 0
        %5737 = vmatprep.subr.bf16.mxu0 0
        %5738 = vmatpush1.bf16.msra.mxu0 0
        %5739 = vmatprep.subr.bf16.mxu0 0
        %5740 = vmatpush1.bf16.msra.mxu0 0
        %5741 = vmatprep.subr.bf16.mxu0 0
        %5742 = vmatpush1.bf16.msra.mxu0 0
        %5743 = vmatprep.subr.bf16.mxu0 0
        %5744 = vmatpush1.bf16.msra.mxu0 0
        %5745 = vmatprep.subr.bf16.mxu0 0
        %5746 = vmatpush1.bf16.msra.mxu0 0
        %5747 = vmatprep.subr.bf16.mxu0 0
        %5748 = vmatpush1.bf16.msra.mxu0 0
        %5749 = vmatprep.subr.bf16.mxu0 0
        %5750 = vmatpush1.bf16.msra.mxu0 0
        %5751 = vmatprep.subr.bf16.mxu0 0
        %5752 = vmatpush1.bf16.msra.mxu0 0
        %5753 = vmatprep.mubr.bf16.mxu0 0
        %5754 = vmatmul.mubr.bf16.gmra.mrb[0].mxu0 %v5719
        %v5755 = vpop.f32.mrb[0].mxu0
        %v5756 = vadd.f32 0.0, %v5755
        %v5757 = vpop.f32.mrb[0].mxu0
        %v5758 = vadd.f32 0.0, %v5757
        %v5759 = vpop.f32.mrb[0].mxu0
        %v5760 = vadd.f32 0.0, %v5759
        %v5761 = vpop.f32.mrb[0].mxu0
        %v5762 = vadd.f32 0.0, %v5761
        %5763 = vdwg.mxu0
        %5764 = vmatprep.subr.bf16.mxu0 %v2131
        %5765 = vmatpush1.bf16.msra.mxu0 %v2128
        %5766 = vmatprep.subr.bf16.mxu0 0
        %5767 = vmatpush1.bf16.msra.mxu0 0
        %5768 = vmatprep.subr.bf16.mxu0 0
        %5769 = vmatpush1.bf16.msra.mxu0 0
        %5770 = vmatprep.subr.bf16.mxu0 0
        %5771 = vmatpush1.bf16.msra.mxu0 0
        %5772 = vmatprep.subr.bf16.mxu0 0
        %5773 = vmatpush1.bf16.msra.mxu0 0
        %5774 = vmatprep.subr.bf16.mxu0 0
        %5775 = vmatpush1.bf16.msra.mxu0 0
        %5776 = vmatprep.subr.bf16.mxu0 0
        %5777 = vmatpush1.bf16.msra.mxu0 0
        %5778 = vmatprep.subr.bf16.mxu0 0
        %5779 = vmatpush1.bf16.msra.mxu0 0
        %5780 = vmatprep.subr.bf16.mxu0 0
        %5781 = vmatpush1.bf16.msra.mxu0 0
        %5782 = vmatprep.subr.bf16.mxu0 0
        %5783 = vmatpush1.bf16.msra.mxu0 0
        %5784 = vmatprep.subr.bf16.mxu0 0
        %5785 = vmatpush1.bf16.msra.mxu0 0
        %5786 = vmatprep.subr.bf16.mxu0 0
        %5787 = vmatpush1.bf16.msra.mxu0 0
        %5788 = vmatprep.subr.bf16.mxu0 0
        %5789 = vmatpush1.bf16.msra.mxu0 0
        %5790 = vmatprep.subr.bf16.mxu0 0
        %5791 = vmatpush1.bf16.msra.mxu0 0
        %5792 = vmatprep.subr.bf16.mxu0 0
        %5793 = vmatpush1.bf16.msra.mxu0 0
        %5794 = vmatprep.subr.bf16.mxu0 0
        %5795 = vmatpush1.bf16.msra.mxu0 0
        %5796 = vmatprep.mubr.bf16.mxu0 0
        %5797 = vmatmul.mubr.bf16.gmra.mrb[0].mxu0 %v5719
        %v5798 = vpop.f32.mrb[0].mxu0
        %v5799 = vadd.f32 0.0, %v5798
        %v5800 = vpop.f32.mrb[0].mxu0
        %v5801 = vadd.f32 0.0, %v5800
        %v5802 = vpop.f32.mrb[0].mxu0
        %v5803 = vadd.f32 0.0, %v5802
        %v5804 = vpop.f32.mrb[0].mxu0
        %v5805 = vadd.f32 0.0, %v5804
        %5806 = vdwg.mxu0
        %v5807 = vpack.c.bf16 %v5760, %v5756
        %v5808 = vpack.c.bf16 %v5762, %v5758
        %v5809 = vpack.c.bf16 %v5803, %v5799
        %v5810 = vpack.c.bf16 %v5805, %v5801
        %s5811 = scalar_lea.vmem [#allocation10], 1792
        %v5812 = vld [vmem:[%s5811] sm:$0xff]
        %v5813 = vld [vmem:[%s5811 + $0x8] sm:$0xff]
        %v5814 = vld [vmem:[%s5811 + $0x10] sm:$0xff]
        %v5815 = vld [vmem:[%s5811 + $0x18] sm:$0xff]
        %v5816 = vld [vmem:[%s5811 + $0x20] sm:$0xff]
        %v5817 = vld [vmem:[%s5811 + $0x28] sm:$0xff]
        %v5818 = vld [vmem:[%s5811 + $0x30] sm:$0xff]
        %v5819 = vld [vmem:[%s5811 + $0x38] sm:$0xff]
        %v5820 = vld [vmem:[%s5811 + $0x40] sm:$0xff]
        %v5821 = vld [vmem:[%s5811 + $0x48] sm:$0xff]
        %v5822 = vld [vmem:[%s5811 + $0x50] sm:$0xff]
        %v5823 = vld [vmem:[%s5811 + $0x58] sm:$0xff]
        %v5824 = vld [vmem:[%s5811 + $0x60] sm:$0xff]
        %v5825 = vld [vmem:[%s5811 + $0x68] sm:$0xff]
        %v5826 = vld [vmem:[%s5811 + $0x70] sm:$0xff]
        %v5827 = vld [vmem:[%s5811 + $0x78] sm:$0xff]
        %v5828 = vld [vmem:[%s5811 + $0x80] sm:$0xff]
        %v5829 = vld [vmem:[%s5811 + $0x88] sm:$0xff]
        %v5830 = vld [vmem:[%s5811 + $0x90] sm:$0xff]
        %v5831 = vld [vmem:[%s5811 + $0x98] sm:$0xff]
        %v5832 = vld [vmem:[%s5811 + $0xa0] sm:$0xff]
        %v5833 = vld [vmem:[%s5811 + $0xa8] sm:$0xff]
        %v5834 = vld [vmem:[%s5811 + $0xb0] sm:$0xff]
        %v5835 = vld [vmem:[%s5811 + $0xb8] sm:$0xff]
        %v5836 = vld [vmem:[%s5811 + $0xc0] sm:$0xff]
        %v5837 = vld [vmem:[%s5811 + $0xc8] sm:$0xff]
        %v5838 = vld [vmem:[%s5811 + $0xd0] sm:$0xff]
        %v5839 = vld [vmem:[%s5811 + $0xd8] sm:$0xff]
        %v5840 = vld [vmem:[%s5811 + $0xe0] sm:$0xff]
        %v5841 = vld [vmem:[%s5811 + $0xe8] sm:$0xff]
        %v5842 = vld [vmem:[%s5811 + $0xf0] sm:$0xff]
        %v5843 = vld [vmem:[%s5811 + $0xf8] sm:$0xff]
        %v5844 = vld [vmem:[%s5811 + $0x100] sm:$0xff]
        %v5845 = vld [vmem:[%s5811 + $0x108] sm:$0xff]
        %v5846 = vld [vmem:[%s5811 + $0x110] sm:$0xff]
        %v5847 = vld [vmem:[%s5811 + $0x118] sm:$0xff]
        %v5848 = vld [vmem:[%s5811 + $0x120] sm:$0xff]
        %v5849 = vld [vmem:[%s5811 + $0x128] sm:$0xff]
        %v5850 = vld [vmem:[%s5811 + $0x130] sm:$0xff]
        %v5851 = vld [vmem:[%s5811 + $0x138] sm:$0xff]
        %v5852 = vld [vmem:[%s5811 + $0x140] sm:$0xff]
        %v5853 = vld [vmem:[%s5811 + $0x148] sm:$0xff]
        %v5854 = vld [vmem:[%s5811 + $0x150] sm:$0xff]
        %v5855 = vld [vmem:[%s5811 + $0x158] sm:$0xff]
        %v5856 = vld [vmem:[%s5811 + $0x160] sm:$0xff]
        %v5857 = vld [vmem:[%s5811 + $0x168] sm:$0xff]
        %v5858 = vld [vmem:[%s5811 + $0x170] sm:$0xff]
        %v5859 = vld [vmem:[%s5811 + $0x178] sm:$0xff]
        %v5860 = vld [vmem:[%s5811 + $0x180] sm:$0xff]
        %v5861 = vld [vmem:[%s5811 + $0x188] sm:$0xff]
        %v5862 = vld [vmem:[%s5811 + $0x190] sm:$0xff]
        %v5863 = vld [vmem:[%s5811 + $0x198] sm:$0xff]
        %v5864 = vld [vmem:[%s5811 + $0x1a0] sm:$0xff]
        %v5865 = vld [vmem:[%s5811 + $0x1a8] sm:$0xff]
        %v5866 = vld [vmem:[%s5811 + $0x1b0] sm:$0xff]
        %v5867 = vld [vmem:[%s5811 + $0x1b8] sm:$0xff]
        %v5868 = vld [vmem:[%s5811 + $0x1c0] sm:$0xff]
        %v5869 = vld [vmem:[%s5811 + $0x1c8] sm:$0xff]
        %v5870 = vld [vmem:[%s5811 + $0x1d0] sm:$0xff]
        %v5871 = vld [vmem:[%s5811 + $0x1d8] sm:$0xff]
        %v5872 = vld [vmem:[%s5811 + $0x1e0] sm:$0xff]
        %v5873 = vld [vmem:[%s5811 + $0x1e8] sm:$0xff]
        %v5874 = vld [vmem:[%s5811 + $0x1f0] sm:$0xff]
        %v5875 = vld [vmem:[%s5811 + $0x1f8] sm:$0xff]
        %v5876 = vld [vmem:[%s5811 + $0x200] sm:$0xff]
        %v5877 = vld [vmem:[%s5811 + $0x208] sm:$0xff]
        %v5878 = vld [vmem:[%s5811 + $0x210] sm:$0xff]
        %v5879 = vld [vmem:[%s5811 + $0x218] sm:$0xff]
        %v5880 = vld [vmem:[%s5811 + $0x220] sm:$0xff]
        %v5881 = vld [vmem:[%s5811 + $0x228] sm:$0xff]
        %v5882 = vld [vmem:[%s5811 + $0x230] sm:$0xff]
        %v5883 = vld [vmem:[%s5811 + $0x238] sm:$0xff]
        %v5884 = vld [vmem:[%s5811 + $0x240] sm:$0xff]
        %v5885 = vld [vmem:[%s5811 + $0x248] sm:$0xff]
        %v5886 = vld [vmem:[%s5811 + $0x250] sm:$0xff]
        %v5887 = vld [vmem:[%s5811 + $0x258] sm:$0xff]
        %v5888 = vld [vmem:[%s5811 + $0x260] sm:$0xff]
        %v5889 = vld [vmem:[%s5811 + $0x268] sm:$0xff]
        %v5890 = vld [vmem:[%s5811 + $0x270] sm:$0xff]
        %v5891 = vld [vmem:[%s5811 + $0x278] sm:$0xff]
        %v5892 = vld [vmem:[%s5811 + $0x280] sm:$0xff]
        %v5893 = vld [vmem:[%s5811 + $0x288] sm:$0xff]
        %v5894 = vld [vmem:[%s5811 + $0x290] sm:$0xff]
        %v5895 = vld [vmem:[%s5811 + $0x298] sm:$0xff]
        %v5896 = vld [vmem:[%s5811 + $0x2a0] sm:$0xff]
        %v5897 = vld [vmem:[%s5811 + $0x2a8] sm:$0xff]
        %v5898 = vld [vmem:[%s5811 + $0x2b0] sm:$0xff]
        %v5899 = vld [vmem:[%s5811 + $0x2b8] sm:$0xff]
        %v5900 = vld [vmem:[%s5811 + $0x2c0] sm:$0xff]
        %v5901 = vld [vmem:[%s5811 + $0x2c8] sm:$0xff]
        %v5902 = vld [vmem:[%s5811 + $0x2d0] sm:$0xff]
        %v5903 = vld [vmem:[%s5811 + $0x2d8] sm:$0xff]
        %v5904 = vld [vmem:[%s5811 + $0x2e0] sm:$0xff]
        %v5905 = vld [vmem:[%s5811 + $0x2e8] sm:$0xff]
        %v5906 = vld [vmem:[%s5811 + $0x2f0] sm:$0xff]
        %v5907 = vld [vmem:[%s5811 + $0x2f8] sm:$0xff]
        %v5908 = vld [vmem:[%s5811 + $0x300] sm:$0xff]
        %v5909 = vld [vmem:[%s5811 + $0x308] sm:$0xff]
        %v5910 = vld [vmem:[%s5811 + $0x310] sm:$0xff]
        %v5911 = vld [vmem:[%s5811 + $0x318] sm:$0xff]
        %v5912 = vld [vmem:[%s5811 + $0x320] sm:$0xff]
        %v5913 = vld [vmem:[%s5811 + $0x328] sm:$0xff]
        %v5914 = vld [vmem:[%s5811 + $0x330] sm:$0xff]
        %v5915 = vld [vmem:[%s5811 + $0x338] sm:$0xff]
        %v5916 = vld [vmem:[%s5811 + $0x340] sm:$0xff]
        %v5917 = vld [vmem:[%s5811 + $0x348] sm:$0xff]
        %v5918 = vld [vmem:[%s5811 + $0x350] sm:$0xff]
        %v5919 = vld [vmem:[%s5811 + $0x358] sm:$0xff]
        %v5920 = vld [vmem:[%s5811 + $0x360] sm:$0xff]
        %v5921 = vld [vmem:[%s5811 + $0x368] sm:$0xff]
        %v5922 = vld [vmem:[%s5811 + $0x370] sm:$0xff]
        %v5923 = vld [vmem:[%s5811 + $0x378] sm:$0xff]
        %v6036 = vunpack.c.l.b16 %v5812
        %v6037 = vunpack.c.h.b16 %v5812
        %v6038 = vunpack.c.l.b16 %v5813
        %v6039 = vunpack.c.h.b16 %v5813
        %v6040 = vunpack.c.l.b16 %v5814
        %v6041 = vunpack.c.h.b16 %v5814
        %v6042 = vunpack.c.l.b16 %v5815
        %v6043 = vunpack.c.h.b16 %v5815
        %v6044 = vunpack.c.l.b16 %v5816
        %v6045 = vunpack.c.h.b16 %v5816
        %v6046 = vunpack.c.l.b16 %v5817
        %v6047 = vunpack.c.h.b16 %v5817
        %v6048 = vunpack.c.l.b16 %v5818
        %v6049 = vunpack.c.h.b16 %v5818
        %v6050 = vunpack.c.l.b16 %v5819
        %v6051 = vunpack.c.h.b16 %v5819
        %v6052 = vunpack.c.l.b16 %v5820
        %v6053 = vunpack.c.h.b16 %v5820
        %v6054 = vunpack.c.l.b16 %v5821
        %v6055 = vunpack.c.h.b16 %v5821
        %v6056 = vunpack.c.l.b16 %v5822
        %v6057 = vunpack.c.h.b16 %v5822
        %v6058 = vunpack.c.l.b16 %v5823
        %v6059 = vunpack.c.h.b16 %v5823
        %v6060 = vunpack.c.l.b16 %v5824
        %v6061 = vunpack.c.h.b16 %v5824
        %v6062 = vunpack.c.l.b16 %v5825
        %v6063 = vunpack.c.h.b16 %v5825
        %v6064 = vunpack.c.l.b16 %v5826
        %v6065 = vunpack.c.h.b16 %v5826
        %v6066 = vunpack.c.l.b16 %v5827
        %v6067 = vunpack.c.h.b16 %v5827
        %v6068 = vunpack.c.l.b16 %v5828
        %v6069 = vunpack.c.h.b16 %v5828
        %v6070 = vunpack.c.l.b16 %v5829
        %v6071 = vunpack.c.h.b16 %v5829
        %v6072 = vunpack.c.l.b16 %v5830
        %v6073 = vunpack.c.h.b16 %v5830
        %v6074 = vunpack.c.l.b16 %v5831
        %v6075 = vunpack.c.h.b16 %v5831
        %v6076 = vunpack.c.l.b16 %v5832
        %v6077 = vunpack.c.h.b16 %v5832
        %v6078 = vunpack.c.l.b16 %v5833
        %v6079 = vunpack.c.h.b16 %v5833
        %v6080 = vunpack.c.l.b16 %v5834
        %v6081 = vunpack.c.h.b16 %v5834
        %v6082 = vunpack.c.l.b16 %v5835
        %v6083 = vunpack.c.h.b16 %v5835
        %v6084 = vunpack.c.l.b16 %v5836
        %v6085 = vunpack.c.h.b16 %v5836
        %v6086 = vunpack.c.l.b16 %v5837
        %v6087 = vunpack.c.h.b16 %v5837
        %v6088 = vunpack.c.l.b16 %v5838
        %v6089 = vunpack.c.h.b16 %v5838
        %v6090 = vunpack.c.l.b16 %v5839
        %v6091 = vunpack.c.h.b16 %v5839
        %v6092 = vunpack.c.l.b16 %v5840
        %v6093 = vunpack.c.h.b16 %v5840
        %v6094 = vunpack.c.l.b16 %v5841
        %v6095 = vunpack.c.h.b16 %v5841
        %v6096 = vunpack.c.l.b16 %v5842
        %v6097 = vunpack.c.h.b16 %v5842
        %v6098 = vunpack.c.l.b16 %v5843
        %v6099 = vunpack.c.h.b16 %v5843
        %v6100 = vunpack.c.l.b16 %v5844
        %v6101 = vunpack.c.h.b16 %v5844
        %v6102 = vunpack.c.l.b16 %v5845
        %v6103 = vunpack.c.h.b16 %v5845
        %v6104 = vunpack.c.l.b16 %v5846
        %v6105 = vunpack.c.h.b16 %v5846
        %v6106 = vunpack.c.l.b16 %v5847
        %v6107 = vunpack.c.h.b16 %v5847
        %v6108 = vunpack.c.l.b16 %v5848
        %v6109 = vunpack.c.h.b16 %v5848
        %v6110 = vunpack.c.l.b16 %v5849
        %v6111 = vunpack.c.h.b16 %v5849
        %v6112 = vunpack.c.l.b16 %v5850
        %v6113 = vunpack.c.h.b16 %v5850
        %v6114 = vunpack.c.l.b16 %v5851
        %v6115 = vunpack.c.h.b16 %v5851
        %v6116 = vunpack.c.l.b16 %v5852
        %v6117 = vunpack.c.h.b16 %v5852
        %v6118 = vunpack.c.l.b16 %v5853
        %v6119 = vunpack.c.h.b16 %v5853
        %v6120 = vunpack.c.l.b16 %v5854
        %v6121 = vunpack.c.h.b16 %v5854
        %v6122 = vunpack.c.l.b16 %v5855
        %v6123 = vunpack.c.h.b16 %v5855
        %v6124 = vunpack.c.l.b16 %v5856
        %v6125 = vunpack.c.h.b16 %v5856
        %v6126 = vunpack.c.l.b16 %v5857
        %v6127 = vunpack.c.h.b16 %v5857
        %v6128 = vunpack.c.l.b16 %v5858
        %v6129 = vunpack.c.h.b16 %v5858
        %v6130 = vunpack.c.l.b16 %v5859
        %v6131 = vunpack.c.h.b16 %v5859
        %v6132 = vunpack.c.l.b16 %v5860
        %v6133 = vunpack.c.h.b16 %v5860
        %v6134 = vunpack.c.l.b16 %v5861
        %v6135 = vunpack.c.h.b16 %v5861
        %v6136 = vunpack.c.l.b16 %v5862
        %v6137 = vunpack.c.h.b16 %v5862
        %v6138 = vunpack.c.l.b16 %v5863
        %v6139 = vunpack.c.h.b16 %v5863
        %v6140 = vunpack.c.l.b16 %v5864
        %v6141 = vunpack.c.h.b16 %v5864
        %v6142 = vunpack.c.l.b16 %v5865
        %v6143 = vunpack.c.h.b16 %v5865
        %v6144 = vunpack.c.l.b16 %v5866
        %v6145 = vunpack.c.h.b16 %v5866
        %v6146 = vunpack.c.l.b16 %v5867
        %v6147 = vunpack.c.h.b16 %v5867
        %v6148 = vunpack.c.l.b16 %v5868
        %v6149 = vunpack.c.h.b16 %v5868
        %v6150 = vunpack.c.l.b16 %v5869
        %v6151 = vunpack.c.h.b16 %v5869
        %v6152 = vunpack.c.l.b16 %v5870
        %v6153 = vunpack.c.h.b16 %v5870
        %v6154 = vunpack.c.l.b16 %v5871
        %v6155 = vunpack.c.h.b16 %v5871
        %v6156 = vunpack.c.l.b16 %v5872
        %v6157 = vunpack.c.h.b16 %v5872
        %v6158 = vunpack.c.l.b16 %v5873
        %v6159 = vunpack.c.h.b16 %v5873
        %v6160 = vunpack.c.l.b16 %v5874
        %v6161 = vunpack.c.h.b16 %v5874
        %v6162 = vunpack.c.l.b16 %v5875
        %v6163 = vunpack.c.h.b16 %v5875
        %v6164 = vunpack.c.l.b16 %v5876
        %v6165 = vunpack.c.h.b16 %v5876
        %v6166 = vunpack.c.l.b16 %v5877
        %v6167 = vunpack.c.h.b16 %v5877
        %v6168 = vunpack.c.l.b16 %v5878
        %v6169 = vunpack.c.h.b16 %v5878
        %v6170 = vunpack.c.l.b16 %v5879
        %v6171 = vunpack.c.h.b16 %v5879
        %v6172 = vunpack.c.l.b16 %v5880
        %v6173 = vunpack.c.h.b16 %v5880
        %v6174 = vunpack.c.l.b16 %v5881
        %v6175 = vunpack.c.h.b16 %v5881
        %v6176 = vunpack.c.l.b16 %v5882
        %v6177 = vunpack.c.h.b16 %v5882
        %v6178 = vunpack.c.l.b16 %v5883
        %v6179 = vunpack.c.h.b16 %v5883
        %v6180 = vunpack.c.l.b16 %v5884
        %v6181 = vunpack.c.h.b16 %v5884
        %v6182 = vunpack.c.l.b16 %v5885
        %v6183 = vunpack.c.h.b16 %v5885
        %v6184 = vunpack.c.l.b16 %v5886
        %v6185 = vunpack.c.h.b16 %v5886
        %v6186 = vunpack.c.l.b16 %v5887
        %v6187 = vunpack.c.h.b16 %v5887
        %v6188 = vunpack.c.l.b16 %v5888
        %v6189 = vunpack.c.h.b16 %v5888
        %v6190 = vunpack.c.l.b16 %v5889
        %v6191 = vunpack.c.h.b16 %v5889
        %v6192 = vunpack.c.l.b16 %v5890
        %v6193 = vunpack.c.h.b16 %v5890
        %v6194 = vunpack.c.l.b16 %v5891
        %v6195 = vunpack.c.h.b16 %v5891
        %v6196 = vunpack.c.l.b16 %v5892
        %v6197 = vunpack.c.h.b16 %v5892
        %v6198 = vunpack.c.l.b16 %v5893
        %v6199 = vunpack.c.h.b16 %v5893
        %v6200 = vunpack.c.l.b16 %v5894
        %v6201 = vunpack.c.h.b16 %v5894
        %v6202 = vunpack.c.l.b16 %v5895
        %v6203 = vunpack.c.h.b16 %v5895
        %v6204 = vunpack.c.l.b16 %v5896
        %v6205 = vunpack.c.h.b16 %v5896
        %v6206 = vunpack.c.l.b16 %v5897
        %v6207 = vunpack.c.h.b16 %v5897
        %v6208 = vunpack.c.l.b16 %v5898
        %v6209 = vunpack.c.h.b16 %v5898
        %v6210 = vunpack.c.l.b16 %v5899
        %v6211 = vunpack.c.h.b16 %v5899
        %v6212 = vunpack.c.l.b16 %v5900
        %v6213 = vunpack.c.h.b16 %v5900
        %v6214 = vunpack.c.l.b16 %v5901
        %v6215 = vunpack.c.h.b16 %v5901
        %v6216 = vunpack.c.l.b16 %v5902
        %v6217 = vunpack.c.h.b16 %v5902
        %v6218 = vunpack.c.l.b16 %v5903
        %v6219 = vunpack.c.h.b16 %v5903
        %v6220 = vunpack.c.l.b16 %v5904
        %v6221 = vunpack.c.h.b16 %v5904
        %v6222 = vunpack.c.l.b16 %v5905
        %v6223 = vunpack.c.h.b16 %v5905
        %v6224 = vunpack.c.l.b16 %v5906
        %v6225 = vunpack.c.h.b16 %v5906
        %v6226 = vunpack.c.l.b16 %v5907
        %v6227 = vunpack.c.h.b16 %v5907
        %v6228 = vunpack.c.l.b16 %v5908
        %v6229 = vunpack.c.h.b16 %v5908
        %v6230 = vunpack.c.l.b16 %v5909
        %v6231 = vunpack.c.h.b16 %v5909
        %v6232 = vunpack.c.l.b16 %v5910
        %v6233 = vunpack.c.h.b16 %v5910
        %v6234 = vunpack.c.l.b16 %v5911
        %v6235 = vunpack.c.h.b16 %v5911
        %v6236 = vunpack.c.l.b16 %v5912
        %v6237 = vunpack.c.h.b16 %v5912
        %v6238 = vunpack.c.l.b16 %v5913
        %v6239 = vunpack.c.h.b16 %v5913
        %v6240 = vunpack.c.l.b16 %v5914
        %v6241 = vunpack.c.h.b16 %v5914
        %v6242 = vunpack.c.l.b16 %v5915
        %v6243 = vunpack.c.h.b16 %v5915
        %v6244 = vunpack.c.l.b16 %v5916
        %v6245 = vunpack.c.h.b16 %v5916
        %v6246 = vunpack.c.l.b16 %v5917
        %v6247 = vunpack.c.h.b16 %v5917
        %v6248 = vunpack.c.l.b16 %v5918
        %v6249 = vunpack.c.h.b16 %v5918
        %v6250 = vunpack.c.l.b16 %v5919
        %v6251 = vunpack.c.h.b16 %v5919
        %v6252 = vunpack.c.l.b16 %v5920
        %v6253 = vunpack.c.h.b16 %v5920
        %v6254 = vunpack.c.l.b16 %v5921
        %v6255 = vunpack.c.h.b16 %v5921
        %v6256 = vunpack.c.l.b16 %v5922
        %v6257 = vunpack.c.h.b16 %v5922
        %v6258 = vunpack.c.l.b16 %v5923
        %v6259 = vunpack.c.h.b16 %v5923
        %v6260 = vpack.c.b16 %v6040, %v6036
        %v6261 = vpack.c.b16 %v6041, %v6037
        %v6262 = vpack.c.b16 %v6042, %v6038
        %v6263 = vpack.c.b16 %v6043, %v6039
        %v6264 = vpack.c.b16 %v6048, %v6044
        %v6265 = vpack.c.b16 %v6049, %v6045
        %v6266 = vpack.c.b16 %v6050, %v6046
        %v6267 = vpack.c.b16 %v6051, %v6047
        %v6268 = vpack.c.b16 %v6056, %v6052
        %v6269 = vpack.c.b16 %v6057, %v6053
        %v6270 = vpack.c.b16 %v6058, %v6054
        %v6271 = vpack.c.b16 %v6059, %v6055
        %v6272 = vpack.c.b16 %v6064, %v6060
        %v6273 = vpack.c.b16 %v6065, %v6061
        %v6274 = vpack.c.b16 %v6066, %v6062
        %v6275 = vpack.c.b16 %v6067, %v6063
        %v6276 = vpack.c.b16 %v6072, %v6068
        %v6277 = vpack.c.b16 %v6073, %v6069
        %v6278 = vpack.c.b16 %v6074, %v6070
        %v6279 = vpack.c.b16 %v6075, %v6071
        %v6280 = vpack.c.b16 %v6080, %v6076
        %v6281 = vpack.c.b16 %v6081, %v6077
        %v6282 = vpack.c.b16 %v6082, %v6078
        %v6283 = vpack.c.b16 %v6083, %v6079
        %v6284 = vpack.c.b16 %v6088, %v6084
        %v6285 = vpack.c.b16 %v6089, %v6085
        %v6286 = vpack.c.b16 %v6090, %v6086
        %v6287 = vpack.c.b16 %v6091, %v6087
        %v6288 = vpack.c.b16 %v6096, %v6092
        %v6289 = vpack.c.b16 %v6097, %v6093
        %v6290 = vpack.c.b16 %v6098, %v6094
        %v6291 = vpack.c.b16 %v6099, %v6095
        %v6292 = vpack.c.b16 %v6104, %v6100
        %v6293 = vpack.c.b16 %v6105, %v6101
        %v6294 = vpack.c.b16 %v6106, %v6102
        %v6295 = vpack.c.b16 %v6107, %v6103
        %v6296 = vpack.c.b16 %v6112, %v6108
        %v6297 = vpack.c.b16 %v6113, %v6109
        %v6298 = vpack.c.b16 %v6114, %v6110
        %v6299 = vpack.c.b16 %v6115, %v6111
        %v6300 = vpack.c.b16 %v6120, %v6116
        %v6301 = vpack.c.b16 %v6121, %v6117
        %v6302 = vpack.c.b16 %v6122, %v6118
        %v6303 = vpack.c.b16 %v6123, %v6119
        %v6304 = vpack.c.b16 %v6128, %v6124
        %v6305 = vpack.c.b16 %v6129, %v6125
        %v6306 = vpack.c.b16 %v6130, %v6126
        %v6307 = vpack.c.b16 %v6131, %v6127
        %v6308 = vpack.c.b16 %v6136, %v6132
        %v6309 = vpack.c.b16 %v6137, %v6133
        %v6310 = vpack.c.b16 %v6138, %v6134
        %v6311 = vpack.c.b16 %v6139, %v6135
        %v6312 = vpack.c.b16 %v6144, %v6140
        %v6313 = vpack.c.b16 %v6145, %v6141
        %v6314 = vpack.c.b16 %v6146, %v6142
        %v6315 = vpack.c.b16 %v6147, %v6143
        %v6316 = vpack.c.b16 %v6152, %v6148
        %v6317 = vpack.c.b16 %v6153, %v6149
        %v6318 = vpack.c.b16 %v6154, %v6150
        %v6319 = vpack.c.b16 %v6155, %v6151
        %v6320 = vpack.c.b16 %v6160, %v6156
        %v6321 = vpack.c.b16 %v6161, %v6157
        %v6322 = vpack.c.b16 %v6162, %v6158
        %v6323 = vpack.c.b16 %v6163, %v6159
        %v6324 = vpack.c.b16 %v6168, %v6164
        %v6325 = vpack.c.b16 %v6169, %v6165
        %v6326 = vpack.c.b16 %v6170, %v6166
        %v6327 = vpack.c.b16 %v6171, %v6167
        %v6328 = vpack.c.b16 %v6176, %v6172
        %v6329 = vpack.c.b16 %v6177, %v6173
        %v6330 = vpack.c.b16 %v6178, %v6174
        %v6331 = vpack.c.b16 %v6179, %v6175
        %v6332 = vpack.c.b16 %v6184, %v6180
        %v6333 = vpack.c.b16 %v6185, %v6181
        %v6334 = vpack.c.b16 %v6186, %v6182
        %v6335 = vpack.c.b16 %v6187, %v6183
        %v6336 = vpack.c.b16 %v6192, %v6188
        %v6337 = vpack.c.b16 %v6193, %v6189
        %v6338 = vpack.c.b16 %v6194, %v6190
        %v6339 = vpack.c.b16 %v6195, %v6191
        %v6340 = vpack.c.b16 %v6200, %v6196
        %v6341 = vpack.c.b16 %v6201, %v6197
        %v6342 = vpack.c.b16 %v6202, %v6198
        %v6343 = vpack.c.b16 %v6203, %v6199
        %v6344 = vpack.c.b16 %v6208, %v6204
        %v6345 = vpack.c.b16 %v6209, %v6205
        %v6346 = vpack.c.b16 %v6210, %v6206
        %v6347 = vpack.c.b16 %v6211, %v6207
        %v6348 = vpack.c.b16 %v6216, %v6212
        %v6349 = vpack.c.b16 %v6217, %v6213
        %v6350 = vpack.c.b16 %v6218, %v6214
        %v6351 = vpack.c.b16 %v6219, %v6215
        %v6352 = vpack.c.b16 %v6224, %v6220
        %v6353 = vpack.c.b16 %v6225, %v6221
        %v6354 = vpack.c.b16 %v6226, %v6222
        %v6355 = vpack.c.b16 %v6227, %v6223
        %v6356 = vpack.c.b16 %v6232, %v6228
        %v6357 = vpack.c.b16 %v6233, %v6229
        %v6358 = vpack.c.b16 %v6234, %v6230
        %v6359 = vpack.c.b16 %v6235, %v6231
        %v6360 = vpack.c.b16 %v6240, %v6236
        %v6361 = vpack.c.b16 %v6241, %v6237
        %v6362 = vpack.c.b16 %v6242, %v6238
        %v6363 = vpack.c.b16 %v6243, %v6239
        %v6364 = vpack.c.b16 %v6248, %v6244
        %v6365 = vpack.c.b16 %v6249, %v6245
        %v6366 = vpack.c.b16 %v6250, %v6246
        %v6367 = vpack.c.b16 %v6251, %v6247
        %v6368 = vpack.c.b16 %v6256, %v6252
        %v6369 = vpack.c.b16 %v6257, %v6253
        %v6370 = vpack.c.b16 %v6258, %v6254
        %v6371 = vpack.c.b16 %v6259, %v6255
        %v6485 = vsel %vm3222, %v5810, 0
        %6487 = vmatprep.subr.bf16.mxu0 %v6261
        %6488 = vmatpush1.bf16.msra.mxu0 %v6260
        %6489 = vmatprep.subr.bf16.mxu0 %v6265
        %6490 = vmatpush1.bf16.msra.mxu0 %v6264
        %6491 = vmatprep.subr.bf16.mxu0 %v6269
        %6492 = vmatpush1.bf16.msra.mxu0 %v6268
        %6493 = vmatprep.subr.bf16.mxu0 %v6273
        %6494 = vmatpush1.bf16.msra.mxu0 %v6272
        %6495 = vmatprep.subr.bf16.mxu0 %v6277
        %6496 = vmatpush1.bf16.msra.mxu0 %v6276
        %6497 = vmatprep.subr.bf16.mxu0 %v6281
        %6498 = vmatpush1.bf16.msra.mxu0 %v6280
        %6499 = vmatprep.subr.bf16.mxu0 %v6285
        %6500 = vmatpush1.bf16.msra.mxu0 %v6284
        %6501 = vmatprep.subr.bf16.mxu0 %v6289
        %6502 = vmatpush1.bf16.msra.mxu0 %v6288
        %6503 = vmatprep.subr.bf16.mxu0 %v6293
        %6504 = vmatpush1.bf16.msra.mxu0 %v6292
        %6505 = vmatprep.subr.bf16.mxu0 %v6297
        %6506 = vmatpush1.bf16.msra.mxu0 %v6296
        %6507 = vmatprep.subr.bf16.mxu0 %v6301
        %6508 = vmatpush1.bf16.msra.mxu0 %v6300
        %6509 = vmatprep.subr.bf16.mxu0 %v6305
        %6510 = vmatpush1.bf16.msra.mxu0 %v6304
        %6511 = vmatprep.subr.bf16.mxu0 %v6309
        %6512 = vmatpush1.bf16.msra.mxu0 %v6308
        %6513 = vmatprep.subr.bf16.mxu0 %v6313
        %6514 = vmatpush1.bf16.msra.mxu0 %v6312
        %6515 = vmatprep.subr.bf16.mxu0 %v6317
        %6516 = vmatpush1.bf16.msra.mxu0 %v6316
        %6517 = vmatprep.subr.bf16.mxu0 %v6321
        %6518 = vmatpush1.bf16.msra.mxu0 %v6320
        %6519 = vmatprep.mubr.bf16.mxu0 %v5808
        %6520 = vmatmul.mubr.bf16.gmra.mrb[0].mxu0 %v5807
        %v6521 = vpop.f32.mrb[0].mxu0
        %v6522 = vadd.f32 0.0, %v6521
        %v6523 = vpop.f32.mrb[0].mxu0
        %v6524 = vadd.f32 0.0, %v6523
        %v6525 = vpop.f32.mrb[0].mxu0
        %v6526 = vadd.f32 0.0, %v6525
        %v6527 = vpop.f32.mrb[0].mxu0
        %v6528 = vadd.f32 0.0, %v6527
        %6529 = vdwg.mxu0
        %6530 = vmatprep.subr.bf16.mxu0 %v6325
        %6531 = vmatpush1.bf16.msra.mxu0 %v6324
        %6532 = vmatprep.subr.bf16.mxu0 %v6329
        %6533 = vmatpush1.bf16.msra.mxu0 %v6328
        %6534 = vmatprep.subr.bf16.mxu0 %v6333
        %6535 = vmatpush1.bf16.msra.mxu0 %v6332
        %6536 = vmatprep.subr.bf16.mxu0 %v6337
        %6537 = vmatpush1.bf16.msra.mxu0 %v6336
        %6538 = vmatprep.subr.bf16.mxu0 %v6341
        %6539 = vmatpush1.bf16.msra.mxu0 %v6340
        %6540 = vmatprep.subr.bf16.mxu0 %v6345
        %6541 = vmatpush1.bf16.msra.mxu0 %v6344
        %6542 = vmatprep.subr.bf16.mxu0 %v6349
        %6543 = vmatpush1.bf16.msra.mxu0 %v6348
        %6544 = vmatprep.subr.bf16.mxu0 %v6353
        %6545 = vmatpush1.bf16.msra.mxu0 %v6352
        %6546 = vmatprep.subr.bf16.mxu0 %v6357
        %6547 = vmatpush1.bf16.msra.mxu0 %v6356
        %6548 = vmatprep.subr.bf16.mxu0 %v6361
        %6549 = vmatpush1.bf16.msra.mxu0 %v6360
        %6550 = vmatprep.subr.bf16.mxu0 %v6365
        %6551 = vmatpush1.bf16.msra.mxu0 %v6364
        %6552 = vmatprep.subr.bf16.mxu0 %v6369
        %6553 = vmatpush1.bf16.msra.mxu0 %v6368
        %6554 = vmatprep.subr.bf16.mxu0 0
        %6555 = vmatpush1.bf16.msra.mxu0 0
        %6556 = vmatprep.subr.bf16.mxu0 0
        %6557 = vmatpush1.bf16.msra.mxu0 0
        %6558 = vmatprep.subr.bf16.mxu0 0
        %6559 = vmatpush1.bf16.msra.mxu0 0
        %6560 = vmatprep.subr.bf16.mxu0 0
        %6561 = vmatpush1.bf16.msra.mxu0 0
        %6562 = vmatprep.mubr.bf16.mxu0 %v6485
        %6563 = vmatmul.mubr.bf16.gmra.mrb[0].mxu0 %v5809
        %v6564 = vpop.f32.mrb[0].mxu0
        %v6565 = vadd.f32 %v6522, %v6564
        %v6566 = vpop.f32.mrb[0].mxu0
        %v6567 = vadd.f32 %v6524, %v6566
        %v6568 = vpop.f32.mrb[0].mxu0
        %v6569 = vadd.f32 %v6526, %v6568
        %v6570 = vpop.f32.mrb[0].mxu0
        %v6571 = vadd.f32 %v6528, %v6570
        %6572 = vdwg.mxu0
        %6573 = vmatprep.subr.bf16.mxu0 %v6263
        %6574 = vmatpush1.bf16.msra.mxu0 %v6262
        %6575 = vmatprep.subr.bf16.mxu0 %v6267
        %6576 = vmatpush1.bf16.msra.mxu0 %v6266
        %6577 = vmatprep.subr.bf16.mxu0 %v6271
        %6578 = vmatpush1.bf16.msra.mxu0 %v6270
        %6579 = vmatprep.subr.bf16.mxu0 %v6275
        %6580 = vmatpush1.bf16.msra.mxu0 %v6274
        %6581 = vmatprep.subr.bf16.mxu0 %v6279
        %6582 = vmatpush1.bf16.msra.mxu0 %v6278
        %6583 = vmatprep.subr.bf16.mxu0 %v6283
        %6584 = vmatpush1.bf16.msra.mxu0 %v6282
        %6585 = vmatprep.subr.bf16.mxu0 %v6287
        %6586 = vmatpush1.bf16.msra.mxu0 %v6286
        %6587 = vmatprep.subr.bf16.mxu0 %v6291
        %6588 = vmatpush1.bf16.msra.mxu0 %v6290
        %6589 = vmatprep.subr.bf16.mxu0 %v6295
        %6590 = vmatpush1.bf16.msra.mxu0 %v6294
        %6591 = vmatprep.subr.bf16.mxu0 %v6299
        %6592 = vmatpush1.bf16.msra.mxu0 %v6298
        %6593 = vmatprep.subr.bf16.mxu0 %v6303
        %6594 = vmatpush1.bf16.msra.mxu0 %v6302
        %6595 = vmatprep.subr.bf16.mxu0 %v6307
        %6596 = vmatpush1.bf16.msra.mxu0 %v6306
        %6597 = vmatprep.subr.bf16.mxu0 %v6311
        %6598 = vmatpush1.bf16.msra.mxu0 %v6310
        %6599 = vmatprep.subr.bf16.mxu0 %v6315
        %6600 = vmatpush1.bf16.msra.mxu0 %v6314
        %6601 = vmatprep.subr.bf16.mxu0 %v6319
        %6602 = vmatpush1.bf16.msra.mxu0 %v6318
        %6603 = vmatprep.subr.bf16.mxu0 %v6323
        %6604 = vmatpush1.bf16.msra.mxu0 %v6322
        %6605 = vmatprep.mubr.bf16.mxu0 %v5808
        %6606 = vmatmul.mubr.bf16.gmra.mrb[0].mxu0 %v5807
        %v6607 = vpop.f32.mrb[0].mxu0
        %v6608 = vadd.f32 0.0, %v6607
        %v6609 = vpop.f32.mrb[0].mxu0
        %v6610 = vadd.f32 0.0, %v6609
        %v6611 = vpop.f32.mrb[0].mxu0
        %v6612 = vadd.f32 0.0, %v6611
        %v6613 = vpop.f32.mrb[0].mxu0
        %v6614 = vadd.f32 0.0, %v6613
        %6615 = vdwg.mxu0
        %6616 = vmatprep.subr.bf16.mxu0 %v6327
        %6617 = vmatpush1.bf16.msra.mxu0 %v6326
        %6618 = vmatprep.subr.bf16.mxu0 %v6331
        %6619 = vmatpush1.bf16.msra.mxu0 %v6330
        %6620 = vmatprep.subr.bf16.mxu0 %v6335
        %6621 = vmatpush1.bf16.msra.mxu0 %v6334
        %6622 = vmatprep.subr.bf16.mxu0 %v6339
        %6623 = vmatpush1.bf16.msra.mxu0 %v6338
        %6624 = vmatprep.subr.bf16.mxu0 %v6343
        %6625 = vmatpush1.bf16.msra.mxu0 %v6342
        %6626 = vmatprep.subr.bf16.mxu0 %v6347
        %6627 = vmatpush1.bf16.msra.mxu0 %v6346
        %6628 = vmatprep.subr.bf16.mxu0 %v6351
        %6629 = vmatpush1.bf16.msra.mxu0 %v6350
        %6630 = vmatprep.subr.bf16.mxu0 %v6355
        %6631 = vmatpush1.bf16.msra.mxu0 %v6354
        %6632 = vmatprep.subr.bf16.mxu0 %v6359
        %6633 = vmatpush1.bf16.msra.mxu0 %v6358
        %6634 = vmatprep.subr.bf16.mxu0 %v6363
        %6635 = vmatpush1.bf16.msra.mxu0 %v6362
        %6636 = vmatprep.subr.bf16.mxu0 %v6367
        %6637 = vmatpush1.bf16.msra.mxu0 %v6366
        %6638 = vmatprep.subr.bf16.mxu0 %v6371
        %6639 = vmatpush1.bf16.msra.mxu0 %v6370
        %6640 = vmatprep.subr.bf16.mxu0 0
        %6641 = vmatpush1.bf16.msra.mxu0 0
        %6642 = vmatprep.subr.bf16.mxu0 0
        %6643 = vmatpush1.bf16.msra.mxu0 0
        %6644 = vmatprep.subr.bf16.mxu0 0
        %6645 = vmatpush1.bf16.msra.mxu0 0
        %6646 = vmatprep.subr.bf16.mxu0 0
        %6647 = vmatpush1.bf16.msra.mxu0 0
        %6648 = vmatprep.mubr.bf16.mxu0 %v6485
        %6649 = vmatmul.mubr.bf16.gmra.mrb[0].mxu0 %v5809
        %v6650 = vpop.f32.mrb[0].mxu0
        %v6651 = vadd.f32 %v6608, %v6650
        %v6652 = vpop.f32.mrb[0].mxu0
        %v6653 = vadd.f32 %v6610, %v6652
        %v6654 = vpop.f32.mrb[0].mxu0
        %v6655 = vadd.f32 %v6612, %v6654
        %v6656 = vpop.f32.mrb[0].mxu0
        %v6657 = vadd.f32 %v6614, %v6656
        %6658 = vdwg.mxu0
        %s6659 = scalar_lea.vmem [#allocation10], 4480
        %v6660 = vld [vmem:[%s6659] sm:$0xff]
        %v6661 = vld [vmem:[%s6659 + $0x8] sm:$0xff]
        %v6662 = vld [vmem:[%s6659 + $0x10] sm:$0xff]
        %v6663 = vld [vmem:[%s6659 + $0x18] sm:$0xff]
        %v6664 = vld [vmem:[%s6659 + $0x20] sm:$0xff]
        %v6665 = vld [vmem:[%s6659 + $0x28] sm:$0xff]
        %v6666 = vld [vmem:[%s6659 + $0x30] sm:$0xff]
        %v6667 = vld [vmem:[%s6659 + $0x38] sm:$0xff]
        %v6668 = vld [vmem:[%s6659 + $0x40] sm:$0xff]
        %v6669 = vld [vmem:[%s6659 + $0x48] sm:$0xff]
        %v6670 = vld [vmem:[%s6659 + $0x50] sm:$0xff]
        %v6671 = vld [vmem:[%s6659 + $0x58] sm:$0xff]
        %v6672 = vld [vmem:[%s6659 + $0x60] sm:$0xff]
        %v6673 = vld [vmem:[%s6659 + $0x68] sm:$0xff]
        %v6674 = vld [vmem:[%s6659 + $0x70] sm:$0xff]
        %v6675 = vld [vmem:[%s6659 + $0x78] sm:$0xff]
        %v6676 = vld [vmem:[%s6659 + $0x80] sm:$0xff]
        %v6677 = vld [vmem:[%s6659 + $0x88] sm:$0xff]
        %v6678 = vld [vmem:[%s6659 + $0x90] sm:$0xff]
        %v6679 = vld [vmem:[%s6659 + $0x98] sm:$0xff]
        %v6680 = vld [vmem:[%s6659 + $0xa0] sm:$0xff]
        %v6681 = vld [vmem:[%s6659 + $0xa8] sm:$0xff]
        %v6682 = vld [vmem:[%s6659 + $0xb0] sm:$0xff]
        %v6683 = vld [vmem:[%s6659 + $0xb8] sm:$0xff]
        %v6684 = vld [vmem:[%s6659 + $0xc0] sm:$0xff]
        %v6685 = vld [vmem:[%s6659 + $0xc8] sm:$0xff]
        %v6686 = vld [vmem:[%s6659 + $0xd0] sm:$0xff]
        %v6687 = vld [vmem:[%s6659 + $0xd8] sm:$0xff]
        %v6688 = vld [vmem:[%s6659 + $0xe0] sm:$0xff]
        %v6689 = vld [vmem:[%s6659 + $0xe8] sm:$0xff]
        %v6690 = vld [vmem:[%s6659 + $0xf0] sm:$0xff]
        %v6691 = vld [vmem:[%s6659 + $0xf8] sm:$0xff]
        %v6692 = vld [vmem:[%s6659 + $0x100] sm:$0xff]
        %v6693 = vld [vmem:[%s6659 + $0x108] sm:$0xff]
        %v6694 = vld [vmem:[%s6659 + $0x110] sm:$0xff]
        %v6695 = vld [vmem:[%s6659 + $0x118] sm:$0xff]
        %v6696 = vld [vmem:[%s6659 + $0x120] sm:$0xff]
        %v6697 = vld [vmem:[%s6659 + $0x128] sm:$0xff]
        %v6698 = vld [vmem:[%s6659 + $0x130] sm:$0xff]
        %v6699 = vld [vmem:[%s6659 + $0x138] sm:$0xff]
        %v6700 = vld [vmem:[%s6659 + $0x140] sm:$0xff]
        %v6701 = vld [vmem:[%s6659 + $0x148] sm:$0xff]
        %v6702 = vld [vmem:[%s6659 + $0x150] sm:$0xff]
        %v6703 = vld [vmem:[%s6659 + $0x158] sm:$0xff]
        %v6704 = vld [vmem:[%s6659 + $0x160] sm:$0xff]
        %v6705 = vld [vmem:[%s6659 + $0x168] sm:$0xff]
        %v6706 = vld [vmem:[%s6659 + $0x170] sm:$0xff]
        %v6707 = vld [vmem:[%s6659 + $0x178] sm:$0xff]
        %v6708 = vld [vmem:[%s6659 + $0x180] sm:$0xff]
        %v6709 = vld [vmem:[%s6659 + $0x188] sm:$0xff]
        %v6710 = vld [vmem:[%s6659 + $0x190] sm:$0xff]
        %v6711 = vld [vmem:[%s6659 + $0x198] sm:$0xff]
        %v6712 = vld [vmem:[%s6659 + $0x1a0] sm:$0xff]
        %v6713 = vld [vmem:[%s6659 + $0x1a8] sm:$0xff]
        %v6714 = vld [vmem:[%s6659 + $0x1b0] sm:$0xff]
        %v6715 = vld [vmem:[%s6659 + $0x1b8] sm:$0xff]
        %v6716 = vld [vmem:[%s6659 + $0x1c0] sm:$0xff]
        %v6717 = vld [vmem:[%s6659 + $0x1c8] sm:$0xff]
        %v6718 = vld [vmem:[%s6659 + $0x1d0] sm:$0xff]
        %v6719 = vld [vmem:[%s6659 + $0x1d8] sm:$0xff]
        %v6720 = vld [vmem:[%s6659 + $0x1e0] sm:$0xff]
        %v6721 = vld [vmem:[%s6659 + $0x1e8] sm:$0xff]
        %v6722 = vld [vmem:[%s6659 + $0x1f0] sm:$0xff]
        %v6723 = vld [vmem:[%s6659 + $0x1f8] sm:$0xff]
        %v6724 = vld [vmem:[%s6659 + $0x200] sm:$0xff]
        %v6725 = vld [vmem:[%s6659 + $0x208] sm:$0xff]
        %v6726 = vld [vmem:[%s6659 + $0x210] sm:$0xff]
        %v6727 = vld [vmem:[%s6659 + $0x218] sm:$0xff]
        %v6728 = vld [vmem:[%s6659 + $0x220] sm:$0xff]
        %v6729 = vld [vmem:[%s6659 + $0x228] sm:$0xff]
        %v6730 = vld [vmem:[%s6659 + $0x230] sm:$0xff]
        %v6731 = vld [vmem:[%s6659 + $0x238] sm:$0xff]
        %v6732 = vld [vmem:[%s6659 + $0x240] sm:$0xff]
        %v6733 = vld [vmem:[%s6659 + $0x248] sm:$0xff]
        %v6734 = vld [vmem:[%s6659 + $0x250] sm:$0xff]
        %v6735 = vld [vmem:[%s6659 + $0x258] sm:$0xff]
        %v6736 = vld [vmem:[%s6659 + $0x260] sm:$0xff]
        %v6737 = vld [vmem:[%s6659 + $0x268] sm:$0xff]
        %v6738 = vld [vmem:[%s6659 + $0x270] sm:$0xff]
        %v6739 = vld [vmem:[%s6659 + $0x278] sm:$0xff]
        %v6740 = vld [vmem:[%s6659 + $0x280] sm:$0xff]
        %v6741 = vld [vmem:[%s6659 + $0x288] sm:$0xff]
        %v6742 = vld [vmem:[%s6659 + $0x290] sm:$0xff]
        %v6743 = vld [vmem:[%s6659 + $0x298] sm:$0xff]
        %v6744 = vld [vmem:[%s6659 + $0x2a0] sm:$0xff]
        %v6745 = vld [vmem:[%s6659 + $0x2a8] sm:$0xff]
        %v6746 = vld [vmem:[%s6659 + $0x2b0] sm:$0xff]
        %v6747 = vld [vmem:[%s6659 + $0x2b8] sm:$0xff]
        %v6748 = vld [vmem:[%s6659 + $0x2c0] sm:$0xff]
        %v6749 = vld [vmem:[%s6659 + $0x2c8] sm:$0xff]
        %v6750 = vld [vmem:[%s6659 + $0x2d0] sm:$0xff]
        %v6751 = vld [vmem:[%s6659 + $0x2d8] sm:$0xff]
        %v6752 = vld [vmem:[%s6659 + $0x2e0] sm:$0xff]
        %v6753 = vld [vmem:[%s6659 + $0x2e8] sm:$0xff]
        %v6754 = vld [vmem:[%s6659 + $0x2f0] sm:$0xff]
        %v6755 = vld [vmem:[%s6659 + $0x2f8] sm:$0xff]
        %v6756 = vld [vmem:[%s6659 + $0x300] sm:$0xff]
        %v6757 = vld [vmem:[%s6659 + $0x308] sm:$0xff]
        %v6758 = vld [vmem:[%s6659 + $0x310] sm:$0xff]
        %v6759 = vld [vmem:[%s6659 + $0x318] sm:$0xff]
        %v6760 = vld [vmem:[%s6659 + $0x320] sm:$0xff]
        %v6761 = vld [vmem:[%s6659 + $0x328] sm:$0xff]
        %v6762 = vld [vmem:[%s6659 + $0x330] sm:$0xff]
        %v6763 = vld [vmem:[%s6659 + $0x338] sm:$0xff]
        %v6764 = vld [vmem:[%s6659 + $0x340] sm:$0xff]
        %v6765 = vld [vmem:[%s6659 + $0x348] sm:$0xff]
        %v6766 = vld [vmem:[%s6659 + $0x350] sm:$0xff]
        %v6767 = vld [vmem:[%s6659 + $0x358] sm:$0xff]
        %v6768 = vld [vmem:[%s6659 + $0x360] sm:$0xff]
        %v6769 = vld [vmem:[%s6659 + $0x368] sm:$0xff]
        %v6770 = vld [vmem:[%s6659 + $0x370] sm:$0xff]
        %v6771 = vld [vmem:[%s6659 + $0x378] sm:$0xff]
        %v6884 = vunpack.c.l.b16 %v6660
        %v6885 = vunpack.c.h.b16 %v6660
        %v6886 = vunpack.c.l.b16 %v6661
        %v6887 = vunpack.c.h.b16 %v6661
        %v6888 = vunpack.c.l.b16 %v6662
        %v6889 = vunpack.c.h.b16 %v6662
        %v6890 = vunpack.c.l.b16 %v6663
        %v6891 = vunpack.c.h.b16 %v6663
        %v6892 = vunpack.c.l.b16 %v6664
        %v6893 = vunpack.c.h.b16 %v6664
        %v6894 = vunpack.c.l.b16 %v6665
        %v6895 = vunpack.c.h.b16 %v6665
        %v6896 = vunpack.c.l.b16 %v6666
        %v6897 = vunpack.c.h.b16 %v6666
        %v6898 = vunpack.c.l.b16 %v6667
        %v6899 = vunpack.c.h.b16 %v6667
        %v6900 = vunpack.c.l.b16 %v6668
        %v6901 = vunpack.c.h.b16 %v6668
        %v6902 = vunpack.c.l.b16 %v6669
        %v6903 = vunpack.c.h.b16 %v6669
        %v6904 = vunpack.c.l.b16 %v6670
        %v6905 = vunpack.c.h.b16 %v6670
        %v6906 = vunpack.c.l.b16 %v6671
        %v6907 = vunpack.c.h.b16 %v6671
        %v6908 = vunpack.c.l.b16 %v6672
        %v6909 = vunpack.c.h.b16 %v6672
        %v6910 = vunpack.c.l.b16 %v6673
        %v6911 = vunpack.c.h.b16 %v6673
        %v6912 = vunpack.c.l.b16 %v6674
        %v6913 = vunpack.c.h.b16 %v6674
        %v6914 = vunpack.c.l.b16 %v6675
        %v6915 = vunpack.c.h.b16 %v6675
        %v6916 = vunpack.c.l.b16 %v6676
        %v6917 = vunpack.c.h.b16 %v6676
        %v6918 = vunpack.c.l.b16 %v6677
        %v6919 = vunpack.c.h.b16 %v6677
        %v6920 = vunpack.c.l.b16 %v6678
        %v6921 = vunpack.c.h.b16 %v6678
        %v6922 = vunpack.c.l.b16 %v6679
        %v6923 = vunpack.c.h.b16 %v6679
        %v6924 = vunpack.c.l.b16 %v6680
        %v6925 = vunpack.c.h.b16 %v6680
        %v6926 = vunpack.c.l.b16 %v6681
        %v6927 = vunpack.c.h.b16 %v6681
        %v6928 = vunpack.c.l.b16 %v6682
        %v6929 = vunpack.c.h.b16 %v6682
        %v6930 = vunpack.c.l.b16 %v6683
        %v6931 = vunpack.c.h.b16 %v6683
        %v6932 = vunpack.c.l.b16 %v6684
        %v6933 = vunpack.c.h.b16 %v6684
        %v6934 = vunpack.c.l.b16 %v6685
        %v6935 = vunpack.c.h.b16 %v6685
        %v6936 = vunpack.c.l.b16 %v6686
        %v6937 = vunpack.c.h.b16 %v6686
        %v6938 = vunpack.c.l.b16 %v6687
        %v6939 = vunpack.c.h.b16 %v6687
        %v6940 = vunpack.c.l.b16 %v6688
        %v6941 = vunpack.c.h.b16 %v6688
        %v6942 = vunpack.c.l.b16 %v6689
        %v6943 = vunpack.c.h.b16 %v6689
        %v6944 = vunpack.c.l.b16 %v6690
        %v6945 = vunpack.c.h.b16 %v6690
        %v6946 = vunpack.c.l.b16 %v6691
        %v6947 = vunpack.c.h.b16 %v6691
        %v6948 = vunpack.c.l.b16 %v6692
        %v6949 = vunpack.c.h.b16 %v6692
        %v6950 = vunpack.c.l.b16 %v6693
        %v6951 = vunpack.c.h.b16 %v6693
        %v6952 = vunpack.c.l.b16 %v6694
        %v6953 = vunpack.c.h.b16 %v6694
        %v6954 = vunpack.c.l.b16 %v6695
        %v6955 = vunpack.c.h.b16 %v6695
        %v6956 = vunpack.c.l.b16 %v6696
        %v6957 = vunpack.c.h.b16 %v6696
        %v6958 = vunpack.c.l.b16 %v6697
        %v6959 = vunpack.c.h.b16 %v6697
        %v6960 = vunpack.c.l.b16 %v6698
        %v6961 = vunpack.c.h.b16 %v6698
        %v6962 = vunpack.c.l.b16 %v6699
        %v6963 = vunpack.c.h.b16 %v6699
        %v6964 = vunpack.c.l.b16 %v6700
        %v6965 = vunpack.c.h.b16 %v6700
        %v6966 = vunpack.c.l.b16 %v6701
        %v6967 = vunpack.c.h.b16 %v6701
        %v6968 = vunpack.c.l.b16 %v6702
        %v6969 = vunpack.c.h.b16 %v6702
        %v6970 = vunpack.c.l.b16 %v6703
        %v6971 = vunpack.c.h.b16 %v6703
        %v6972 = vunpack.c.l.b16 %v6704
        %v6973 = vunpack.c.h.b16 %v6704
        %v6974 = vunpack.c.l.b16 %v6705
        %v6975 = vunpack.c.h.b16 %v6705
        %v6976 = vunpack.c.l.b16 %v6706
        %v6977 = vunpack.c.h.b16 %v6706
        %v6978 = vunpack.c.l.b16 %v6707
        %v6979 = vunpack.c.h.b16 %v6707
        %v6980 = vunpack.c.l.b16 %v6708
        %v6981 = vunpack.c.h.b16 %v6708
        %v6982 = vunpack.c.l.b16 %v6709
        %v6983 = vunpack.c.h.b16 %v6709
        %v6984 = vunpack.c.l.b16 %v6710
        %v6985 = vunpack.c.h.b16 %v6710
        %v6986 = vunpack.c.l.b16 %v6711
        %v6987 = vunpack.c.h.b16 %v6711
        %v6988 = vunpack.c.l.b16 %v6712
        %v6989 = vunpack.c.h.b16 %v6712
        %v6990 = vunpack.c.l.b16 %v6713
        %v6991 = vunpack.c.h.b16 %v6713
        %v6992 = vunpack.c.l.b16 %v6714
        %v6993 = vunpack.c.h.b16 %v6714
        %v6994 = vunpack.c.l.b16 %v6715
        %v6995 = vunpack.c.h.b16 %v6715
        %v6996 = vunpack.c.l.b16 %v6716
        %v6997 = vunpack.c.h.b16 %v6716
        %v6998 = vunpack.c.l.b16 %v6717
        %v6999 = vunpack.c.h.b16 %v6717
        %v7000 = vunpack.c.l.b16 %v6718
        %v7001 = vunpack.c.h.b16 %v6718
        %v7002 = vunpack.c.l.b16 %v6719
        %v7003 = vunpack.c.h.b16 %v6719
        %v7004 = vunpack.c.l.b16 %v6720
        %v7005 = vunpack.c.h.b16 %v6720
        %v7006 = vunpack.c.l.b16 %v6721
        %v7007 = vunpack.c.h.b16 %v6721
        %v7008 = vunpack.c.l.b16 %v6722
        %v7009 = vunpack.c.h.b16 %v6722
        %v7010 = vunpack.c.l.b16 %v6723
        %v7011 = vunpack.c.h.b16 %v6723
        %v7012 = vunpack.c.l.b16 %v6724
        %v7013 = vunpack.c.h.b16 %v6724
        %v7014 = vunpack.c.l.b16 %v6725
        %v7015 = vunpack.c.h.b16 %v6725
        %v7016 = vunpack.c.l.b16 %v6726
        %v7017 = vunpack.c.h.b16 %v6726
        %v7018 = vunpack.c.l.b16 %v6727
        %v7019 = vunpack.c.h.b16 %v6727
        %v7020 = vunpack.c.l.b16 %v6728
        %v7021 = vunpack.c.h.b16 %v6728
        %v7022 = vunpack.c.l.b16 %v6729
        %v7023 = vunpack.c.h.b16 %v6729
        %v7024 = vunpack.c.l.b16 %v6730
        %v7025 = vunpack.c.h.b16 %v6730
        %v7026 = vunpack.c.l.b16 %v6731
        %v7027 = vunpack.c.h.b16 %v6731
        %v7028 = vunpack.c.l.b16 %v6732
        %v7029 = vunpack.c.h.b16 %v6732
        %v7030 = vunpack.c.l.b16 %v6733
        %v7031 = vunpack.c.h.b16 %v6733
        %v7032 = vunpack.c.l.b16 %v6734
        %v7033 = vunpack.c.h.b16 %v6734
        %v7034 = vunpack.c.l.b16 %v6735
        %v7035 = vunpack.c.h.b16 %v6735
        %v7036 = vunpack.c.l.b16 %v6736
        %v7037 = vunpack.c.h.b16 %v6736
        %v7038 = vunpack.c.l.b16 %v6737
        %v7039 = vunpack.c.h.b16 %v6737
        %v7040 = vunpack.c.l.b16 %v6738
        %v7041 = vunpack.c.h.b16 %v6738
        %v7042 = vunpack.c.l.b16 %v6739
        %v7043 = vunpack.c.h.b16 %v6739
        %v7044 = vunpack.c.l.b16 %v6740
        %v7045 = vunpack.c.h.b16 %v6740
        %v7046 = vunpack.c.l.b16 %v6741
        %v7047 = vunpack.c.h.b16 %v6741
        %v7048 = vunpack.c.l.b16 %v6742
        %v7049 = vunpack.c.h.b16 %v6742
        %v7050 = vunpack.c.l.b16 %v6743
        %v7051 = vunpack.c.h.b16 %v6743
        %v7052 = vunpack.c.l.b16 %v6744
        %v7053 = vunpack.c.h.b16 %v6744
        %v7054 = vunpack.c.l.b16 %v6745
        %v7055 = vunpack.c.h.b16 %v6745
        %v7056 = vunpack.c.l.b16 %v6746
        %v7057 = vunpack.c.h.b16 %v6746
        %v7058 = vunpack.c.l.b16 %v6747
        %v7059 = vunpack.c.h.b16 %v6747
        %v7060 = vunpack.c.l.b16 %v6748
        %v7061 = vunpack.c.h.b16 %v6748
        %v7062 = vunpack.c.l.b16 %v6749
        %v7063 = vunpack.c.h.b16 %v6749
        %v7064 = vunpack.c.l.b16 %v6750
        %v7065 = vunpack.c.h.b16 %v6750
        %v7066 = vunpack.c.l.b16 %v6751
        %v7067 = vunpack.c.h.b16 %v6751
        %v7068 = vunpack.c.l.b16 %v6752
        %v7069 = vunpack.c.h.b16 %v6752
        %v7070 = vunpack.c.l.b16 %v6753
        %v7071 = vunpack.c.h.b16 %v6753
        %v7072 = vunpack.c.l.b16 %v6754
        %v7073 = vunpack.c.h.b16 %v6754
        %v7074 = vunpack.c.l.b16 %v6755
        %v7075 = vunpack.c.h.b16 %v6755
        %v7076 = vunpack.c.l.b16 %v6756
        %v7077 = vunpack.c.h.b16 %v6756
        %v7078 = vunpack.c.l.b16 %v6757
        %v7079 = vunpack.c.h.b16 %v6757
        %v7080 = vunpack.c.l.b16 %v6758
        %v7081 = vunpack.c.h.b16 %v6758
        %v7082 = vunpack.c.l.b16 %v6759
        %v7083 = vunpack.c.h.b16 %v6759
        %v7084 = vunpack.c.l.b16 %v6760
        %v7085 = vunpack.c.h.b16 %v6760
        %v7086 = vunpack.c.l.b16 %v6761
        %v7087 = vunpack.c.h.b16 %v6761
        %v7088 = vunpack.c.l.b16 %v6762
        %v7089 = vunpack.c.h.b16 %v6762
        %v7090 = vunpack.c.l.b16 %v6763
        %v7091 = vunpack.c.h.b16 %v6763
        %v7092 = vunpack.c.l.b16 %v6764
        %v7093 = vunpack.c.h.b16 %v6764
        %v7094 = vunpack.c.l.b16 %v6765
        %v7095 = vunpack.c.h.b16 %v6765
        %v7096 = vunpack.c.l.b16 %v6766
        %v7097 = vunpack.c.h.b16 %v6766
        %v7098 = vunpack.c.l.b16 %v6767
        %v7099 = vunpack.c.h.b16 %v6767
        %v7100 = vunpack.c.l.b16 %v6768
        %v7101 = vunpack.c.h.b16 %v6768
        %v7102 = vunpack.c.l.b16 %v6769
        %v7103 = vunpack.c.h.b16 %v6769
        %v7104 = vunpack.c.l.b16 %v6770
        %v7105 = vunpack.c.h.b16 %v6770
        %v7106 = vunpack.c.l.b16 %v6771
        %v7107 = vunpack.c.h.b16 %v6771
        %v7108 = vpack.c.b16 %v6888, %v6884
        %v7109 = vpack.c.b16 %v6889, %v6885
        %v7110 = vpack.c.b16 %v6890, %v6886
        %v7111 = vpack.c.b16 %v6891, %v6887
        %v7112 = vpack.c.b16 %v6896, %v6892
        %v7113 = vpack.c.b16 %v6897, %v6893
        %v7114 = vpack.c.b16 %v6898, %v6894
        %v7115 = vpack.c.b16 %v6899, %v6895
        %v7116 = vpack.c.b16 %v6904, %v6900
        %v7117 = vpack.c.b16 %v6905, %v6901
        %v7118 = vpack.c.b16 %v6906, %v6902
        %v7119 = vpack.c.b16 %v6907, %v6903
        %v7120 = vpack.c.b16 %v6912, %v6908
        %v7121 = vpack.c.b16 %v6913, %v6909
        %v7122 = vpack.c.b16 %v6914, %v6910
        %v7123 = vpack.c.b16 %v6915, %v6911
        %v7124 = vpack.c.b16 %v6920, %v6916
        %v7125 = vpack.c.b16 %v6921, %v6917
        %v7126 = vpack.c.b16 %v6922, %v6918
        %v7127 = vpack.c.b16 %v6923, %v6919
        %v7128 = vpack.c.b16 %v6928, %v6924
        %v7129 = vpack.c.b16 %v6929, %v6925
        %v7130 = vpack.c.b16 %v6930, %v6926
        %v7131 = vpack.c.b16 %v6931, %v6927
        %v7132 = vpack.c.b16 %v6936, %v6932
        %v7133 = vpack.c.b16 %v6937, %v6933
        %v7134 = vpack.c.b16 %v6938, %v6934
        %v7135 = vpack.c.b16 %v6939, %v6935
        %v7136 = vpack.c.b16 %v6944, %v6940
        %v7137 = vpack.c.b16 %v6945, %v6941
        %v7138 = vpack.c.b16 %v6946, %v6942
        %v7139 = vpack.c.b16 %v6947, %v6943
        %v7140 = vpack.c.b16 %v6952, %v6948
        %v7141 = vpack.c.b16 %v6953, %v6949
        %v7142 = vpack.c.b16 %v6954, %v6950
        %v7143 = vpack.c.b16 %v6955, %v6951
        %v7144 = vpack.c.b16 %v6960, %v6956
        %v7145 = vpack.c.b16 %v6961, %v6957
        %v7146 = vpack.c.b16 %v6962, %v6958
        %v7147 = vpack.c.b16 %v6963, %v6959
        %v7148 = vpack.c.b16 %v6968, %v6964
        %v7149 = vpack.c.b16 %v6969, %v6965
        %v7150 = vpack.c.b16 %v6970, %v6966
        %v7151 = vpack.c.b16 %v6971, %v6967
        %v7152 = vpack.c.b16 %v6976, %v6972
        %v7153 = vpack.c.b16 %v6977, %v6973
        %v7154 = vpack.c.b16 %v6978, %v6974
        %v7155 = vpack.c.b16 %v6979, %v6975
        %v7156 = vpack.c.b16 %v6984, %v6980
        %v7157 = vpack.c.b16 %v6985, %v6981
        %v7158 = vpack.c.b16 %v6986, %v6982
        %v7159 = vpack.c.b16 %v6987, %v6983
        %v7160 = vpack.c.b16 %v6992, %v6988
        %v7161 = vpack.c.b16 %v6993, %v6989
        %v7162 = vpack.c.b16 %v6994, %v6990
        %v7163 = vpack.c.b16 %v6995, %v6991
        %v7164 = vpack.c.b16 %v7000, %v6996
        %v7165 = vpack.c.b16 %v7001, %v6997
        %v7166 = vpack.c.b16 %v7002, %v6998
        %v7167 = vpack.c.b16 %v7003, %v6999
        %v7168 = vpack.c.b16 %v7008, %v7004
        %v7169 = vpack.c.b16 %v7009, %v7005
        %v7170 = vpack.c.b16 %v7010, %v7006
        %v7171 = vpack.c.b16 %v7011, %v7007
        %v7172 = vpack.c.b16 %v7016, %v7012
        %v7173 = vpack.c.b16 %v7017, %v7013
        %v7174 = vpack.c.b16 %v7018, %v7014
        %v7175 = vpack.c.b16 %v7019, %v7015
        %v7176 = vpack.c.b16 %v7024, %v7020
        %v7177 = vpack.c.b16 %v7025, %v7021
        %v7178 = vpack.c.b16 %v7026, %v7022
        %v7179 = vpack.c.b16 %v7027, %v7023
        %v7180 = vpack.c.b16 %v7032, %v7028
        %v7181 = vpack.c.b16 %v7033, %v7029
        %v7182 = vpack.c.b16 %v7034, %v7030
        %v7183 = vpack.c.b16 %v7035, %v7031
        %v7184 = vpack.c.b16 %v7040, %v7036
        %v7185 = vpack.c.b16 %v7041, %v7037
        %v7186 = vpack.c.b16 %v7042, %v7038
        %v7187 = vpack.c.b16 %v7043, %v7039
        %v7188 = vpack.c.b16 %v7048, %v7044
        %v7189 = vpack.c.b16 %v7049, %v7045
        %v7190 = vpack.c.b16 %v7050, %v7046
        %v7191 = vpack.c.b16 %v7051, %v7047
        %v7192 = vpack.c.b16 %v7056, %v7052
        %v7193 = vpack.c.b16 %v7057, %v7053
        %v7194 = vpack.c.b16 %v7058, %v7054
        %v7195 = vpack.c.b16 %v7059, %v7055
        %v7196 = vpack.c.b16 %v7064, %v7060
        %v7197 = vpack.c.b16 %v7065, %v7061
        %v7198 = vpack.c.b16 %v7066, %v7062
        %v7199 = vpack.c.b16 %v7067, %v7063
        %v7200 = vpack.c.b16 %v7072, %v7068
        %v7201 = vpack.c.b16 %v7073, %v7069
        %v7202 = vpack.c.b16 %v7074, %v7070
        %v7203 = vpack.c.b16 %v7075, %v7071
        %v7204 = vpack.c.b16 %v7080, %v7076
        %v7205 = vpack.c.b16 %v7081, %v7077
        %v7206 = vpack.c.b16 %v7082, %v7078
        %v7207 = vpack.c.b16 %v7083, %v7079
        %v7208 = vpack.c.b16 %v7088, %v7084
        %v7209 = vpack.c.b16 %v7089, %v7085
        %v7210 = vpack.c.b16 %v7090, %v7086
        %v7211 = vpack.c.b16 %v7091, %v7087
        %v7212 = vpack.c.b16 %v7096, %v7092
        %v7213 = vpack.c.b16 %v7097, %v7093
        %v7214 = vpack.c.b16 %v7098, %v7094
        %v7215 = vpack.c.b16 %v7099, %v7095
        %v7216 = vpack.c.b16 %v7104, %v7100
        %v7217 = vpack.c.b16 %v7105, %v7101
        %v7218 = vpack.c.b16 %v7106, %v7102
        %v7219 = vpack.c.b16 %v7107, %v7103
        %7332 = vmatprep.subr.bf16.mxu0 %v7109
        %7333 = vmatpush1.bf16.msra.mxu0 %v7108
        %7334 = vmatprep.subr.bf16.mxu0 %v7113
        %7335 = vmatpush1.bf16.msra.mxu0 %v7112
        %7336 = vmatprep.subr.bf16.mxu0 %v7117
        %7337 = vmatpush1.bf16.msra.mxu0 %v7116
        %7338 = vmatprep.subr.bf16.mxu0 %v7121
        %7339 = vmatpush1.bf16.msra.mxu0 %v7120
        %7340 = vmatprep.subr.bf16.mxu0 %v7125
        %7341 = vmatpush1.bf16.msra.mxu0 %v7124
        %7342 = vmatprep.subr.bf16.mxu0 %v7129
        %7343 = vmatpush1.bf16.msra.mxu0 %v7128
        %7344 = vmatprep.subr.bf16.mxu0 %v7133
        %7345 = vmatpush1.bf16.msra.mxu0 %v7132
        %7346 = vmatprep.subr.bf16.mxu0 %v7137
        %7347 = vmatpush1.bf16.msra.mxu0 %v7136
        %7348 = vmatprep.subr.bf16.mxu0 %v7141
        %7349 = vmatpush1.bf16.msra.mxu0 %v7140
        %7350 = vmatprep.subr.bf16.mxu0 %v7145
        %7351 = vmatpush1.bf16.msra.mxu0 %v7144
        %7352 = vmatprep.subr.bf16.mxu0 %v7149
        %7353 = vmatpush1.bf16.msra.mxu0 %v7148
        %7354 = vmatprep.subr.bf16.mxu0 %v7153
        %7355 = vmatpush1.bf16.msra.mxu0 %v7152
        %7356 = vmatprep.subr.bf16.mxu0 %v7157
        %7357 = vmatpush1.bf16.msra.mxu0 %v7156
        %7358 = vmatprep.subr.bf16.mxu0 %v7161
        %7359 = vmatpush1.bf16.msra.mxu0 %v7160
        %7360 = vmatprep.subr.bf16.mxu0 %v7165
        %7361 = vmatpush1.bf16.msra.mxu0 %v7164
        %7362 = vmatprep.subr.bf16.mxu0 %v7169
        %7363 = vmatpush1.bf16.msra.mxu0 %v7168
        %7364 = vmatprep.mubr.bf16.mxu0 %v5808
        %7365 = vmatmul.mubr.bf16.gmra.mrb[0].mxu0 %v5807
        %v7366 = vpop.f32.mrb[0].mxu0
        %v7367 = vadd.f32 0.0, %v7366
        %v7368 = vpop.f32.mrb[0].mxu0
        %v7369 = vadd.f32 0.0, %v7368
        %v7370 = vpop.f32.mrb[0].mxu0
        %v7371 = vadd.f32 0.0, %v7370
        %v7372 = vpop.f32.mrb[0].mxu0
        %v7373 = vadd.f32 0.0, %v7372
        %7374 = vdwg.mxu0
        %7375 = vmatprep.subr.bf16.mxu0 %v7173
        %7376 = vmatpush1.bf16.msra.mxu0 %v7172
        %7377 = vmatprep.subr.bf16.mxu0 %v7177
        %7378 = vmatpush1.bf16.msra.mxu0 %v7176
        %7379 = vmatprep.subr.bf16.mxu0 %v7181
        %7380 = vmatpush1.bf16.msra.mxu0 %v7180
        %7381 = vmatprep.subr.bf16.mxu0 %v7185
        %7382 = vmatpush1.bf16.msra.mxu0 %v7184
        %7383 = vmatprep.subr.bf16.mxu0 %v7189
        %7384 = vmatpush1.bf16.msra.mxu0 %v7188
        %7385 = vmatprep.subr.bf16.mxu0 %v7193
        %7386 = vmatpush1.bf16.msra.mxu0 %v7192
        %7387 = vmatprep.subr.bf16.mxu0 %v7197
        %7388 = vmatpush1.bf16.msra.mxu0 %v7196
        %7389 = vmatprep.subr.bf16.mxu0 %v7201
        %7390 = vmatpush1.bf16.msra.mxu0 %v7200
        %7391 = vmatprep.subr.bf16.mxu0 %v7205
        %7392 = vmatpush1.bf16.msra.mxu0 %v7204
        %7393 = vmatprep.subr.bf16.mxu0 %v7209
        %7394 = vmatpush1.bf16.msra.mxu0 %v7208
        %7395 = vmatprep.subr.bf16.mxu0 %v7213
        %7396 = vmatpush1.bf16.msra.mxu0 %v7212
        %7397 = vmatprep.subr.bf16.mxu0 %v7217
        %7398 = vmatpush1.bf16.msra.mxu0 %v7216
        %7399 = vmatprep.subr.bf16.mxu0 0
        %7400 = vmatpush1.bf16.msra.mxu0 0
        %7401 = vmatprep.subr.bf16.mxu0 0
        %7402 = vmatpush1.bf16.msra.mxu0 0
        %7403 = vmatprep.subr.bf16.mxu0 0
        %7404 = vmatpush1.bf16.msra.mxu0 0
        %7405 = vmatprep.subr.bf16.mxu0 0
        %7406 = vmatpush1.bf16.msra.mxu0 0
        %7407 = vmatprep.mubr.bf16.mxu0 %v6485
        %7408 = vmatmul.mubr.bf16.gmra.mrb[0].mxu0 %v5809
        %v7409 = vpop.f32.mrb[0].mxu0
        %v7410 = vadd.f32 %v7367, %v7409
        %v7411 = vpop.f32.mrb[0].mxu0
        %v7412 = vadd.f32 %v7369, %v7411
        %v7413 = vpop.f32.mrb[0].mxu0
        %v7414 = vadd.f32 %v7371, %v7413
        %v7415 = vpop.f32.mrb[0].mxu0
        %v7416 = vadd.f32 %v7373, %v7415
        %7417 = vdwg.mxu0
        %7418 = vmatprep.subr.bf16.mxu0 %v7111
        %7419 = vmatpush1.bf16.msra.mxu0 %v7110
        %7420 = vmatprep.subr.bf16.mxu0 %v7115
        %7421 = vmatpush1.bf16.msra.mxu0 %v7114
        %7422 = vmatprep.subr.bf16.mxu0 %v7119
        %7423 = vmatpush1.bf16.msra.mxu0 %v7118
        %7424 = vmatprep.subr.bf16.mxu0 %v7123
        %7425 = vmatpush1.bf16.msra.mxu0 %v7122
        %7426 = vmatprep.subr.bf16.mxu0 %v7127
        %7427 = vmatpush1.bf16.msra.mxu0 %v7126
        %7428 = vmatprep.subr.bf16.mxu0 %v7131
        %7429 = vmatpush1.bf16.msra.mxu0 %v7130
        %7430 = vmatprep.subr.bf16.mxu0 %v7135
        %7431 = vmatpush1.bf16.msra.mxu0 %v7134
        %7432 = vmatprep.subr.bf16.mxu0 %v7139
        %7433 = vmatpush1.bf16.msra.mxu0 %v7138
        %7434 = vmatprep.subr.bf16.mxu0 %v7143
        %7435 = vmatpush1.bf16.msra.mxu0 %v7142
        %7436 = vmatprep.subr.bf16.mxu0 %v7147
        %7437 = vmatpush1.bf16.msra.mxu0 %v7146
        %7438 = vmatprep.subr.bf16.mxu0 %v7151
        %7439 = vmatpush1.bf16.msra.mxu0 %v7150
        %7440 = vmatprep.subr.bf16.mxu0 %v7155
        %7441 = vmatpush1.bf16.msra.mxu0 %v7154
        %7442 = vmatprep.subr.bf16.mxu0 %v7159
        %7443 = vmatpush1.bf16.msra.mxu0 %v7158
        %7444 = vmatprep.subr.bf16.mxu0 %v7163
        %7445 = vmatpush1.bf16.msra.mxu0 %v7162
        %7446 = vmatprep.subr.bf16.mxu0 %v7167
        %7447 = vmatpush1.bf16.msra.mxu0 %v7166
        %7448 = vmatprep.subr.bf16.mxu0 %v7171
        %7449 = vmatpush1.bf16.msra.mxu0 %v7170
        %7450 = vmatprep.mubr.bf16.mxu0 %v5808
        %7451 = vmatmul.mubr.bf16.gmra.mrb[0].mxu0 %v5807
        %v7452 = vpop.f32.mrb[0].mxu0
        %v7453 = vadd.f32 0.0, %v7452
        %v7454 = vpop.f32.mrb[0].mxu0
        %v7455 = vadd.f32 0.0, %v7454
        %v7456 = vpop.f32.mrb[0].mxu0
        %v7457 = vadd.f32 0.0, %v7456
        %v7458 = vpop.f32.mrb[0].mxu0
        %v7459 = vadd.f32 0.0, %v7458
        %7460 = vdwg.mxu0
        %7461 = vmatprep.subr.bf16.mxu0 %v7175
        %7462 = vmatpush1.bf16.msra.mxu0 %v7174
        %7463 = vmatprep.subr.bf16.mxu0 %v7179
        %7464 = vmatpush1.bf16.msra.mxu0 %v7178
        %7465 = vmatprep.subr.bf16.mxu0 %v7183
        %7466 = vmatpush1.bf16.msra.mxu0 %v7182
        %7467 = vmatprep.subr.bf16.mxu0 %v7187
        %7468 = vmatpush1.bf16.msra.mxu0 %v7186
        %7469 = vmatprep.subr.bf16.mxu0 %v7191
        %7470 = vmatpush1.bf16.msra.mxu0 %v7190
        %7471 = vmatprep.subr.bf16.mxu0 %v7195
        %7472 = vmatpush1.bf16.msra.mxu0 %v7194
        %7473 = vmatprep.subr.bf16.mxu0 %v7199
        %7474 = vmatpush1.bf16.msra.mxu0 %v7198
        %7475 = vmatprep.subr.bf16.mxu0 %v7203
        %7476 = vmatpush1.bf16.msra.mxu0 %v7202
        %7477 = vmatprep.subr.bf16.mxu0 %v7207
        %7478 = vmatpush1.bf16.msra.mxu0 %v7206
        %7479 = vmatprep.subr.bf16.mxu0 %v7211
        %7480 = vmatpush1.bf16.msra.mxu0 %v7210
        %7481 = vmatprep.subr.bf16.mxu0 %v7215
        %7482 = vmatpush1.bf16.msra.mxu0 %v7214
        %7483 = vmatprep.subr.bf16.mxu0 %v7219
        %7484 = vmatpush1.bf16.msra.mxu0 %v7218
        %7485 = vmatprep.subr.bf16.mxu0 0
        %7486 = vmatpush1.bf16.msra.mxu0 0
        %7487 = vmatprep.subr.bf16.mxu0 0
        %7488 = vmatpush1.bf16.msra.mxu0 0
        %7489 = vmatprep.subr.bf16.mxu0 0
        %7490 = vmatpush1.bf16.msra.mxu0 0
        %7491 = vmatprep.subr.bf16.mxu0 0
        %7492 = vmatpush1.bf16.msra.mxu0 0
        %7493 = vmatprep.mubr.bf16.mxu0 %v6485
        %7494 = vmatmul.mubr.bf16.gmra.mrb[0].mxu0 %v5809
        %v7495 = vpop.f32.mrb[0].mxu0
        %v7496 = vadd.f32 %v7453, %v7495
        %v7497 = vpop.f32.mrb[0].mxu0
        %v7498 = vadd.f32 %v7455, %v7497
        %v7499 = vpop.f32.mrb[0].mxu0
        %v7500 = vadd.f32 %v7457, %v7499
        %v7501 = vpop.f32.mrb[0].mxu0
        %v7502 = vadd.f32 %v7459, %v7501
        %7503 = vdwg.mxu0
        %v7504 = vadd.f32 %v4884, %v6565
        %v7505 = vadd.f32 %v4886, %v6567
        %v7506 = vadd.f32 %v4970, %v6651
        %v7507 = vadd.f32 %v4972, %v6653
        %v7508 = vadd.f32 %v4888, %v6569
        %v7509 = vadd.f32 %v4890, %v6571
        %v7510 = vadd.f32 %v4974, %v6655
        %v7511 = vadd.f32 %v4976, %v6657
        %v7512 = vadd.f32 %v5616, %v7410
        %v7513 = vadd.f32 %v5618, %v7412
        %v7514 = vadd.f32 %v5702, %v7496
        %v7515 = vadd.f32 %v5704, %v7498
        %v7516 = vadd.f32 %v5620, %v7414
        %v7517 = vadd.f32 %v5622, %v7416
        %v7518 = vadd.f32 %v5706, %v7500
        %v7519 = vadd.f32 %v5708, %v7502
        %v7520 = vmax.f32 %v7504, %v7512
        %v7521 = vmax.f32 %v7505, %v7513
        %v7522 = vmax.f32 %v7506, %v7514
        %v7523 = vmax.f32 %v7507, %v7515
        %v7524 = vmax.f32 %v7508, %v7516
        %v7525 = vmax.f32 %v7509, %v7517
        %v7526 = vmax.f32 %v7510, %v7518
        %v7527 = vmax.f32 %v7511, %v7519
        %v7528 = vpack.c.bf16 %v7524, %v7520
        %v7529 = vpack.c.bf16 %v7525, %v7521
        %v7530 = vpack.c.bf16 %v7526, %v7522
        %v7531 = vpack.c.bf16 %v7527, %v7523
        %v7532 = vld [vmem:[%s7] sm:$0xf]
        %v7534 = vsel %vm2116, %v7532, 0
        %v7537 = vsel %vm2120, %v7528, 0
        %v7540 = vsel %vm2120, %v7529, 0
        %v7543 = vsel %vm2120, %v7530, 0
        %v7546 = vsel %vm2120, %v7531, 0
        %7548 = vmatprep.subr.bf16.mxu0 %v7540
        %7549 = vmatpush1.bf16.msra.mxu0 %v7537
        %7550 = vmatprep.subr.bf16.mxu0 0
        %7551 = vmatpush1.bf16.msra.mxu0 0
        %7552 = vmatprep.subr.bf16.mxu0 0
        %7553 = vmatpush1.bf16.msra.mxu0 0
        %7554 = vmatprep.subr.bf16.mxu0 0
        %7555 = vmatpush1.bf16.msra.mxu0 0
        %7556 = vmatprep.subr.bf16.mxu0 0
        %7557 = vmatpush1.bf16.msra.mxu0 0
        %7558 = vmatprep.subr.bf16.mxu0 0
        %7559 = vmatpush1.bf16.msra.mxu0 0
        %7560 = vmatprep.subr.bf16.mxu0 0
        %7561 = vmatpush1.bf16.msra.mxu0 0
        %7562 = vmatprep.subr.bf16.mxu0 0
        %7563 = vmatpush1.bf16.msra.mxu0 0
        %7564 = vmatprep.subr.bf16.mxu0 0
        %7565 = vmatpush1.bf16.msra.mxu0 0
        %7566 = vmatprep.subr.bf16.mxu0 0
        %7567 = vmatpush1.bf16.msra.mxu0 0
        %7568 = vmatprep.subr.bf16.mxu0 0
        %7569 = vmatpush1.bf16.msra.mxu0 0
        %7570 = vmatprep.subr.bf16.mxu0 0
        %7571 = vmatpush1.bf16.msra.mxu0 0
        %7572 = vmatprep.subr.bf16.mxu0 0
        %7573 = vmatpush1.bf16.msra.mxu0 0
        %7574 = vmatprep.subr.bf16.mxu0 0
        %7575 = vmatpush1.bf16.msra.mxu0 0
        %7576 = vmatprep.subr.bf16.mxu0 0
        %7577 = vmatpush1.bf16.msra.mxu0 0
        %7578 = vmatprep.subr.bf16.mxu0 0
        %7579 = vmatpush1.bf16.msra.mxu0 0
        %7580 = vmatprep.mubr.bf16.mxu0 0
        %7581 = vmatmul.mubr.bf16.gmra.mrb[0].mxu0 %v7534
        %v7582 = vpop.f32.mrb[0].mxu0
        %v7583 = vadd.f32 0.0, %v7582
        %v7584 = vpop.f32.mrb[0].mxu0
        %v7585 = vadd.f32 0.0, %v7584
        %v7586 = vpop.f32.mrb[0].mxu0
        %v7587 = vpop.f32.mrb[0].mxu0
        %7588 = vdwg.mxu0
        %7589 = vmatprep.subr.bf16.mxu0 %v7546
        %7590 = vmatpush1.bf16.msra.mxu0 %v7543
        %7591 = vmatprep.subr.bf16.mxu0 0
        %7592 = vmatpush1.bf16.msra.mxu0 0
        %7593 = vmatprep.subr.bf16.mxu0 0
        %7594 = vmatpush1.bf16.msra.mxu0 0
        %7595 = vmatprep.subr.bf16.mxu0 0
        %7596 = vmatpush1.bf16.msra.mxu0 0
        %7597 = vmatprep.subr.bf16.mxu0 0
        %7598 = vmatpush1.bf16.msra.mxu0 0
        %7599 = vmatprep.subr.bf16.mxu0 0
        %7600 = vmatpush1.bf16.msra.mxu0 0
        %7601 = vmatprep.subr.bf16.mxu0 0
        %7602 = vmatpush1.bf16.msra.mxu0 0
        %7603 = vmatprep.subr.bf16.mxu0 0
        %7604 = vmatpush1.bf16.msra.mxu0 0
        %7605 = vmatprep.subr.bf16.mxu0 0
        %7606 = vmatpush1.bf16.msra.mxu0 0
        %7607 = vmatprep.subr.bf16.mxu0 0
        %7608 = vmatpush1.bf16.msra.mxu0 0
        %7609 = vmatprep.subr.bf16.mxu0 0
        %7610 = vmatpush1.bf16.msra.mxu0 0
        %7611 = vmatprep.subr.bf16.mxu0 0
        %7612 = vmatpush1.bf16.msra.mxu0 0
        %7613 = vmatprep.subr.bf16.mxu0 0
        %7614 = vmatpush1.bf16.msra.mxu0 0
        %7615 = vmatprep.subr.bf16.mxu0 0
        %7616 = vmatpush1.bf16.msra.mxu0 0
        %7617 = vmatprep.subr.bf16.mxu0 0
        %7618 = vmatpush1.bf16.msra.mxu0 0
        %7619 = vmatprep.subr.bf16.mxu0 0
        %7620 = vmatpush1.bf16.msra.mxu0 0
        %7621 = vmatprep.mubr.bf16.mxu0 0
        %7622 = vmatmul.mubr.bf16.gmra.mrb[0].mxu0 %v7534
        %v7623 = vpop.f32.mrb[0].mxu0
        %v7624 = vadd.f32 0.0, %v7623
        %v7625 = vpop.f32.mrb[0].mxu0
        %v7626 = vadd.f32 0.0, %v7625
        %v7627 = vpop.f32.mrb[0].mxu0
        %v7628 = vpop.f32.mrb[0].mxu0
        %7629 = vdwg.mxu0
        %s7630 = scalar_lea.vmem %s7, 4
        %v7631 = vld [vmem:[%s7630] sm:$0xf]
        %v7633 = vsel %vm2116, %v7631, 0
        %7635 = vmatprep.subr.bf16.mxu0 %v7540
        %7636 = vmatpush1.bf16.msra.mxu0 %v7537
        %7637 = vmatprep.subr.bf16.mxu0 0
        %7638 = vmatpush1.bf16.msra.mxu0 0
        %7639 = vmatprep.subr.bf16.mxu0 0
        %7640 = vmatpush1.bf16.msra.mxu0 0
        %7641 = vmatprep.subr.bf16.mxu0 0
        %7642 = vmatpush1.bf16.msra.mxu0 0
        %7643 = vmatprep.subr.bf16.mxu0 0
        %7644 = vmatpush1.bf16.msra.mxu0 0
        %7645 = vmatprep.subr.bf16.mxu0 0
        %7646 = vmatpush1.bf16.msra.mxu0 0
        %7647 = vmatprep.subr.bf16.mxu0 0
        %7648 = vmatpush1.bf16.msra.mxu0 0
        %7649 = vmatprep.subr.bf16.mxu0 0
        %7650 = vmatpush1.bf16.msra.mxu0 0
        %7651 = vmatprep.subr.bf16.mxu0 0
        %7652 = vmatpush1.bf16.msra.mxu0 0
        %7653 = vmatprep.subr.bf16.mxu0 0
        %7654 = vmatpush1.bf16.msra.mxu0 0
        %7655 = vmatprep.subr.bf16.mxu0 0
        %7656 = vmatpush1.bf16.msra.mxu0 0
        %7657 = vmatprep.subr.bf16.mxu0 0
        %7658 = vmatpush1.bf16.msra.mxu0 0
        %7659 = vmatprep.subr.bf16.mxu0 0
        %7660 = vmatpush1.bf16.msra.mxu0 0
        %7661 = vmatprep.subr.bf16.mxu0 0
        %7662 = vmatpush1.bf16.msra.mxu0 0
        %7663 = vmatprep.subr.bf16.mxu0 0
        %7664 = vmatpush1.bf16.msra.mxu0 0
        %7665 = vmatprep.subr.bf16.mxu0 0
        %7666 = vmatpush1.bf16.msra.mxu0 0
        %7667 = vmatprep.mubr.bf16.mxu0 0
        %7668 = vmatmul.mubr.bf16.gmra.mrb[0].mxu0 %v7633
        %v7669 = vpop.f32.mrb[0].mxu0
        %v7670 = vadd.f32 0.0, %v7669
        %v7671 = vpop.f32.mrb[0].mxu0
        %v7672 = vadd.f32 0.0, %v7671
        %v7673 = vpop.f32.mrb[0].mxu0
        %v7674 = vpop.f32.mrb[0].mxu0
        %7675 = vdwg.mxu0
        %7676 = vmatprep.subr.bf16.mxu0 %v7546
        %7677 = vmatpush1.bf16.msra.mxu0 %v7543
        %7678 = vmatprep.subr.bf16.mxu0 0
        %7679 = vmatpush1.bf16.msra.mxu0 0
        %7680 = vmatprep.subr.bf16.mxu0 0
        %7681 = vmatpush1.bf16.msra.mxu0 0
        %7682 = vmatprep.subr.bf16.mxu0 0
        %7683 = vmatpush1.bf16.msra.mxu0 0
        %7684 = vmatprep.subr.bf16.mxu0 0
        %7685 = vmatpush1.bf16.msra.mxu0 0
        %7686 = vmatprep.subr.bf16.mxu0 0
        %7687 = vmatpush1.bf16.msra.mxu0 0
        %7688 = vmatprep.subr.bf16.mxu0 0
        %7689 = vmatpush1.bf16.msra.mxu0 0
        %7690 = vmatprep.subr.bf16.mxu0 0
        %7691 = vmatpush1.bf16.msra.mxu0 0
        %7692 = vmatprep.subr.bf16.mxu0 0
        %7693 = vmatpush1.bf16.msra.mxu0 0
        %7694 = vmatprep.subr.bf16.mxu0 0
        %7695 = vmatpush1.bf16.msra.mxu0 0
        %7696 = vmatprep.subr.bf16.mxu0 0
        %7697 = vmatpush1.bf16.msra.mxu0 0
        %7698 = vmatprep.subr.bf16.mxu0 0
        %7699 = vmatpush1.bf16.msra.mxu0 0
        %7700 = vmatprep.subr.bf16.mxu0 0
        %7701 = vmatpush1.bf16.msra.mxu0 0
        %7702 = vmatprep.subr.bf16.mxu0 0
        %7703 = vmatpush1.bf16.msra.mxu0 0
        %7704 = vmatprep.subr.bf16.mxu0 0
        %7705 = vmatpush1.bf16.msra.mxu0 0
        %7706 = vmatprep.subr.bf16.mxu0 0
        %7707 = vmatpush1.bf16.msra.mxu0 0
        %7708 = vmatprep.mubr.bf16.mxu0 0
        %7709 = vmatmul.mubr.bf16.gmra.mrb[0].mxu0 %v7633
        %v7710 = vpop.f32.mrb[0].mxu0
        %v7711 = vadd.f32 0.0, %v7710
        %v7712 = vpop.f32.mrb[0].mxu0
        %v7713 = vadd.f32 0.0, %v7712
        %v7714 = vpop.f32.mrb[0].mxu0
        %v7715 = vpop.f32.mrb[0].mxu0
        %7716 = vdwg.mxu0
        %v7717 = vmax.f32 %v7583, %v7670
        %v7718 = vmax.f32 %v7585, %v7672
        %v7719 = vmax.f32 %v7624, %v7711
        %v7720 = vmax.f32 %v7626, %v7713
        %v7721 = vld [vmem:[#allocation11] sm:$0xf]
        %v7723 = vlaneseq
        %v7724 = vshrl.u32 %v7723, 7
        %v7725 = vsub.s32 0, %v7724
        %v7726 = vrot.slane %v7721, %v7725
        %v7727 = vlaneseq
        %v7728 = vshrl.u32 %v7727, 7
        %v7729 = vsub.s32 1, %v7728
        %v7730 = vrot.slane %v7721, %v7729
        %v7731 = vlaneseq
        %v7732 = vshrl.u32 %v7731, 7
        %v7733 = vsub.s32 2, %v7732
        %v7734 = vrot.slane %v7721, %v7733
        %v7735 = vlaneseq
        %v7736 = vshrl.u32 %v7735, 7
        %v7737 = vsub.s32 3, %v7736
        %v7738 = vrot.slane %v7721, %v7737
        %v7743 = vadd.f32 %v7717, %v7726
        %v7744 = vadd.f32 %v7718, %v7730
        %v7745 = vadd.f32 %v7719, %v7734
        %v7746 = vadd.f32 %v7720, %v7738
        %v7747 = vmax.f32 %v7743, 0.0
        %v7748 = vmax.f32 %v7744, 0.0
        %v7749 = vmax.f32 %v7745, 0.0
        %v7750 = vmax.f32 %v7746, 0.0
        %v7751 = vpack.c.bf16 %v7747, %v7747
        %v7752 = vpack.c.bf16 %v7748, %v7748
        %v7753 = vpack.c.bf16 %v7749, %v7749
        %v7754 = vpack.c.bf16 %v7750, %v7750
        %v7755 = vld [vmem:[#allocation13] sm:$0xf]
        %v7756 = vld [vmem:[#allocation13 + $0x4] sm:$0xf]
        %v7757 = vld [vmem:[#allocation13 + $0x8] sm:$0xf]
        %v7758 = vld [vmem:[#allocation13 + $0xc] sm:$0xf]
        %v7759 = vld [vmem:[#allocation13 + $0x10] sm:$0xf]
        %v7760 = vld [vmem:[#allocation13 + $0x14] sm:$0xf]
        %v7761 = vld [vmem:[#allocation13 + $0x18] sm:$0xf]
        %v7762 = vld [vmem:[#allocation13 + $0x1c] sm:$0xf]
        %v7763 = vld [vmem:[#allocation13 + $0x20] sm:$0xf]
        %v7764 = vld [vmem:[#allocation13 + $0x24] sm:$0xf]
        %v7765 = vld [vmem:[#allocation13 + $0x28] sm:$0xf]
        %v7766 = vld [vmem:[#allocation13 + $0x2c] sm:$0xf]
        %v7767 = vld [vmem:[#allocation13 + $0x30] sm:$0xf]
        %v7768 = vld [vmem:[#allocation13 + $0x34] sm:$0xf]
        %v7769 = vld [vmem:[#allocation13 + $0x38] sm:$0xf]
        %v7770 = vld [vmem:[#allocation13 + $0x3c] sm:$0xf]
        %v7771 = vld [vmem:[#allocation13 + $0x40] sm:$0xf]
        %v7772 = vld [vmem:[#allocation13 + $0x44] sm:$0xf]
        %v7773 = vld [vmem:[#allocation13 + $0x48] sm:$0xf]
        %v7774 = vld [vmem:[#allocation13 + $0x4c] sm:$0xf]
        %v7775 = vld [vmem:[#allocation13 + $0x50] sm:$0xf]
        %v7776 = vld [vmem:[#allocation13 + $0x54] sm:$0xf]
        %v7777 = vld [vmem:[#allocation13 + $0x58] sm:$0xf]
        %v7778 = vld [vmem:[#allocation13 + $0x5c] sm:$0xf]
        %v7779 = vld [vmem:[#allocation13 + $0x60] sm:$0xf]
        %v7780 = vld [vmem:[#allocation13 + $0x64] sm:$0xf]
        %v7781 = vld [vmem:[#allocation13 + $0x68] sm:$0xf]
        %v7782 = vld [vmem:[#allocation13 + $0x6c] sm:$0xf]
        %v7783 = vld [vmem:[#allocation13 + $0x70] sm:$0xf]
        %v7784 = vld [vmem:[#allocation13 + $0x74] sm:$0xf]
        %v7785 = vld [vmem:[#allocation13 + $0x78] sm:$0xf]
        %v7786 = vld [vmem:[#allocation13 + $0x7c] sm:$0xf]
        %v7787 = vld [vmem:[#allocation13 + $0x80] sm:$0xf]
        %v7788 = vld [vmem:[#allocation13 + $0x84] sm:$0xf]
        %v7789 = vld [vmem:[#allocation13 + $0x88] sm:$0xf]
        %v7790 = vld [vmem:[#allocation13 + $0x8c] sm:$0xf]
        %v7791 = vld [vmem:[#allocation13 + $0x90] sm:$0xf]
        %v7792 = vld [vmem:[#allocation13 + $0x94] sm:$0xf]
        %v7793 = vld [vmem:[#allocation13 + $0x98] sm:$0xf]
        %v7794 = vld [vmem:[#allocation13 + $0x9c] sm:$0xf]
        %v7795 = vld [vmem:[#allocation13 + $0xa0] sm:$0xf]
        %v7796 = vld [vmem:[#allocation13 + $0xa4] sm:$0xf]
        %v7797 = vld [vmem:[#allocation13 + $0xa8] sm:$0xf]
        %v7798 = vld [vmem:[#allocation13 + $0xac] sm:$0xf]
        %v7799 = vld [vmem:[#allocation13 + $0xb0] sm:$0xf]
        %v7800 = vld [vmem:[#allocation13 + $0xb4] sm:$0xf]
        %v7801 = vld [vmem:[#allocation13 + $0xb8] sm:$0xf]
        %v7802 = vld [vmem:[#allocation13 + $0xbc] sm:$0xf]
        %v7803 = vld [vmem:[#allocation13 + $0xc0] sm:$0xf]
        %v7804 = vld [vmem:[#allocation13 + $0xc4] sm:$0xf]
        %v7805 = vld [vmem:[#allocation13 + $0xc8] sm:$0xf]
        %v7806 = vld [vmem:[#allocation13 + $0xcc] sm:$0xf]
        %v7807 = vld [vmem:[#allocation13 + $0xd0] sm:$0xf]
        %v7808 = vld [vmem:[#allocation13 + $0xd4] sm:$0xf]
        %v7809 = vld [vmem:[#allocation13 + $0xd8] sm:$0xf]
        %v7810 = vld [vmem:[#allocation13 + $0xdc] sm:$0xf]
        %s7811 = scalar_lea.vmem [#allocation13], 224
        %v7812 = vld [vmem:[%s7811] sm:$0xf]
        %v7813 = vld [vmem:[%s7811 + $0x4] sm:$0xf]
        %v7814 = vld [vmem:[%s7811 + $0x8] sm:$0xf]
        %v7815 = vld [vmem:[%s7811 + $0xc] sm:$0xf]
        %v7816 = vld [vmem:[%s7811 + $0x10] sm:$0xf]
        %v7817 = vld [vmem:[%s7811 + $0x14] sm:$0xf]
        %v7818 = vld [vmem:[%s7811 + $0x18] sm:$0xf]
        %v7819 = vld [vmem:[%s7811 + $0x1c] sm:$0xf]
        %v7820 = vld [vmem:[%s7811 + $0x20] sm:$0xf]
        %v7821 = vld [vmem:[%s7811 + $0x24] sm:$0xf]
        %v7822 = vld [vmem:[%s7811 + $0x28] sm:$0xf]
        %v7823 = vld [vmem:[%s7811 + $0x2c] sm:$0xf]
        %v7824 = vld [vmem:[%s7811 + $0x30] sm:$0xf]
        %v7825 = vld [vmem:[%s7811 + $0x34] sm:$0xf]
        %v7826 = vld [vmem:[%s7811 + $0x38] sm:$0xf]
        %v7827 = vld [vmem:[%s7811 + $0x3c] sm:$0xf]
        %v7828 = vld [vmem:[%s7811 + $0x40] sm:$0xf]
        %v7829 = vld [vmem:[%s7811 + $0x44] sm:$0xf]
        %v7830 = vld [vmem:[%s7811 + $0x48] sm:$0xf]
        %v7831 = vld [vmem:[%s7811 + $0x4c] sm:$0xf]
        %v7832 = vld [vmem:[%s7811 + $0x50] sm:$0xf]
        %v7833 = vld [vmem:[%s7811 + $0x54] sm:$0xf]
        %v7834 = vld [vmem:[%s7811 + $0x58] sm:$0xf]
        %v7835 = vld [vmem:[%s7811 + $0x5c] sm:$0xf]
        %v7836 = vld [vmem:[%s7811 + $0x60] sm:$0xf]
        %v7837 = vld [vmem:[%s7811 + $0x64] sm:$0xf]
        %v7838 = vld [vmem:[%s7811 + $0x68] sm:$0xf]
        %v7839 = vld [vmem:[%s7811 + $0x6c] sm:$0xf]
        %v7840 = vld [vmem:[%s7811 + $0x70] sm:$0xf]
        %v7841 = vld [vmem:[%s7811 + $0x74] sm:$0xf]
        %v7842 = vld [vmem:[%s7811 + $0x78] sm:$0xf]
        %v7843 = vld [vmem:[%s7811 + $0x7c] sm:$0xf]
        %v7844 = vld [vmem:[%s7811 + $0x80] sm:$0xf]
        %v7845 = vld [vmem:[%s7811 + $0x84] sm:$0xf]
        %v7846 = vld [vmem:[%s7811 + $0x88] sm:$0xf]
        %v7847 = vld [vmem:[%s7811 + $0x8c] sm:$0xf]
        %v7848 = vld [vmem:[%s7811 + $0x90] sm:$0xf]
        %v7849 = vld [vmem:[%s7811 + $0x94] sm:$0xf]
        %v7850 = vld [vmem:[%s7811 + $0x98] sm:$0xf]
        %v7851 = vld [vmem:[%s7811 + $0x9c] sm:$0xf]
        %v7852 = vld [vmem:[%s7811 + $0xa0] sm:$0xf]
        %v7853 = vld [vmem:[%s7811 + $0xa4] sm:$0xf]
        %v7854 = vld [vmem:[%s7811 + $0xa8] sm:$0xf]
        %v7855 = vld [vmem:[%s7811 + $0xac] sm:$0xf]
        %v7856 = vld [vmem:[%s7811 + $0xb0] sm:$0xf]
        %v7857 = vld [vmem:[%s7811 + $0xb4] sm:$0xf]
        %v7858 = vld [vmem:[%s7811 + $0xb8] sm:$0xf]
        %v7859 = vld [vmem:[%s7811 + $0xbc] sm:$0xf]
        %v7860 = vld [vmem:[%s7811 + $0xc0] sm:$0xf]
        %v7861 = vld [vmem:[%s7811 + $0xc4] sm:$0xf]
        %v7862 = vld [vmem:[%s7811 + $0xc8] sm:$0xf]
        %v7863 = vld [vmem:[%s7811 + $0xcc] sm:$0xf]
        %v7864 = vld [vmem:[%s7811 + $0xd0] sm:$0xf]
        %v7865 = vld [vmem:[%s7811 + $0xd4] sm:$0xf]
        %v7866 = vld [vmem:[%s7811 + $0xd8] sm:$0xf]
        %v7867 = vld [vmem:[%s7811 + $0xdc] sm:$0xf]
        %v7869 = vshrl.u32 %v7751, 16
        %v7872 = vshrl.u32 %v7752, 16
        %v7875 = vshrl.u32 %v7753, 16
        %v7878 = vshrl.u32 %v7754, 16
        %v7939 = vunpack.c.l.b16 %v7812
        %v7940 = vunpack.c.l.b16 %v7813
        %v7941 = vunpack.c.l.b16 %v7814
        %v7942 = vunpack.c.l.b16 %v7815
        %v7943 = vunpack.c.l.b16 %v7816
        %v7944 = vunpack.c.l.b16 %v7817
        %v7945 = vunpack.c.l.b16 %v7818
        %v7946 = vunpack.c.l.b16 %v7819
        %v7947 = vunpack.c.l.b16 %v7820
        %v7948 = vunpack.c.l.b16 %v7821
        %v7949 = vunpack.c.l.b16 %v7822
        %v7950 = vunpack.c.l.b16 %v7823
        %v7951 = vunpack.c.l.b16 %v7824
        %v7952 = vunpack.c.l.b16 %v7825
        %v7953 = vunpack.c.l.b16 %v7826
        %v7954 = vunpack.c.l.b16 %v7827
        %v7955 = vunpack.c.l.b16 %v7828
        %v7956 = vunpack.c.l.b16 %v7829
        %v7957 = vunpack.c.l.b16 %v7830
        %v7958 = vunpack.c.l.b16 %v7831
        %v7959 = vunpack.c.l.b16 %v7832
        %v7960 = vunpack.c.l.b16 %v7833
        %v7961 = vunpack.c.l.b16 %v7834
        %v7962 = vunpack.c.l.b16 %v7835
        %v7963 = vunpack.c.l.b16 %v7836
        %v7964 = vunpack.c.l.b16 %v7837
        %v7965 = vunpack.c.l.b16 %v7838
        %v7966 = vunpack.c.l.b16 %v7839
        %v7967 = vunpack.c.l.b16 %v7840
        %v7968 = vunpack.c.l.b16 %v7841
        %v7969 = vunpack.c.l.b16 %v7842
        %v7970 = vunpack.c.l.b16 %v7843
        %v7971 = vunpack.c.l.b16 %v7844
        %v7972 = vunpack.c.l.b16 %v7845
        %v7973 = vunpack.c.l.b16 %v7846
        %v7974 = vunpack.c.l.b16 %v7847
        %v7975 = vunpack.c.l.b16 %v7848
        %v7976 = vunpack.c.l.b16 %v7849
        %v7977 = vunpack.c.l.b16 %v7850
        %v7978 = vunpack.c.l.b16 %v7851
        %v7979 = vunpack.c.l.b16 %v7852
        %v7980 = vunpack.c.l.b16 %v7853
        %v7981 = vunpack.c.l.b16 %v7854
        %v7982 = vunpack.c.l.b16 %v7855
        %v7983 = vunpack.c.l.b16 %v7856
        %v7984 = vunpack.c.l.b16 %v7857
        %v7985 = vunpack.c.l.b16 %v7858
        %v7986 = vunpack.c.l.b16 %v7859
        %v7987 = vunpack.c.l.b16 %v7860
        %v7988 = vunpack.c.l.b16 %v7861
        %v7989 = vunpack.c.l.b16 %v7862
        %v7990 = vunpack.c.l.b16 %v7863
        %v7991 = vunpack.c.l.b16 %v7864
        %v7992 = vunpack.c.l.b16 %v7865
        %v7993 = vunpack.c.l.b16 %v7866
        %v7994 = vunpack.c.l.b16 %v7867
        %v7995 = vpack.c.b16 %v7940, %v7939
        %v7996 = vpack.c.b16 %v7942, %v7941
        %v7997 = vpack.c.b16 %v7944, %v7943
        %v7998 = vpack.c.b16 %v7946, %v7945
        %v7999 = vpack.c.b16 %v7948, %v7947
        %v8000 = vpack.c.b16 %v7950, %v7949
        %v8001 = vpack.c.b16 %v7952, %v7951
        %v8002 = vpack.c.b16 %v7954, %v7953
        %v8003 = vpack.c.b16 %v7956, %v7955
        %v8004 = vpack.c.b16 %v7958, %v7957
        %v8005 = vpack.c.b16 %v7960, %v7959
        %v8006 = vpack.c.b16 %v7962, %v7961
        %v8007 = vpack.c.b16 %v7964, %v7963
        %v8008 = vpack.c.b16 %v7966, %v7965
        %v8009 = vpack.c.b16 %v7968, %v7967
        %v8010 = vpack.c.b16 %v7970, %v7969
        %v8011 = vpack.c.b16 %v7972, %v7971
        %v8012 = vpack.c.b16 %v7974, %v7973
        %v8013 = vpack.c.b16 %v7976, %v7975
        %v8014 = vpack.c.b16 %v7978, %v7977
        %v8015 = vpack.c.b16 %v7980, %v7979
        %v8016 = vpack.c.b16 %v7982, %v7981
        %v8017 = vpack.c.b16 %v7984, %v7983
        %v8018 = vpack.c.b16 %v7986, %v7985
        %v8019 = vpack.c.b16 %v7988, %v7987
        %v8020 = vpack.c.b16 %v7990, %v7989
        %v8021 = vpack.c.b16 %v7992, %v7991
        %v8022 = vpack.c.b16 %v7994, %v7993
        %v8052 = vsel %vm3222, %v7878, 0
        %8054 = vmatprep.subr.bf16.mxu0 0
        %8055 = vmatpush1.bf16.msra.mxu0 %v7995
        %8056 = vmatprep.subr.bf16.mxu0 0
        %8057 = vmatpush1.bf16.msra.mxu0 %v7996
        %8058 = vmatprep.subr.bf16.mxu0 0
        %8059 = vmatpush1.bf16.msra.mxu0 %v7997
        %8060 = vmatprep.subr.bf16.mxu0 0
        %8061 = vmatpush1.bf16.msra.mxu0 %v7998
        %8062 = vmatprep.subr.bf16.mxu0 0
        %8063 = vmatpush1.bf16.msra.mxu0 %v7999
        %8064 = vmatprep.subr.bf16.mxu0 0
        %8065 = vmatpush1.bf16.msra.mxu0 %v8000
        %8066 = vmatprep.subr.bf16.mxu0 0
        %8067 = vmatpush1.bf16.msra.mxu0 %v8001
        %8068 = vmatprep.subr.bf16.mxu0 0
        %8069 = vmatpush1.bf16.msra.mxu0 %v8002
        %8070 = vmatprep.subr.bf16.mxu0 0
        %8071 = vmatpush1.bf16.msra.mxu0 %v8003
        %8072 = vmatprep.subr.bf16.mxu0 0
        %8073 = vmatpush1.bf16.msra.mxu0 %v8004
        %8074 = vmatprep.subr.bf16.mxu0 0
        %8075 = vmatpush1.bf16.msra.mxu0 %v8005
        %8076 = vmatprep.subr.bf16.mxu0 0
        %8077 = vmatpush1.bf16.msra.mxu0 %v8006
        %8078 = vmatprep.subr.bf16.mxu0 0
        %8079 = vmatpush1.bf16.msra.mxu0 %v8007
        %8080 = vmatprep.subr.bf16.mxu0 0
        %8081 = vmatpush1.bf16.msra.mxu0 %v8008
        %8082 = vmatprep.subr.bf16.mxu0 0
        %8083 = vmatpush1.bf16.msra.mxu0 %v8009
        %8084 = vmatprep.subr.bf16.mxu0 0
        %8085 = vmatpush1.bf16.msra.mxu0 %v8010
        %8086 = vmatprep.mubr.bf16.mxu0 %v7872
        %8087 = vmatmul.mubr.bf16.gmra.mrb[0].mxu0 %v7869
        %v8088 = vpop.f32.mrb[0].mxu0
        %v8089 = vadd.f32 0.0, %v8088
        %v8090 = vpop.f32.mrb[0].mxu0
        %v8091 = vpop.f32.mrb[0].mxu0
        %v8092 = vpop.f32.mrb[0].mxu0
        %8093 = vdwg.mxu0
        %8094 = vmatprep.subr.bf16.mxu0 0
        %8095 = vmatpush1.bf16.msra.mxu0 %v8011
        %8096 = vmatprep.subr.bf16.mxu0 0
        %8097 = vmatpush1.bf16.msra.mxu0 %v8012
        %8098 = vmatprep.subr.bf16.mxu0 0
        %8099 = vmatpush1.bf16.msra.mxu0 %v8013
        %8100 = vmatprep.subr.bf16.mxu0 0
        %8101 = vmatpush1.bf16.msra.mxu0 %v8014
        %8102 = vmatprep.subr.bf16.mxu0 0
        %8103 = vmatpush1.bf16.msra.mxu0 %v8015
        %8104 = vmatprep.subr.bf16.mxu0 0
        %8105 = vmatpush1.bf16.msra.mxu0 %v8016
        %8106 = vmatprep.subr.bf16.mxu0 0
        %8107 = vmatpush1.bf16.msra.mxu0 %v8017
        %8108 = vmatprep.subr.bf16.mxu0 0
        %8109 = vmatpush1.bf16.msra.mxu0 %v8018
        %8110 = vmatprep.subr.bf16.mxu0 0
        %8111 = vmatpush1.bf16.msra.mxu0 %v8019
        %8112 = vmatprep.subr.bf16.mxu0 0
        %8113 = vmatpush1.bf16.msra.mxu0 %v8020
        %8114 = vmatprep.subr.bf16.mxu0 0
        %8115 = vmatpush1.bf16.msra.mxu0 %v8021
        %8116 = vmatprep.subr.bf16.mxu0 0
        %8117 = vmatpush1.bf16.msra.mxu0 %v8022
        %8118 = vmatprep.subr.bf16.mxu0 0
        %8119 = vmatpush1.bf16.msra.mxu0 0
        %8120 = vmatprep.subr.bf16.mxu0 0
        %8121 = vmatpush1.bf16.msra.mxu0 0
        %8122 = vmatprep.subr.bf16.mxu0 0
        %8123 = vmatpush1.bf16.msra.mxu0 0
        %8124 = vmatprep.subr.bf16.mxu0 0
        %8125 = vmatpush1.bf16.msra.mxu0 0
        %8126 = vmatprep.mubr.bf16.mxu0 %v8052
        %8127 = vmatmul.mubr.bf16.gmra.mrb[0].mxu0 %v7875
        %v8128 = vpop.f32.mrb[0].mxu0
        %v8129 = vadd.f32 %v8089, %v8128
        %v8130 = vpop.f32.mrb[0].mxu0
        %v8131 = vpop.f32.mrb[0].mxu0
        %v8132 = vpop.f32.mrb[0].mxu0
        %8133 = vdwg.mxu0
        %v8190 = vunpack.c.l.b16 %v7755
        %v8191 = vunpack.c.l.b16 %v7756
        %v8192 = vunpack.c.l.b16 %v7757
        %v8193 = vunpack.c.l.b16 %v7758
        %v8194 = vunpack.c.l.b16 %v7759
        %v8195 = vunpack.c.l.b16 %v7760
        %v8196 = vunpack.c.l.b16 %v7761
        %v8197 = vunpack.c.l.b16 %v7762
        %v8198 = vunpack.c.l.b16 %v7763
        %v8199 = vunpack.c.l.b16 %v7764
        %v8200 = vunpack.c.l.b16 %v7765
        %v8201 = vunpack.c.l.b16 %v7766
        %v8202 = vunpack.c.l.b16 %v7767
        %v8203 = vunpack.c.l.b16 %v7768
        %v8204 = vunpack.c.l.b16 %v7769
        %v8205 = vunpack.c.l.b16 %v7770
        %v8206 = vunpack.c.l.b16 %v7771
        %v8207 = vunpack.c.l.b16 %v7772
        %v8208 = vunpack.c.l.b16 %v7773
        %v8209 = vunpack.c.l.b16 %v7774
        %v8210 = vunpack.c.l.b16 %v7775
        %v8211 = vunpack.c.l.b16 %v7776
        %v8212 = vunpack.c.l.b16 %v7777
        %v8213 = vunpack.c.l.b16 %v7778
        %v8214 = vunpack.c.l.b16 %v7779
        %v8215 = vunpack.c.l.b16 %v7780
        %v8216 = vunpack.c.l.b16 %v7781
        %v8217 = vunpack.c.l.b16 %v7782
        %v8218 = vunpack.c.l.b16 %v7783
        %v8219 = vunpack.c.l.b16 %v7784
        %v8220 = vunpack.c.l.b16 %v7785
        %v8221 = vunpack.c.l.b16 %v7786
        %v8222 = vunpack.c.l.b16 %v7787
        %v8223 = vunpack.c.l.b16 %v7788
        %v8224 = vunpack.c.l.b16 %v7789
        %v8225 = vunpack.c.l.b16 %v7790
        %v8226 = vunpack.c.l.b16 %v7791
        %v8227 = vunpack.c.l.b16 %v7792
        %v8228 = vunpack.c.l.b16 %v7793
        %v8229 = vunpack.c.l.b16 %v7794
        %v8230 = vunpack.c.l.b16 %v7795
        %v8231 = vunpack.c.l.b16 %v7796
        %v8232 = vunpack.c.l.b16 %v7797
        %v8233 = vunpack.c.l.b16 %v7798
        %v8234 = vunpack.c.l.b16 %v7799
        %v8235 = vunpack.c.l.b16 %v7800
        %v8236 = vunpack.c.l.b16 %v7801
        %v8237 = vunpack.c.l.b16 %v7802
        %v8238 = vunpack.c.l.b16 %v7803
        %v8239 = vunpack.c.l.b16 %v7804
        %v8240 = vunpack.c.l.b16 %v7805
        %v8241 = vunpack.c.l.b16 %v7806
        %v8242 = vunpack.c.l.b16 %v7807
        %v8243 = vunpack.c.l.b16 %v7808
        %v8244 = vunpack.c.l.b16 %v7809
        %v8245 = vunpack.c.l.b16 %v7810
        %v8246 = vpack.c.b16 %v8191, %v8190
        %v8247 = vpack.c.b16 %v8193, %v8192
        %v8248 = vpack.c.b16 %v8195, %v8194
        %v8249 = vpack.c.b16 %v8197, %v8196
        %v8250 = vpack.c.b16 %v8199, %v8198
        %v8251 = vpack.c.b16 %v8201, %v8200
        %v8252 = vpack.c.b16 %v8203, %v8202
        %v8253 = vpack.c.b16 %v8205, %v8204
        %v8254 = vpack.c.b16 %v8207, %v8206
        %v8255 = vpack.c.b16 %v8209, %v8208
        %v8256 = vpack.c.b16 %v8211, %v8210
        %v8257 = vpack.c.b16 %v8213, %v8212
        %v8258 = vpack.c.b16 %v8215, %v8214
        %v8259 = vpack.c.b16 %v8217, %v8216
        %v8260 = vpack.c.b16 %v8219, %v8218
        %v8261 = vpack.c.b16 %v8221, %v8220
        %v8262 = vpack.c.b16 %v8223, %v8222
        %v8263 = vpack.c.b16 %v8225, %v8224
        %v8264 = vpack.c.b16 %v8227, %v8226
        %v8265 = vpack.c.b16 %v8229, %v8228
        %v8266 = vpack.c.b16 %v8231, %v8230
        %v8267 = vpack.c.b16 %v8233, %v8232
        %v8268 = vpack.c.b16 %v8235, %v8234
        %v8269 = vpack.c.b16 %v8237, %v8236
        %v8270 = vpack.c.b16 %v8239, %v8238
        %v8271 = vpack.c.b16 %v8241, %v8240
        %v8272 = vpack.c.b16 %v8243, %v8242
        %v8273 = vpack.c.b16 %v8245, %v8244
        %v8302 = vsel %vm3222, %v7754, 0
        %8304 = vmatprep.subr.bf16.mxu0 0
        %8305 = vmatpush1.bf16.msra.mxu0 %v8246
        %8306 = vmatprep.subr.bf16.mxu0 0
        %8307 = vmatpush1.bf16.msra.mxu0 %v8247
        %8308 = vmatprep.subr.bf16.mxu0 0
        %8309 = vmatpush1.bf16.msra.mxu0 %v8248
        %8310 = vmatprep.subr.bf16.mxu0 0
        %8311 = vmatpush1.bf16.msra.mxu0 %v8249
        %8312 = vmatprep.subr.bf16.mxu0 0
        %8313 = vmatpush1.bf16.msra.mxu0 %v8250
        %8314 = vmatprep.subr.bf16.mxu0 0
        %8315 = vmatpush1.bf16.msra.mxu0 %v8251
        %8316 = vmatprep.subr.bf16.mxu0 0
        %8317 = vmatpush1.bf16.msra.mxu0 %v8252
        %8318 = vmatprep.subr.bf16.mxu0 0
        %8319 = vmatpush1.bf16.msra.mxu0 %v8253
        %8320 = vmatprep.subr.bf16.mxu0 0
        %8321 = vmatpush1.bf16.msra.mxu0 %v8254
        %8322 = vmatprep.subr.bf16.mxu0 0
        %8323 = vmatpush1.bf16.msra.mxu0 %v8255
        %8324 = vmatprep.subr.bf16.mxu0 0
        %8325 = vmatpush1.bf16.msra.mxu0 %v8256
        %8326 = vmatprep.subr.bf16.mxu0 0
        %8327 = vmatpush1.bf16.msra.mxu0 %v8257
        %8328 = vmatprep.subr.bf16.mxu0 0
        %8329 = vmatpush1.bf16.msra.mxu0 %v8258
        %8330 = vmatprep.subr.bf16.mxu0 0
        %8331 = vmatpush1.bf16.msra.mxu0 %v8259
        %8332 = vmatprep.subr.bf16.mxu0 0
        %8333 = vmatpush1.bf16.msra.mxu0 %v8260
        %8334 = vmatprep.subr.bf16.mxu0 0
        %8335 = vmatpush1.bf16.msra.mxu0 %v8261
        %8336 = vmatprep.mubr.bf16.mxu0 %v7752
        %8337 = vmatmul.mubr.bf16.gmra.mrb[0].mxu0 %v7751
        %v8338 = vpop.f32.mrb[0].mxu0
        %v8339 = vadd.f32 %v8129, %v8338
        %v8340 = vpop.f32.mrb[0].mxu0
        %v8341 = vpop.f32.mrb[0].mxu0
        %v8342 = vpop.f32.mrb[0].mxu0
        %8343 = vdwg.mxu0
        %8344 = vmatprep.subr.bf16.mxu0 0
        %8345 = vmatpush1.bf16.msra.mxu0 %v8262
        %8346 = vmatprep.subr.bf16.mxu0 0
        %8347 = vmatpush1.bf16.msra.mxu0 %v8263
        %8348 = vmatprep.subr.bf16.mxu0 0
        %8349 = vmatpush1.bf16.msra.mxu0 %v8264
        %8350 = vmatprep.subr.bf16.mxu0 0
        %8351 = vmatpush1.bf16.msra.mxu0 %v8265
        %8352 = vmatprep.subr.bf16.mxu0 0
        %8353 = vmatpush1.bf16.msra.mxu0 %v8266
        %8354 = vmatprep.subr.bf16.mxu0 0
        %8355 = vmatpush1.bf16.msra.mxu0 %v8267
        %8356 = vmatprep.subr.bf16.mxu0 0
        %8357 = vmatpush1.bf16.msra.mxu0 %v8268
        %8358 = vmatprep.subr.bf16.mxu0 0
        %8359 = vmatpush1.bf16.msra.mxu0 %v8269
        %8360 = vmatprep.subr.bf16.mxu0 0
        %8361 = vmatpush1.bf16.msra.mxu0 %v8270
        %8362 = vmatprep.subr.bf16.mxu0 0
        %8363 = vmatpush1.bf16.msra.mxu0 %v8271
        %8364 = vmatprep.subr.bf16.mxu0 0
        %8365 = vmatpush1.bf16.msra.mxu0 %v8272
        %8366 = vmatprep.subr.bf16.mxu0 0
        %8367 = vmatpush1.bf16.msra.mxu0 %v8273
        %8368 = vmatprep.subr.bf16.mxu0 0
        %8369 = vmatpush1.bf16.msra.mxu0 0
        %8370 = vmatprep.subr.bf16.mxu0 0
        %8371 = vmatpush1.bf16.msra.mxu0 0
        %8372 = vmatprep.subr.bf16.mxu0 0
        %8373 = vmatpush1.bf16.msra.mxu0 0
        %8374 = vmatprep.subr.bf16.mxu0 0
        %8375 = vmatpush1.bf16.msra.mxu0 0
        %8376 = vmatprep.mubr.bf16.mxu0 %v8302
        %8377 = vmatmul.mubr.bf16.gmra.mrb[0].mxu0 %v7753
        %v8378 = vpop.f32.mrb[0].mxu0
        %v8379 = vadd.f32 %v8339, %v8378
        %v8380 = vpop.f32.mrb[0].mxu0
        %v8381 = vpop.f32.mrb[0].mxu0
        %v8382 = vpop.f32.mrb[0].mxu0
        %8383 = vdwg.mxu0
        %s8384 = scalar_lea.vmem [#allocation13], 448
        %v8385 = vld [vmem:[%s8384] sm:$0xf]
        %v8386 = vld [vmem:[%s8384 + $0x4] sm:$0xf]
        %v8387 = vld [vmem:[%s8384 + $0x8] sm:$0xf]
        %v8388 = vld [vmem:[%s8384 + $0xc] sm:$0xf]
        %v8389 = vld [vmem:[%s8384 + $0x10] sm:$0xf]
        %v8390 = vld [vmem:[%s8384 + $0x14] sm:$0xf]
        %v8391 = vld [vmem:[%s8384 + $0x18] sm:$0xf]
        %v8392 = vld [vmem:[%s8384 + $0x1c] sm:$0xf]
        %v8393 = vld [vmem:[%s8384 + $0x20] sm:$0xf]
        %v8394 = vld [vmem:[%s8384 + $0x24] sm:$0xf]
        %v8395 = vld [vmem:[%s8384 + $0x28] sm:$0xf]
        %v8396 = vld [vmem:[%s8384 + $0x2c] sm:$0xf]
        %v8397 = vld [vmem:[%s8384 + $0x30] sm:$0xf]
        %v8398 = vld [vmem:[%s8384 + $0x34] sm:$0xf]
        %v8399 = vld [vmem:[%s8384 + $0x38] sm:$0xf]
        %v8400 = vld [vmem:[%s8384 + $0x3c] sm:$0xf]
        %v8401 = vld [vmem:[%s8384 + $0x40] sm:$0xf]
        %v8402 = vld [vmem:[%s8384 + $0x44] sm:$0xf]
        %v8403 = vld [vmem:[%s8384 + $0x48] sm:$0xf]
        %v8404 = vld [vmem:[%s8384 + $0x4c] sm:$0xf]
        %v8405 = vld [vmem:[%s8384 + $0x50] sm:$0xf]
        %v8406 = vld [vmem:[%s8384 + $0x54] sm:$0xf]
        %v8407 = vld [vmem:[%s8384 + $0x58] sm:$0xf]
        %v8408 = vld [vmem:[%s8384 + $0x5c] sm:$0xf]
        %v8409 = vld [vmem:[%s8384 + $0x60] sm:$0xf]
        %v8410 = vld [vmem:[%s8384 + $0x64] sm:$0xf]
        %v8411 = vld [vmem:[%s8384 + $0x68] sm:$0xf]
        %v8412 = vld [vmem:[%s8384 + $0x6c] sm:$0xf]
        %v8413 = vld [vmem:[%s8384 + $0x70] sm:$0xf]
        %v8414 = vld [vmem:[%s8384 + $0x74] sm:$0xf]
        %v8415 = vld [vmem:[%s8384 + $0x78] sm:$0xf]
        %v8416 = vld [vmem:[%s8384 + $0x7c] sm:$0xf]
        %v8417 = vld [vmem:[%s8384 + $0x80] sm:$0xf]
        %v8418 = vld [vmem:[%s8384 + $0x84] sm:$0xf]
        %v8419 = vld [vmem:[%s8384 + $0x88] sm:$0xf]
        %v8420 = vld [vmem:[%s8384 + $0x8c] sm:$0xf]
        %v8421 = vld [vmem:[%s8384 + $0x90] sm:$0xf]
        %v8422 = vld [vmem:[%s8384 + $0x94] sm:$0xf]
        %v8423 = vld [vmem:[%s8384 + $0x98] sm:$0xf]
        %v8424 = vld [vmem:[%s8384 + $0x9c] sm:$0xf]
        %v8425 = vld [vmem:[%s8384 + $0xa0] sm:$0xf]
        %v8426 = vld [vmem:[%s8384 + $0xa4] sm:$0xf]
        %v8427 = vld [vmem:[%s8384 + $0xa8] sm:$0xf]
        %v8428 = vld [vmem:[%s8384 + $0xac] sm:$0xf]
        %v8429 = vld [vmem:[%s8384 + $0xb0] sm:$0xf]
        %v8430 = vld [vmem:[%s8384 + $0xb4] sm:$0xf]
        %v8431 = vld [vmem:[%s8384 + $0xb8] sm:$0xf]
        %v8432 = vld [vmem:[%s8384 + $0xbc] sm:$0xf]
        %v8433 = vld [vmem:[%s8384 + $0xc0] sm:$0xf]
        %v8434 = vld [vmem:[%s8384 + $0xc4] sm:$0xf]
        %v8435 = vld [vmem:[%s8384 + $0xc8] sm:$0xf]
        %v8436 = vld [vmem:[%s8384 + $0xcc] sm:$0xf]
        %v8437 = vld [vmem:[%s8384 + $0xd0] sm:$0xf]
        %v8438 = vld [vmem:[%s8384 + $0xd4] sm:$0xf]
        %v8439 = vld [vmem:[%s8384 + $0xd8] sm:$0xf]
        %v8440 = vld [vmem:[%s8384 + $0xdc] sm:$0xf]
        %v8445 = vrot.slane %v7751, 1
        %v8446 = vrot.slane %v7752, 1
        %v8447 = vrot.slane %v7753, 1
        %v8448 = vrot.slane %v7754, 1
        %v8508 = vunpack.c.l.b16 %v8385
        %v8509 = vunpack.c.l.b16 %v8386
        %v8510 = vunpack.c.l.b16 %v8387
        %v8511 = vunpack.c.l.b16 %v8388
        %v8512 = vunpack.c.l.b16 %v8389
        %v8513 = vunpack.c.l.b16 %v8390
        %v8514 = vunpack.c.l.b16 %v8391
        %v8515 = vunpack.c.l.b16 %v8392
        %v8516 = vunpack.c.l.b16 %v8393
        %v8517 = vunpack.c.l.b16 %v8394
        %v8518 = vunpack.c.l.b16 %v8395
        %v8519 = vunpack.c.l.b16 %v8396
        %v8520 = vunpack.c.l.b16 %v8397
        %v8521 = vunpack.c.l.b16 %v8398
        %v8522 = vunpack.c.l.b16 %v8399
        %v8523 = vunpack.c.l.b16 %v8400
        %v8524 = vunpack.c.l.b16 %v8401
        %v8525 = vunpack.c.l.b16 %v8402
        %v8526 = vunpack.c.l.b16 %v8403
        %v8527 = vunpack.c.l.b16 %v8404
        %v8528 = vunpack.c.l.b16 %v8405
        %v8529 = vunpack.c.l.b16 %v8406
        %v8530 = vunpack.c.l.b16 %v8407
        %v8531 = vunpack.c.l.b16 %v8408
        %v8532 = vunpack.c.l.b16 %v8409
        %v8533 = vunpack.c.l.b16 %v8410
        %v8534 = vunpack.c.l.b16 %v8411
        %v8535 = vunpack.c.l.b16 %v8412
        %v8536 = vunpack.c.l.b16 %v8413
        %v8537 = vunpack.c.l.b16 %v8414
        %v8538 = vunpack.c.l.b16 %v8415
        %v8539 = vunpack.c.l.b16 %v8416
        %v8540 = vunpack.c.l.b16 %v8417
        %v8541 = vunpack.c.l.b16 %v8418
        %v8542 = vunpack.c.l.b16 %v8419
        %v8543 = vunpack.c.l.b16 %v8420
        %v8544 = vunpack.c.l.b16 %v8421
        %v8545 = vunpack.c.l.b16 %v8422
        %v8546 = vunpack.c.l.b16 %v8423
        %v8547 = vunpack.c.l.b16 %v8424
        %v8548 = vunpack.c.l.b16 %v8425
        %v8549 = vunpack.c.l.b16 %v8426
        %v8550 = vunpack.c.l.b16 %v8427
        %v8551 = vunpack.c.l.b16 %v8428
        %v8552 = vunpack.c.l.b16 %v8429
        %v8553 = vunpack.c.l.b16 %v8430
        %v8554 = vunpack.c.l.b16 %v8431
        %v8555 = vunpack.c.l.b16 %v8432
        %v8556 = vunpack.c.l.b16 %v8433
        %v8557 = vunpack.c.l.b16 %v8434
        %v8558 = vunpack.c.l.b16 %v8435
        %v8559 = vunpack.c.l.b16 %v8436
        %v8560 = vunpack.c.l.b16 %v8437
        %v8561 = vunpack.c.l.b16 %v8438
        %v8562 = vunpack.c.l.b16 %v8439
        %v8563 = vunpack.c.l.b16 %v8440
        %v8564 = vpack.c.b16 %v8509, %v8508
        %v8565 = vpack.c.b16 %v8511, %v8510
        %v8566 = vpack.c.b16 %v8513, %v8512
        %v8567 = vpack.c.b16 %v8515, %v8514
        %v8568 = vpack.c.b16 %v8517, %v8516
        %v8569 = vpack.c.b16 %v8519, %v8518
        %v8570 = vpack.c.b16 %v8521, %v8520
        %v8571 = vpack.c.b16 %v8523, %v8522
        %v8572 = vpack.c.b16 %v8525, %v8524
        %v8573 = vpack.c.b16 %v8527, %v8526
        %v8574 = vpack.c.b16 %v8529, %v8528
        %v8575 = vpack.c.b16 %v8531, %v8530
        %v8576 = vpack.c.b16 %v8533, %v8532
        %v8577 = vpack.c.b16 %v8535, %v8534
        %v8578 = vpack.c.b16 %v8537, %v8536
        %v8579 = vpack.c.b16 %v8539, %v8538
        %v8580 = vpack.c.b16 %v8541, %v8540
        %v8581 = vpack.c.b16 %v8543, %v8542
        %v8582 = vpack.c.b16 %v8545, %v8544
        %v8583 = vpack.c.b16 %v8547, %v8546
        %v8584 = vpack.c.b16 %v8549, %v8548
        %v8585 = vpack.c.b16 %v8551, %v8550
        %v8586 = vpack.c.b16 %v8553, %v8552
        %v8587 = vpack.c.b16 %v8555, %v8554
        %v8588 = vpack.c.b16 %v8557, %v8556
        %v8589 = vpack.c.b16 %v8559, %v8558
        %v8590 = vpack.c.b16 %v8561, %v8560
        %v8591 = vpack.c.b16 %v8563, %v8562
        %v8621 = vsel %vm3222, %v8448, 0
        %8623 = vmatprep.subr.bf16.mxu0 0
        %8624 = vmatpush1.bf16.msra.mxu0 %v8564
        %8625 = vmatprep.subr.bf16.mxu0 0
        %8626 = vmatpush1.bf16.msra.mxu0 %v8565
        %8627 = vmatprep.subr.bf16.mxu0 0
        %8628 = vmatpush1.bf16.msra.mxu0 %v8566
        %8629 = vmatprep.subr.bf16.mxu0 0
        %8630 = vmatpush1.bf16.msra.mxu0 %v8567
        %8631 = vmatprep.subr.bf16.mxu0 0
        %8632 = vmatpush1.bf16.msra.mxu0 %v8568
        %8633 = vmatprep.subr.bf16.mxu0 0
        %8634 = vmatpush1.bf16.msra.mxu0 %v8569
        %8635 = vmatprep.subr.bf16.mxu0 0
        %8636 = vmatpush1.bf16.msra.mxu0 %v8570
        %8637 = vmatprep.subr.bf16.mxu0 0
        %8638 = vmatpush1.bf16.msra.mxu0 %v8571
        %8639 = vmatprep.subr.bf16.mxu0 0
        %8640 = vmatpush1.bf16.msra.mxu0 %v8572
        %8641 = vmatprep.subr.bf16.mxu0 0
        %8642 = vmatpush1.bf16.msra.mxu0 %v8573
        %8643 = vmatprep.subr.bf16.mxu0 0
        %8644 = vmatpush1.bf16.msra.mxu0 %v8574
        %8645 = vmatprep.subr.bf16.mxu0 0
        %8646 = vmatpush1.bf16.msra.mxu0 %v8575
        %8647 = vmatprep.subr.bf16.mxu0 0
        %8648 = vmatpush1.bf16.msra.mxu0 %v8576
        %8649 = vmatprep.subr.bf16.mxu0 0
        %8650 = vmatpush1.bf16.msra.mxu0 %v8577
        %8651 = vmatprep.subr.bf16.mxu0 0
        %8652 = vmatpush1.bf16.msra.mxu0 %v8578
        %8653 = vmatprep.subr.bf16.mxu0 0
        %8654 = vmatpush1.bf16.msra.mxu0 %v8579
        %8655 = vmatprep.mubr.bf16.mxu0 %v8446
        %8656 = vmatmul.mubr.bf16.gmra.mrb[0].mxu0 %v8445
        %v8657 = vpop.f32.mrb[0].mxu0
        %v8658 = vadd.f32 0.0, %v8657
        %v8659 = vpop.f32.mrb[0].mxu0
        %v8660 = vpop.f32.mrb[0].mxu0
        %v8661 = vpop.f32.mrb[0].mxu0
        %8662 = vdwg.mxu0
        %8663 = vmatprep.subr.bf16.mxu0 0
        %8664 = vmatpush1.bf16.msra.mxu0 %v8580
        %8665 = vmatprep.subr.bf16.mxu0 0
        %8666 = vmatpush1.bf16.msra.mxu0 %v8581
        %8667 = vmatprep.subr.bf16.mxu0 0
        %8668 = vmatpush1.bf16.msra.mxu0 %v8582
        %8669 = vmatprep.subr.bf16.mxu0 0
        %8670 = vmatpush1.bf16.msra.mxu0 %v8583
        %8671 = vmatprep.subr.bf16.mxu0 0
        %8672 = vmatpush1.bf16.msra.mxu0 %v8584
        %8673 = vmatprep.subr.bf16.mxu0 0
        %8674 = vmatpush1.bf16.msra.mxu0 %v8585
        %8675 = vmatprep.subr.bf16.mxu0 0
        %8676 = vmatpush1.bf16.msra.mxu0 %v8586
        %8677 = vmatprep.subr.bf16.mxu0 0
        %8678 = vmatpush1.bf16.msra.mxu0 %v8587
        %8679 = vmatprep.subr.bf16.mxu0 0
        %8680 = vmatpush1.bf16.msra.mxu0 %v8588
        %8681 = vmatprep.subr.bf16.mxu0 0
        %8682 = vmatpush1.bf16.msra.mxu0 %v8589
        %8683 = vmatprep.subr.bf16.mxu0 0
        %8684 = vmatpush1.bf16.msra.mxu0 %v8590
        %8685 = vmatprep.subr.bf16.mxu0 0
        %8686 = vmatpush1.bf16.msra.mxu0 %v8591
        %8687 = vmatprep.subr.bf16.mxu0 0
        %8688 = vmatpush1.bf16.msra.mxu0 0
        %8689 = vmatprep.subr.bf16.mxu0 0
        %8690 = vmatpush1.bf16.msra.mxu0 0
        %8691 = vmatprep.subr.bf16.mxu0 0
        %8692 = vmatpush1.bf16.msra.mxu0 0
        %8693 = vmatprep.subr.bf16.mxu0 0
        %8694 = vmatpush1.bf16.msra.mxu0 0
        %8695 = vmatprep.mubr.bf16.mxu0 %v8621
        %8696 = vmatmul.mubr.bf16.gmra.mrb[0].mxu0 %v8447
        %v8697 = vpop.f32.mrb[0].mxu0
        %v8698 = vadd.f32 %v8658, %v8697
        %v8699 = vpop.f32.mrb[0].mxu0
        %v8700 = vpop.f32.mrb[0].mxu0
        %v8701 = vpop.f32.mrb[0].mxu0
        %8702 = vdwg.mxu0
        %v8703 = vadd.f32 %v8379, %v8698
        %s8704 = scalar_lea.vmem [#allocation13], 672
        %v8705 = vld [vmem:[%s8704] sm:$0xf]
        %v8706 = vld [vmem:[%s8704 + $0x4] sm:$0xf]
        %v8707 = vld [vmem:[%s8704 + $0x8] sm:$0xf]
        %v8708 = vld [vmem:[%s8704 + $0xc] sm:$0xf]
        %v8709 = vld [vmem:[%s8704 + $0x10] sm:$0xf]
        %v8710 = vld [vmem:[%s8704 + $0x14] sm:$0xf]
        %v8711 = vld [vmem:[%s8704 + $0x18] sm:$0xf]
        %v8712 = vld [vmem:[%s8704 + $0x1c] sm:$0xf]
        %v8713 = vld [vmem:[%s8704 + $0x20] sm:$0xf]
        %v8714 = vld [vmem:[%s8704 + $0x24] sm:$0xf]
        %v8715 = vld [vmem:[%s8704 + $0x28] sm:$0xf]
        %v8716 = vld [vmem:[%s8704 + $0x2c] sm:$0xf]
        %v8717 = vld [vmem:[%s8704 + $0x30] sm:$0xf]
        %v8718 = vld [vmem:[%s8704 + $0x34] sm:$0xf]
        %v8719 = vld [vmem:[%s8704 + $0x38] sm:$0xf]
        %v8720 = vld [vmem:[%s8704 + $0x3c] sm:$0xf]
        %v8721 = vld [vmem:[%s8704 + $0x40] sm:$0xf]
        %v8722 = vld [vmem:[%s8704 + $0x44] sm:$0xf]
        %v8723 = vld [vmem:[%s8704 + $0x48] sm:$0xf]
        %v8724 = vld [vmem:[%s8704 + $0x4c] sm:$0xf]
        %v8725 = vld [vmem:[%s8704 + $0x50] sm:$0xf]
        %v8726 = vld [vmem:[%s8704 + $0x54] sm:$0xf]
        %v8727 = vld [vmem:[%s8704 + $0x58] sm:$0xf]
        %v8728 = vld [vmem:[%s8704 + $0x5c] sm:$0xf]
        %v8729 = vld [vmem:[%s8704 + $0x60] sm:$0xf]
        %v8730 = vld [vmem:[%s8704 + $0x64] sm:$0xf]
        %v8731 = vld [vmem:[%s8704 + $0x68] sm:$0xf]
        %v8732 = vld [vmem:[%s8704 + $0x6c] sm:$0xf]
        %v8733 = vld [vmem:[%s8704 + $0x70] sm:$0xf]
        %v8734 = vld [vmem:[%s8704 + $0x74] sm:$0xf]
        %v8735 = vld [vmem:[%s8704 + $0x78] sm:$0xf]
        %v8736 = vld [vmem:[%s8704 + $0x7c] sm:$0xf]
        %v8737 = vld [vmem:[%s8704 + $0x80] sm:$0xf]
        %v8738 = vld [vmem:[%s8704 + $0x84] sm:$0xf]
        %v8739 = vld [vmem:[%s8704 + $0x88] sm:$0xf]
        %v8740 = vld [vmem:[%s8704 + $0x8c] sm:$0xf]
        %v8741 = vld [vmem:[%s8704 + $0x90] sm:$0xf]
        %v8742 = vld [vmem:[%s8704 + $0x94] sm:$0xf]
        %v8743 = vld [vmem:[%s8704 + $0x98] sm:$0xf]
        %v8744 = vld [vmem:[%s8704 + $0x9c] sm:$0xf]
        %v8745 = vld [vmem:[%s8704 + $0xa0] sm:$0xf]
        %v8746 = vld [vmem:[%s8704 + $0xa4] sm:$0xf]
        %v8747 = vld [vmem:[%s8704 + $0xa8] sm:$0xf]
        %v8748 = vld [vmem:[%s8704 + $0xac] sm:$0xf]
        %v8749 = vld [vmem:[%s8704 + $0xb0] sm:$0xf]
        %v8750 = vld [vmem:[%s8704 + $0xb4] sm:$0xf]
        %v8751 = vld [vmem:[%s8704 + $0xb8] sm:$0xf]
        %v8752 = vld [vmem:[%s8704 + $0xbc] sm:$0xf]
        %v8753 = vld [vmem:[%s8704 + $0xc0] sm:$0xf]
        %v8754 = vld [vmem:[%s8704 + $0xc4] sm:$0xf]
        %v8755 = vld [vmem:[%s8704 + $0xc8] sm:$0xf]
        %v8756 = vld [vmem:[%s8704 + $0xcc] sm:$0xf]
        %v8757 = vld [vmem:[%s8704 + $0xd0] sm:$0xf]
        %v8758 = vld [vmem:[%s8704 + $0xd4] sm:$0xf]
        %v8759 = vld [vmem:[%s8704 + $0xd8] sm:$0xf]
        %v8760 = vld [vmem:[%s8704 + $0xdc] sm:$0xf]
        %v8761 = vrot.slane %v7869, 1
        %v8762 = vrot.slane %v7872, 1
        %v8763 = vrot.slane %v7875, 1
        %v8764 = vrot.slane %v7878, 1
        %v8824 = vunpack.c.l.b16 %v8705
        %v8825 = vunpack.c.l.b16 %v8706
        %v8826 = vunpack.c.l.b16 %v8707
        %v8827 = vunpack.c.l.b16 %v8708
        %v8828 = vunpack.c.l.b16 %v8709
        %v8829 = vunpack.c.l.b16 %v8710
        %v8830 = vunpack.c.l.b16 %v8711
        %v8831 = vunpack.c.l.b16 %v8712
        %v8832 = vunpack.c.l.b16 %v8713
        %v8833 = vunpack.c.l.b16 %v8714
        %v8834 = vunpack.c.l.b16 %v8715
        %v8835 = vunpack.c.l.b16 %v8716
        %v8836 = vunpack.c.l.b16 %v8717
        %v8837 = vunpack.c.l.b16 %v8718
        %v8838 = vunpack.c.l.b16 %v8719
        %v8839 = vunpack.c.l.b16 %v8720
        %v8840 = vunpack.c.l.b16 %v8721
        %v8841 = vunpack.c.l.b16 %v8722
        %v8842 = vunpack.c.l.b16 %v8723
        %v8843 = vunpack.c.l.b16 %v8724
        %v8844 = vunpack.c.l.b16 %v8725
        %v8845 = vunpack.c.l.b16 %v8726
        %v8846 = vunpack.c.l.b16 %v8727
        %v8847 = vunpack.c.l.b16 %v8728
        %v8848 = vunpack.c.l.b16 %v8729
        %v8849 = vunpack.c.l.b16 %v8730
        %v8850 = vunpack.c.l.b16 %v8731
        %v8851 = vunpack.c.l.b16 %v8732
        %v8852 = vunpack.c.l.b16 %v8733
        %v8853 = vunpack.c.l.b16 %v8734
        %v8854 = vunpack.c.l.b16 %v8735
        %v8855 = vunpack.c.l.b16 %v8736
        %v8856 = vunpack.c.l.b16 %v8737
        %v8857 = vunpack.c.l.b16 %v8738
        %v8858 = vunpack.c.l.b16 %v8739
        %v8859 = vunpack.c.l.b16 %v8740
        %v8860 = vunpack.c.l.b16 %v8741
        %v8861 = vunpack.c.l.b16 %v8742
        %v8862 = vunpack.c.l.b16 %v8743
        %v8863 = vunpack.c.l.b16 %v8744
        %v8864 = vunpack.c.l.b16 %v8745
        %v8865 = vunpack.c.l.b16 %v8746
        %v8866 = vunpack.c.l.b16 %v8747
        %v8867 = vunpack.c.l.b16 %v8748
        %v8868 = vunpack.c.l.b16 %v8749
        %v8869 = vunpack.c.l.b16 %v8750
        %v8870 = vunpack.c.l.b16 %v8751
        %v8871 = vunpack.c.l.b16 %v8752
        %v8872 = vunpack.c.l.b16 %v8753
        %v8873 = vunpack.c.l.b16 %v8754
        %v8874 = vunpack.c.l.b16 %v8755
        %v8875 = vunpack.c.l.b16 %v8756
        %v8876 = vunpack.c.l.b16 %v8757
        %v8877 = vunpack.c.l.b16 %v8758
        %v8878 = vunpack.c.l.b16 %v8759
        %v8879 = vunpack.c.l.b16 %v8760
        %v8880 = vpack.c.b16 %v8825, %v8824
        %v8881 = vpack.c.b16 %v8827, %v8826
        %v8882 = vpack.c.b16 %v8829, %v8828
        %v8883 = vpack.c.b16 %v8831, %v8830
        %v8884 = vpack.c.b16 %v8833, %v8832
        %v8885 = vpack.c.b16 %v8835, %v8834
        %v8886 = vpack.c.b16 %v8837, %v8836
        %v8887 = vpack.c.b16 %v8839, %v8838
        %v8888 = vpack.c.b16 %v8841, %v8840
        %v8889 = vpack.c.b16 %v8843, %v8842
        %v8890 = vpack.c.b16 %v8845, %v8844
        %v8891 = vpack.c.b16 %v8847, %v8846
        %v8892 = vpack.c.b16 %v8849, %v8848
        %v8893 = vpack.c.b16 %v8851, %v8850
        %v8894 = vpack.c.b16 %v8853, %v8852
        %v8895 = vpack.c.b16 %v8855, %v8854
        %v8896 = vpack.c.b16 %v8857, %v8856
        %v8897 = vpack.c.b16 %v8859, %v8858
        %v8898 = vpack.c.b16 %v8861, %v8860
        %v8899 = vpack.c.b16 %v8863, %v8862
        %v8900 = vpack.c.b16 %v8865, %v8864
        %v8901 = vpack.c.b16 %v8867, %v8866
        %v8902 = vpack.c.b16 %v8869, %v8868
        %v8903 = vpack.c.b16 %v8871, %v8870
        %v8904 = vpack.c.b16 %v8873, %v8872
        %v8905 = vpack.c.b16 %v8875, %v8874
        %v8906 = vpack.c.b16 %v8877, %v8876
        %v8907 = vpack.c.b16 %v8879, %v8878
        %v8937 = vsel %vm3222, %v8764, 0
        %8939 = vmatprep.subr.bf16.mxu0 0
        %8940 = vmatpush1.bf16.msra.mxu0 %v8880
        %8941 = vmatprep.subr.bf16.mxu0 0
        %8942 = vmatpush1.bf16.msra.mxu0 %v8881
        %8943 = vmatprep.subr.bf16.mxu0 0
        %8944 = vmatpush1.bf16.msra.mxu0 %v8882
        %8945 = vmatprep.subr.bf16.mxu0 0
        %8946 = vmatpush1.bf16.msra.mxu0 %v8883
        %8947 = vmatprep.subr.bf16.mxu0 0
        %8948 = vmatpush1.bf16.msra.mxu0 %v8884
        %8949 = vmatprep.subr.bf16.mxu0 0
        %8950 = vmatpush1.bf16.msra.mxu0 %v8885
        %8951 = vmatprep.subr.bf16.mxu0 0
        %8952 = vmatpush1.bf16.msra.mxu0 %v8886
        %8953 = vmatprep.subr.bf16.mxu0 0
        %8954 = vmatpush1.bf16.msra.mxu0 %v8887
        %8955 = vmatprep.subr.bf16.mxu0 0
        %8956 = vmatpush1.bf16.msra.mxu0 %v8888
        %8957 = vmatprep.subr.bf16.mxu0 0
        %8958 = vmatpush1.bf16.msra.mxu0 %v8889
        %8959 = vmatprep.subr.bf16.mxu0 0
        %8960 = vmatpush1.bf16.msra.mxu0 %v8890
        %8961 = vmatprep.subr.bf16.mxu0 0
        %8962 = vmatpush1.bf16.msra.mxu0 %v8891
        %8963 = vmatprep.subr.bf16.mxu0 0
        %8964 = vmatpush1.bf16.msra.mxu0 %v8892
        %8965 = vmatprep.subr.bf16.mxu0 0
        %8966 = vmatpush1.bf16.msra.mxu0 %v8893
        %8967 = vmatprep.subr.bf16.mxu0 0
        %8968 = vmatpush1.bf16.msra.mxu0 %v8894
        %8969 = vmatprep.subr.bf16.mxu0 0
        %8970 = vmatpush1.bf16.msra.mxu0 %v8895
        %8971 = vmatprep.mubr.bf16.mxu0 %v8762
        %8972 = vmatmul.mubr.bf16.gmra.mrb[0].mxu0 %v8761
        %v8973 = vpop.f32.mrb[0].mxu0
        %v8974 = vadd.f32 0.0, %v8973
        %v8975 = vpop.f32.mrb[0].mxu0
        %v8976 = vpop.f32.mrb[0].mxu0
        %v8977 = vpop.f32.mrb[0].mxu0
        %8978 = vdwg.mxu0
        %8979 = vmatprep.subr.bf16.mxu0 0
        %8980 = vmatpush1.bf16.msra.mxu0 %v8896
        %8981 = vmatprep.subr.bf16.mxu0 0
        %8982 = vmatpush1.bf16.msra.mxu0 %v8897
        %8983 = vmatprep.subr.bf16.mxu0 0
        %8984 = vmatpush1.bf16.msra.mxu0 %v8898
        %8985 = vmatprep.subr.bf16.mxu0 0
        %8986 = vmatpush1.bf16.msra.mxu0 %v8899
        %8987 = vmatprep.subr.bf16.mxu0 0
        %8988 = vmatpush1.bf16.msra.mxu0 %v8900
        %8989 = vmatprep.subr.bf16.mxu0 0
        %8990 = vmatpush1.bf16.msra.mxu0 %v8901
        %8991 = vmatprep.subr.bf16.mxu0 0
        %8992 = vmatpush1.bf16.msra.mxu0 %v8902
        %8993 = vmatprep.subr.bf16.mxu0 0
        %8994 = vmatpush1.bf16.msra.mxu0 %v8903
        %8995 = vmatprep.subr.bf16.mxu0 0
        %8996 = vmatpush1.bf16.msra.mxu0 %v8904
        %8997 = vmatprep.subr.bf16.mxu0 0
        %8998 = vmatpush1.bf16.msra.mxu0 %v8905
        %8999 = vmatprep.subr.bf16.mxu0 0
        %9000 = vmatpush1.bf16.msra.mxu0 %v8906
        %9001 = vmatprep.subr.bf16.mxu0 0
        %9002 = vmatpush1.bf16.msra.mxu0 %v8907
        %9003 = vmatprep.subr.bf16.mxu0 0
        %9004 = vmatpush1.bf16.msra.mxu0 0
        %9005 = vmatprep.subr.bf16.mxu0 0
        %9006 = vmatpush1.bf16.msra.mxu0 0
        %9007 = vmatprep.subr.bf16.mxu0 0
        %9008 = vmatpush1.bf16.msra.mxu0 0
        %9009 = vmatprep.subr.bf16.mxu0 0
        %9010 = vmatpush1.bf16.msra.mxu0 0
        %9011 = vmatprep.mubr.bf16.mxu0 %v8937
        %9012 = vmatmul.mubr.bf16.gmra.mrb[0].mxu0 %v8763
        %v9013 = vpop.f32.mrb[0].mxu0
        %v9014 = vadd.f32 %v8974, %v9013
        %v9015 = vpop.f32.mrb[0].mxu0
        %v9016 = vpop.f32.mrb[0].mxu0
        %v9017 = vpop.f32.mrb[0].mxu0
        %9018 = vdwg.mxu0
        %v9019 = vadd.f32 %v8703, %v9014
        %s9020 = scalar_lea.vmem [#allocation13], 896
        %v9021 = vld [vmem:[%s9020] sm:$0xf]
        %v9022 = vld [vmem:[%s9020 + $0x4] sm:$0xf]
        %v9023 = vld [vmem:[%s9020 + $0x8] sm:$0xf]
        %v9024 = vld [vmem:[%s9020 + $0xc] sm:$0xf]
        %v9025 = vld [vmem:[%s9020 + $0x10] sm:$0xf]
        %v9026 = vld [vmem:[%s9020 + $0x14] sm:$0xf]
        %v9027 = vld [vmem:[%s9020 + $0x18] sm:$0xf]
        %v9028 = vld [vmem:[%s9020 + $0x1c] sm:$0xf]
        %v9029 = vld [vmem:[%s9020 + $0x20] sm:$0xf]
        %v9030 = vld [vmem:[%s9020 + $0x24] sm:$0xf]
        %v9031 = vld [vmem:[%s9020 + $0x28] sm:$0xf]
        %v9032 = vld [vmem:[%s9020 + $0x2c] sm:$0xf]
        %v9033 = vld [vmem:[%s9020 + $0x30] sm:$0xf]
        %v9034 = vld [vmem:[%s9020 + $0x34] sm:$0xf]
        %v9035 = vld [vmem:[%s9020 + $0x38] sm:$0xf]
        %v9036 = vld [vmem:[%s9020 + $0x3c] sm:$0xf]
        %v9037 = vld [vmem:[%s9020 + $0x40] sm:$0xf]
        %v9038 = vld [vmem:[%s9020 + $0x44] sm:$0xf]
        %v9039 = vld [vmem:[%s9020 + $0x48] sm:$0xf]
        %v9040 = vld [vmem:[%s9020 + $0x4c] sm:$0xf]
        %v9041 = vld [vmem:[%s9020 + $0x50] sm:$0xf]
        %v9042 = vld [vmem:[%s9020 + $0x54] sm:$0xf]
        %v9043 = vld [vmem:[%s9020 + $0x58] sm:$0xf]
        %v9044 = vld [vmem:[%s9020 + $0x5c] sm:$0xf]
        %v9045 = vld [vmem:[%s9020 + $0x60] sm:$0xf]
        %v9046 = vld [vmem:[%s9020 + $0x64] sm:$0xf]
        %v9047 = vld [vmem:[%s9020 + $0x68] sm:$0xf]
        %v9048 = vld [vmem:[%s9020 + $0x6c] sm:$0xf]
        %v9049 = vld [vmem:[%s9020 + $0x70] sm:$0xf]
        %v9050 = vld [vmem:[%s9020 + $0x74] sm:$0xf]
        %v9051 = vld [vmem:[%s9020 + $0x78] sm:$0xf]
        %v9052 = vld [vmem:[%s9020 + $0x7c] sm:$0xf]
        %v9053 = vld [vmem:[%s9020 + $0x80] sm:$0xf]
        %v9054 = vld [vmem:[%s9020 + $0x84] sm:$0xf]
        %v9055 = vld [vmem:[%s9020 + $0x88] sm:$0xf]
        %v9056 = vld [vmem:[%s9020 + $0x8c] sm:$0xf]
        %v9057 = vld [vmem:[%s9020 + $0x90] sm:$0xf]
        %v9058 = vld [vmem:[%s9020 + $0x94] sm:$0xf]
        %v9059 = vld [vmem:[%s9020 + $0x98] sm:$0xf]
        %v9060 = vld [vmem:[%s9020 + $0x9c] sm:$0xf]
        %v9061 = vld [vmem:[%s9020 + $0xa0] sm:$0xf]
        %v9062 = vld [vmem:[%s9020 + $0xa4] sm:$0xf]
        %v9063 = vld [vmem:[%s9020 + $0xa8] sm:$0xf]
        %v9064 = vld [vmem:[%s9020 + $0xac] sm:$0xf]
        %v9065 = vld [vmem:[%s9020 + $0xb0] sm:$0xf]
        %v9066 = vld [vmem:[%s9020 + $0xb4] sm:$0xf]
        %v9067 = vld [vmem:[%s9020 + $0xb8] sm:$0xf]
        %v9068 = vld [vmem:[%s9020 + $0xbc] sm:$0xf]
        %v9069 = vld [vmem:[%s9020 + $0xc0] sm:$0xf]
        %v9070 = vld [vmem:[%s9020 + $0xc4] sm:$0xf]
        %v9071 = vld [vmem:[%s9020 + $0xc8] sm:$0xf]
        %v9072 = vld [vmem:[%s9020 + $0xcc] sm:$0xf]
        %v9073 = vld [vmem:[%s9020 + $0xd0] sm:$0xf]
        %v9074 = vld [vmem:[%s9020 + $0xd4] sm:$0xf]
        %v9075 = vld [vmem:[%s9020 + $0xd8] sm:$0xf]
        %v9076 = vld [vmem:[%s9020 + $0xdc] sm:$0xf]
        %v9077 = vrot.slane %v7751, 2
        %v9078 = vrot.slane %v7752, 2
        %v9079 = vrot.slane %v7753, 2
        %v9080 = vrot.slane %v7754, 2
        %v9140 = vunpack.c.l.b16 %v9021
        %v9141 = vunpack.c.l.b16 %v9022
        %v9142 = vunpack.c.l.b16 %v9023
        %v9143 = vunpack.c.l.b16 %v9024
        %v9144 = vunpack.c.l.b16 %v9025
        %v9145 = vunpack.c.l.b16 %v9026
        %v9146 = vunpack.c.l.b16 %v9027
        %v9147 = vunpack.c.l.b16 %v9028
        %v9148 = vunpack.c.l.b16 %v9029
        %v9149 = vunpack.c.l.b16 %v9030
        %v9150 = vunpack.c.l.b16 %v9031
        %v9151 = vunpack.c.l.b16 %v9032
        %v9152 = vunpack.c.l.b16 %v9033
        %v9153 = vunpack.c.l.b16 %v9034
        %v9154 = vunpack.c.l.b16 %v9035
        %v9155 = vunpack.c.l.b16 %v9036
        %v9156 = vunpack.c.l.b16 %v9037
        %v9157 = vunpack.c.l.b16 %v9038
        %v9158 = vunpack.c.l.b16 %v9039
        %v9159 = vunpack.c.l.b16 %v9040
        %v9160 = vunpack.c.l.b16 %v9041
        %v9161 = vunpack.c.l.b16 %v9042
        %v9162 = vunpack.c.l.b16 %v9043
        %v9163 = vunpack.c.l.b16 %v9044
        %v9164 = vunpack.c.l.b16 %v9045
        %v9165 = vunpack.c.l.b16 %v9046
        %v9166 = vunpack.c.l.b16 %v9047
        %v9167 = vunpack.c.l.b16 %v9048
        %v9168 = vunpack.c.l.b16 %v9049
        %v9169 = vunpack.c.l.b16 %v9050
        %v9170 = vunpack.c.l.b16 %v9051
        %v9171 = vunpack.c.l.b16 %v9052
        %v9172 = vunpack.c.l.b16 %v9053
        %v9173 = vunpack.c.l.b16 %v9054
        %v9174 = vunpack.c.l.b16 %v9055
        %v9175 = vunpack.c.l.b16 %v9056
        %v9176 = vunpack.c.l.b16 %v9057
        %v9177 = vunpack.c.l.b16 %v9058
        %v9178 = vunpack.c.l.b16 %v9059
        %v9179 = vunpack.c.l.b16 %v9060
        %v9180 = vunpack.c.l.b16 %v9061
        %v9181 = vunpack.c.l.b16 %v9062
        %v9182 = vunpack.c.l.b16 %v9063
        %v9183 = vunpack.c.l.b16 %v9064
        %v9184 = vunpack.c.l.b16 %v9065
        %v9185 = vunpack.c.l.b16 %v9066
        %v9186 = vunpack.c.l.b16 %v9067
        %v9187 = vunpack.c.l.b16 %v9068
        %v9188 = vunpack.c.l.b16 %v9069
        %v9189 = vunpack.c.l.b16 %v9070
        %v9190 = vunpack.c.l.b16 %v9071
        %v9191 = vunpack.c.l.b16 %v9072
        %v9192 = vunpack.c.l.b16 %v9073
        %v9193 = vunpack.c.l.b16 %v9074
        %v9194 = vunpack.c.l.b16 %v9075
        %v9195 = vunpack.c.l.b16 %v9076
        %v9196 = vpack.c.b16 %v9141, %v9140
        %v9197 = vpack.c.b16 %v9143, %v9142
        %v9198 = vpack.c.b16 %v9145, %v9144
        %v9199 = vpack.c.b16 %v9147, %v9146
        %v9200 = vpack.c.b16 %v9149, %v9148
        %v9201 = vpack.c.b16 %v9151, %v9150
        %v9202 = vpack.c.b16 %v9153, %v9152
        %v9203 = vpack.c.b16 %v9155, %v9154
        %v9204 = vpack.c.b16 %v9157, %v9156
        %v9205 = vpack.c.b16 %v9159, %v9158
        %v9206 = vpack.c.b16 %v9161, %v9160
        %v9207 = vpack.c.b16 %v9163, %v9162
        %v9208 = vpack.c.b16 %v9165, %v9164
        %v9209 = vpack.c.b16 %v9167, %v9166
        %v9210 = vpack.c.b16 %v9169, %v9168
        %v9211 = vpack.c.b16 %v9171, %v9170
        %v9212 = vpack.c.b16 %v9173, %v9172
        %v9213 = vpack.c.b16 %v9175, %v9174
        %v9214 = vpack.c.b16 %v9177, %v9176
        %v9215 = vpack.c.b16 %v9179, %v9178
        %v9216 = vpack.c.b16 %v9181, %v9180
        %v9217 = vpack.c.b16 %v9183, %v9182
        %v9218 = vpack.c.b16 %v9185, %v9184
        %v9219 = vpack.c.b16 %v9187, %v9186
        %v9220 = vpack.c.b16 %v9189, %v9188
        %v9221 = vpack.c.b16 %v9191, %v9190
        %v9222 = vpack.c.b16 %v9193, %v9192
        %v9223 = vpack.c.b16 %v9195, %v9194
        %v9253 = vsel %vm3222, %v9080, 0
        %9255 = vmatprep.subr.bf16.mxu0 0
        %9256 = vmatpush1.bf16.msra.mxu0 %v9196
        %9257 = vmatprep.subr.bf16.mxu0 0
        %9258 = vmatpush1.bf16.msra.mxu0 %v9197
        %9259 = vmatprep.subr.bf16.mxu0 0
        %9260 = vmatpush1.bf16.msra.mxu0 %v9198
        %9261 = vmatprep.subr.bf16.mxu0 0
        %9262 = vmatpush1.bf16.msra.mxu0 %v9199
        %9263 = vmatprep.subr.bf16.mxu0 0
        %9264 = vmatpush1.bf16.msra.mxu0 %v9200
        %9265 = vmatprep.subr.bf16.mxu0 0
        %9266 = vmatpush1.bf16.msra.mxu0 %v9201
        %9267 = vmatprep.subr.bf16.mxu0 0
        %9268 = vmatpush1.bf16.msra.mxu0 %v9202
        %9269 = vmatprep.subr.bf16.mxu0 0
        %9270 = vmatpush1.bf16.msra.mxu0 %v9203
        %9271 = vmatprep.subr.bf16.mxu0 0
        %9272 = vmatpush1.bf16.msra.mxu0 %v9204
        %9273 = vmatprep.subr.bf16.mxu0 0
        %9274 = vmatpush1.bf16.msra.mxu0 %v9205
        %9275 = vmatprep.subr.bf16.mxu0 0
        %9276 = vmatpush1.bf16.msra.mxu0 %v9206
        %9277 = vmatprep.subr.bf16.mxu0 0
        %9278 = vmatpush1.bf16.msra.mxu0 %v9207
        %9279 = vmatprep.subr.bf16.mxu0 0
        %9280 = vmatpush1.bf16.msra.mxu0 %v9208
        %9281 = vmatprep.subr.bf16.mxu0 0
        %9282 = vmatpush1.bf16.msra.mxu0 %v9209
        %9283 = vmatprep.subr.bf16.mxu0 0
        %9284 = vmatpush1.bf16.msra.mxu0 %v9210
        %9285 = vmatprep.subr.bf16.mxu0 0
        %9286 = vmatpush1.bf16.msra.mxu0 %v9211
        %9287 = vmatprep.mubr.bf16.mxu0 %v9078
        %9288 = vmatmul.mubr.bf16.gmra.mrb[0].mxu0 %v9077
        %v9289 = vpop.f32.mrb[0].mxu0
        %v9290 = vadd.f32 0.0, %v9289
        %v9291 = vpop.f32.mrb[0].mxu0
        %v9292 = vpop.f32.mrb[0].mxu0
        %v9293 = vpop.f32.mrb[0].mxu0
        %9294 = vdwg.mxu0
        %9295 = vmatprep.subr.bf16.mxu0 0
        %9296 = vmatpush1.bf16.msra.mxu0 %v9212
        %9297 = vmatprep.subr.bf16.mxu0 0
        %9298 = vmatpush1.bf16.msra.mxu0 %v9213
        %9299 = vmatprep.subr.bf16.mxu0 0
        %9300 = vmatpush1.bf16.msra.mxu0 %v9214
        %9301 = vmatprep.subr.bf16.mxu0 0
        %9302 = vmatpush1.bf16.msra.mxu0 %v9215
        %9303 = vmatprep.subr.bf16.mxu0 0
        %9304 = vmatpush1.bf16.msra.mxu0 %v9216
        %9305 = vmatprep.subr.bf16.mxu0 0
        %9306 = vmatpush1.bf16.msra.mxu0 %v9217
        %9307 = vmatprep.subr.bf16.mxu0 0
        %9308 = vmatpush1.bf16.msra.mxu0 %v9218
        %9309 = vmatprep.subr.bf16.mxu0 0
        %9310 = vmatpush1.bf16.msra.mxu0 %v9219
        %9311 = vmatprep.subr.bf16.mxu0 0
        %9312 = vmatpush1.bf16.msra.mxu0 %v9220
        %9313 = vmatprep.subr.bf16.mxu0 0
        %9314 = vmatpush1.bf16.msra.mxu0 %v9221
        %9315 = vmatprep.subr.bf16.mxu0 0
        %9316 = vmatpush1.bf16.msra.mxu0 %v9222
        %9317 = vmatprep.subr.bf16.mxu0 0
        %9318 = vmatpush1.bf16.msra.mxu0 %v9223
        %9319 = vmatprep.subr.bf16.mxu0 0
        %9320 = vmatpush1.bf16.msra.mxu0 0
        %9321 = vmatprep.subr.bf16.mxu0 0
        %9322 = vmatpush1.bf16.msra.mxu0 0
        %9323 = vmatprep.subr.bf16.mxu0 0
        %9324 = vmatpush1.bf16.msra.mxu0 0
        %9325 = vmatprep.subr.bf16.mxu0 0
        %9326 = vmatpush1.bf16.msra.mxu0 0
        %9327 = vmatprep.mubr.bf16.mxu0 %v9253
        %9328 = vmatmul.mubr.bf16.gmra.mrb[0].mxu0 %v9079
        %v9329 = vpop.f32.mrb[0].mxu0
        %v9330 = vadd.f32 %v9290, %v9329
        %v9331 = vpop.f32.mrb[0].mxu0
        %v9332 = vpop.f32.mrb[0].mxu0
        %v9333 = vpop.f32.mrb[0].mxu0
        %9334 = vdwg.mxu0
        %v9335 = vadd.f32 %v9019, %v9330
        %s9336 = scalar_lea.vmem [#allocation13], 1120
        %v9337 = vld [vmem:[%s9336] sm:$0xf]
        %v9338 = vld [vmem:[%s9336 + $0x4] sm:$0xf]
        %v9339 = vld [vmem:[%s9336 + $0x8] sm:$0xf]
        %v9340 = vld [vmem:[%s9336 + $0xc] sm:$0xf]
        %v9341 = vld [vmem:[%s9336 + $0x10] sm:$0xf]
        %v9342 = vld [vmem:[%s9336 + $0x14] sm:$0xf]
        %v9343 = vld [vmem:[%s9336 + $0x18] sm:$0xf]
        %v9344 = vld [vmem:[%s9336 + $0x1c] sm:$0xf]
        %v9345 = vld [vmem:[%s9336 + $0x20] sm:$0xf]
        %v9346 = vld [vmem:[%s9336 + $0x24] sm:$0xf]
        %v9347 = vld [vmem:[%s9336 + $0x28] sm:$0xf]
        %v9348 = vld [vmem:[%s9336 + $0x2c] sm:$0xf]
        %v9349 = vld [vmem:[%s9336 + $0x30] sm:$0xf]
        %v9350 = vld [vmem:[%s9336 + $0x34] sm:$0xf]
        %v9351 = vld [vmem:[%s9336 + $0x38] sm:$0xf]
        %v9352 = vld [vmem:[%s9336 + $0x3c] sm:$0xf]
        %v9353 = vld [vmem:[%s9336 + $0x40] sm:$0xf]
        %v9354 = vld [vmem:[%s9336 + $0x44] sm:$0xf]
        %v9355 = vld [vmem:[%s9336 + $0x48] sm:$0xf]
        %v9356 = vld [vmem:[%s9336 + $0x4c] sm:$0xf]
        %v9357 = vld [vmem:[%s9336 + $0x50] sm:$0xf]
        %v9358 = vld [vmem:[%s9336 + $0x54] sm:$0xf]
        %v9359 = vld [vmem:[%s9336 + $0x58] sm:$0xf]
        %v9360 = vld [vmem:[%s9336 + $0x5c] sm:$0xf]
        %v9361 = vld [vmem:[%s9336 + $0x60] sm:$0xf]
        %v9362 = vld [vmem:[%s9336 + $0x64] sm:$0xf]
        %v9363 = vld [vmem:[%s9336 + $0x68] sm:$0xf]
        %v9364 = vld [vmem:[%s9336 + $0x6c] sm:$0xf]
        %v9365 = vld [vmem:[%s9336 + $0x70] sm:$0xf]
        %v9366 = vld [vmem:[%s9336 + $0x74] sm:$0xf]
        %v9367 = vld [vmem:[%s9336 + $0x78] sm:$0xf]
        %v9368 = vld [vmem:[%s9336 + $0x7c] sm:$0xf]
        %v9369 = vld [vmem:[%s9336 + $0x80] sm:$0xf]
        %v9370 = vld [vmem:[%s9336 + $0x84] sm:$0xf]
        %v9371 = vld [vmem:[%s9336 + $0x88] sm:$0xf]
        %v9372 = vld [vmem:[%s9336 + $0x8c] sm:$0xf]
        %v9373 = vld [vmem:[%s9336 + $0x90] sm:$0xf]
        %v9374 = vld [vmem:[%s9336 + $0x94] sm:$0xf]
        %v9375 = vld [vmem:[%s9336 + $0x98] sm:$0xf]
        %v9376 = vld [vmem:[%s9336 + $0x9c] sm:$0xf]
        %v9377 = vld [vmem:[%s9336 + $0xa0] sm:$0xf]
        %v9378 = vld [vmem:[%s9336 + $0xa4] sm:$0xf]
        %v9379 = vld [vmem:[%s9336 + $0xa8] sm:$0xf]
        %v9380 = vld [vmem:[%s9336 + $0xac] sm:$0xf]
        %v9381 = vld [vmem:[%s9336 + $0xb0] sm:$0xf]
        %v9382 = vld [vmem:[%s9336 + $0xb4] sm:$0xf]
        %v9383 = vld [vmem:[%s9336 + $0xb8] sm:$0xf]
        %v9384 = vld [vmem:[%s9336 + $0xbc] sm:$0xf]
        %v9385 = vld [vmem:[%s9336 + $0xc0] sm:$0xf]
        %v9386 = vld [vmem:[%s9336 + $0xc4] sm:$0xf]
        %v9387 = vld [vmem:[%s9336 + $0xc8] sm:$0xf]
        %v9388 = vld [vmem:[%s9336 + $0xcc] sm:$0xf]
        %v9389 = vld [vmem:[%s9336 + $0xd0] sm:$0xf]
        %v9390 = vld [vmem:[%s9336 + $0xd4] sm:$0xf]
        %v9391 = vld [vmem:[%s9336 + $0xd8] sm:$0xf]
        %v9392 = vld [vmem:[%s9336 + $0xdc] sm:$0xf]
        %v9393 = vrot.slane %v7869, 2
        %v9394 = vrot.slane %v7872, 2
        %v9395 = vrot.slane %v7875, 2
        %v9396 = vrot.slane %v7878, 2
        %v9456 = vunpack.c.l.b16 %v9337
        %v9457 = vunpack.c.l.b16 %v9338
        %v9458 = vunpack.c.l.b16 %v9339
        %v9459 = vunpack.c.l.b16 %v9340
        %v9460 = vunpack.c.l.b16 %v9341
        %v9461 = vunpack.c.l.b16 %v9342
        %v9462 = vunpack.c.l.b16 %v9343
        %v9463 = vunpack.c.l.b16 %v9344
        %v9464 = vunpack.c.l.b16 %v9345
        %v9465 = vunpack.c.l.b16 %v9346
        %v9466 = vunpack.c.l.b16 %v9347
        %v9467 = vunpack.c.l.b16 %v9348
        %v9468 = vunpack.c.l.b16 %v9349
        %v9469 = vunpack.c.l.b16 %v9350
        %v9470 = vunpack.c.l.b16 %v9351
        %v9471 = vunpack.c.l.b16 %v9352
        %v9472 = vunpack.c.l.b16 %v9353
        %v9473 = vunpack.c.l.b16 %v9354
        %v9474 = vunpack.c.l.b16 %v9355
        %v9475 = vunpack.c.l.b16 %v9356
        %v9476 = vunpack.c.l.b16 %v9357
        %v9477 = vunpack.c.l.b16 %v9358
        %v9478 = vunpack.c.l.b16 %v9359
        %v9479 = vunpack.c.l.b16 %v9360
        %v9480 = vunpack.c.l.b16 %v9361
        %v9481 = vunpack.c.l.b16 %v9362
        %v9482 = vunpack.c.l.b16 %v9363
        %v9483 = vunpack.c.l.b16 %v9364
        %v9484 = vunpack.c.l.b16 %v9365
        %v9485 = vunpack.c.l.b16 %v9366
        %v9486 = vunpack.c.l.b16 %v9367
        %v9487 = vunpack.c.l.b16 %v9368
        %v9488 = vunpack.c.l.b16 %v9369
        %v9489 = vunpack.c.l.b16 %v9370
        %v9490 = vunpack.c.l.b16 %v9371
        %v9491 = vunpack.c.l.b16 %v9372
        %v9492 = vunpack.c.l.b16 %v9373
        %v9493 = vunpack.c.l.b16 %v9374
        %v9494 = vunpack.c.l.b16 %v9375
        %v9495 = vunpack.c.l.b16 %v9376
        %v9496 = vunpack.c.l.b16 %v9377
        %v9497 = vunpack.c.l.b16 %v9378
        %v9498 = vunpack.c.l.b16 %v9379
        %v9499 = vunpack.c.l.b16 %v9380
        %v9500 = vunpack.c.l.b16 %v9381
        %v9501 = vunpack.c.l.b16 %v9382
        %v9502 = vunpack.c.l.b16 %v9383
        %v9503 = vunpack.c.l.b16 %v9384
        %v9504 = vunpack.c.l.b16 %v9385
        %v9505 = vunpack.c.l.b16 %v9386
        %v9506 = vunpack.c.l.b16 %v9387
        %v9507 = vunpack.c.l.b16 %v9388
        %v9508 = vunpack.c.l.b16 %v9389
        %v9509 = vunpack.c.l.b16 %v9390
        %v9510 = vunpack.c.l.b16 %v9391
        %v9511 = vunpack.c.l.b16 %v9392
        %v9512 = vpack.c.b16 %v9457, %v9456
        %v9513 = vpack.c.b16 %v9459, %v9458
        %v9514 = vpack.c.b16 %v9461, %v9460
        %v9515 = vpack.c.b16 %v9463, %v9462
        %v9516 = vpack.c.b16 %v9465, %v9464
        %v9517 = vpack.c.b16 %v9467, %v9466
        %v9518 = vpack.c.b16 %v9469, %v9468
        %v9519 = vpack.c.b16 %v9471, %v9470
        %v9520 = vpack.c.b16 %v9473, %v9472
        %v9521 = vpack.c.b16 %v9475, %v9474
        %v9522 = vpack.c.b16 %v9477, %v9476
        %v9523 = vpack.c.b16 %v9479, %v9478
        %v9524 = vpack.c.b16 %v9481, %v9480
        %v9525 = vpack.c.b16 %v9483, %v9482
        %v9526 = vpack.c.b16 %v9485, %v9484
        %v9527 = vpack.c.b16 %v9487, %v9486
        %v9528 = vpack.c.b16 %v9489, %v9488
        %v9529 = vpack.c.b16 %v9491, %v9490
        %v9530 = vpack.c.b16 %v9493, %v9492
        %v9531 = vpack.c.b16 %v9495, %v9494
        %v9532 = vpack.c.b16 %v9497, %v9496
        %v9533 = vpack.c.b16 %v9499, %v9498
        %v9534 = vpack.c.b16 %v9501, %v9500
        %v9535 = vpack.c.b16 %v9503, %v9502
        %v9536 = vpack.c.b16 %v9505, %v9504
        %v9537 = vpack.c.b16 %v9507, %v9506
        %v9538 = vpack.c.b16 %v9509, %v9508
        %v9539 = vpack.c.b16 %v9511, %v9510
        %v9569 = vsel %vm3222, %v9396, 0
        %9571 = vmatprep.subr.bf16.mxu0 0
        %9572 = vmatpush1.bf16.msra.mxu0 %v9512
        %9573 = vmatprep.subr.bf16.mxu0 0
        %9574 = vmatpush1.bf16.msra.mxu0 %v9513
        %9575 = vmatprep.subr.bf16.mxu0 0
        %9576 = vmatpush1.bf16.msra.mxu0 %v9514
        %9577 = vmatprep.subr.bf16.mxu0 0
        %9578 = vmatpush1.bf16.msra.mxu0 %v9515
        %9579 = vmatprep.subr.bf16.mxu0 0
        %9580 = vmatpush1.bf16.msra.mxu0 %v9516
        %9581 = vmatprep.subr.bf16.mxu0 0
        %9582 = vmatpush1.bf16.msra.mxu0 %v9517
        %9583 = vmatprep.subr.bf16.mxu0 0
        %9584 = vmatpush1.bf16.msra.mxu0 %v9518
        %9585 = vmatprep.subr.bf16.mxu0 0
        %9586 = vmatpush1.bf16.msra.mxu0 %v9519
        %9587 = vmatprep.subr.bf16.mxu0 0
        %9588 = vmatpush1.bf16.msra.mxu0 %v9520
        %9589 = vmatprep.subr.bf16.mxu0 0
        %9590 = vmatpush1.bf16.msra.mxu0 %v9521
        %9591 = vmatprep.subr.bf16.mxu0 0
        %9592 = vmatpush1.bf16.msra.mxu0 %v9522
        %9593 = vmatprep.subr.bf16.mxu0 0
        %9594 = vmatpush1.bf16.msra.mxu0 %v9523
        %9595 = vmatprep.subr.bf16.mxu0 0
        %9596 = vmatpush1.bf16.msra.mxu0 %v9524
        %9597 = vmatprep.subr.bf16.mxu0 0
        %9598 = vmatpush1.bf16.msra.mxu0 %v9525
        %9599 = vmatprep.subr.bf16.mxu0 0
        %9600 = vmatpush1.bf16.msra.mxu0 %v9526
        %9601 = vmatprep.subr.bf16.mxu0 0
        %9602 = vmatpush1.bf16.msra.mxu0 %v9527
        %9603 = vmatprep.mubr.bf16.mxu0 %v9394
        %9604 = vmatmul.mubr.bf16.gmra.mrb[0].mxu0 %v9393
        %v9605 = vpop.f32.mrb[0].mxu0
        %v9606 = vadd.f32 0.0, %v9605
        %v9607 = vpop.f32.mrb[0].mxu0
        %v9608 = vpop.f32.mrb[0].mxu0
        %v9609 = vpop.f32.mrb[0].mxu0
        %9610 = vdwg.mxu0
        %9611 = vmatprep.subr.bf16.mxu0 0
        %9612 = vmatpush1.bf16.msra.mxu0 %v9528
        %9613 = vmatprep.subr.bf16.mxu0 0
        %9614 = vmatpush1.bf16.msra.mxu0 %v9529
        %9615 = vmatprep.subr.bf16.mxu0 0
        %9616 = vmatpush1.bf16.msra.mxu0 %v9530
        %9617 = vmatprep.subr.bf16.mxu0 0
        %9618 = vmatpush1.bf16.msra.mxu0 %v9531
        %9619 = vmatprep.subr.bf16.mxu0 0
        %9620 = vmatpush1.bf16.msra.mxu0 %v9532
        %9621 = vmatprep.subr.bf16.mxu0 0
        %9622 = vmatpush1.bf16.msra.mxu0 %v9533
        %9623 = vmatprep.subr.bf16.mxu0 0
        %9624 = vmatpush1.bf16.msra.mxu0 %v9534
        %9625 = vmatprep.subr.bf16.mxu0 0
        %9626 = vmatpush1.bf16.msra.mxu0 %v9535
        %9627 = vmatprep.subr.bf16.mxu0 0
        %9628 = vmatpush1.bf16.msra.mxu0 %v9536
        %9629 = vmatprep.subr.bf16.mxu0 0
        %9630 = vmatpush1.bf16.msra.mxu0 %v9537
        %9631 = vmatprep.subr.bf16.mxu0 0
        %9632 = vmatpush1.bf16.msra.mxu0 %v9538
        %9633 = vmatprep.subr.bf16.mxu0 0
        %9634 = vmatpush1.bf16.msra.mxu0 %v9539
        %9635 = vmatprep.subr.bf16.mxu0 0
        %9636 = vmatpush1.bf16.msra.mxu0 0
        %9637 = vmatprep.subr.bf16.mxu0 0
        %9638 = vmatpush1.bf16.msra.mxu0 0
        %9639 = vmatprep.subr.bf16.mxu0 0
        %9640 = vmatpush1.bf16.msra.mxu0 0
        %9641 = vmatprep.subr.bf16.mxu0 0
        %9642 = vmatpush1.bf16.msra.mxu0 0
        %9643 = vmatprep.mubr.bf16.mxu0 %v9569
        %9644 = vmatmul.mubr.bf16.gmra.mrb[0].mxu0 %v9395
        %v9645 = vpop.f32.mrb[0].mxu0
        %v9646 = vadd.f32 %v9606, %v9645
        %v9647 = vpop.f32.mrb[0].mxu0
        %v9648 = vpop.f32.mrb[0].mxu0
        %v9649 = vpop.f32.mrb[0].mxu0
        %9650 = vdwg.mxu0
        %v9651 = vadd.f32 %v9335, %v9646
        %s9652 = scalar_lea.vmem [#allocation13], 1344
        %v9653 = vld [vmem:[%s9652] sm:$0xf]
        %v9654 = vld [vmem:[%s9652 + $0x4] sm:$0xf]
        %v9655 = vld [vmem:[%s9652 + $0x8] sm:$0xf]
        %v9656 = vld [vmem:[%s9652 + $0xc] sm:$0xf]
        %v9657 = vld [vmem:[%s9652 + $0x10] sm:$0xf]
        %v9658 = vld [vmem:[%s9652 + $0x14] sm:$0xf]
        %v9659 = vld [vmem:[%s9652 + $0x18] sm:$0xf]
        %v9660 = vld [vmem:[%s9652 + $0x1c] sm:$0xf]
        %v9661 = vld [vmem:[%s9652 + $0x20] sm:$0xf]
        %v9662 = vld [vmem:[%s9652 + $0x24] sm:$0xf]
        %v9663 = vld [vmem:[%s9652 + $0x28] sm:$0xf]
        %v9664 = vld [vmem:[%s9652 + $0x2c] sm:$0xf]
        %v9665 = vld [vmem:[%s9652 + $0x30] sm:$0xf]
        %v9666 = vld [vmem:[%s9652 + $0x34] sm:$0xf]
        %v9667 = vld [vmem:[%s9652 + $0x38] sm:$0xf]
        %v9668 = vld [vmem:[%s9652 + $0x3c] sm:$0xf]
        %v9669 = vld [vmem:[%s9652 + $0x40] sm:$0xf]
        %v9670 = vld [vmem:[%s9652 + $0x44] sm:$0xf]
        %v9671 = vld [vmem:[%s9652 + $0x48] sm:$0xf]
        %v9672 = vld [vmem:[%s9652 + $0x4c] sm:$0xf]
        %v9673 = vld [vmem:[%s9652 + $0x50] sm:$0xf]
        %v9674 = vld [vmem:[%s9652 + $0x54] sm:$0xf]
        %v9675 = vld [vmem:[%s9652 + $0x58] sm:$0xf]
        %v9676 = vld [vmem:[%s9652 + $0x5c] sm:$0xf]
        %v9677 = vld [vmem:[%s9652 + $0x60] sm:$0xf]
        %v9678 = vld [vmem:[%s9652 + $0x64] sm:$0xf]
        %v9679 = vld [vmem:[%s9652 + $0x68] sm:$0xf]
        %v9680 = vld [vmem:[%s9652 + $0x6c] sm:$0xf]
        %v9681 = vld [vmem:[%s9652 + $0x70] sm:$0xf]
        %v9682 = vld [vmem:[%s9652 + $0x74] sm:$0xf]
        %v9683 = vld [vmem:[%s9652 + $0x78] sm:$0xf]
        %v9684 = vld [vmem:[%s9652 + $0x7c] sm:$0xf]
        %v9685 = vld [vmem:[%s9652 + $0x80] sm:$0xf]
        %v9686 = vld [vmem:[%s9652 + $0x84] sm:$0xf]
        %v9687 = vld [vmem:[%s9652 + $0x88] sm:$0xf]
        %v9688 = vld [vmem:[%s9652 + $0x8c] sm:$0xf]
        %v9689 = vld [vmem:[%s9652 + $0x90] sm:$0xf]
        %v9690 = vld [vmem:[%s9652 + $0x94] sm:$0xf]
        %v9691 = vld [vmem:[%s9652 + $0x98] sm:$0xf]
        %v9692 = vld [vmem:[%s9652 + $0x9c] sm:$0xf]
        %v9693 = vld [vmem:[%s9652 + $0xa0] sm:$0xf]
        %v9694 = vld [vmem:[%s9652 + $0xa4] sm:$0xf]
        %v9695 = vld [vmem:[%s9652 + $0xa8] sm:$0xf]
        %v9696 = vld [vmem:[%s9652 + $0xac] sm:$0xf]
        %v9697 = vld [vmem:[%s9652 + $0xb0] sm:$0xf]
        %v9698 = vld [vmem:[%s9652 + $0xb4] sm:$0xf]
        %v9699 = vld [vmem:[%s9652 + $0xb8] sm:$0xf]
        %v9700 = vld [vmem:[%s9652 + $0xbc] sm:$0xf]
        %v9701 = vld [vmem:[%s9652 + $0xc0] sm:$0xf]
        %v9702 = vld [vmem:[%s9652 + $0xc4] sm:$0xf]
        %v9703 = vld [vmem:[%s9652 + $0xc8] sm:$0xf]
        %v9704 = vld [vmem:[%s9652 + $0xcc] sm:$0xf]
        %v9705 = vld [vmem:[%s9652 + $0xd0] sm:$0xf]
        %v9706 = vld [vmem:[%s9652 + $0xd4] sm:$0xf]
        %v9707 = vld [vmem:[%s9652 + $0xd8] sm:$0xf]
        %v9708 = vld [vmem:[%s9652 + $0xdc] sm:$0xf]
        %v9709 = vrot.slane %v7751, 3
        %v9710 = vrot.slane %v7752, 3
        %v9711 = vrot.slane %v7753, 3
        %v9712 = vrot.slane %v7754, 3
        %v9772 = vunpack.c.l.b16 %v9653
        %v9773 = vunpack.c.l.b16 %v9654
        %v9774 = vunpack.c.l.b16 %v9655
        %v9775 = vunpack.c.l.b16 %v9656
        %v9776 = vunpack.c.l.b16 %v9657
        %v9777 = vunpack.c.l.b16 %v9658
        %v9778 = vunpack.c.l.b16 %v9659
        %v9779 = vunpack.c.l.b16 %v9660
        %v9780 = vunpack.c.l.b16 %v9661
        %v9781 = vunpack.c.l.b16 %v9662
        %v9782 = vunpack.c.l.b16 %v9663
        %v9783 = vunpack.c.l.b16 %v9664
        %v9784 = vunpack.c.l.b16 %v9665
        %v9785 = vunpack.c.l.b16 %v9666
        %v9786 = vunpack.c.l.b16 %v9667
        %v9787 = vunpack.c.l.b16 %v9668
        %v9788 = vunpack.c.l.b16 %v9669
        %v9789 = vunpack.c.l.b16 %v9670
        %v9790 = vunpack.c.l.b16 %v9671
        %v9791 = vunpack.c.l.b16 %v9672
        %v9792 = vunpack.c.l.b16 %v9673
        %v9793 = vunpack.c.l.b16 %v9674
        %v9794 = vunpack.c.l.b16 %v9675
        %v9795 = vunpack.c.l.b16 %v9676
        %v9796 = vunpack.c.l.b16 %v9677
        %v9797 = vunpack.c.l.b16 %v9678
        %v9798 = vunpack.c.l.b16 %v9679
        %v9799 = vunpack.c.l.b16 %v9680
        %v9800 = vunpack.c.l.b16 %v9681
        %v9801 = vunpack.c.l.b16 %v9682
        %v9802 = vunpack.c.l.b16 %v9683
        %v9803 = vunpack.c.l.b16 %v9684
        %v9804 = vunpack.c.l.b16 %v9685
        %v9805 = vunpack.c.l.b16 %v9686
        %v9806 = vunpack.c.l.b16 %v9687
        %v9807 = vunpack.c.l.b16 %v9688
        %v9808 = vunpack.c.l.b16 %v9689
        %v9809 = vunpack.c.l.b16 %v9690
        %v9810 = vunpack.c.l.b16 %v9691
        %v9811 = vunpack.c.l.b16 %v9692
        %v9812 = vunpack.c.l.b16 %v9693
        %v9813 = vunpack.c.l.b16 %v9694
        %v9814 = vunpack.c.l.b16 %v9695
        %v9815 = vunpack.c.l.b16 %v9696
        %v9816 = vunpack.c.l.b16 %v9697
        %v9817 = vunpack.c.l.b16 %v9698
        %v9818 = vunpack.c.l.b16 %v9699
        %v9819 = vunpack.c.l.b16 %v9700
        %v9820 = vunpack.c.l.b16 %v9701
        %v9821 = vunpack.c.l.b16 %v9702
        %v9822 = vunpack.c.l.b16 %v9703
        %v9823 = vunpack.c.l.b16 %v9704
        %v9824 = vunpack.c.l.b16 %v9705
        %v9825 = vunpack.c.l.b16 %v9706
        %v9826 = vunpack.c.l.b16 %v9707
        %v9827 = vunpack.c.l.b16 %v9708
        %v9828 = vpack.c.b16 %v9773, %v9772
        %v9829 = vpack.c.b16 %v9775, %v9774
        %v9830 = vpack.c.b16 %v9777, %v9776
        %v9831 = vpack.c.b16 %v9779, %v9778
        %v9832 = vpack.c.b16 %v9781, %v9780
        %v9833 = vpack.c.b16 %v9783, %v9782
        %v9834 = vpack.c.b16 %v9785, %v9784
        %v9835 = vpack.c.b16 %v9787, %v9786
        %v9836 = vpack.c.b16 %v9789, %v9788
        %v9837 = vpack.c.b16 %v9791, %v9790
        %v9838 = vpack.c.b16 %v9793, %v9792
        %v9839 = vpack.c.b16 %v9795, %v9794
        %v9840 = vpack.c.b16 %v9797, %v9796
        %v9841 = vpack.c.b16 %v9799, %v9798
        %v9842 = vpack.c.b16 %v9801, %v9800
        %v9843 = vpack.c.b16 %v9803, %v9802
        %v9844 = vpack.c.b16 %v9805, %v9804
        %v9845 = vpack.c.b16 %v9807, %v9806
        %v9846 = vpack.c.b16 %v9809, %v9808
        %v9847 = vpack.c.b16 %v9811, %v9810
        %v9848 = vpack.c.b16 %v9813, %v9812
        %v9849 = vpack.c.b16 %v9815, %v9814
        %v9850 = vpack.c.b16 %v9817, %v9816
        %v9851 = vpack.c.b16 %v9819, %v9818
        %v9852 = vpack.c.b16 %v9821, %v9820
        %v9853 = vpack.c.b16 %v9823, %v9822
        %v9854 = vpack.c.b16 %v9825, %v9824
        %v9855 = vpack.c.b16 %v9827, %v9826
        %v9885 = vsel %vm3222, %v9712, 0
        %9887 = vmatprep.subr.bf16.mxu0 0
        %9888 = vmatpush1.bf16.msra.mxu0 %v9828
        %9889 = vmatprep.subr.bf16.mxu0 0
        %9890 = vmatpush1.bf16.msra.mxu0 %v9829
        %9891 = vmatprep.subr.bf16.mxu0 0
        %9892 = vmatpush1.bf16.msra.mxu0 %v9830
        %9893 = vmatprep.subr.bf16.mxu0 0
        %9894 = vmatpush1.bf16.msra.mxu0 %v9831
        %9895 = vmatprep.subr.bf16.mxu0 0
        %9896 = vmatpush1.bf16.msra.mxu0 %v9832
        %9897 = vmatprep.subr.bf16.mxu0 0
        %9898 = vmatpush1.bf16.msra.mxu0 %v9833
        %9899 = vmatprep.subr.bf16.mxu0 0
        %9900 = vmatpush1.bf16.msra.mxu0 %v9834
        %9901 = vmatprep.subr.bf16.mxu0 0
        %9902 = vmatpush1.bf16.msra.mxu0 %v9835
        %9903 = vmatprep.subr.bf16.mxu0 0
        %9904 = vmatpush1.bf16.msra.mxu0 %v9836
        %9905 = vmatprep.subr.bf16.mxu0 0
        %9906 = vmatpush1.bf16.msra.mxu0 %v9837
        %9907 = vmatprep.subr.bf16.mxu0 0
        %9908 = vmatpush1.bf16.msra.mxu0 %v9838
        %9909 = vmatprep.subr.bf16.mxu0 0
        %9910 = vmatpush1.bf16.msra.mxu0 %v9839
        %9911 = vmatprep.subr.bf16.mxu0 0
        %9912 = vmatpush1.bf16.msra.mxu0 %v9840
        %9913 = vmatprep.subr.bf16.mxu0 0
        %9914 = vmatpush1.bf16.msra.mxu0 %v9841
        %9915 = vmatprep.subr.bf16.mxu0 0
        %9916 = vmatpush1.bf16.msra.mxu0 %v9842
        %9917 = vmatprep.subr.bf16.mxu0 0
        %9918 = vmatpush1.bf16.msra.mxu0 %v9843
        %9919 = vmatprep.mubr.bf16.mxu0 %v9710
        %9920 = vmatmul.mubr.bf16.gmra.mrb[0].mxu0 %v9709
        %v9921 = vpop.f32.mrb[0].mxu0
        %v9922 = vadd.f32 0.0, %v9921
        %v9923 = vpop.f32.mrb[0].mxu0
        %v9924 = vpop.f32.mrb[0].mxu0
        %v9925 = vpop.f32.mrb[0].mxu0
        %9926 = vdwg.mxu0
        %9927 = vmatprep.subr.bf16.mxu0 0
        %9928 = vmatpush1.bf16.msra.mxu0 %v9844
        %9929 = vmatprep.subr.bf16.mxu0 0
        %9930 = vmatpush1.bf16.msra.mxu0 %v9845
        %9931 = vmatprep.subr.bf16.mxu0 0
        %9932 = vmatpush1.bf16.msra.mxu0 %v9846
        %9933 = vmatprep.subr.bf16.mxu0 0
        %9934 = vmatpush1.bf16.msra.mxu0 %v9847
        %9935 = vmatprep.subr.bf16.mxu0 0
        %9936 = vmatpush1.bf16.msra.mxu0 %v9848
        %9937 = vmatprep.subr.bf16.mxu0 0
        %9938 = vmatpush1.bf16.msra.mxu0 %v9849
        %9939 = vmatprep.subr.bf16.mxu0 0
        %9940 = vmatpush1.bf16.msra.mxu0 %v9850
        %9941 = vmatprep.subr.bf16.mxu0 0
        %9942 = vmatpush1.bf16.msra.mxu0 %v9851
        %9943 = vmatprep.subr.bf16.mxu0 0
        %9944 = vmatpush1.bf16.msra.mxu0 %v9852
        %9945 = vmatprep.subr.bf16.mxu0 0
        %9946 = vmatpush1.bf16.msra.mxu0 %v9853
        %9947 = vmatprep.subr.bf16.mxu0 0
        %9948 = vmatpush1.bf16.msra.mxu0 %v9854
        %9949 = vmatprep.subr.bf16.mxu0 0
        %9950 = vmatpush1.bf16.msra.mxu0 %v9855
        %9951 = vmatprep.subr.bf16.mxu0 0
        %9952 = vmatpush1.bf16.msra.mxu0 0
        %9953 = vmatprep.subr.bf16.mxu0 0
        %9954 = vmatpush1.bf16.msra.mxu0 0
        %9955 = vmatprep.subr.bf16.mxu0 0
        %9956 = vmatpush1.bf16.msra.mxu0 0
        %9957 = vmatprep.subr.bf16.mxu0 0
        %9958 = vmatpush1.bf16.msra.mxu0 0
        %9959 = vmatprep.mubr.bf16.mxu0 %v9885
        %9960 = vmatmul.mubr.bf16.gmra.mrb[0].mxu0 %v9711
        %v9961 = vpop.f32.mrb[0].mxu0
        %v9962 = vadd.f32 %v9922, %v9961
        %v9963 = vpop.f32.mrb[0].mxu0
        %v9964 = vpop.f32.mrb[0].mxu0
        %v9965 = vpop.f32.mrb[0].mxu0
        %9966 = vdwg.mxu0
        %v9967 = vadd.f32 %v9651, %v9962
        %v9968 = vld [vmem:[#allocation14] sm:$0x1]
        %v9969 = vadd.f32 %v9967, %v9968
        %v9970 = vmax.f32 %v9969, 0.0
        %v9971 = vpack.c.bf16 %v9970, %v9970
        %v9972 = vld [vmem:[#allocation16] sm:$0xf]
        %v9973 = vld [vmem:[#allocation16 + $0x4] sm:$0xf]
        %v9974 = vld [vmem:[#allocation16 + $0x8] sm:$0xf]
        %v9975 = vld [vmem:[#allocation16 + $0xc] sm:$0xf]
        %v9976 = vld [vmem:[#allocation16 + $0x10] sm:$0xf]
        %v9977 = vld [vmem:[#allocation16 + $0x14] sm:$0xf]
        %v9978 = vld [vmem:[#allocation16 + $0x18] sm:$0xf]
        %v9979 = vld [vmem:[#allocation16 + $0x1c] sm:$0xf]
        %v9980 = vld [vmem:[#allocation16 + $0x20] sm:$0xf]
        %v9981 = vld [vmem:[#allocation16 + $0x24] sm:$0xf]
        %v9982 = vld [vmem:[#allocation16 + $0x28] sm:$0xf]
        %v9983 = vld [vmem:[#allocation16 + $0x2c] sm:$0xf]
        %v9984 = vld [vmem:[#allocation16 + $0x30] sm:$0xf]
        %v9985 = vld [vmem:[#allocation16 + $0x34] sm:$0xf]
        %v9986 = vld [vmem:[#allocation16 + $0x38] sm:$0xf]
        %v9987 = vld [vmem:[#allocation16 + $0x3c] sm:$0xf]
        %v9988 = vld [vmem:[#allocation17] sm:$0x1]
        %v10005 = vunpack.c.l.b16 %v9972
        %v10006 = vunpack.c.l.b16 %v9973
        %v10007 = vunpack.c.l.b16 %v9974
        %v10008 = vunpack.c.l.b16 %v9975
        %v10009 = vunpack.c.l.b16 %v9976
        %v10010 = vunpack.c.l.b16 %v9977
        %v10011 = vunpack.c.l.b16 %v9978
        %v10012 = vunpack.c.l.b16 %v9979
        %v10013 = vunpack.c.l.b16 %v9980
        %v10014 = vunpack.c.l.b16 %v9981
        %v10015 = vunpack.c.l.b16 %v9982
        %v10016 = vunpack.c.l.b16 %v9983
        %v10017 = vunpack.c.l.b16 %v9984
        %v10018 = vunpack.c.l.b16 %v9985
        %v10019 = vunpack.c.l.b16 %v9986
        %v10020 = vunpack.c.l.b16 %v9987
        %v10021 = vpack.c.b16 %v10006, %v10005
        %v10022 = vpack.c.b16 %v10008, %v10007
        %v10023 = vpack.c.b16 %v10010, %v10009
        %v10024 = vpack.c.b16 %v10012, %v10011
        %v10025 = vpack.c.b16 %v10014, %v10013
        %v10026 = vpack.c.b16 %v10016, %v10015
        %v10027 = vpack.c.b16 %v10018, %v10017
        %v10028 = vpack.c.b16 %v10020, %v10019
        %10037 = vmatprep.subr.bf16.mxu0 0
        %10038 = vmatpush1.bf16.msra.mxu0 %v10021
        %10039 = vmatprep.subr.bf16.mxu0 0
        %10040 = vmatpush1.bf16.msra.mxu0 %v10022
        %10041 = vmatprep.subr.bf16.mxu0 0
        %10042 = vmatpush1.bf16.msra.mxu0 %v10023
        %10043 = vmatprep.subr.bf16.mxu0 0
        %10044 = vmatpush1.bf16.msra.mxu0 %v10024
        %10045 = vmatprep.subr.bf16.mxu0 0
        %10046 = vmatpush1.bf16.msra.mxu0 %v10025
        %10047 = vmatprep.subr.bf16.mxu0 0
        %10048 = vmatpush1.bf16.msra.mxu0 %v10026
        %10049 = vmatprep.subr.bf16.mxu0 0
        %10050 = vmatpush1.bf16.msra.mxu0 %v10027
        %10051 = vmatprep.subr.bf16.mxu0 0
        %10052 = vmatpush1.bf16.msra.mxu0 %v10028
        %10053 = vmatprep.subr.bf16.mxu0 0
        %10054 = vmatpush1.bf16.msra.mxu0 0
        %10055 = vmatprep.subr.bf16.mxu0 0
        %10056 = vmatpush1.bf16.msra.mxu0 0
        %10057 = vmatprep.subr.bf16.mxu0 0
        %10058 = vmatpush1.bf16.msra.mxu0 0
        %10059 = vmatprep.subr.bf16.mxu0 0
        %10060 = vmatpush1.bf16.msra.mxu0 0
        %10061 = vmatprep.subr.bf16.mxu0 0
        %10062 = vmatpush1.bf16.msra.mxu0 0
        %10063 = vmatprep.subr.bf16.mxu0 0
        %10064 = vmatpush1.bf16.msra.mxu0 0
        %10065 = vmatprep.subr.bf16.mxu0 0
        %10066 = vmatpush1.bf16.msra.mxu0 0
        %10067 = vmatprep.subr.bf16.mxu0 0
        %10068 = vmatpush1.bf16.msra.mxu0 0
        %10069 = vmatprep.mubr.bf16.mxu0 0
        %10070 = vmatmul.mubr.bf16.gmra.mrb[0].mxu0 %v9971
        %v10071 = vpop.f32.mrb[0].mxu0
        %v10072 = vadd.f32 %v9988, %v10071
        %v10073 = vpop.f32.mrb[0].mxu0
        %v10074 = vpop.f32.mrb[0].mxu0
        %v10075 = vpop.f32.mrb[0].mxu0
        %10076 = vdwg.mxu0
        %10077 = vst [vmem:[%s570] sm:$0x1] %v10072
        %s10078 = sand.u32 %s319, 1
        %s10079 = scalar_lea.sflag [#allocation4], %s10078
        %s10080 = sand.u32 %s319, 1
        %s10081 = scalar_lea.vmem [#allocation19], %s10080
        // Predicated region
        $region113: #{pallas_forward.1} parent=71 // pred_check
          %p10082 = pneg %p329
        $region114: #{pallas_forward.1} parent=71 // pred_check_branch
          %10084 = sbr.rel (%p10082) target = $region116
        $region115: #{pallas_forward.1} parent=71 // pred_region
          %s10086 = ssub.s32 16, 16
          %10087 = vsyncadd %s10079, %s10086
          %s10088 = smul.addr %s33, 16
          %s10089 = scalar_lea.hbm %s13, %s10088
          %s10091 = sshll.u32 %s10081, 4
          %s10092 = int_to_ptr.vmem [resolvable:$true] %s10091
          %10094 = dma.vmem_to_hbm [thread:$0]  %s10092, 16, %s10089, %s10079
        $region116: #{pallas_forward.1} parent=71 // pred_fallthru
          _
      $region72: #{pallas_forward.1} parent=5 // pred_fallthru
        _
      %p10095 = scmp.le.s32.totalorder 2, %s28
      // Predicated region
      $region117: #{pallas_forward.1} parent=5 // pred_check
        %p10096 = pneg %p10095
      $region118: #{pallas_forward.1} parent=5 // pred_check_branch
        %10098 = sbr.rel (%p10096) target = $region120
      $region119: #{pallas_forward.1} parent=5 // pred_region
        %s10099 = ssub.s32 %s28, 2
        // Predicated region
        $region121: #{pallas_forward.1} parent=119 // pred_check
          %p10100 = pneg %p335
        $region122: #{pallas_forward.1} parent=119 // pred_check_branch
          %10102 = sbr.rel (%p10100) target = $region124
        $region123: #{pallas_forward.1} parent=119 // pred_region
          %s10103 = sand.u32 %s320, 1
          %s10104 = scalar_lea.sflag [#allocation4], %s10103
          %s10105 = sand.u32 %s320, 1
          %s10106 = scalar_lea.vmem [#allocation19], %s10105
          %10107 = dma.done %s10104, 16
        $region124: #{pallas_forward.1} parent=119 // pred_fallthru
          _
      $region120: #{pallas_forward.1} parent=5 // pred_fallthru
        _
    $region6: #{pallas_forward.1} parent=1 // loop_footer
      %s32 = sadd.s32 1, %s28
    $region7: #{pallas_forward.1} parent=1 // loop_footer_branch
      %27 = sbr.rel target = $region3
    $region8: #{pallas_forward.1} parent=1 // loop_exit
      _
    %10108 = vsyncpa [#allocation3], 1
    %s10109 = scalar_lea.sflag [#allocation3], 1
    %10110 = vsyncpa %s10109, 1
    %10111 = vsyncpa [#allocation6], 1
    %10112 = vsyncpa [#allocation9], 1
    %10113 = vsyncpa [#allocation12], 1
    %10114 = vsyncpa [#allocation15], 1
    %10115 = vsyncpa [#allocation18], 1
    %10116 = vsyncpa [#allocation4], 1
    %s10117 = scalar_lea.sflag [#allocation4], 1
    %10118 = vsyncpa %s10117, 1

</llo_original>
